<compile_context>
chip_gen: v5e
topology: v5e:2x2
jax: 0.10.0
libtpu: 0.0.40
codegen_flags: <defaults>
</compile_context>

<pallas_src>
import functools

import jax
import jax.numpy as jnp
from jax.experimental import pallas as pl
from jax.experimental.pallas import tpu as pltpu

LANE = 128  # TPU lane width; feature channels / K groups are padded to this.


# ---------------------------------------------------------------------------
# Fused kernel (one image per grid step):
#   stem matmul -> res conv1 -> res conv2 + skip -> global avg pool -> embed
# ---------------------------------------------------------------------------
def _fused_encoder_kernel(
    xcol_ref,              # [1, H*W, K0] bf16  stem im2col for the current image
    w0_ref, b0_ref,        # stem : [K0, CP]   bf16, [1, CP] f32
    w1_ref, b1_ref,        # res1 : [9*CP, CP] bf16, [1, CP] f32
    w2_ref, b2_ref,        # res2 : [9*CP, CP] bf16, [1, CP] f32
    we_ref, be_ref,        # embed: [CP, EP]   bf16 (1/(H*W) folded in), [1, EP] f32
    o_ref,                 # [1, 1, EP] f32
    pad_ref,               # scratch: [H+2, W, CP] bf16   H-haloed activation
    col_ref,               # scratch: [H*W, 9*CP]  bf16   im2col operand
    res_ref,               # scratch: [H*W, CP]    bf16   skip connection
):
    Hp, W, CP = pad_ref.shape
    H = Hp - 2
    HW = H * W

    # Halo-only zeroing: just the two halo rows (8 KiB), interior is rewritten
    # before every conv. (No width halo exists; it is synthesized by the masks.)
    zero_row = jnp.zeros((W, CP), jnp.bfloat16)
    pad_ref[0, :, :] = zero_row
    pad_ref[H + 1, :, :] = zero_row

    # Width-edge masks for the roll-based kw shifts (hoisted out of the conv loops).
    w_idx = jax.lax.broadcasted_iota(jnp.int32, (HW, CP), 0) % W
    not_left = w_idx > 0          # position has a valid (w-1) neighbour
    not_right = w_idx < (W - 1)   # position has a valid (w+1) neighbour

    def conv3x3(w_ref, b_ref):
        # im2col with only lane-aligned, 128-wide stores.  kh shifts are aligned
        # first-axis slices of the bf16 haloed buffer; kw shifts are sublane rolls
        # (XLU slot) + edge masks (VPU slot) -> no misaligned sublane slicing and
        # no per-tap f32 activation traffic.  One MXU matmul with K = 9*CP.
        for kh in range(3):
            rows_bf = pad_ref[kh:kh + H, :, :].reshape(HW, CP)            # bf16
            col_ref[:, (3 * kh + 1) * CP:(3 * kh + 2) * CP] = rows_bf     # kw=1 (center)
            rows = rows_bf.astype(jnp.float32)    # roll done in f32 (simple sublane rotate)
            left = jnp.where(not_left, pltpu.roll(rows, shift=1, axis=0), 0.0)
            right = jnp.where(not_right, pltpu.roll(rows, shift=HW - 1, axis=0), 0.0)
            col_ref[:, (3 * kh + 0) * CP:(3 * kh + 1) * CP] = left.astype(jnp.bfloat16)
            col_ref[:, (3 * kh + 2) * CP:(3 * kh + 3) * CP] = right.astype(jnp.bfloat16)
        y = jnp.dot(col_ref[...], w_ref[...], preferred_element_type=jnp.float32)
        return y + b_ref[...]                                             # bias in f32 (VPU)

    # -- stem conv + ReLU (single MXU matmul; K pre-packed dense to 128 in wrapper) --
    h = jnp.maximum(
        jnp.dot(xcol_ref[0, :, :], w0_ref[...], preferred_element_type=jnp.float32)
        + b0_ref[...], 0.0)                                               # [HW, CP] f32
    h_bf = h.astype(jnp.bfloat16)                                         # single cast
    res_ref[...] = h_bf                                                   # keep for skip
    pad_ref[1:H + 1, :, :] = h_bf.reshape(H, W, CP)

    # -- residual block conv1 + ReLU --
    h = jnp.maximum(conv3x3(w1_ref, b1_ref), 0.0)
    pad_ref[1:H + 1, :, :] = h.astype(jnp.bfloat16).reshape(H, W, CP)     # single cast

    # -- residual block conv2 + skip + ReLU --
    h = jnp.maximum(conv3x3(w2_ref, b2_ref) + res_ref[...].astype(jnp.float32), 0.0)

    # -- AdaptiveAvgPool2d(1) + flatten + Linear(embed); 1/(H*W) folded into we --
    pooled = jnp.sum(h, axis=0, keepdims=True)                            # [1, CP] f32
    y = jnp.dot(pooled.astype(jnp.bfloat16), we_ref[...],
                preferred_element_type=jnp.float32) + be_ref[...]         # [1, EP] f32
    o_ref[0] = y


# ---------------------------------------------------------------------------
# Parameter packing (outside the hot path): dense stem K, im2col weight layout,
# lane padding, pool scale folded into embed weight, bf16 MXU operands.
# ---------------------------------------------------------------------------
def pack_encoder_params(params, H, W, lane=LANE):
    cp = lane
    kh, kw, cin, cf = params["stem_w"].shape
    assert kh == 3 and kw == 3 and 9 * cin <= lane and cf <= cp

    # Stem: all 9 taps x cin channels packed densely into ONE 128-wide K group.
    w0 = jnp.zeros((lane, cp), jnp.float32)
    w0 = w0.at[:9 * cin, :cf].set(params["stem_w"].reshape(9 * cin, cf))
    b0 = jnp.zeros((1, cp), jnp.float32).at[0, :cf].set(params["stem_b"])

    def pack_res(w, b):
        wp = jnp.zeros((3, 3, cp, cp), jnp.float32).at[:, :, :cf, :cf].set(w)
        bp = jnp.zeros((1, cp), jnp.float32).at[0, :cf].set(b)
        return wp.reshape(9 * cp, cp).astype(jnp.bfloat16), bp

    w1, b1 = pack_res(params["res1_w"], params["res1_b"])
    w2, b2 = pack_res(params["res2_w"], params["res2_b"])

    # Embed: fold global-average-pool scale into the weight; lane-pad E to 128.
    c, e = params["embed_w"].shape
    ep = ((e + lane - 1) // lane) * lane
    we = jnp.zeros((cp, ep), jnp.float32)
    we = we.at[:c, :e].set(params["embed_w"] * (1.0 / (H * W)))
    be = jnp.zeros((1, ep), jnp.float32).at[0, :e].set(params["embed_b"])

    return {
        "stem_w": w0.astype(jnp.bfloat16), "stem_b": b0,
        "res1_w": w1, "res1_b": b1,
        "res2_w": w2, "res2_b": b2,
        "embed_w": we.astype(jnp.bfloat16), "embed_b": be,
    }


# ---------------------------------------------------------------------------
# EncoderCNN: raw parameters + forward
# ---------------------------------------------------------------------------
def init_encoder_params(key, in_channels, feat_channels, embed_size):
    ks = jax.random.split(key, 8)

    def norm(k, shape, scale):
        return scale * jax.random.normal(k, shape, jnp.float32)

    return {
        # backbone (stand-in for the frozen resnet50 -- see TODO at top)
        "stem_w": norm(ks[0], (3, 3, in_channels, feat_channels), 0.10),
        "stem_b": norm(ks[1], (feat_channels,), 0.01),
        "res1_w": norm(ks[2], (3, 3, feat_channels, feat_channels), 0.05),
        "res1_b": norm(ks[3], (feat_channels,), 0.01),
        "res2_w": norm(ks[4], (3, 3, feat_channels, feat_channels), 0.05),
        "res2_b": norm(ks[5], (feat_channels,), 0.01),
        # self.embed = nn.Linear(resnet.fc.in_features, embed_size)
        "embed_w": norm(ks[6], (feat_channels, embed_size), 0.05),
        "embed_b": norm(ks[7], (embed_size,), 0.01),
    }


def encoder_cnn_forward(packed, embed_size, images_nchw):
    # PyTorch NCHW -> NHWC (layout plumbing so channels ride the 128-lane axis).
    x = jnp.transpose(images_nchw, (0, 2, 3, 1)).astype(jnp.float32)
    B, H, W, Cin = x.shape
    K0, CP = packed["stem_w"].shape
    EP = packed["embed_w"].shape[1]
    HW = H * W
    assert 9 * Cin <= K0, "stem taps must fit in one 128-wide K group"
    assert W % 8 == 0, "width must be a sublane multiple for the roll-based shifts"

    # Stem im2col in the wrapper (layout plumbing, not compute): 9 taps x Cin input
    # channels packed densely into a single 128-wide K group (stem K=128, not 9*128).
    xp = jnp.pad(x, ((0, 0), (1, 1), (1, 1), (0, 0)))
    patches = jnp.concatenate(
        [xp[:, kh:kh + H, kw:kw + W, :] for kh in range(3) for kw in range(3)],
        axis=-1)                                               # [B, H, W, 9*Cin]
    x_col = patches.reshape(B, HW, 9 * Cin)
    x_col = jnp.pad(x_col, ((0, 0), (0, 0), (0, K0 - 9 * Cin))).astype(jnp.bfloat16)

    grid_spec = pltpu.PrefetchScalarGridSpec(
        num_scalar_prefetch=0,
        grid=(B,),                                             # one image per grid step
        in_specs=[
            pl.BlockSpec((1, HW, K0), lambda b: (b, 0, 0)),    # per-image activation (pipelined)
            pl.BlockSpec((K0, CP), lambda b: (0, 0)),          # resident weights: same block
            pl.BlockSpec((1, CP), lambda b: (0, 0)),           #   index every step -> no re-DMA
            pl.BlockSpec((9 * CP, CP), lambda b: (0, 0)),
            pl.BlockSpec((1, CP), lambda b: (0, 0)),
            pl.BlockSpec((9 * CP, CP), lambda b: (0, 0)),
            pl.BlockSpec((1, CP), lambda b: (0, 0)),
            pl.BlockSpec((CP, EP), lambda b: (0, 0)),
            pl.BlockSpec((1, EP), lambda b: (0, 0)),
        ],
        out_specs=pl.BlockSpec((1, 1, EP), lambda b: (b, 0, 0)),  # lane-dense (EP = 128*k)
        scratch_shapes=[
            pltpu.VMEM((H + 2, W, CP), jnp.bfloat16),          # H-haloed activation (bf16)
            pltpu.VMEM((HW, 9 * CP), jnp.bfloat16),            # im2col operand (bf16)
            pltpu.VMEM((HW, CP), jnp.bfloat16),                # residual skip (bf16)
        ],
    )

    out = pl.pallas_call(
        _fused_encoder_kernel,
        out_shape=jax.ShapeDtypeStruct((B, 1, EP), jnp.float32),
        grid_spec=grid_spec,
        compiler_params=pltpu.CompilerParams(
            dimension_semantics=("parallel",),                 # batch grid -> both TCs on v7x
        ),
    )(x_col,
      packed["stem_w"], packed["stem_b"],
      packed["res1_w"], packed["res1_b"],
      packed["res2_w"], packed["res2_b"],
      packed["embed_w"], packed["embed_b"])

    return out[:, 0, :embed_size]


# ---------------------------------------------------------------------------
# Pure-JAX f32 reference (same synthetic backbone) for a correctness check.
# ---------------------------------------------------------------------------
def _reference_forward(params, images_nchw):
    x = jnp.transpose(images_nchw, (0, 2, 3, 1)).astype(jnp.float32)
    dn = ("NHWC", "HWIO", "NHWC")

    def conv(a, w, b):
        return jax.lax.conv_general_dilated(
            a, w, (1, 1), "SAME", dimension_numbers=dn,
            precision=jax.lax.Precision.HIGHEST) + b

    h = jax.nn.relu(conv(x, params["stem_w"], params["stem_b"]))
    r = h
    h = jax.nn.relu(conv(h, params["res1_w"], params["res1_b"]))
    h = jax.nn.relu(conv(h, params["res2_w"], params["res2_b"]) + r)
    pooled = jnp.mean(h, axis=(1, 2))
    return jnp.dot(pooled, params["embed_w"],
                   precision=jax.lax.Precision.HIGHEST) + params["embed_b"]


if __name__ == "__main__":
    key = jax.random.PRNGKey(0)
    pkey, xkey = jax.random.split(key)

    batch, in_channels, spatial = 2, 4, 16
    feat_channels, embed_size = 32, 32

    params = init_encoder_params(pkey, in_channels, feat_channels, embed_size)
    packed = pack_encoder_params(params, spatial, spatial)
    images = jax.random.normal(
        xkey, (batch, in_channels, spatial, spatial), jnp.float32)

    fwd = jax.jit(functools.partial(encoder_cnn_forward, packed, embed_size))
    feats = jax.block_until_ready(fwd(images))

    assert feats.shape == (batch, embed_size), feats.shape
    assert feats.dtype == jnp.float32
    assert bool(jnp.all(jnp.isfinite(feats)))

    ref = _reference_forward(params, images)
    max_err = float(jnp.max(jnp.abs(feats - ref)))
    assert max_err < 5e-2, f"max abs err vs f32 reference = {max_err}"

    print("KERNEL_OK")
</pallas_src>

<mosaic_0001>
module attributes {stable_mosaic.version = 11 : i64} {
  func.func @_fused_encoder_kernel(%arg0: i32, %arg1: memref<1x256x128xbf16, #tpu.memory_space<vmem>>, %arg2: memref<128x128xbf16, #tpu.memory_space<vmem>>, %arg3: memref<1x128xf32, #tpu.memory_space<vmem>>, %arg4: memref<1152x128xbf16, #tpu.memory_space<vmem>>, %arg5: memref<1x128xf32, #tpu.memory_space<vmem>>, %arg6: memref<1152x128xbf16, #tpu.memory_space<vmem>>, %arg7: memref<1x128xf32, #tpu.memory_space<vmem>>, %arg8: memref<128x128xbf16, #tpu.memory_space<vmem>>, %arg9: memref<1x128xf32, #tpu.memory_space<vmem>>, %arg10: memref<1x1x128xf32, #tpu.memory_space<vmem>>, %arg11: memref<18x16x128xbf16, #tpu.memory_space<vmem>>, %arg12: memref<256x1152xbf16, #tpu.memory_space<vmem>>, %arg13: memref<256x128xbf16, #tpu.memory_space<vmem>>) attributes {dimension_semantics = [#tpu.dimension_semantics<parallel>], iteration_bounds = array<i64: 2>, scalar_prefetch = 0 : i64, scratch_operands = 3 : i64, tpu.core_type = #tpu.core_type<tc>, window_params = [{transform_indices = @transform_0, window_bounds = array<i64: 1, 256, 128>}, {pipeline_mode = #tpu.pipeline_mode<synchronous>, transform_indices = @transform_1, window_bounds = array<i64: 128, 128>}, {pipeline_mode = #tpu.pipeline_mode<synchronous>, transform_indices = @transform_2, window_bounds = array<i64: 1, 128>}, {pipeline_mode = #tpu.pipeline_mode<synchronous>, transform_indices = @transform_3, window_bounds = array<i64: 1152, 128>}, {pipeline_mode = #tpu.pipeline_mode<synchronous>, transform_indices = @transform_4, window_bounds = array<i64: 1, 128>}, {pipeline_mode = #tpu.pipeline_mode<synchronous>, transform_indices = @transform_5, window_bounds = array<i64: 1152, 128>}, {pipeline_mode = #tpu.pipeline_mode<synchronous>, transform_indices = @transform_6, window_bounds = array<i64: 1, 128>}, {pipeline_mode = #tpu.pipeline_mode<synchronous>, transform_indices = @transform_7, window_bounds = array<i64: 128, 128>}, {pipeline_mode = #tpu.pipeline_mode<synchronous>, transform_indices = @transform_8, window_bounds = array<i64: 1, 128>}, {transform_indices = @transform_9, window_bounds = array<i64: 1, 1, 128>}]} {
    %cst = arith.constant 0.000000e+00 : bf16
    %0 = vector.broadcast %cst : bf16 to vector<16x128xbf16>
    %c0 = arith.constant 0 : index
    %c0_0 = arith.constant 0 : index
    %c0_1 = arith.constant 0 : index
    %1 = vector.load %arg11[%c0, %c0_0, %c0_1] : memref<18x16x128xbf16, #tpu.memory_space<vmem>>, vector<1x16x128xbf16>
    %2 = vector.shape_cast %1 : vector<1x16x128xbf16> to vector<16x128xbf16>
    %3 = vector.shape_cast %0 : vector<16x128xbf16> to vector<1x16x128xbf16>
    tpu.vector_store %arg11[%c0, %c0_0, %c0_1], %3 {strides = array<i32>} : memref<18x16x128xbf16, #tpu.memory_space<vmem>>, vector<1x16x128xbf16>,
    %c17 = arith.constant 17 : index
    %c0_2 = arith.constant 0 : index
    %c0_3 = arith.constant 0 : index
    %4 = vector.load %arg11[%c17, %c0_2, %c0_3] : memref<18x16x128xbf16, #tpu.memory_space<vmem>>, vector<1x16x128xbf16>
    %5 = vector.shape_cast %4 : vector<1x16x128xbf16> to vector<16x128xbf16>
    %6 = vector.shape_cast %0 : vector<16x128xbf16> to vector<1x16x128xbf16>
    tpu.vector_store %arg11[%c17, %c0_2, %c0_3], %6 {strides = array<i32>} : memref<18x16x128xbf16, #tpu.memory_space<vmem>>, vector<1x16x128xbf16>,
    %7 = tpu.iota {dimensions = array<i32: 0>} : vector<256x128xi32>
    %c16_i32 = arith.constant 16 : i32
    %c0_i32 = arith.constant 0 : i32
    %8 = arith.cmpi eq, %c16_i32, %c0_i32 : i32
    %c1_i32 = arith.constant 1 : i32
    %9 = arith.select %8, %c1_i32, %c16_i32 : i32
    %10 = vector.broadcast %9 : i32 to vector<256x128xi32>
    %11 = arith.remsi %7, %10 : vector<256x128xi32>
    %c0_i32_4 = arith.constant 0 : i32
    %12 = vector.broadcast %c0_i32_4 : i32 to vector<256x128xi32>
    %13 = arith.cmpi ne, %11, %12 : vector<256x128xi32>
    %c0_i32_5 = arith.constant 0 : i32
    %14 = vector.broadcast %c0_i32_5 : i32 to vector<256x128xi32>
    %15 = arith.cmpi slt, %11, %14 : vector<256x128xi32>
    %c0_i32_6 = arith.constant 0 : i32
    %16 = arith.cmpi slt, %9, %c0_i32_6 : i32
    %17 = vector.broadcast %16 : i1 to vector<256x128xi1>
    %18 = vector.broadcast %17 : vector<256x128xi1> to vector<256x128xi1>
    %19 = arith.xori %15, %18 : vector<256x128xi1>
    %20 = arith.andi %19, %13 : vector<256x128xi1>
    %21 = vector.broadcast %9 : i32 to vector<256x128xi32>
    %22 = arith.addi %11, %21 : vector<256x128xi32>
    %23 = arith.select %20, %22, %11 : vector<256x128xi1>, vector<256x128xi32>
    %c0_i32_7 = arith.constant 0 : i32
    %24 = vector.broadcast %c0_i32_7 : i32 to vector<256x128xi32>
    %25 = arith.cmpi sgt, %23, %24 : vector<256x128xi32>
    %c15_i32 = arith.constant 15 : i32
    %26 = vector.broadcast %c15_i32 : i32 to vector<256x128xi32>
    %27 = arith.cmpi slt, %23, %26 : vector<256x128xi32>
    %c0_8 = arith.constant 0 : index
    %c0_9 = arith.constant 0 : index
    %c0_10 = arith.constant 0 : index
    %28 = vector.load %arg1[%c0_8, %c0_9, %c0_10] : memref<1x256x128xbf16, #tpu.memory_space<vmem>>, vector<1x256x128xbf16>
    %29 = vector.shape_cast %28 : vector<1x256x128xbf16> to vector<256x128xbf16>
    %c0_11 = arith.constant 0 : index
    %c0_12 = arith.constant 0 : index
    %30 = vector.load %arg2[%c0_11, %c0_12] : memref<128x128xbf16, #tpu.memory_space<vmem>>, vector<128x128xbf16>
    %cst_13 = arith.constant dense<0.000000e+00> : vector<256x128xf32>
    %31 = tpu.matmul %29, %30, %cst_13 {dimension_numbers = #tpu.dot_dimension_numbers<[1], [0], [0], [1], [0, 0, 1, 1], [], []>} : vector<256x128xbf16>, vector<128x128xbf16>, vector<256x128xf32> -> vector<256x128xf32>
    %c0_14 = arith.constant 0 : index
    %c0_15 = arith.constant 0 : index
    %32 = vector.load %arg3[%c0_14, %c0_15] : memref<1x128xf32, #tpu.memory_space<vmem>>, vector<1x128xf32>
    %33 = vector.broadcast %32 : vector<1x128xf32> to vector<256x128xf32>
    %34 = arith.addf %31, %33 : vector<256x128xf32>
    %cst_16 = arith.constant 0.000000e+00 : f32
    %35 = vector.broadcast %cst_16 : f32 to vector<256x128xf32>
    %36 = arith.maximumf %34, %35 : vector<256x128xf32>
    %37 = arith.truncf %36 : vector<256x128xf32> to vector<256x128xbf16>
    %c0_17 = arith.constant 0 : index
    %c0_18 = arith.constant 0 : index
    %38 = vector.load %arg13[%c0_17, %c0_18] : memref<256x128xbf16, #tpu.memory_space<vmem>>, vector<256x128xbf16>
    tpu.vector_store %arg13[%c0_17, %c0_18], %37 {strides = array<i32>} : memref<256x128xbf16, #tpu.memory_space<vmem>>, vector<256x128xbf16>,
    %39 = vector.shape_cast %37 : vector<256x128xbf16> to vector<16x16x128xbf16>
    %c1 = arith.constant 1 : index
    %c0_19 = arith.constant 0 : index
    %c0_20 = arith.constant 0 : index
    %40 = vector.load %arg11[%c1, %c0_19, %c0_20] : memref<18x16x128xbf16, #tpu.memory_space<vmem>>, vector<16x16x128xbf16>
    tpu.vector_store %arg11[%c1, %c0_19, %c0_20], %39 {strides = array<i32>} : memref<18x16x128xbf16, #tpu.memory_space<vmem>>, vector<16x16x128xbf16>,
    %c0_21 = arith.constant 0 : index
    %c0_22 = arith.constant 0 : index
    %c0_23 = arith.constant 0 : index
    %41 = vector.load %arg11[%c0_21, %c0_22, %c0_23] : memref<18x16x128xbf16, #tpu.memory_space<vmem>>, vector<16x16x128xbf16>
    %42 = vector.shape_cast %41 : vector<16x16x128xbf16> to vector<256x128xbf16>
    %c0_24 = arith.constant 0 : index
    %c128 = arith.constant 128 : index
    %43 = vector.load %arg12[%c0_24, %c128] : memref<256x1152xbf16, #tpu.memory_space<vmem>>, vector<256x128xbf16>
    tpu.vector_store %arg12[%c0_24, %c128], %42 {strides = array<i32>} : memref<256x1152xbf16, #tpu.memory_space<vmem>>, vector<256x128xbf16>,
    %44 = arith.extf %42 : vector<256x128xbf16> to vector<256x128xf32>
    %c1_i32_25 = arith.constant 1 : i32
    %45 = tpu.dynamic_rotate %44 by %c1_i32_25 dim 0 : vector<256x128xf32>, i32 -> vector<256x128xf32>
    %cst_26 = arith.constant 0.000000e+00 : f32
    %46 = vector.broadcast %cst_26 : f32 to vector<256x128xf32>
    %47 = arith.select %25, %45, %46 : vector<256x128xi1>, vector<256x128xf32>
    %c255_i32 = arith.constant 255 : i32
    %48 = tpu.dynamic_rotate %44 by %c255_i32 dim 0 : vector<256x128xf32>, i32 -> vector<256x128xf32>
    %cst_27 = arith.constant 0.000000e+00 : f32
    %49 = vector.broadcast %cst_27 : f32 to vector<256x128xf32>
    %50 = arith.select %27, %48, %49 : vector<256x128xi1>, vector<256x128xf32>
    %51 = arith.truncf %47 : vector<256x128xf32> to vector<256x128xbf16>
    %c0_28 = arith.constant 0 : index
    %c0_29 = arith.constant 0 : index
    %52 = vector.load %arg12[%c0_28, %c0_29] : memref<256x1152xbf16, #tpu.memory_space<vmem>>, vector<256x128xbf16>
    tpu.vector_store %arg12[%c0_28, %c0_29], %51 {strides = array<i32>} : memref<256x1152xbf16, #tpu.memory_space<vmem>>, vector<256x128xbf16>,
    %53 = arith.truncf %50 : vector<256x128xf32> to vector<256x128xbf16>
    %c0_30 = arith.constant 0 : index
    %c256 = arith.constant 256 : index
    %54 = vector.load %arg12[%c0_30, %c256] : memref<256x1152xbf16, #tpu.memory_space<vmem>>, vector<256x128xbf16>
    tpu.vector_store %arg12[%c0_30, %c256], %53 {strides = array<i32>} : memref<256x1152xbf16, #tpu.memory_space<vmem>>, vector<256x128xbf16>,
    %c1_31 = arith.constant 1 : index
    %c0_32 = arith.constant 0 : index
    %c0_33 = arith.constant 0 : index
    %55 = vector.load %arg11[%c1_31, %c0_32, %c0_33] : memref<18x16x128xbf16, #tpu.memory_space<vmem>>, vector<16x16x128xbf16>
    %56 = vector.shape_cast %55 : vector<16x16x128xbf16> to vector<256x128xbf16>
    %c0_34 = arith.constant 0 : index
    %c512 = arith.constant 512 : index
    %57 = vector.load %arg12[%c0_34, %c512] : memref<256x1152xbf16, #tpu.memory_space<vmem>>, vector<256x128xbf16>
    tpu.vector_store %arg12[%c0_34, %c512], %56 {strides = array<i32>} : memref<256x1152xbf16, #tpu.memory_space<vmem>>, vector<256x128xbf16>,
    %58 = arith.extf %56 : vector<256x128xbf16> to vector<256x128xf32>
    %c1_i32_35 = arith.constant 1 : i32
    %59 = tpu.dynamic_rotate %58 by %c1_i32_35 dim 0 : vector<256x128xf32>, i32 -> vector<256x128xf32>
    %cst_36 = arith.constant 0.000000e+00 : f32
    %60 = vector.broadcast %cst_36 : f32 to vector<256x128xf32>
    %61 = arith.select %25, %59, %60 : vector<256x128xi1>, vector<256x128xf32>
    %c255_i32_37 = arith.constant 255 : i32
    %62 = tpu.dynamic_rotate %58 by %c255_i32_37 dim 0 : vector<256x128xf32>, i32 -> vector<256x128xf32>
    %cst_38 = arith.constant 0.000000e+00 : f32
    %63 = vector.broadcast %cst_38 : f32 to vector<256x128xf32>
    %64 = arith.select %27, %62, %63 : vector<256x128xi1>, vector<256x128xf32>
    %65 = arith.truncf %61 : vector<256x128xf32> to vector<256x128xbf16>
    %c0_39 = arith.constant 0 : index
    %c384 = arith.constant 384 : index
    %66 = vector.load %arg12[%c0_39, %c384] : memref<256x1152xbf16, #tpu.memory_space<vmem>>, vector<256x128xbf16>
    tpu.vector_store %arg12[%c0_39, %c384], %65 {strides = array<i32>} : memref<256x1152xbf16, #tpu.memory_space<vmem>>, vector<256x128xbf16>,
    %67 = arith.truncf %64 : vector<256x128xf32> to vector<256x128xbf16>
    %c0_40 = arith.constant 0 : index
    %c640 = arith.constant 640 : index
    %68 = vector.load %arg12[%c0_40, %c640] : memref<256x1152xbf16, #tpu.memory_space<vmem>>, vector<256x128xbf16>
    tpu.vector_store %arg12[%c0_40, %c640], %67 {strides = array<i32>} : memref<256x1152xbf16, #tpu.memory_space<vmem>>, vector<256x128xbf16>,
    %c2 = arith.constant 2 : index
    %c0_41 = arith.constant 0 : index
    %c0_42 = arith.constant 0 : index
    %69 = vector.load %arg11[%c2, %c0_41, %c0_42] : memref<18x16x128xbf16, #tpu.memory_space<vmem>>, vector<16x16x128xbf16>
    %70 = vector.shape_cast %69 : vector<16x16x128xbf16> to vector<256x128xbf16>
    %c0_43 = arith.constant 0 : index
    %c896 = arith.constant 896 : index
    %71 = vector.load %arg12[%c0_43, %c896] : memref<256x1152xbf16, #tpu.memory_space<vmem>>, vector<256x128xbf16>
    tpu.vector_store %arg12[%c0_43, %c896], %70 {strides = array<i32>} : memref<256x1152xbf16, #tpu.memory_space<vmem>>, vector<256x128xbf16>,
    %72 = arith.extf %70 : vector<256x128xbf16> to vector<256x128xf32>
    %c1_i32_44 = arith.constant 1 : i32
    %73 = tpu.dynamic_rotate %72 by %c1_i32_44 dim 0 : vector<256x128xf32>, i32 -> vector<256x128xf32>
    %cst_45 = arith.constant 0.000000e+00 : f32
    %74 = vector.broadcast %cst_45 : f32 to vector<256x128xf32>
    %75 = arith.select %25, %73, %74 : vector<256x128xi1>, vector<256x128xf32>
    %c255_i32_46 = arith.constant 255 : i32
    %76 = tpu.dynamic_rotate %72 by %c255_i32_46 dim 0 : vector<256x128xf32>, i32 -> vector<256x128xf32>
    %cst_47 = arith.constant 0.000000e+00 : f32
    %77 = vector.broadcast %cst_47 : f32 to vector<256x128xf32>
    %78 = arith.select %27, %76, %77 : vector<256x128xi1>, vector<256x128xf32>
    %79 = arith.truncf %75 : vector<256x128xf32> to vector<256x128xbf16>
    %c0_48 = arith.constant 0 : index
    %c768 = arith.constant 768 : index
    %80 = vector.load %arg12[%c0_48, %c768] : memref<256x1152xbf16, #tpu.memory_space<vmem>>, vector<256x128xbf16>
    tpu.vector_store %arg12[%c0_48, %c768], %79 {strides = array<i32>} : memref<256x1152xbf16, #tpu.memory_space<vmem>>, vector<256x128xbf16>,
    %81 = arith.truncf %78 : vector<256x128xf32> to vector<256x128xbf16>
    %c0_49 = arith.constant 0 : index
    %c1024 = arith.constant 1024 : index
    %82 = vector.load %arg12[%c0_49, %c1024] : memref<256x1152xbf16, #tpu.memory_space<vmem>>, vector<256x128xbf16>
    tpu.vector_store %arg12[%c0_49, %c1024], %81 {strides = array<i32>} : memref<256x1152xbf16, #tpu.memory_space<vmem>>, vector<256x128xbf16>,
    %c0_50 = arith.constant 0 : index
    %c0_51 = arith.constant 0 : index
    %83 = vector.load %arg12[%c0_50, %c0_51] : memref<256x1152xbf16, #tpu.memory_space<vmem>>, vector<256x1152xbf16>
    %c0_52 = arith.constant 0 : index
    %c0_53 = arith.constant 0 : index
    %84 = vector.load %arg4[%c0_52, %c0_53] : memref<1152x128xbf16, #tpu.memory_space<vmem>>, vector<1152x128xbf16>
    %cst_54 = arith.constant dense<0.000000e+00> : vector<256x128xf32>
    %85 = tpu.matmul %83, %84, %cst_54 {dimension_numbers = #tpu.dot_dimension_numbers<[1], [0], [0], [1], [0, 0, 1, 1], [], []>} : vector<256x1152xbf16>, vector<1152x128xbf16>, vector<256x128xf32> -> vector<256x128xf32>
    %c0_55 = arith.constant 0 : index
    %c0_56 = arith.constant 0 : index
    %86 = vector.load %arg5[%c0_55, %c0_56] : memref<1x128xf32, #tpu.memory_space<vmem>>, vector<1x128xf32>
    %87 = vector.broadcast %86 : vector<1x128xf32> to vector<256x128xf32>
    %88 = arith.addf %85, %87 : vector<256x128xf32>
    %cst_57 = arith.constant 0.000000e+00 : f32
    %89 = vector.broadcast %cst_57 : f32 to vector<256x128xf32>
    %90 = arith.maximumf %88, %89 : vector<256x128xf32>
    %91 = arith.truncf %90 : vector<256x128xf32> to vector<256x128xbf16>
    %92 = vector.shape_cast %91 : vector<256x128xbf16> to vector<16x16x128xbf16>
    %c1_58 = arith.constant 1 : index
    %c0_59 = arith.constant 0 : index
    %c0_60 = arith.constant 0 : index
    %93 = vector.load %arg11[%c1_58, %c0_59, %c0_60] : memref<18x16x128xbf16, #tpu.memory_space<vmem>>, vector<16x16x128xbf16>
    tpu.vector_store %arg11[%c1_58, %c0_59, %c0_60], %92 {strides = array<i32>} : memref<18x16x128xbf16, #tpu.memory_space<vmem>>, vector<16x16x128xbf16>,
    %c0_61 = arith.constant 0 : index
    %c0_62 = arith.constant 0 : index
    %c0_63 = arith.constant 0 : index
    %94 = vector.load %arg11[%c0_61, %c0_62, %c0_63] : memref<18x16x128xbf16, #tpu.memory_space<vmem>>, vector<16x16x128xbf16>
    %95 = vector.shape_cast %94 : vector<16x16x128xbf16> to vector<256x128xbf16>
    %c0_64 = arith.constant 0 : index
    %c128_65 = arith.constant 128 : index
    %96 = vector.load %arg12[%c0_64, %c128_65] : memref<256x1152xbf16, #tpu.memory_space<vmem>>, vector<256x128xbf16>
    tpu.vector_store %arg12[%c0_64, %c128_65], %95 {strides = array<i32>} : memref<256x1152xbf16, #tpu.memory_space<vmem>>, vector<256x128xbf16>,
    %97 = arith.extf %95 : vector<256x128xbf16> to vector<256x128xf32>
    %c1_i32_66 = arith.constant 1 : i32
    %98 = tpu.dynamic_rotate %97 by %c1_i32_66 dim 0 : vector<256x128xf32>, i32 -> vector<256x128xf32>
    %cst_67 = arith.constant 0.000000e+00 : f32
    %99 = vector.broadcast %cst_67 : f32 to vector<256x128xf32>
    %100 = arith.select %25, %98, %99 : vector<256x128xi1>, vector<256x128xf32>
    %c255_i32_68 = arith.constant 255 : i32
    %101 = tpu.dynamic_rotate %97 by %c255_i32_68 dim 0 : vector<256x128xf32>, i32 -> vector<256x128xf32>
    %cst_69 = arith.constant 0.000000e+00 : f32
    %102 = vector.broadcast %cst_69 : f32 to vector<256x128xf32>
    %103 = arith.select %27, %101, %102 : vector<256x128xi1>, vector<256x128xf32>
    %104 = arith.truncf %100 : vector<256x128xf32> to vector<256x128xbf16>
    %c0_70 = arith.constant 0 : index
    %c0_71 = arith.constant 0 : index
    %105 = vector.load %arg12[%c0_70, %c0_71] : memref<256x1152xbf16, #tpu.memory_space<vmem>>, vector<256x128xbf16>
    tpu.vector_store %arg12[%c0_70, %c0_71], %104 {strides = array<i32>} : memref<256x1152xbf16, #tpu.memory_space<vmem>>, vector<256x128xbf16>,
    %106 = arith.truncf %103 : vector<256x128xf32> to vector<256x128xbf16>
    %c0_72 = arith.constant 0 : index
    %c256_73 = arith.constant 256 : index
    %107 = vector.load %arg12[%c0_72, %c256_73] : memref<256x1152xbf16, #tpu.memory_space<vmem>>, vector<256x128xbf16>
    tpu.vector_store %arg12[%c0_72, %c256_73], %106 {strides = array<i32>} : memref<256x1152xbf16, #tpu.memory_space<vmem>>, vector<256x128xbf16>,
    %c1_74 = arith.constant 1 : index
    %c0_75 = arith.constant 0 : index
    %c0_76 = arith.constant 0 : index
    %108 = vector.load %arg11[%c1_74, %c0_75, %c0_76] : memref<18x16x128xbf16, #tpu.memory_space<vmem>>, vector<16x16x128xbf16>
    %109 = vector.shape_cast %108 : vector<16x16x128xbf16> to vector<256x128xbf16>
    %c0_77 = arith.constant 0 : index
    %c512_78 = arith.constant 512 : index
    %110 = vector.load %arg12[%c0_77, %c512_78] : memref<256x1152xbf16, #tpu.memory_space<vmem>>, vector<256x128xbf16>
    tpu.vector_store %arg12[%c0_77, %c512_78], %109 {strides = array<i32>} : memref<256x1152xbf16, #tpu.memory_space<vmem>>, vector<256x128xbf16>,
    %111 = arith.extf %109 : vector<256x128xbf16> to vector<256x128xf32>
    %c1_i32_79 = arith.constant 1 : i32
    %112 = tpu.dynamic_rotate %111 by %c1_i32_79 dim 0 : vector<256x128xf32>, i32 -> vector<256x128xf32>
    %cst_80 = arith.constant 0.000000e+00 : f32
    %113 = vector.broadcast %cst_80 : f32 to vector<256x128xf32>
    %114 = arith.select %25, %112, %113 : vector<256x128xi1>, vector<256x128xf32>
    %c255_i32_81 = arith.constant 255 : i32
    %115 = tpu.dynamic_rotate %111 by %c255_i32_81 dim 0 : vector<256x128xf32>, i32 -> vector<256x128xf32>
    %cst_82 = arith.constant 0.000000e+00 : f32
    %116 = vector.broadcast %cst_82 : f32 to vector<256x128xf32>
    %117 = arith.select %27, %115, %116 : vector<256x128xi1>, vector<256x128xf32>
    %118 = arith.truncf %114 : vector<256x128xf32> to vector<256x128xbf16>
    %c0_83 = arith.constant 0 : index
    %c384_84 = arith.constant 384 : index
    %119 = vector.load %arg12[%c0_83, %c384_84] : memref<256x1152xbf16, #tpu.memory_space<vmem>>, vector<256x128xbf16>
    tpu.vector_store %arg12[%c0_83, %c384_84], %118 {strides = array<i32>} : memref<256x1152xbf16, #tpu.memory_space<vmem>>, vector<256x128xbf16>,
    %120 = arith.truncf %117 : vector<256x128xf32> to vector<256x128xbf16>
    %c0_85 = arith.constant 0 : index
    %c640_86 = arith.constant 640 : index
    %121 = vector.load %arg12[%c0_85, %c640_86] : memref<256x1152xbf16, #tpu.memory_space<vmem>>, vector<256x128xbf16>
    tpu.vector_store %arg12[%c0_85, %c640_86], %120 {strides = array<i32>} : memref<256x1152xbf16, #tpu.memory_space<vmem>>, vector<256x128xbf16>,
    %c2_87 = arith.constant 2 : index
    %c0_88 = arith.constant 0 : index
    %c0_89 = arith.constant 0 : index
    %122 = vector.load %arg11[%c2_87, %c0_88, %c0_89] : memref<18x16x128xbf16, #tpu.memory_space<vmem>>, vector<16x16x128xbf16>
    %123 = vector.shape_cast %122 : vector<16x16x128xbf16> to vector<256x128xbf16>
    %c0_90 = arith.constant 0 : index
    %c896_91 = arith.constant 896 : index
    %124 = vector.load %arg12[%c0_90, %c896_91] : memref<256x1152xbf16, #tpu.memory_space<vmem>>, vector<256x128xbf16>
    tpu.vector_store %arg12[%c0_90, %c896_91], %123 {strides = array<i32>} : memref<256x1152xbf16, #tpu.memory_space<vmem>>, vector<256x128xbf16>,
    %125 = arith.extf %123 : vector<256x128xbf16> to vector<256x128xf32>
    %c1_i32_92 = arith.constant 1 : i32
    %126 = tpu.dynamic_rotate %125 by %c1_i32_92 dim 0 : vector<256x128xf32>, i32 -> vector<256x128xf32>
    %cst_93 = arith.constant 0.000000e+00 : f32
    %127 = vector.broadcast %cst_93 : f32 to vector<256x128xf32>
    %128 = arith.select %25, %126, %127 : vector<256x128xi1>, vector<256x128xf32>
    %c255_i32_94 = arith.constant 255 : i32
    %129 = tpu.dynamic_rotate %125 by %c255_i32_94 dim 0 : vector<256x128xf32>, i32 -> vector<256x128xf32>
    %cst_95 = arith.constant 0.000000e+00 : f32
    %130 = vector.broadcast %cst_95 : f32 to vector<256x128xf32>
    %131 = arith.select %27, %129, %130 : vector<256x128xi1>, vector<256x128xf32>
    %132 = arith.truncf %128 : vector<256x128xf32> to vector<256x128xbf16>
    %c0_96 = arith.constant 0 : index
    %c768_97 = arith.constant 768 : index
    %133 = vector.load %arg12[%c0_96, %c768_97] : memref<256x1152xbf16, #tpu.memory_space<vmem>>, vector<256x128xbf16>
    tpu.vector_store %arg12[%c0_96, %c768_97], %132 {strides = array<i32>} : memref<256x1152xbf16, #tpu.memory_space<vmem>>, vector<256x128xbf16>,
    %134 = arith.truncf %131 : vector<256x128xf32> to vector<256x128xbf16>
    %c0_98 = arith.constant 0 : index
    %c1024_99 = arith.constant 1024 : index
    %135 = vector.load %arg12[%c0_98, %c1024_99] : memref<256x1152xbf16, #tpu.memory_space<vmem>>, vector<256x128xbf16>
    tpu.vector_store %arg12[%c0_98, %c1024_99], %134 {strides = array<i32>} : memref<256x1152xbf16, #tpu.memory_space<vmem>>, vector<256x128xbf16>,
    %c0_100 = arith.constant 0 : index
    %c0_101 = arith.constant 0 : index
    %136 = vector.load %arg12[%c0_100, %c0_101] : memref<256x1152xbf16, #tpu.memory_space<vmem>>, vector<256x1152xbf16>
    %c0_102 = arith.constant 0 : index
    %c0_103 = arith.constant 0 : index
    %137 = vector.load %arg6[%c0_102, %c0_103] : memref<1152x128xbf16, #tpu.memory_space<vmem>>, vector<1152x128xbf16>
    %cst_104 = arith.constant dense<0.000000e+00> : vector<256x128xf32>
    %138 = tpu.matmul %136, %137, %cst_104 {dimension_numbers = #tpu.dot_dimension_numbers<[1], [0], [0], [1], [0, 0, 1, 1], [], []>} : vector<256x1152xbf16>, vector<1152x128xbf16>, vector<256x128xf32> -> vector<256x128xf32>
    %c0_105 = arith.constant 0 : index
    %c0_106 = arith.constant 0 : index
    %139 = vector.load %arg7[%c0_105, %c0_106] : memref<1x128xf32, #tpu.memory_space<vmem>>, vector<1x128xf32>
    %140 = vector.broadcast %139 : vector<1x128xf32> to vector<256x128xf32>
    %141 = arith.addf %138, %140 : vector<256x128xf32>
    %c0_107 = arith.constant 0 : index
    %c0_108 = arith.constant 0 : index
    %142 = vector.load %arg13[%c0_107, %c0_108] : memref<256x128xbf16, #tpu.memory_space<vmem>>, vector<256x128xbf16>
    %143 = arith.extf %142 : vector<256x128xbf16> to vector<256x128xf32>
    %144 = arith.addf %141, %143 : vector<256x128xf32>
    %cst_109 = arith.constant 0.000000e+00 : f32
    %145 = vector.broadcast %cst_109 : f32 to vector<256x128xf32>
    %146 = arith.maximumf %144, %145 : vector<256x128xf32>
    %cst_110 = arith.constant dense<0.000000e+00> : vector<128xf32>
    %147 = vector.multi_reduction <add>, %146, %cst_110 [0] : vector<256x128xf32> to vector<128xf32>
    %148 = vector.shape_cast %147 : vector<128xf32> to vector<1x128xf32>
    %149 = arith.truncf %148 : vector<1x128xf32> to vector<1x128xbf16>
    %c0_111 = arith.constant 0 : index
    %c0_112 = arith.constant 0 : index
    %150 = vector.load %arg8[%c0_111, %c0_112] : memref<128x128xbf16, #tpu.memory_space<vmem>>, vector<128x128xbf16>
    %cst_113 = arith.constant dense<0.000000e+00> : vector<1x128xf32>
    %151 = tpu.matmul %149, %150, %cst_113 {dimension_numbers = #tpu.dot_dimension_numbers<[1], [0], [0], [1], [0, 0, 1, 1], [], []>} : vector<1x128xbf16>, vector<128x128xbf16>, vector<1x128xf32> -> vector<1x128xf32>
    %c0_114 = arith.constant 0 : index
    %c0_115 = arith.constant 0 : index
    %152 = vector.load %arg9[%c0_114, %c0_115] : memref<1x128xf32, #tpu.memory_space<vmem>>, vector<1x128xf32>
    %153 = arith.addf %151, %152 : vector<1x128xf32>
    %c0_116 = arith.constant 0 : index
    %c0_117 = arith.constant 0 : index
    %c0_118 = arith.constant 0 : index
    %154 = vector.load %arg10[%c0_116, %c0_117, %c0_118] : memref<1x1x128xf32, #tpu.memory_space<vmem>>, vector<1x1x128xf32>
    %155 = vector.shape_cast %154 : vector<1x1x128xf32> to vector<1x128xf32>
    %156 = vector.shape_cast %153 : vector<1x128xf32> to vector<1x1x128xf32>
    tpu.vector_store %arg10[%c0_116, %c0_117, %c0_118], %156 {strides = array<i32>} : memref<1x1x128xf32, #tpu.memory_space<vmem>>, vector<1x1x128xf32>,
    return
  }
  func.func @transform_0(%arg0: i32) -> (i32, i32, i32) {
    %c0_i32 = arith.constant 0 : i32
    %c0_i32_0 = arith.constant 0 : i32
    %c0_i32_1 = arith.constant 0 : i32
    return %arg0, %c0_i32, %c0_i32_0 : i32, i32, i32
  }
  func.func @transform_1(%arg0: i32) -> (i32, i32) {
    %c0_i32 = arith.constant 0 : i32
    %c0_i32_0 = arith.constant 0 : i32
    %c0_i32_1 = arith.constant 0 : i32
    return %c0_i32, %c0_i32_0 : i32, i32
  }
  func.func @transform_2(%arg0: i32) -> (i32, i32) {
    %c0_i32 = arith.constant 0 : i32
    %c0_i32_0 = arith.constant 0 : i32
    %c0_i32_1 = arith.constant 0 : i32
    return %c0_i32, %c0_i32_0 : i32, i32
  }
  func.func @transform_3(%arg0: i32) -> (i32, i32) {
    %c0_i32 = arith.constant 0 : i32
    %c0_i32_0 = arith.constant 0 : i32
    %c0_i32_1 = arith.constant 0 : i32
    return %c0_i32, %c0_i32_0 : i32, i32
  }
  func.func @transform_4(%arg0: i32) -> (i32, i32) {
    %c0_i32 = arith.constant 0 : i32
    %c0_i32_0 = arith.constant 0 : i32
    %c0_i32_1 = arith.constant 0 : i32
    return %c0_i32, %c0_i32_0 : i32, i32
  }
  func.func @transform_5(%arg0: i32) -> (i32, i32) {
    %c0_i32 = arith.constant 0 : i32
    %c0_i32_0 = arith.constant 0 : i32
    %c0_i32_1 = arith.constant 0 : i32
    return %c0_i32, %c0_i32_0 : i32, i32
  }
  func.func @transform_6(%arg0: i32) -> (i32, i32) {
    %c0_i32 = arith.constant 0 : i32
    %c0_i32_0 = arith.constant 0 : i32
    %c0_i32_1 = arith.constant 0 : i32
    return %c0_i32, %c0_i32_0 : i32, i32
  }
  func.func @transform_7(%arg0: i32) -> (i32, i32) {
    %c0_i32 = arith.constant 0 : i32
    %c0_i32_0 = arith.constant 0 : i32
    %c0_i32_1 = arith.constant 0 : i32
    return %c0_i32, %c0_i32_0 : i32, i32
  }
  func.func @transform_8(%arg0: i32) -> (i32, i32) {
    %c0_i32 = arith.constant 0 : i32
    %c0_i32_0 = arith.constant 0 : i32
    %c0_i32_1 = arith.constant 0 : i32
    return %c0_i32, %c0_i32_0 : i32, i32
  }
  func.func @transform_9(%arg0: i32) -> (i32, i32, i32) {
    %c0_i32 = arith.constant 0 : i32
    %c0_i32_0 = arith.constant 0 : i32
    %c0_i32_1 = arith.constant 0 : i32
    return %arg0, %c0_i32, %c0_i32_0 : i32, i32, i32
  }
}

</mosaic_0001>

<llo_original>
// kernel: encoder_cnn_forward.1
$region0: #{encoder_cnn_forward.1}
  #allocation0 [shape = 'u32[]', space=smem, size = 0x4, offset = 0x4, fixed_abs, tag = 'smem constant byte address 0x4 - core index']
  #allocation1 [shape = 'u32[72,128]{1,0:T(1,128)}', space=vmem, size = 0x9000, scoped, tag = 'internal scratch']
  #allocation2 [shape = 'bf16[18,16,128]{2,1,0:T(8,128)(2,1)}', space=vmem, size = 0x12000, scoped, tag = 'scratch operand']
  #allocation3 [shape = 'bf16[256,1152]{1,0:T(8,128)(2,1)}', space=vmem, size = 0x90000, scoped, tag = 'scratch operand']
  #allocation4 [shape = 'bf16[256,128]{1,0:T(8,128)(2,1)}', space=vmem, size = 0x10000, scoped, tag = 'scratch operand']
  %s0 = inlined_call_operand.vmem [shape: bf16[2,256,128], index: 0, kind: input, shape index: {}]
  %s1 = inlined_call_operand.vmem [shape: bf16[128,128], index: 1, kind: input, shape index: {}]
  %s2 = inlined_call_operand.vmem [shape: f32[1,128], index: 2, kind: input, shape index: {}]
  %s3 = inlined_call_operand.vmem [shape: bf16[1152,128], index: 3, kind: input, shape index: {}]
  %s4 = inlined_call_operand.vmem [shape: f32[1,128], index: 4, kind: input, shape index: {}]
  %s5 = inlined_call_operand.vmem [shape: bf16[1152,128], index: 5, kind: input, shape index: {}]
  %s6 = inlined_call_operand.vmem [shape: f32[1,128], index: 6, kind: input, shape index: {}]
  %s7 = inlined_call_operand.vmem [shape: bf16[128,128], index: 7, kind: input, shape index: {}]
  %s8 = inlined_call_operand.vmem [shape: f32[1,128], index: 8, kind: input, shape index: {}]
  %s9 = inlined_call_operand.hbm [shape: f32[2,1,128], index: 9, kind: output, shape index: {}]
  %s10 = sld [smem:[#allocation0]]
  $region69: #{encoder_cnn_forward.1} parent=0
    _
  %s12 = ssub.s32 1, %s10
  %s13 = scalar_select 0, %s12, %s10
  $region1: #{encoder_cnn_forward.1} parent=0
    #allocation5 [shape = 'u8[1024]{0}', space=vmem, size = 0x400, scoped, tag = 'output window, operand 0']
    #allocation6 [shape = 's32[2]{0}', space=sflag, size = 0x8, scoped, tag = 'scoped memory for encoder_cnn_forward.1']
    %14 = vsyncpa [#allocation6], 0
    %s15 = scalar_lea.sflag [#allocation6], 1
    %16 = vsyncpa %s15, 0
    loop: start=0, step=1, limit=4
    $region2: #{encoder_cnn_forward.1} parent=1 // loop_pre_header
      _
    $region3: #{encoder_cnn_forward.1} parent=1 // loop_header
      %s18 = sphi 0, %s22
      %p19 = scmp.ge.s32.totalorder %s18, 4
      %s28 = sphi 0, %s30
      %s31 = sphi 0, %s28
      %s32 = sphi 0, %s31
      %s48 = sphi 0, %s32
      %s52 = sphi 0, %s52
      %s54 = sphi 0, %s52
      %s55 = sphi 0, %s54
      %s69 = sphi 0, %s55
      %s73 = sphi 0, %s73
      %s75 = sphi 0, %s73
      %s76 = sphi 0, %s75
      %s90 = sphi 0, %s76
      %s94 = sphi 0, %s94
      %s96 = sphi 0, %s94
      %s97 = sphi 0, %s96
      %s111 = sphi 0, %s97
      %s115 = sphi 0, %s115
      %s117 = sphi 0, %s115
      %s118 = sphi 0, %s117
      %s132 = sphi 0, %s118
      %s136 = sphi 0, %s136
      %s138 = sphi 0, %s136
      %s139 = sphi 0, %s138
      %s153 = sphi 0, %s139
      %s157 = sphi 0, %s157
      %s159 = sphi 0, %s157
      %s160 = sphi 0, %s159
      %s174 = sphi 0, %s160
      %s178 = sphi 0, %s178
      %s180 = sphi 0, %s178
      %s181 = sphi 0, %s180
      %s195 = sphi 0, %s181
      %s199 = sphi 0, %s199
      %s201 = sphi 0, %s199
      %s202 = sphi 0, %s201
      %s216 = sphi 0, %s202
      %s222 = sphi 0, %s224
      %s225 = sphi 0, %s222
      %s226 = sphi 0, %s225
      %s242 = sphi 0, %s226
    $region4: #{encoder_cnn_forward.1} parent=1 // loop_header_branch
      %21 = sbr.rel (%p19) target = $region8
    $region5: #{encoder_cnn_forward.1} parent=1 // loop_body
      %s23 = ssub.s32 %s18, 1
      %s24 = ssub.s32 %s18, 2
      %s25 = sadd.s32 %s18, 1
      %s26 = ssub.s32 %s18, %s25
      %p27 = scmp.eq.s32.totalorder %s26, 0
      %s29 = sadd.s32 %s28, 1
      %s30 = scalar_select %p27, %s28, %s29
      %p33 = pneg %p27
      %p34 = scmp.eq.s32.totalorder %s18, 1
      %p35 = por %p33, %p34
      %p36 = scmp.ne.s32.totalorder %s28, %s31
      %p37 = scmp.eq.s32.totalorder %s18, 0
      %p38 = por %p36, %p37
      %p39 = scmp.ne.s32.totalorder %s28, %s31
      %p40 = scmp.eq.s32.totalorder %s23, 1
      %p41 = por %p39, %p40
      %p42 = scmp.ne.s32.totalorder %s31, %s32
      %p43 = scmp.eq.s32.totalorder %s23, 0
      %p44 = por %p42, %p43
      %p45 = scmp.ne.s32.totalorder %s31, %s32
      %p46 = scmp.eq.s32.totalorder %s24, 1
      %p47 = por %p45, %p46
      %p49 = scmp.ne.s32.totalorder %s32, %s48
      %p50 = scmp.eq.s32.totalorder %s24, 0
      %p51 = por %p49, %p50
      %s53 = sadd.s32 %s52, 1
      %p56 = scmp.eq.s32.totalorder %s18, 1
      %p57 = scmp.ne.s32.totalorder %s52, %s54
      %p58 = scmp.eq.s32.totalorder %s18, 0
      %p59 = por %p57, %p58
      %p60 = scmp.ne.s32.totalorder %s52, %s54
      %p61 = scmp.eq.s32.totalorder %s23, 1
      %p62 = por %p60, %p61
      %p63 = scmp.ne.s32.totalorder %s54, %s55
      %p64 = scmp.eq.s32.totalorder %s23, 0
      %p65 = por %p63, %p64
      %p66 = scmp.ne.s32.totalorder %s54, %s55
      %p67 = scmp.eq.s32.totalorder %s24, 1
      %p68 = por %p66, %p67
      %p70 = scmp.ne.s32.totalorder %s55, %s69
      %p71 = scmp.eq.s32.totalorder %s24, 0
      %p72 = por %p70, %p71
      %s74 = sadd.s32 %s73, 1
      %p77 = scmp.eq.s32.totalorder %s18, 1
      %p78 = scmp.ne.s32.totalorder %s73, %s75
      %p79 = scmp.eq.s32.totalorder %s18, 0
      %p80 = por %p78, %p79
      %p81 = scmp.ne.s32.totalorder %s73, %s75
      %p82 = scmp.eq.s32.totalorder %s23, 1
      %p83 = por %p81, %p82
      %p84 = scmp.ne.s32.totalorder %s75, %s76
      %p85 = scmp.eq.s32.totalorder %s23, 0
      %p86 = por %p84, %p85
      %p87 = scmp.ne.s32.totalorder %s75, %s76
      %p88 = scmp.eq.s32.totalorder %s24, 1
      %p89 = por %p87, %p88
      %p91 = scmp.ne.s32.totalorder %s76, %s90
      %p92 = scmp.eq.s32.totalorder %s24, 0
      %p93 = por %p91, %p92
      %s95 = sadd.s32 %s94, 1
      %p98 = scmp.eq.s32.totalorder %s18, 1
      %p99 = scmp.ne.s32.totalorder %s94, %s96
      %p100 = scmp.eq.s32.totalorder %s18, 0
      %p101 = por %p99, %p100
      %p102 = scmp.ne.s32.totalorder %s94, %s96
      %p103 = scmp.eq.s32.totalorder %s23, 1
      %p104 = por %p102, %p103
      %p105 = scmp.ne.s32.totalorder %s96, %s97
      %p106 = scmp.eq.s32.totalorder %s23, 0
      %p107 = por %p105, %p106
      %p108 = scmp.ne.s32.totalorder %s96, %s97
      %p109 = scmp.eq.s32.totalorder %s24, 1
      %p110 = por %p108, %p109
      %p112 = scmp.ne.s32.totalorder %s97, %s111
      %p113 = scmp.eq.s32.totalorder %s24, 0
      %p114 = por %p112, %p113
      %s116 = sadd.s32 %s115, 1
      %p119 = scmp.eq.s32.totalorder %s18, 1
      %p120 = scmp.ne.s32.totalorder %s115, %s117
      %p121 = scmp.eq.s32.totalorder %s18, 0
      %p122 = por %p120, %p121
      %p123 = scmp.ne.s32.totalorder %s115, %s117
      %p124 = scmp.eq.s32.totalorder %s23, 1
      %p125 = por %p123, %p124
      %p126 = scmp.ne.s32.totalorder %s117, %s118
      %p127 = scmp.eq.s32.totalorder %s23, 0
      %p128 = por %p126, %p127
      %p129 = scmp.ne.s32.totalorder %s117, %s118
      %p130 = scmp.eq.s32.totalorder %s24, 1
      %p131 = por %p129, %p130
      %p133 = scmp.ne.s32.totalorder %s118, %s132
      %p134 = scmp.eq.s32.totalorder %s24, 0
      %p135 = por %p133, %p134
      %s137 = sadd.s32 %s136, 1
      %p140 = scmp.eq.s32.totalorder %s18, 1
      %p141 = scmp.ne.s32.totalorder %s136, %s138
      %p142 = scmp.eq.s32.totalorder %s18, 0
      %p143 = por %p141, %p142
      %p144 = scmp.ne.s32.totalorder %s136, %s138
      %p145 = scmp.eq.s32.totalorder %s23, 1
      %p146 = por %p144, %p145
      %p147 = scmp.ne.s32.totalorder %s138, %s139
      %p148 = scmp.eq.s32.totalorder %s23, 0
      %p149 = por %p147, %p148
      %p150 = scmp.ne.s32.totalorder %s138, %s139
      %p151 = scmp.eq.s32.totalorder %s24, 1
      %p152 = por %p150, %p151
      %p154 = scmp.ne.s32.totalorder %s139, %s153
      %p155 = scmp.eq.s32.totalorder %s24, 0
      %p156 = por %p154, %p155
      %s158 = sadd.s32 %s157, 1
      %p161 = scmp.eq.s32.totalorder %s18, 1
      %p162 = scmp.ne.s32.totalorder %s157, %s159
      %p163 = scmp.eq.s32.totalorder %s18, 0
      %p164 = por %p162, %p163
      %p165 = scmp.ne.s32.totalorder %s157, %s159
      %p166 = scmp.eq.s32.totalorder %s23, 1
      %p167 = por %p165, %p166
      %p168 = scmp.ne.s32.totalorder %s159, %s160
      %p169 = scmp.eq.s32.totalorder %s23, 0
      %p170 = por %p168, %p169
      %p171 = scmp.ne.s32.totalorder %s159, %s160
      %p172 = scmp.eq.s32.totalorder %s24, 1
      %p173 = por %p171, %p172
      %p175 = scmp.ne.s32.totalorder %s160, %s174
      %p176 = scmp.eq.s32.totalorder %s24, 0
      %p177 = por %p175, %p176
      %s179 = sadd.s32 %s178, 1
      %p182 = scmp.eq.s32.totalorder %s18, 1
      %p183 = scmp.ne.s32.totalorder %s178, %s180
      %p184 = scmp.eq.s32.totalorder %s18, 0
      %p185 = por %p183, %p184
      %p186 = scmp.ne.s32.totalorder %s178, %s180
      %p187 = scmp.eq.s32.totalorder %s23, 1
      %p188 = por %p186, %p187
      %p189 = scmp.ne.s32.totalorder %s180, %s181
      %p190 = scmp.eq.s32.totalorder %s23, 0
      %p191 = por %p189, %p190
      %p192 = scmp.ne.s32.totalorder %s180, %s181
      %p193 = scmp.eq.s32.totalorder %s24, 1
      %p194 = por %p192, %p193
      %p196 = scmp.ne.s32.totalorder %s181, %s195
      %p197 = scmp.eq.s32.totalorder %s24, 0
      %p198 = por %p196, %p197
      %s200 = sadd.s32 %s199, 1
      %p203 = scmp.eq.s32.totalorder %s18, 1
      %p204 = scmp.ne.s32.totalorder %s199, %s201
      %p205 = scmp.eq.s32.totalorder %s18, 0
      %p206 = por %p204, %p205
      %p207 = scmp.ne.s32.totalorder %s199, %s201
      %p208 = scmp.eq.s32.totalorder %s23, 1
      %p209 = por %p207, %p208
      %p210 = scmp.ne.s32.totalorder %s201, %s202
      %p211 = scmp.eq.s32.totalorder %s23, 0
      %p212 = por %p210, %p211
      %p213 = scmp.ne.s32.totalorder %s201, %s202
      %p214 = scmp.eq.s32.totalorder %s24, 1
      %p215 = por %p213, %p214
      %p217 = scmp.ne.s32.totalorder %s202, %s216
      %p218 = scmp.eq.s32.totalorder %s24, 0
      %p219 = por %p217, %p218
      %s220 = ssub.s32 %s18, %s25
      %p221 = scmp.eq.s32.totalorder %s220, 0
      %s223 = sadd.s32 %s222, 1
      %s224 = scalar_select %p221, %s222, %s223
      %p227 = pneg %p221
      %p228 = scmp.eq.s32.totalorder %s18, 1
      %p229 = por %p227, %p228
      %p230 = scmp.ne.s32.totalorder %s222, %s225
      %p231 = scmp.eq.s32.totalorder %s18, 0
      %p232 = por %p230, %p231
      %p233 = scmp.ne.s32.totalorder %s222, %s225
      %p234 = scmp.eq.s32.totalorder %s23, 1
      %p235 = por %p233, %p234
      %p236 = scmp.ne.s32.totalorder %s225, %s226
      %p237 = scmp.eq.s32.totalorder %s23, 0
      %p238 = por %p236, %p237
      %p239 = scmp.ne.s32.totalorder %s225, %s226
      %p240 = scmp.eq.s32.totalorder %s24, 1
      %p241 = por %p239, %p240
      %p243 = scmp.ne.s32.totalorder %s226, %s242
      %p244 = scmp.eq.s32.totalorder %s24, 0
      %p245 = por %p243, %p244
      %p246 = scmp.le.s32.totalorder 1, %s18
      %p247 = scmp.lt.s32.totalorder %s18, 3
      %p248 = pnand %p246, %p247
      %p249 = pneg %p248
      // Predicated region
      $region9: #{encoder_cnn_forward.1} parent=5 // pred_check
        _
      $region10: #{encoder_cnn_forward.1} parent=5 // pred_check_branch
        %251 = sbr.rel (%p248) target = $region12
      $region11: #{encoder_cnn_forward.1} parent=5 // pred_region
        %s252 = ssub.s32 %s18, 1
        // Predicated region
        $region13: #{encoder_cnn_forward.1} parent=11 // pred_check
          %p253 = pneg %p65
        $region14: #{encoder_cnn_forward.1} parent=11 // pred_check_branch
          %255 = sbr.rel (%p253) target = $region16
        $region15: #{encoder_cnn_forward.1} parent=11 // pred_region
          _
        $region16: #{encoder_cnn_forward.1} parent=11 // pred_fallthru
          _
        // Predicated region
        $region17: #{encoder_cnn_forward.1} parent=11 // pred_check
          %p256 = pneg %p86
        $region18: #{encoder_cnn_forward.1} parent=11 // pred_check_branch
          %258 = sbr.rel (%p256) target = $region20
        $region19: #{encoder_cnn_forward.1} parent=11 // pred_region
          _
        $region20: #{encoder_cnn_forward.1} parent=11 // pred_fallthru
          _
        // Predicated region
        $region21: #{encoder_cnn_forward.1} parent=11 // pred_check
          %p259 = pneg %p107
        $region22: #{encoder_cnn_forward.1} parent=11 // pred_check_branch
          %261 = sbr.rel (%p259) target = $region24
        $region23: #{encoder_cnn_forward.1} parent=11 // pred_region
          _
        $region24: #{encoder_cnn_forward.1} parent=11 // pred_fallthru
          _
        // Predicated region
        $region25: #{encoder_cnn_forward.1} parent=11 // pred_check
          %p262 = pneg %p128
        $region26: #{encoder_cnn_forward.1} parent=11 // pred_check_branch
          %264 = sbr.rel (%p262) target = $region28
        $region27: #{encoder_cnn_forward.1} parent=11 // pred_region
          _
        $region28: #{encoder_cnn_forward.1} parent=11 // pred_fallthru
          _
        // Predicated region
        $region29: #{encoder_cnn_forward.1} parent=11 // pred_check
          %p265 = pneg %p149
        $region30: #{encoder_cnn_forward.1} parent=11 // pred_check_branch
          %267 = sbr.rel (%p265) target = $region32
        $region31: #{encoder_cnn_forward.1} parent=11 // pred_region
          _
        $region32: #{encoder_cnn_forward.1} parent=11 // pred_fallthru
          _
        // Predicated region
        $region33: #{encoder_cnn_forward.1} parent=11 // pred_check
          %p268 = pneg %p170
        $region34: #{encoder_cnn_forward.1} parent=11 // pred_check_branch
          %270 = sbr.rel (%p268) target = $region36
        $region35: #{encoder_cnn_forward.1} parent=11 // pred_region
          _
        $region36: #{encoder_cnn_forward.1} parent=11 // pred_fallthru
          _
        // Predicated region
        $region37: #{encoder_cnn_forward.1} parent=11 // pred_check
          %p271 = pneg %p191
        $region38: #{encoder_cnn_forward.1} parent=11 // pred_check_branch
          %273 = sbr.rel (%p271) target = $region40
        $region39: #{encoder_cnn_forward.1} parent=11 // pred_region
          _
        $region40: #{encoder_cnn_forward.1} parent=11 // pred_fallthru
          _
        // Predicated region
        $region41: #{encoder_cnn_forward.1} parent=11 // pred_check
          %p274 = pneg %p212
        $region42: #{encoder_cnn_forward.1} parent=11 // pred_check_branch
          %276 = sbr.rel (%p274) target = $region44
        $region43: #{encoder_cnn_forward.1} parent=11 // pred_region
          _
        $region44: #{encoder_cnn_forward.1} parent=11 // pred_fallthru
          _
      $region12: #{encoder_cnn_forward.1} parent=5 // pred_fallthru
        _
      %p277 = scmp.lt.s32.totalorder %s18, 2
      // Predicated region
      $region45: #{encoder_cnn_forward.1} parent=5 // pred_check
        %p278 = pneg %p277
      $region46: #{encoder_cnn_forward.1} parent=5 // pred_check_branch
        %280 = sbr.rel (%p278) target = $region48
      $region47: #{encoder_cnn_forward.1} parent=5 // pred_region
        // Predicated region
        $region49: #{encoder_cnn_forward.1} parent=47 // pred_check
          %p281 = pneg %p38
        $region50: #{encoder_cnn_forward.1} parent=47 // pred_check_branch
          %283 = sbr.rel (%p281) target = $region52
        $region51: #{encoder_cnn_forward.1} parent=47 // pred_region
          %p284 = scmp.lt.s32.totalorder %s18, 1
          %s285 = scalar_select %p284, %s18, 1
          %s286 = smul.addr %s285, 32
          %s287 = smul.addr %s286, 4
          %s288 = scalar_lea.vmem %s0, %s287
        $region52: #{encoder_cnn_forward.1} parent=47 // pred_fallthru
          _
      $region48: #{encoder_cnn_forward.1} parent=5 // pred_fallthru
        _
      %p289 = scmp.le.s32.totalorder 1, %s18
      %p290 = scmp.lt.s32.totalorder %s18, 3
      %p291 = pnand %p289, %p290
      %p292 = pneg %p291
      // Predicated region
      $region53: #{encoder_cnn_forward.1} parent=5 // pred_check
        _
      $region54: #{encoder_cnn_forward.1} parent=5 // pred_check_branch
        %294 = sbr.rel (%p291) target = $region56
      $region55: #{encoder_cnn_forward.1} parent=5 // pred_region
        %s295 = ssub.s32 %s18, 1
        %p296 = scmp.lt.s32.totalorder %s23, 1
        %s297 = scalar_select %p296, %s23, 1
        %s298 = smul.addr %s297, 32
        %s299 = smul.addr %s298, 4
        %s300 = scalar_lea.vmem %s0, %s299
        %p301 = pneg %p44
        %p302 = pneg %p41
        %p303 = pneg %p65
        %p304 = pneg %p62
        %p305 = pneg %p86
        %p306 = pneg %p83
        %p307 = pneg %p107
        %p308 = pneg %p104
        %p309 = pneg %p128
        %p310 = pneg %p125
        %p311 = pneg %p149
        %p312 = pneg %p146
        %p313 = pneg %p170
        %p314 = pneg %p167
        %p315 = pneg %p191
        %p316 = pneg %p188
        %p317 = pneg %p212
        %p318 = pneg %p209
        %p319 = pneg %p238
        %p320 = pneg %p235
        %s321 = sand.u32 %s225, 1
        %s322 = scalar_lea.sflag [#allocation6], %s321
        %s323 = sand.u32 %s225, 1
        %s324 = scalar_lea.vmem [#allocation5], %s323
        %p325 = scmp.lt.s32.totalorder %s23, 1
        %s326 = scalar_select %p325, %s23, 1
        %s327 = smul.addr %s326, 32
        %s328 = smul.addr %s327, 4
        %s329 = scalar_lea.vmem %s0, %s328
        %331 = vst [vmem:[#allocation2] sm:$0xf] 0
        %332 = vst [vmem:[#allocation2 + $0x4] sm:$0xf] 0
        %s333 = scalar_lea.vmem [#allocation2], 136
        %334 = vst [vmem:[%s333] sm:$0xf] 0
        %335 = vst [vmem:[%s333 + $0x4] sm:$0xf] 0
        %v336 = vlaneseq
        %v337 = vshrl.u32 %v336, 7
        %v338 = vadd.s32 %v337, 8
        %v339 = vadd.s32 %v337, 16
        %v340 = vadd.s32 %v337, 24
        %v341 = vadd.s32 %v337, 32
        %v342 = vadd.s32 %v337, 40
        %v343 = vadd.s32 %v337, 48
        %v344 = vadd.s32 %v337, 56
        %v345 = vadd.s32 %v337, 64
        %v346 = vadd.s32 %v337, 72
        %v347 = vadd.s32 %v337, 80
        %v348 = vadd.s32 %v337, 88
        %v349 = vadd.s32 %v337, 96
        %v350 = vadd.s32 %v337, 104
        %v351 = vadd.s32 %v337, 112
        %v352 = vadd.s32 %v337, 120
        %v353 = vadd.s32 %v337, 128
        %v354 = vadd.s32 %v337, 136
        %v355 = vadd.s32 %v337, 144
        %v356 = vadd.s32 %v337, 152
        %v357 = vadd.s32 %v337, 160
        %v358 = vadd.s32 %v337, 168
        %v359 = vadd.s32 %v337, 176
        %v360 = vadd.s32 %v337, 184
        %v361 = vadd.s32 %v337, 192
        %v362 = vadd.s32 %v337, 200
        %v363 = vadd.s32 %v337, 208
        %v364 = vadd.s32 %v337, 216
        %v365 = vadd.s32 %v337, 224
        %v366 = vadd.s32 %v337, 232
        %v367 = vadd.s32 %v337, 240
        %v368 = vadd.s32 %v337, 248
        %vm369 = vcmp.lt.s32.totalorder %v337, 0
        %v370 = vsub.s32 0, %v337
        %v371 = vsel %vm369, %v370, %v337
        %v372 = vshrl.u32 %v371, 4
        %v373 = vand.u32 %v371, 15
        %v374 = vsub.s32 0, %v373
        %v375 = vsel %vm369, %v374, %v373
        %vm376 = vcmp.lt.s32.totalorder %v338, 0
        %v377 = vsub.s32 0, %v338
        %v378 = vsel %vm376, %v377, %v338
        %v379 = vshrl.u32 %v378, 4
        %v380 = vand.u32 %v378, 15
        %v381 = vsub.s32 0, %v380
        %v382 = vsel %vm376, %v381, %v380
        %vm383 = vcmp.lt.s32.totalorder %v339, 0
        %v384 = vsub.s32 0, %v339
        %v385 = vsel %vm383, %v384, %v339
        %v386 = vshrl.u32 %v385, 4
        %v387 = vand.u32 %v385, 15
        %v388 = vsub.s32 0, %v387
        %v389 = vsel %vm383, %v388, %v387
        %vm390 = vcmp.lt.s32.totalorder %v340, 0
        %v391 = vsub.s32 0, %v340
        %v392 = vsel %vm390, %v391, %v340
        %v393 = vshrl.u32 %v392, 4
        %v394 = vand.u32 %v392, 15
        %v395 = vsub.s32 0, %v394
        %v396 = vsel %vm390, %v395, %v394
        %vm397 = vcmp.lt.s32.totalorder %v341, 0
        %v398 = vsub.s32 0, %v341
        %v399 = vsel %vm397, %v398, %v341
        %v400 = vshrl.u32 %v399, 4
        %v401 = vand.u32 %v399, 15
        %v402 = vsub.s32 0, %v401
        %v403 = vsel %vm397, %v402, %v401
        %vm404 = vcmp.lt.s32.totalorder %v342, 0
        %v405 = vsub.s32 0, %v342
        %v406 = vsel %vm404, %v405, %v342
        %v407 = vshrl.u32 %v406, 4
        %v408 = vand.u32 %v406, 15
        %v409 = vsub.s32 0, %v408
        %v410 = vsel %vm404, %v409, %v408
        %vm411 = vcmp.lt.s32.totalorder %v343, 0
        %v412 = vsub.s32 0, %v343
        %v413 = vsel %vm411, %v412, %v343
        %v414 = vshrl.u32 %v413, 4
        %v415 = vand.u32 %v413, 15
        %v416 = vsub.s32 0, %v415
        %v417 = vsel %vm411, %v416, %v415
        %vm418 = vcmp.lt.s32.totalorder %v344, 0
        %v419 = vsub.s32 0, %v344
        %v420 = vsel %vm418, %v419, %v344
        %v421 = vshrl.u32 %v420, 4
        %v422 = vand.u32 %v420, 15
        %v423 = vsub.s32 0, %v422
        %v424 = vsel %vm418, %v423, %v422
        %vm425 = vcmp.lt.s32.totalorder %v345, 0
        %v426 = vsub.s32 0, %v345
        %v427 = vsel %vm425, %v426, %v345
        %v428 = vshrl.u32 %v427, 4
        %v429 = vand.u32 %v427, 15
        %v430 = vsub.s32 0, %v429
        %v431 = vsel %vm425, %v430, %v429
        %vm432 = vcmp.lt.s32.totalorder %v346, 0
        %v433 = vsub.s32 0, %v346
        %v434 = vsel %vm432, %v433, %v346
        %v435 = vshrl.u32 %v434, 4
        %v436 = vand.u32 %v434, 15
        %v437 = vsub.s32 0, %v436
        %v438 = vsel %vm432, %v437, %v436
        %vm439 = vcmp.lt.s32.totalorder %v347, 0
        %v440 = vsub.s32 0, %v347
        %v441 = vsel %vm439, %v440, %v347
        %v442 = vshrl.u32 %v441, 4
        %v443 = vand.u32 %v441, 15
        %v444 = vsub.s32 0, %v443
        %v445 = vsel %vm439, %v444, %v443
        %vm446 = vcmp.lt.s32.totalorder %v348, 0
        %v447 = vsub.s32 0, %v348
        %v448 = vsel %vm446, %v447, %v348
        %v449 = vshrl.u32 %v448, 4
        %v450 = vand.u32 %v448, 15
        %v451 = vsub.s32 0, %v450
        %v452 = vsel %vm446, %v451, %v450
        %vm453 = vcmp.lt.s32.totalorder %v349, 0
        %v454 = vsub.s32 0, %v349
        %v455 = vsel %vm453, %v454, %v349
        %v456 = vshrl.u32 %v455, 4
        %v457 = vand.u32 %v455, 15
        %v458 = vsub.s32 0, %v457
        %v459 = vsel %vm453, %v458, %v457
        %vm460 = vcmp.lt.s32.totalorder %v350, 0
        %v461 = vsub.s32 0, %v350
        %v462 = vsel %vm460, %v461, %v350
        %v463 = vshrl.u32 %v462, 4
        %v464 = vand.u32 %v462, 15
        %v465 = vsub.s32 0, %v464
        %v466 = vsel %vm460, %v465, %v464
        %vm467 = vcmp.lt.s32.totalorder %v351, 0
        %v468 = vsub.s32 0, %v351
        %v469 = vsel %vm467, %v468, %v351
        %v470 = vshrl.u32 %v469, 4
        %v471 = vand.u32 %v469, 15
        %v472 = vsub.s32 0, %v471
        %v473 = vsel %vm467, %v472, %v471
        %vm474 = vcmp.lt.s32.totalorder %v352, 0
        %v475 = vsub.s32 0, %v352
        %v476 = vsel %vm474, %v475, %v352
        %v477 = vshrl.u32 %v476, 4
        %v478 = vand.u32 %v476, 15
        %v479 = vsub.s32 0, %v478
        %v480 = vsel %vm474, %v479, %v478
        %vm481 = vcmp.lt.s32.totalorder %v353, 0
        %v482 = vsub.s32 0, %v353
        %v483 = vsel %vm481, %v482, %v353
        %v484 = vshrl.u32 %v483, 4
        %v485 = vand.u32 %v483, 15
        %v486 = vsub.s32 0, %v485
        %v487 = vsel %vm481, %v486, %v485
        %vm488 = vcmp.lt.s32.totalorder %v354, 0
        %v489 = vsub.s32 0, %v354
        %v490 = vsel %vm488, %v489, %v354
        %v491 = vshrl.u32 %v490, 4
        %v492 = vand.u32 %v490, 15
        %v493 = vsub.s32 0, %v492
        %v494 = vsel %vm488, %v493, %v492
        %vm495 = vcmp.lt.s32.totalorder %v355, 0
        %v496 = vsub.s32 0, %v355
        %v497 = vsel %vm495, %v496, %v355
        %v498 = vshrl.u32 %v497, 4
        %v499 = vand.u32 %v497, 15
        %v500 = vsub.s32 0, %v499
        %v501 = vsel %vm495, %v500, %v499
        %vm502 = vcmp.lt.s32.totalorder %v356, 0
        %v503 = vsub.s32 0, %v356
        %v504 = vsel %vm502, %v503, %v356
        %v505 = vshrl.u32 %v504, 4
        %v506 = vand.u32 %v504, 15
        %v507 = vsub.s32 0, %v506
        %v508 = vsel %vm502, %v507, %v506
        %vm509 = vcmp.lt.s32.totalorder %v357, 0
        %v510 = vsub.s32 0, %v357
        %v511 = vsel %vm509, %v510, %v357
        %v512 = vshrl.u32 %v511, 4
        %v513 = vand.u32 %v511, 15
        %v514 = vsub.s32 0, %v513
        %v515 = vsel %vm509, %v514, %v513
        %vm516 = vcmp.lt.s32.totalorder %v358, 0
        %v517 = vsub.s32 0, %v358
        %v518 = vsel %vm516, %v517, %v358
        %v519 = vshrl.u32 %v518, 4
        %v520 = vand.u32 %v518, 15
        %v521 = vsub.s32 0, %v520
        %v522 = vsel %vm516, %v521, %v520
        %vm523 = vcmp.lt.s32.totalorder %v359, 0
        %v524 = vsub.s32 0, %v359
        %v525 = vsel %vm523, %v524, %v359
        %v526 = vshrl.u32 %v525, 4
        %v527 = vand.u32 %v525, 15
        %v528 = vsub.s32 0, %v527
        %v529 = vsel %vm523, %v528, %v527
        %vm530 = vcmp.lt.s32.totalorder %v360, 0
        %v531 = vsub.s32 0, %v360
        %v532 = vsel %vm530, %v531, %v360
        %v533 = vshrl.u32 %v532, 4
        %v534 = vand.u32 %v532, 15
        %v535 = vsub.s32 0, %v534
        %v536 = vsel %vm530, %v535, %v534
        %vm537 = vcmp.lt.s32.totalorder %v361, 0
        %v538 = vsub.s32 0, %v361
        %v539 = vsel %vm537, %v538, %v361
        %v540 = vshrl.u32 %v539, 4
        %v541 = vand.u32 %v539, 15
        %v542 = vsub.s32 0, %v541
        %v543 = vsel %vm537, %v542, %v541
        %vm544 = vcmp.lt.s32.totalorder %v362, 0
        %v545 = vsub.s32 0, %v362
        %v546 = vsel %vm544, %v545, %v362
        %v547 = vshrl.u32 %v546, 4
        %v548 = vand.u32 %v546, 15
        %v549 = vsub.s32 0, %v548
        %v550 = vsel %vm544, %v549, %v548
        %vm551 = vcmp.lt.s32.totalorder %v363, 0
        %v552 = vsub.s32 0, %v363
        %v553 = vsel %vm551, %v552, %v363
        %v554 = vshrl.u32 %v553, 4
        %v555 = vand.u32 %v553, 15
        %v556 = vsub.s32 0, %v555
        %v557 = vsel %vm551, %v556, %v555
        %vm558 = vcmp.lt.s32.totalorder %v364, 0
        %v559 = vsub.s32 0, %v364
        %v560 = vsel %vm558, %v559, %v364
        %v561 = vshrl.u32 %v560, 4
        %v562 = vand.u32 %v560, 15
        %v563 = vsub.s32 0, %v562
        %v564 = vsel %vm558, %v563, %v562
        %vm565 = vcmp.lt.s32.totalorder %v365, 0
        %v566 = vsub.s32 0, %v365
        %v567 = vsel %vm565, %v566, %v365
        %v568 = vshrl.u32 %v567, 4
        %v569 = vand.u32 %v567, 15
        %v570 = vsub.s32 0, %v569
        %v571 = vsel %vm565, %v570, %v569
        %vm572 = vcmp.lt.s32.totalorder %v366, 0
        %v573 = vsub.s32 0, %v366
        %v574 = vsel %vm572, %v573, %v366
        %v575 = vshrl.u32 %v574, 4
        %v576 = vand.u32 %v574, 15
        %v577 = vsub.s32 0, %v576
        %v578 = vsel %vm572, %v577, %v576
        %vm579 = vcmp.lt.s32.totalorder %v367, 0
        %v580 = vsub.s32 0, %v367
        %v581 = vsel %vm579, %v580, %v367
        %v582 = vshrl.u32 %v581, 4
        %v583 = vand.u32 %v581, 15
        %v584 = vsub.s32 0, %v583
        %v585 = vsel %vm579, %v584, %v583
        %vm586 = vcmp.lt.s32.totalorder %v368, 0
        %v587 = vsub.s32 0, %v368
        %v588 = vsel %vm586, %v587, %v368
        %v589 = vshrl.u32 %v588, 4
        %v590 = vand.u32 %v588, 15
        %v591 = vsub.s32 0, %v590
        %v592 = vsel %vm586, %v591, %v590
        %vm593 = vcmp.ne.s32.totalorder %v375, 0
        %vm594 = vcmp.ne.s32.totalorder %v382, 0
        %vm595 = vcmp.ne.s32.totalorder %v389, 0
        %vm596 = vcmp.ne.s32.totalorder %v396, 0
        %vm597 = vcmp.ne.s32.totalorder %v403, 0
        %vm598 = vcmp.ne.s32.totalorder %v410, 0
        %vm599 = vcmp.ne.s32.totalorder %v417, 0
        %vm600 = vcmp.ne.s32.totalorder %v424, 0
        %vm601 = vcmp.ne.s32.totalorder %v431, 0
        %vm602 = vcmp.ne.s32.totalorder %v438, 0
        %vm603 = vcmp.ne.s32.totalorder %v445, 0
        %vm604 = vcmp.ne.s32.totalorder %v452, 0
        %vm605 = vcmp.ne.s32.totalorder %v459, 0
        %vm606 = vcmp.ne.s32.totalorder %v466, 0
        %vm607 = vcmp.ne.s32.totalorder %v473, 0
        %vm608 = vcmp.ne.s32.totalorder %v480, 0
        %vm609 = vcmp.ne.s32.totalorder %v487, 0
        %vm610 = vcmp.ne.s32.totalorder %v494, 0
        %vm611 = vcmp.ne.s32.totalorder %v501, 0
        %vm612 = vcmp.ne.s32.totalorder %v508, 0
        %vm613 = vcmp.ne.s32.totalorder %v515, 0
        %vm614 = vcmp.ne.s32.totalorder %v522, 0
        %vm615 = vcmp.ne.s32.totalorder %v529, 0
        %vm616 = vcmp.ne.s32.totalorder %v536, 0
        %vm617 = vcmp.ne.s32.totalorder %v543, 0
        %vm618 = vcmp.ne.s32.totalorder %v550, 0
        %vm619 = vcmp.ne.s32.totalorder %v557, 0
        %vm620 = vcmp.ne.s32.totalorder %v564, 0
        %vm621 = vcmp.ne.s32.totalorder %v571, 0
        %vm622 = vcmp.ne.s32.totalorder %v578, 0
        %vm623 = vcmp.ne.s32.totalorder %v585, 0
        %vm624 = vcmp.ne.s32.totalorder %v592, 0
        %vm625 = vcmp.lt.s32.totalorder %v375, 0
        %vm626 = vcmp.lt.s32.totalorder %v382, 0
        %vm627 = vcmp.lt.s32.totalorder %v389, 0
        %vm628 = vcmp.lt.s32.totalorder %v396, 0
        %vm629 = vcmp.lt.s32.totalorder %v403, 0
        %vm630 = vcmp.lt.s32.totalorder %v410, 0
        %vm631 = vcmp.lt.s32.totalorder %v417, 0
        %vm632 = vcmp.lt.s32.totalorder %v424, 0
        %vm633 = vcmp.lt.s32.totalorder %v431, 0
        %vm634 = vcmp.lt.s32.totalorder %v438, 0
        %vm635 = vcmp.lt.s32.totalorder %v445, 0
        %vm636 = vcmp.lt.s32.totalorder %v452, 0
        %vm637 = vcmp.lt.s32.totalorder %v459, 0
        %vm638 = vcmp.lt.s32.totalorder %v466, 0
        %vm639 = vcmp.lt.s32.totalorder %v473, 0
        %vm640 = vcmp.lt.s32.totalorder %v480, 0
        %vm641 = vcmp.lt.s32.totalorder %v487, 0
        %vm642 = vcmp.lt.s32.totalorder %v494, 0
        %vm643 = vcmp.lt.s32.totalorder %v501, 0
        %vm644 = vcmp.lt.s32.totalorder %v508, 0
        %vm645 = vcmp.lt.s32.totalorder %v515, 0
        %vm646 = vcmp.lt.s32.totalorder %v522, 0
        %vm647 = vcmp.lt.s32.totalorder %v529, 0
        %vm648 = vcmp.lt.s32.totalorder %v536, 0
        %vm649 = vcmp.lt.s32.totalorder %v543, 0
        %vm650 = vcmp.lt.s32.totalorder %v550, 0
        %vm651 = vcmp.lt.s32.totalorder %v557, 0
        %vm652 = vcmp.lt.s32.totalorder %v564, 0
        %vm653 = vcmp.lt.s32.totalorder %v571, 0
        %vm654 = vcmp.lt.s32.totalorder %v578, 0
        %vm655 = vcmp.lt.s32.totalorder %v585, 0
        %vm656 = vcmp.lt.s32.totalorder %v592, 0
        %vm657 = vmand %vm625, %vm593
        %vm658 = vmand %vm626, %vm594
        %vm659 = vmand %vm627, %vm595
        %vm660 = vmand %vm628, %vm596
        %vm661 = vmand %vm629, %vm597
        %vm662 = vmand %vm630, %vm598
        %vm663 = vmand %vm631, %vm599
        %vm664 = vmand %vm632, %vm600
        %vm665 = vmand %vm633, %vm601
        %vm666 = vmand %vm634, %vm602
        %vm667 = vmand %vm635, %vm603
        %vm668 = vmand %vm636, %vm604
        %vm669 = vmand %vm637, %vm605
        %vm670 = vmand %vm638, %vm606
        %vm671 = vmand %vm639, %vm607
        %vm672 = vmand %vm640, %vm608
        %vm673 = vmand %vm641, %vm609
        %vm674 = vmand %vm642, %vm610
        %vm675 = vmand %vm643, %vm611
        %vm676 = vmand %vm644, %vm612
        %vm677 = vmand %vm645, %vm613
        %vm678 = vmand %vm646, %vm614
        %vm679 = vmand %vm647, %vm615
        %vm680 = vmand %vm648, %vm616
        %vm681 = vmand %vm649, %vm617
        %vm682 = vmand %vm650, %vm618
        %vm683 = vmand %vm651, %vm619
        %vm684 = vmand %vm652, %vm620
        %vm685 = vmand %vm653, %vm621
        %vm686 = vmand %vm654, %vm622
        %vm687 = vmand %vm655, %vm623
        %vm688 = vmand %vm656, %vm624
        %v689 = vadd.s32 %v375, 16
        %v690 = vadd.s32 %v382, 16
        %v691 = vadd.s32 %v389, 16
        %v692 = vadd.s32 %v396, 16
        %v693 = vadd.s32 %v403, 16
        %v694 = vadd.s32 %v410, 16
        %v695 = vadd.s32 %v417, 16
        %v696 = vadd.s32 %v424, 16
        %v697 = vadd.s32 %v431, 16
        %v698 = vadd.s32 %v438, 16
        %v699 = vadd.s32 %v445, 16
        %v700 = vadd.s32 %v452, 16
        %v701 = vadd.s32 %v459, 16
        %v702 = vadd.s32 %v466, 16
        %v703 = vadd.s32 %v473, 16
        %v704 = vadd.s32 %v480, 16
        %v705 = vadd.s32 %v487, 16
        %v706 = vadd.s32 %v494, 16
        %v707 = vadd.s32 %v501, 16
        %v708 = vadd.s32 %v508, 16
        %v709 = vadd.s32 %v515, 16
        %v710 = vadd.s32 %v522, 16
        %v711 = vadd.s32 %v529, 16
        %v712 = vadd.s32 %v536, 16
        %v713 = vadd.s32 %v543, 16
        %v714 = vadd.s32 %v550, 16
        %v715 = vadd.s32 %v557, 16
        %v716 = vadd.s32 %v564, 16
        %v717 = vadd.s32 %v571, 16
        %v718 = vadd.s32 %v578, 16
        %v719 = vadd.s32 %v585, 16
        %v720 = vadd.s32 %v592, 16
        %v721 = vsel %vm657, %v689, %v375
        %v722 = vsel %vm658, %v690, %v382
        %v723 = vsel %vm659, %v691, %v389
        %v724 = vsel %vm660, %v692, %v396
        %v725 = vsel %vm661, %v693, %v403
        %v726 = vsel %vm662, %v694, %v410
        %v727 = vsel %vm663, %v695, %v417
        %v728 = vsel %vm664, %v696, %v424
        %v729 = vsel %vm665, %v697, %v431
        %v730 = vsel %vm666, %v698, %v438
        %v731 = vsel %vm667, %v699, %v445
        %v732 = vsel %vm668, %v700, %v452
        %v733 = vsel %vm669, %v701, %v459
        %v734 = vsel %vm670, %v702, %v466
        %v735 = vsel %vm671, %v703, %v473
        %v736 = vsel %vm672, %v704, %v480
        %v737 = vsel %vm673, %v705, %v487
        %v738 = vsel %vm674, %v706, %v494
        %v739 = vsel %vm675, %v707, %v501
        %v740 = vsel %vm676, %v708, %v508
        %v741 = vsel %vm677, %v709, %v515
        %v742 = vsel %vm678, %v710, %v522
        %v743 = vsel %vm679, %v711, %v529
        %v744 = vsel %vm680, %v712, %v536
        %v745 = vsel %vm681, %v713, %v543
        %v746 = vsel %vm682, %v714, %v550
        %v747 = vsel %vm683, %v715, %v557
        %v748 = vsel %vm684, %v716, %v564
        %v749 = vsel %vm685, %v717, %v571
        %v750 = vsel %vm686, %v718, %v578
        %v751 = vsel %vm687, %v719, %v585
        %v752 = vsel %vm688, %v720, %v592
        %vm753 = vcmp.gt.s32.totalorder %v721, 0
        %vm754 = vcmp.gt.s32.totalorder %v722, 0
        %vm755 = vcmp.gt.s32.totalorder %v723, 0
        %vm756 = vcmp.gt.s32.totalorder %v724, 0
        %vm757 = vcmp.gt.s32.totalorder %v725, 0
        %vm758 = vcmp.gt.s32.totalorder %v726, 0
        %vm759 = vcmp.gt.s32.totalorder %v727, 0
        %vm760 = vcmp.gt.s32.totalorder %v728, 0
        %vm761 = vcmp.gt.s32.totalorder %v729, 0
        %vm762 = vcmp.gt.s32.totalorder %v730, 0
        %vm763 = vcmp.gt.s32.totalorder %v731, 0
        %vm764 = vcmp.gt.s32.totalorder %v732, 0
        %vm765 = vcmp.gt.s32.totalorder %v733, 0
        %vm766 = vcmp.gt.s32.totalorder %v734, 0
        %vm767 = vcmp.gt.s32.totalorder %v735, 0
        %vm768 = vcmp.gt.s32.totalorder %v736, 0
        %vm769 = vcmp.gt.s32.totalorder %v737, 0
        %vm770 = vcmp.gt.s32.totalorder %v738, 0
        %vm771 = vcmp.gt.s32.totalorder %v739, 0
        %vm772 = vcmp.gt.s32.totalorder %v740, 0
        %vm773 = vcmp.gt.s32.totalorder %v741, 0
        %vm774 = vcmp.gt.s32.totalorder %v742, 0
        %vm775 = vcmp.gt.s32.totalorder %v743, 0
        %vm776 = vcmp.gt.s32.totalorder %v744, 0
        %vm777 = vcmp.gt.s32.totalorder %v745, 0
        %vm778 = vcmp.gt.s32.totalorder %v746, 0
        %vm779 = vcmp.gt.s32.totalorder %v747, 0
        %vm780 = vcmp.gt.s32.totalorder %v748, 0
        %vm781 = vcmp.gt.s32.totalorder %v749, 0
        %vm782 = vcmp.gt.s32.totalorder %v750, 0
        %vm783 = vcmp.gt.s32.totalorder %v751, 0
        %vm784 = vcmp.gt.s32.totalorder %v752, 0
        %vm785 = vcmp.lt.s32.totalorder %v721, 15
        %vm786 = vcmp.lt.s32.totalorder %v722, 15
        %vm787 = vcmp.lt.s32.totalorder %v723, 15
        %vm788 = vcmp.lt.s32.totalorder %v724, 15
        %vm789 = vcmp.lt.s32.totalorder %v725, 15
        %vm790 = vcmp.lt.s32.totalorder %v726, 15
        %vm791 = vcmp.lt.s32.totalorder %v727, 15
        %vm792 = vcmp.lt.s32.totalorder %v728, 15
        %vm793 = vcmp.lt.s32.totalorder %v729, 15
        %vm794 = vcmp.lt.s32.totalorder %v730, 15
        %vm795 = vcmp.lt.s32.totalorder %v731, 15
        %vm796 = vcmp.lt.s32.totalorder %v732, 15
        %vm797 = vcmp.lt.s32.totalorder %v733, 15
        %vm798 = vcmp.lt.s32.totalorder %v734, 15
        %vm799 = vcmp.lt.s32.totalorder %v735, 15
        %vm800 = vcmp.lt.s32.totalorder %v736, 15
        %vm801 = vcmp.lt.s32.totalorder %v737, 15
        %vm802 = vcmp.lt.s32.totalorder %v738, 15
        %vm803 = vcmp.lt.s32.totalorder %v739, 15
        %vm804 = vcmp.lt.s32.totalorder %v740, 15
        %vm805 = vcmp.lt.s32.totalorder %v741, 15
        %vm806 = vcmp.lt.s32.totalorder %v742, 15
        %vm807 = vcmp.lt.s32.totalorder %v743, 15
        %vm808 = vcmp.lt.s32.totalorder %v744, 15
        %vm809 = vcmp.lt.s32.totalorder %v745, 15
        %vm810 = vcmp.lt.s32.totalorder %v746, 15
        %vm811 = vcmp.lt.s32.totalorder %v747, 15
        %vm812 = vcmp.lt.s32.totalorder %v748, 15
        %vm813 = vcmp.lt.s32.totalorder %v749, 15
        %vm814 = vcmp.lt.s32.totalorder %v750, 15
        %vm815 = vcmp.lt.s32.totalorder %v751, 15
        %vm816 = vcmp.lt.s32.totalorder %v752, 15
        %v817 = vld [vmem:[%s329] sm:$0xf]
        %v818 = vld [vmem:[%s329 + $0x4] sm:$0xf]
        %v819 = vld [vmem:[%s329 + $0x8] sm:$0xf]
        %v820 = vld [vmem:[%s329 + $0xc] sm:$0xf]
        %v821 = vld [vmem:[%s329 + $0x10] sm:$0xf]
        %v822 = vld [vmem:[%s329 + $0x14] sm:$0xf]
        %v823 = vld [vmem:[%s329 + $0x18] sm:$0xf]
        %v824 = vld [vmem:[%s329 + $0x1c] sm:$0xf]
        %v825 = vld [vmem:[%s329 + $0x20] sm:$0xf]
        %v826 = vld [vmem:[%s329 + $0x24] sm:$0xf]
        %v827 = vld [vmem:[%s329 + $0x28] sm:$0xf]
        %v828 = vld [vmem:[%s329 + $0x2c] sm:$0xf]
        %v829 = vld [vmem:[%s329 + $0x30] sm:$0xf]
        %v830 = vld [vmem:[%s329 + $0x34] sm:$0xf]
        %v831 = vld [vmem:[%s329 + $0x38] sm:$0xf]
        %v832 = vld [vmem:[%s329 + $0x3c] sm:$0xf]
        %v833 = vld [vmem:[%s329 + $0x40] sm:$0xf]
        %v834 = vld [vmem:[%s329 + $0x44] sm:$0xf]
        %v835 = vld [vmem:[%s329 + $0x48] sm:$0xf]
        %v836 = vld [vmem:[%s329 + $0x4c] sm:$0xf]
        %v837 = vld [vmem:[%s329 + $0x50] sm:$0xf]
        %v838 = vld [vmem:[%s329 + $0x54] sm:$0xf]
        %v839 = vld [vmem:[%s329 + $0x58] sm:$0xf]
        %v840 = vld [vmem:[%s329 + $0x5c] sm:$0xf]
        %v841 = vld [vmem:[%s329 + $0x60] sm:$0xf]
        %v842 = vld [vmem:[%s329 + $0x64] sm:$0xf]
        %v843 = vld [vmem:[%s329 + $0x68] sm:$0xf]
        %v844 = vld [vmem:[%s329 + $0x6c] sm:$0xf]
        %v845 = vld [vmem:[%s329 + $0x70] sm:$0xf]
        %v846 = vld [vmem:[%s329 + $0x74] sm:$0xf]
        %v847 = vld [vmem:[%s329 + $0x78] sm:$0xf]
        %v848 = vld [vmem:[%s329 + $0x7c] sm:$0xf]
        %v849 = vld [vmem:[%s1] sm:$0xf]
        %v850 = vld [vmem:[%s1 + $0x4] sm:$0xf]
        %v851 = vld [vmem:[%s1 + $0x8] sm:$0xf]
        %v852 = vld [vmem:[%s1 + $0xc] sm:$0xf]
        %v853 = vld [vmem:[%s1 + $0x10] sm:$0xf]
        %v854 = vld [vmem:[%s1 + $0x14] sm:$0xf]
        %v855 = vld [vmem:[%s1 + $0x18] sm:$0xf]
        %v856 = vld [vmem:[%s1 + $0x1c] sm:$0xf]
        %v857 = vld [vmem:[%s1 + $0x20] sm:$0xf]
        %v858 = vld [vmem:[%s1 + $0x24] sm:$0xf]
        %v859 = vld [vmem:[%s1 + $0x28] sm:$0xf]
        %v860 = vld [vmem:[%s1 + $0x2c] sm:$0xf]
        %v861 = vld [vmem:[%s1 + $0x30] sm:$0xf]
        %v862 = vld [vmem:[%s1 + $0x34] sm:$0xf]
        %v863 = vld [vmem:[%s1 + $0x38] sm:$0xf]
        %v864 = vld [vmem:[%s1 + $0x3c] sm:$0xf]
        %v865 = vld [vmem:[%s2] sm:$0x1]
        %v867 = vperm.slane %v865, 0
        %v901 = vunpack.c.l.b16 %v817
        %v902 = vunpack.c.l.b16 %v818
        %v903 = vunpack.c.l.b16 %v819
        %v904 = vunpack.c.l.b16 %v820
        %v905 = vunpack.c.l.b16 %v821
        %v906 = vunpack.c.l.b16 %v822
        %v907 = vunpack.c.l.b16 %v823
        %v908 = vunpack.c.l.b16 %v824
        %v909 = vunpack.c.l.b16 %v825
        %v910 = vunpack.c.l.b16 %v826
        %v911 = vunpack.c.l.b16 %v827
        %v912 = vunpack.c.l.b16 %v828
        %v913 = vunpack.c.l.b16 %v829
        %v914 = vunpack.c.l.b16 %v830
        %v915 = vunpack.c.l.b16 %v831
        %v916 = vunpack.c.l.b16 %v832
        %v917 = vunpack.c.l.b16 %v833
        %v918 = vunpack.c.l.b16 %v834
        %v919 = vunpack.c.l.b16 %v835
        %v920 = vunpack.c.l.b16 %v836
        %v921 = vunpack.c.l.b16 %v837
        %v922 = vunpack.c.l.b16 %v838
        %v923 = vunpack.c.l.b16 %v839
        %v924 = vunpack.c.l.b16 %v840
        %v925 = vunpack.c.l.b16 %v841
        %v926 = vunpack.c.l.b16 %v842
        %v927 = vunpack.c.l.b16 %v843
        %v928 = vunpack.c.l.b16 %v844
        %v929 = vunpack.c.l.b16 %v845
        %v930 = vunpack.c.l.b16 %v846
        %v931 = vunpack.c.l.b16 %v847
        %v932 = vunpack.c.l.b16 %v848
        %v933 = vpack.c.b16 %v902, %v901
        %v934 = vpack.c.b16 %v904, %v903
        %v935 = vpack.c.b16 %v906, %v905
        %v936 = vpack.c.b16 %v908, %v907
        %v937 = vpack.c.b16 %v910, %v909
        %v938 = vpack.c.b16 %v912, %v911
        %v939 = vpack.c.b16 %v914, %v913
        %v940 = vpack.c.b16 %v916, %v915
        %v941 = vpack.c.b16 %v918, %v917
        %v942 = vpack.c.b16 %v920, %v919
        %v943 = vpack.c.b16 %v922, %v921
        %v944 = vpack.c.b16 %v924, %v923
        %v945 = vpack.c.b16 %v926, %v925
        %v946 = vpack.c.b16 %v928, %v927
        %v947 = vpack.c.b16 %v930, %v929
        %v948 = vpack.c.b16 %v932, %v931
        %v981 = vunpack.c.l.b16 %v849
        %v982 = vunpack.c.l.b16 %v850
        %v983 = vunpack.c.l.b16 %v851
        %v984 = vunpack.c.l.b16 %v852
        %v985 = vunpack.c.l.b16 %v853
        %v986 = vunpack.c.l.b16 %v854
        %v987 = vunpack.c.l.b16 %v855
        %v988 = vunpack.c.l.b16 %v856
        %v989 = vunpack.c.l.b16 %v857
        %v990 = vunpack.c.l.b16 %v858
        %v991 = vunpack.c.l.b16 %v859
        %v992 = vunpack.c.l.b16 %v860
        %v993 = vunpack.c.l.b16 %v861
        %v994 = vunpack.c.l.b16 %v862
        %v995 = vunpack.c.l.b16 %v863
        %v996 = vunpack.c.l.b16 %v864
        %v997 = vpack.c.b16 %v982, %v981
        %v998 = vpack.c.b16 %v984, %v983
        %v999 = vpack.c.b16 %v986, %v985
        %v1000 = vpack.c.b16 %v988, %v987
        %v1001 = vpack.c.b16 %v990, %v989
        %v1002 = vpack.c.b16 %v992, %v991
        %v1003 = vpack.c.b16 %v994, %v993
        %v1004 = vpack.c.b16 %v996, %v995
        %1013 = vmatpush.bf16.msra.mxu0 %v1004
        %1014 = vmatpush.bf16.msra.mxu0 %v1003
        %1015 = vmatpush.bf16.msra.mxu0 %v1002
        %1016 = vmatpush.bf16.msra.mxu0 %v1001
        %1017 = vmatpush.bf16.msra.mxu0 %v1000
        %1018 = vmatpush.bf16.msra.mxu0 %v999
        %1019 = vmatpush.bf16.msra.mxu0 %v998
        %1020 = vmatpush.bf16.msra.mxu0 %v997
        %1021 = vmatmul.bf16.gmra.mxu0 %v933
        %v1022 = vpop.f32.mrf.mxu0
        %v1023 = vadd.f32 %v867, %v1022
        %v1024 = vpop.f32.mrf.mxu0
        %v1025 = vadd.f32 %v867, %v1024
        %1026 = vmatmul.bf16.gmra.mxu0 %v934
        %v1027 = vpop.f32.mrf.mxu0
        %v1028 = vadd.f32 %v867, %v1027
        %v1029 = vpop.f32.mrf.mxu0
        %v1030 = vadd.f32 %v867, %v1029
        %1031 = vmatmul.bf16.gmra.mxu0 %v935
        %v1032 = vpop.f32.mrf.mxu0
        %v1033 = vadd.f32 %v867, %v1032
        %v1034 = vpop.f32.mrf.mxu0
        %v1035 = vadd.f32 %v867, %v1034
        %1036 = vmatmul.bf16.gmra.mxu0 %v936
        %v1037 = vpop.f32.mrf.mxu0
        %v1038 = vadd.f32 %v867, %v1037
        %v1039 = vpop.f32.mrf.mxu0
        %v1040 = vadd.f32 %v867, %v1039
        %1041 = vmatmul.bf16.gmra.mxu0 %v937
        %v1042 = vpop.f32.mrf.mxu0
        %v1043 = vadd.f32 %v867, %v1042
        %v1044 = vpop.f32.mrf.mxu0
        %v1045 = vadd.f32 %v867, %v1044
        %1046 = vmatmul.bf16.gmra.mxu0 %v938
        %v1047 = vpop.f32.mrf.mxu0
        %v1048 = vadd.f32 %v867, %v1047
        %v1049 = vpop.f32.mrf.mxu0
        %v1050 = vadd.f32 %v867, %v1049
        %1051 = vmatmul.bf16.gmra.mxu0 %v939
        %v1052 = vpop.f32.mrf.mxu0
        %v1053 = vadd.f32 %v867, %v1052
        %v1054 = vpop.f32.mrf.mxu0
        %v1055 = vadd.f32 %v867, %v1054
        %1056 = vmatmul.bf16.gmra.mxu0 %v940
        %v1057 = vpop.f32.mrf.mxu0
        %v1058 = vadd.f32 %v867, %v1057
        %v1059 = vpop.f32.mrf.mxu0
        %v1060 = vadd.f32 %v867, %v1059
        %1061 = vmatmul.bf16.gmra.mxu0 %v941
        %v1062 = vpop.f32.mrf.mxu0
        %v1063 = vadd.f32 %v867, %v1062
        %v1064 = vpop.f32.mrf.mxu0
        %v1065 = vadd.f32 %v867, %v1064
        %1066 = vmatmul.bf16.gmra.mxu0 %v942
        %v1067 = vpop.f32.mrf.mxu0
        %v1068 = vadd.f32 %v867, %v1067
        %v1069 = vpop.f32.mrf.mxu0
        %v1070 = vadd.f32 %v867, %v1069
        %1071 = vmatmul.bf16.gmra.mxu0 %v943
        %v1072 = vpop.f32.mrf.mxu0
        %v1073 = vadd.f32 %v867, %v1072
        %v1074 = vpop.f32.mrf.mxu0
        %v1075 = vadd.f32 %v867, %v1074
        %1076 = vmatmul.bf16.gmra.mxu0 %v944
        %v1077 = vpop.f32.mrf.mxu0
        %v1078 = vadd.f32 %v867, %v1077
        %v1079 = vpop.f32.mrf.mxu0
        %v1080 = vadd.f32 %v867, %v1079
        %1081 = vmatmul.bf16.gmra.mxu0 %v945
        %v1082 = vpop.f32.mrf.mxu0
        %v1083 = vadd.f32 %v867, %v1082
        %v1084 = vpop.f32.mrf.mxu0
        %v1085 = vadd.f32 %v867, %v1084
        %1086 = vmatmul.bf16.gmra.mxu0 %v946
        %v1087 = vpop.f32.mrf.mxu0
        %v1088 = vadd.f32 %v867, %v1087
        %v1089 = vpop.f32.mrf.mxu0
        %v1090 = vadd.f32 %v867, %v1089
        %1091 = vmatmul.bf16.gmra.mxu0 %v947
        %v1092 = vpop.f32.mrf.mxu0
        %v1093 = vadd.f32 %v867, %v1092
        %v1094 = vpop.f32.mrf.mxu0
        %v1095 = vadd.f32 %v867, %v1094
        %1096 = vmatmul.bf16.gmra.mxu0 %v948
        %v1097 = vpop.f32.mrf.mxu0
        %v1098 = vadd.f32 %v867, %v1097
        %v1099 = vpop.f32.mrf.mxu0
        %v1100 = vadd.f32 %v867, %v1099
        %1101 = vdwg.mxu0
        %v1102 = vmax.f32 %v1023, 0.0
        %v1103 = vmax.f32 %v1025, 0.0
        %v1104 = vmax.f32 %v1028, 0.0
        %v1105 = vmax.f32 %v1030, 0.0
        %v1106 = vmax.f32 %v1033, 0.0
        %v1107 = vmax.f32 %v1035, 0.0
        %v1108 = vmax.f32 %v1038, 0.0
        %v1109 = vmax.f32 %v1040, 0.0
        %v1110 = vmax.f32 %v1043, 0.0
        %v1111 = vmax.f32 %v1045, 0.0
        %v1112 = vmax.f32 %v1048, 0.0
        %v1113 = vmax.f32 %v1050, 0.0
        %v1114 = vmax.f32 %v1053, 0.0
        %v1115 = vmax.f32 %v1055, 0.0
        %v1116 = vmax.f32 %v1058, 0.0
        %v1117 = vmax.f32 %v1060, 0.0
        %v1118 = vmax.f32 %v1063, 0.0
        %v1119 = vmax.f32 %v1065, 0.0
        %v1120 = vmax.f32 %v1068, 0.0
        %v1121 = vmax.f32 %v1070, 0.0
        %v1122 = vmax.f32 %v1073, 0.0
        %v1123 = vmax.f32 %v1075, 0.0
        %v1124 = vmax.f32 %v1078, 0.0
        %v1125 = vmax.f32 %v1080, 0.0
        %v1126 = vmax.f32 %v1083, 0.0
        %v1127 = vmax.f32 %v1085, 0.0
        %v1128 = vmax.f32 %v1088, 0.0
        %v1129 = vmax.f32 %v1090, 0.0
        %v1130 = vmax.f32 %v1093, 0.0
        %v1131 = vmax.f32 %v1095, 0.0
        %v1132 = vmax.f32 %v1098, 0.0
        %v1133 = vmax.f32 %v1100, 0.0
        %v1134 = vpack.c.bf16 %v1102, %v1102
        %v1135 = vpack.c.bf16 %v1103, %v1103
        %v1136 = vpack.c.bf16 %v1104, %v1104
        %v1137 = vpack.c.bf16 %v1105, %v1105
        %v1138 = vpack.c.bf16 %v1106, %v1106
        %v1139 = vpack.c.bf16 %v1107, %v1107
        %v1140 = vpack.c.bf16 %v1108, %v1108
        %v1141 = vpack.c.bf16 %v1109, %v1109
        %v1142 = vpack.c.bf16 %v1110, %v1110
        %v1143 = vpack.c.bf16 %v1111, %v1111
        %v1144 = vpack.c.bf16 %v1112, %v1112
        %v1145 = vpack.c.bf16 %v1113, %v1113
        %v1146 = vpack.c.bf16 %v1114, %v1114
        %v1147 = vpack.c.bf16 %v1115, %v1115
        %v1148 = vpack.c.bf16 %v1116, %v1116
        %v1149 = vpack.c.bf16 %v1117, %v1117
        %v1150 = vpack.c.bf16 %v1118, %v1118
        %v1151 = vpack.c.bf16 %v1119, %v1119
        %v1152 = vpack.c.bf16 %v1120, %v1120
        %v1153 = vpack.c.bf16 %v1121, %v1121
        %v1154 = vpack.c.bf16 %v1122, %v1122
        %v1155 = vpack.c.bf16 %v1123, %v1123
        %v1156 = vpack.c.bf16 %v1124, %v1124
        %v1157 = vpack.c.bf16 %v1125, %v1125
        %v1158 = vpack.c.bf16 %v1126, %v1126
        %v1159 = vpack.c.bf16 %v1127, %v1127
        %v1160 = vpack.c.bf16 %v1128, %v1128
        %v1161 = vpack.c.bf16 %v1129, %v1129
        %v1162 = vpack.c.bf16 %v1130, %v1130
        %v1163 = vpack.c.bf16 %v1131, %v1131
        %v1164 = vpack.c.bf16 %v1132, %v1132
        %v1165 = vpack.c.bf16 %v1133, %v1133
        %1166 = vst [vmem:[#allocation4] sm:$0xf] %v1134
        %1167 = vst [vmem:[#allocation4 + $0x4] sm:$0xf] %v1135
        %1168 = vst [vmem:[#allocation4 + $0x8] sm:$0xf] %v1136
        %1169 = vst [vmem:[#allocation4 + $0xc] sm:$0xf] %v1137
        %1170 = vst [vmem:[#allocation4 + $0x10] sm:$0xf] %v1138
        %1171 = vst [vmem:[#allocation4 + $0x14] sm:$0xf] %v1139
        %1172 = vst [vmem:[#allocation4 + $0x18] sm:$0xf] %v1140
        %1173 = vst [vmem:[#allocation4 + $0x1c] sm:$0xf] %v1141
        %1174 = vst [vmem:[#allocation4 + $0x20] sm:$0xf] %v1142
        %1175 = vst [vmem:[#allocation4 + $0x24] sm:$0xf] %v1143
        %1176 = vst [vmem:[#allocation4 + $0x28] sm:$0xf] %v1144
        %1177 = vst [vmem:[#allocation4 + $0x2c] sm:$0xf] %v1145
        %1178 = vst [vmem:[#allocation4 + $0x30] sm:$0xf] %v1146
        %1179 = vst [vmem:[#allocation4 + $0x34] sm:$0xf] %v1147
        %1180 = vst [vmem:[#allocation4 + $0x38] sm:$0xf] %v1148
        %1181 = vst [vmem:[#allocation4 + $0x3c] sm:$0xf] %v1149
        %1182 = vst [vmem:[#allocation4 + $0x40] sm:$0xf] %v1150
        %1183 = vst [vmem:[#allocation4 + $0x44] sm:$0xf] %v1151
        %1184 = vst [vmem:[#allocation4 + $0x48] sm:$0xf] %v1152
        %1185 = vst [vmem:[#allocation4 + $0x4c] sm:$0xf] %v1153
        %1186 = vst [vmem:[#allocation4 + $0x50] sm:$0xf] %v1154
        %1187 = vst [vmem:[#allocation4 + $0x54] sm:$0xf] %v1155
        %1188 = vst [vmem:[#allocation4 + $0x58] sm:$0xf] %v1156
        %1189 = vst [vmem:[#allocation4 + $0x5c] sm:$0xf] %v1157
        %1190 = vst [vmem:[#allocation4 + $0x60] sm:$0xf] %v1158
        %1191 = vst [vmem:[#allocation4 + $0x64] sm:$0xf] %v1159
        %1192 = vst [vmem:[#allocation4 + $0x68] sm:$0xf] %v1160
        %1193 = vst [vmem:[#allocation4 + $0x6c] sm:$0xf] %v1161
        %1194 = vst [vmem:[#allocation4 + $0x70] sm:$0xf] %v1162
        %1195 = vst [vmem:[#allocation4 + $0x74] sm:$0xf] %v1163
        %1196 = vst [vmem:[#allocation4 + $0x78] sm:$0xf] %v1164
        %1197 = vst [vmem:[#allocation4 + $0x7c] sm:$0xf] %v1165
        %s1198 = scalar_lea.vmem [#allocation2], 8
        %1199 = vst [vmem:[%s1198] sm:$0xf] %v1134
        %1200 = vst [vmem:[%s1198 + $0x4] sm:$0xf] %v1135
        %1201 = vst [vmem:[%s1198 + $0x8] sm:$0xf] %v1136
        %1202 = vst [vmem:[%s1198 + $0xc] sm:$0xf] %v1137
        %1203 = vst [vmem:[%s1198 + $0x10] sm:$0xf] %v1138
        %1204 = vst [vmem:[%s1198 + $0x14] sm:$0xf] %v1139
        %1205 = vst [vmem:[%s1198 + $0x18] sm:$0xf] %v1140
        %1206 = vst [vmem:[%s1198 + $0x1c] sm:$0xf] %v1141
        %1207 = vst [vmem:[%s1198 + $0x20] sm:$0xf] %v1142
        %1208 = vst [vmem:[%s1198 + $0x24] sm:$0xf] %v1143
        %1209 = vst [vmem:[%s1198 + $0x28] sm:$0xf] %v1144
        %1210 = vst [vmem:[%s1198 + $0x2c] sm:$0xf] %v1145
        %1211 = vst [vmem:[%s1198 + $0x30] sm:$0xf] %v1146
        %1212 = vst [vmem:[%s1198 + $0x34] sm:$0xf] %v1147
        %1213 = vst [vmem:[%s1198 + $0x38] sm:$0xf] %v1148
        %1214 = vst [vmem:[%s1198 + $0x3c] sm:$0xf] %v1149
        %1215 = vst [vmem:[%s1198 + $0x40] sm:$0xf] %v1150
        %1216 = vst [vmem:[%s1198 + $0x44] sm:$0xf] %v1151
        %1217 = vst [vmem:[%s1198 + $0x48] sm:$0xf] %v1152
        %1218 = vst [vmem:[%s1198 + $0x4c] sm:$0xf] %v1153
        %1219 = vst [vmem:[%s1198 + $0x50] sm:$0xf] %v1154
        %1220 = vst [vmem:[%s1198 + $0x54] sm:$0xf] %v1155
        %1221 = vst [vmem:[%s1198 + $0x58] sm:$0xf] %v1156
        %1222 = vst [vmem:[%s1198 + $0x5c] sm:$0xf] %v1157
        %1223 = vst [vmem:[%s1198 + $0x60] sm:$0xf] %v1158
        %1224 = vst [vmem:[%s1198 + $0x64] sm:$0xf] %v1159
        %1225 = vst [vmem:[%s1198 + $0x68] sm:$0xf] %v1160
        %1226 = vst [vmem:[%s1198 + $0x6c] sm:$0xf] %v1161
        %1227 = vst [vmem:[%s1198 + $0x70] sm:$0xf] %v1162
        %1228 = vst [vmem:[%s1198 + $0x74] sm:$0xf] %v1163
        %1229 = vst [vmem:[%s1198 + $0x78] sm:$0xf] %v1164
        %1230 = vst [vmem:[%s1198 + $0x7c] sm:$0xf] %v1165
        %v1231 = vld [vmem:[#allocation2] sm:$0xf]
        %v1232 = vld [vmem:[#allocation2 + $0x4] sm:$0xf]
        %v1233 = vld [vmem:[#allocation2 + $0x8] sm:$0xf]
        %v1234 = vld [vmem:[#allocation2 + $0xc] sm:$0xf]
        %v1235 = vld [vmem:[#allocation2 + $0x10] sm:$0xf]
        %v1236 = vld [vmem:[#allocation2 + $0x14] sm:$0xf]
        %v1237 = vld [vmem:[#allocation2 + $0x18] sm:$0xf]
        %v1238 = vld [vmem:[#allocation2 + $0x1c] sm:$0xf]
        %v1239 = vld [vmem:[#allocation2 + $0x20] sm:$0xf]
        %v1240 = vld [vmem:[#allocation2 + $0x24] sm:$0xf]
        %v1241 = vld [vmem:[#allocation2 + $0x28] sm:$0xf]
        %v1242 = vld [vmem:[#allocation2 + $0x2c] sm:$0xf]
        %v1243 = vld [vmem:[#allocation2 + $0x30] sm:$0xf]
        %v1244 = vld [vmem:[#allocation2 + $0x34] sm:$0xf]
        %v1245 = vld [vmem:[#allocation2 + $0x38] sm:$0xf]
        %v1246 = vld [vmem:[#allocation2 + $0x3c] sm:$0xf]
        %v1247 = vld [vmem:[#allocation2 + $0x40] sm:$0xf]
        %v1248 = vld [vmem:[#allocation2 + $0x44] sm:$0xf]
        %v1249 = vld [vmem:[#allocation2 + $0x48] sm:$0xf]
        %v1250 = vld [vmem:[#allocation2 + $0x4c] sm:$0xf]
        %v1251 = vld [vmem:[#allocation2 + $0x50] sm:$0xf]
        %v1252 = vld [vmem:[#allocation2 + $0x54] sm:$0xf]
        %v1253 = vld [vmem:[#allocation2 + $0x58] sm:$0xf]
        %v1254 = vld [vmem:[#allocation2 + $0x5c] sm:$0xf]
        %v1255 = vld [vmem:[#allocation2 + $0x60] sm:$0xf]
        %v1256 = vld [vmem:[#allocation2 + $0x64] sm:$0xf]
        %v1257 = vld [vmem:[#allocation2 + $0x68] sm:$0xf]
        %v1258 = vld [vmem:[#allocation2 + $0x6c] sm:$0xf]
        %v1259 = vld [vmem:[#allocation2 + $0x70] sm:$0xf]
        %v1260 = vld [vmem:[#allocation2 + $0x74] sm:$0xf]
        %v1261 = vld [vmem:[#allocation2 + $0x78] sm:$0xf]
        %v1262 = vld [vmem:[#allocation2 + $0x7c] sm:$0xf]
        %1263 = vst [vmem:[#allocation3 + $0x4] sm:$0xf] %v1231
        %1264 = vst [vmem:[#allocation3 + $0x28] sm:$0xf] %v1232
        %1265 = vst [vmem:[#allocation3 + $0x4c] sm:$0xf] %v1233
        %1266 = vst [vmem:[#allocation3 + $0x70] sm:$0xf] %v1234
        %1267 = vst [vmem:[#allocation3 + $0x94] sm:$0xf] %v1235
        %1268 = vst [vmem:[#allocation3 + $0xb8] sm:$0xf] %v1236
        %1269 = vst [vmem:[#allocation3 + $0xdc] sm:$0xf] %v1237
        %1270 = vst [vmem:[#allocation3 + $0x100] sm:$0xf] %v1238
        %1271 = vst [vmem:[#allocation3 + $0x124] sm:$0xf] %v1239
        %1272 = vst [vmem:[#allocation3 + $0x148] sm:$0xf] %v1240
        %1273 = vst [vmem:[#allocation3 + $0x16c] sm:$0xf] %v1241
        %1274 = vst [vmem:[#allocation3 + $0x190] sm:$0xf] %v1242
        %1275 = vst [vmem:[#allocation3 + $0x1b4] sm:$0xf] %v1243
        %1276 = vst [vmem:[#allocation3 + $0x1d8] sm:$0xf] %v1244
        %1277 = vst [vmem:[#allocation3 + $0x1fc] sm:$0xf] %v1245
        %1278 = vst [vmem:[#allocation3 + $0x220] sm:$0xf] %v1246
        %1279 = vst [vmem:[#allocation3 + $0x244] sm:$0xf] %v1247
        %1280 = vst [vmem:[#allocation3 + $0x268] sm:$0xf] %v1248
        %1281 = vst [vmem:[#allocation3 + $0x28c] sm:$0xf] %v1249
        %1282 = vst [vmem:[#allocation3 + $0x2b0] sm:$0xf] %v1250
        %1283 = vst [vmem:[#allocation3 + $0x2d4] sm:$0xf] %v1251
        %1284 = vst [vmem:[#allocation3 + $0x2f8] sm:$0xf] %v1252
        %1285 = vst [vmem:[#allocation3 + $0x31c] sm:$0xf] %v1253
        %1286 = vst [vmem:[#allocation3 + $0x340] sm:$0xf] %v1254
        %1287 = vst [vmem:[#allocation3 + $0x364] sm:$0xf] %v1255
        %1288 = vst [vmem:[#allocation3 + $0x388] sm:$0xf] %v1256
        %1289 = vst [vmem:[#allocation3 + $0x3ac] sm:$0xf] %v1257
        %1290 = vst [vmem:[#allocation3 + $0x3d0] sm:$0xf] %v1258
        %1291 = vst [vmem:[#allocation3 + $0x3f4] sm:$0xf] %v1259
        %1292 = vst [vmem:[#allocation3 + $0x418] sm:$0xf] %v1260
        %1293 = vst [vmem:[#allocation3 + $0x43c] sm:$0xf] %v1261
        %1294 = vst [vmem:[#allocation3 + $0x460] sm:$0xf] %v1262
        %v1295 = vunpack.c.l.bf16 %v1231
        %v1296 = vunpack.c.l.bf16 %v1232
        %v1297 = vunpack.c.l.bf16 %v1233
        %v1298 = vunpack.c.l.bf16 %v1234
        %v1299 = vunpack.c.l.bf16 %v1235
        %v1300 = vunpack.c.l.bf16 %v1236
        %v1301 = vunpack.c.l.bf16 %v1237
        %v1302 = vunpack.c.l.bf16 %v1238
        %v1303 = vunpack.c.l.bf16 %v1239
        %v1304 = vunpack.c.l.bf16 %v1240
        %v1305 = vunpack.c.l.bf16 %v1241
        %v1306 = vunpack.c.l.bf16 %v1242
        %v1307 = vunpack.c.l.bf16 %v1243
        %v1308 = vunpack.c.l.bf16 %v1244
        %v1309 = vunpack.c.l.bf16 %v1245
        %v1310 = vunpack.c.l.bf16 %v1246
        %v1311 = vunpack.c.l.bf16 %v1247
        %v1312 = vunpack.c.l.bf16 %v1248
        %v1313 = vunpack.c.l.bf16 %v1249
        %v1314 = vunpack.c.l.bf16 %v1250
        %v1315 = vunpack.c.l.bf16 %v1251
        %v1316 = vunpack.c.l.bf16 %v1252
        %v1317 = vunpack.c.l.bf16 %v1253
        %v1318 = vunpack.c.l.bf16 %v1254
        %v1319 = vunpack.c.l.bf16 %v1255
        %v1320 = vunpack.c.l.bf16 %v1256
        %v1321 = vunpack.c.l.bf16 %v1257
        %v1322 = vunpack.c.l.bf16 %v1258
        %v1323 = vunpack.c.l.bf16 %v1259
        %v1324 = vunpack.c.l.bf16 %v1260
        %v1325 = vunpack.c.l.bf16 %v1261
        %v1326 = vunpack.c.l.bf16 %v1262
        %v1327 = vrot.slane %v1295, 7
        %v1328 = vrot.slane %v1296, 7
        %v1329 = vrot.slane %v1297, 7
        %v1330 = vrot.slane %v1298, 7
        %v1331 = vrot.slane %v1299, 7
        %v1332 = vrot.slane %v1300, 7
        %v1333 = vrot.slane %v1301, 7
        %v1334 = vrot.slane %v1302, 7
        %v1335 = vrot.slane %v1303, 7
        %v1336 = vrot.slane %v1304, 7
        %v1337 = vrot.slane %v1305, 7
        %v1338 = vrot.slane %v1306, 7
        %v1339 = vrot.slane %v1307, 7
        %v1340 = vrot.slane %v1308, 7
        %v1341 = vrot.slane %v1309, 7
        %v1342 = vrot.slane %v1310, 7
        %v1343 = vrot.slane %v1311, 7
        %v1344 = vrot.slane %v1312, 7
        %v1345 = vrot.slane %v1313, 7
        %v1346 = vrot.slane %v1314, 7
        %v1347 = vrot.slane %v1315, 7
        %v1348 = vrot.slane %v1316, 7
        %v1349 = vrot.slane %v1317, 7
        %v1350 = vrot.slane %v1318, 7
        %v1351 = vrot.slane %v1319, 7
        %v1352 = vrot.slane %v1320, 7
        %v1353 = vrot.slane %v1321, 7
        %v1354 = vrot.slane %v1322, 7
        %v1355 = vrot.slane %v1323, 7
        %v1356 = vrot.slane %v1324, 7
        %v1357 = vrot.slane %v1325, 7
        %v1358 = vrot.slane %v1326, 7
        %vm1359 = vcmp.lt.s32.totalorder %v337, 1
        %v1360 = vsel %vm1359, %v1357, %v1358
        %v1361 = vsel %vm1359, %v1356, %v1357
        %v1362 = vsel %vm1359, %v1355, %v1356
        %v1363 = vsel %vm1359, %v1354, %v1355
        %v1364 = vsel %vm1359, %v1353, %v1354
        %v1365 = vsel %vm1359, %v1352, %v1353
        %v1366 = vsel %vm1359, %v1351, %v1352
        %v1367 = vsel %vm1359, %v1350, %v1351
        %v1368 = vsel %vm1359, %v1349, %v1350
        %v1369 = vsel %vm1359, %v1348, %v1349
        %v1370 = vsel %vm1359, %v1347, %v1348
        %v1371 = vsel %vm1359, %v1346, %v1347
        %v1372 = vsel %vm1359, %v1345, %v1346
        %v1373 = vsel %vm1359, %v1344, %v1345
        %v1374 = vsel %vm1359, %v1343, %v1344
        %v1375 = vsel %vm1359, %v1342, %v1343
        %v1376 = vsel %vm1359, %v1341, %v1342
        %v1377 = vsel %vm1359, %v1340, %v1341
        %v1378 = vsel %vm1359, %v1339, %v1340
        %v1379 = vsel %vm1359, %v1338, %v1339
        %v1380 = vsel %vm1359, %v1337, %v1338
        %v1381 = vsel %vm1359, %v1336, %v1337
        %v1382 = vsel %vm1359, %v1335, %v1336
        %v1383 = vsel %vm1359, %v1334, %v1335
        %v1384 = vsel %vm1359, %v1333, %v1334
        %v1385 = vsel %vm1359, %v1332, %v1333
        %v1386 = vsel %vm1359, %v1331, %v1332
        %v1387 = vsel %vm1359, %v1330, %v1331
        %v1388 = vsel %vm1359, %v1329, %v1330
        %v1389 = vsel %vm1359, %v1328, %v1329
        %v1390 = vsel %vm1359, %v1327, %v1328
        %v1391 = vsel %vm1359, %v1358, %v1327
        %v1392 = vsel %vm753, %v1391, 0.0
        %v1393 = vsel %vm754, %v1390, 0.0
        %v1394 = vsel %vm755, %v1389, 0.0
        %v1395 = vsel %vm756, %v1388, 0.0
        %v1396 = vsel %vm757, %v1387, 0.0
        %v1397 = vsel %vm758, %v1386, 0.0
        %v1398 = vsel %vm759, %v1385, 0.0
        %v1399 = vsel %vm760, %v1384, 0.0
        %v1400 = vsel %vm761, %v1383, 0.0
        %v1401 = vsel %vm762, %v1382, 0.0
        %v1402 = vsel %vm763, %v1381, 0.0
        %v1403 = vsel %vm764, %v1380, 0.0
        %v1404 = vsel %vm765, %v1379, 0.0
        %v1405 = vsel %vm766, %v1378, 0.0
        %v1406 = vsel %vm767, %v1377, 0.0
        %v1407 = vsel %vm768, %v1376, 0.0
        %v1408 = vsel %vm769, %v1375, 0.0
        %v1409 = vsel %vm770, %v1374, 0.0
        %v1410 = vsel %vm771, %v1373, 0.0
        %v1411 = vsel %vm772, %v1372, 0.0
        %v1412 = vsel %vm773, %v1371, 0.0
        %v1413 = vsel %vm774, %v1370, 0.0
        %v1414 = vsel %vm775, %v1369, 0.0
        %v1415 = vsel %vm776, %v1368, 0.0
        %v1416 = vsel %vm777, %v1367, 0.0
        %v1417 = vsel %vm778, %v1366, 0.0
        %v1418 = vsel %vm779, %v1365, 0.0
        %v1419 = vsel %vm780, %v1364, 0.0
        %v1420 = vsel %vm781, %v1363, 0.0
        %v1421 = vsel %vm782, %v1362, 0.0
        %v1422 = vsel %vm783, %v1361, 0.0
        %v1423 = vsel %vm784, %v1360, 0.0
        %v1424 = vrot.slane %v1295, 1
        %v1425 = vrot.slane %v1296, 1
        %v1426 = vrot.slane %v1297, 1
        %v1427 = vrot.slane %v1298, 1
        %v1428 = vrot.slane %v1299, 1
        %v1429 = vrot.slane %v1300, 1
        %v1430 = vrot.slane %v1301, 1
        %v1431 = vrot.slane %v1302, 1
        %v1432 = vrot.slane %v1303, 1
        %v1433 = vrot.slane %v1304, 1
        %v1434 = vrot.slane %v1305, 1
        %v1435 = vrot.slane %v1306, 1
        %v1436 = vrot.slane %v1307, 1
        %v1437 = vrot.slane %v1308, 1
        %v1438 = vrot.slane %v1309, 1
        %v1439 = vrot.slane %v1310, 1
        %v1440 = vrot.slane %v1311, 1
        %v1441 = vrot.slane %v1312, 1
        %v1442 = vrot.slane %v1313, 1
        %v1443 = vrot.slane %v1314, 1
        %v1444 = vrot.slane %v1315, 1
        %v1445 = vrot.slane %v1316, 1
        %v1446 = vrot.slane %v1317, 1
        %v1447 = vrot.slane %v1318, 1
        %v1448 = vrot.slane %v1319, 1
        %v1449 = vrot.slane %v1320, 1
        %v1450 = vrot.slane %v1321, 1
        %v1451 = vrot.slane %v1322, 1
        %v1452 = vrot.slane %v1323, 1
        %v1453 = vrot.slane %v1324, 1
        %v1454 = vrot.slane %v1325, 1
        %v1455 = vrot.slane %v1326, 1
        %vm1456 = vcmp.lt.s32.totalorder %v337, 7
        %v1457 = vsel %vm1456, %v1454, %v1455
        %v1458 = vsel %vm1456, %v1453, %v1454
        %v1459 = vsel %vm1456, %v1452, %v1453
        %v1460 = vsel %vm1456, %v1451, %v1452
        %v1461 = vsel %vm1456, %v1450, %v1451
        %v1462 = vsel %vm1456, %v1449, %v1450
        %v1463 = vsel %vm1456, %v1448, %v1449
        %v1464 = vsel %vm1456, %v1447, %v1448
        %v1465 = vsel %vm1456, %v1446, %v1447
        %v1466 = vsel %vm1456, %v1445, %v1446
        %v1467 = vsel %vm1456, %v1444, %v1445
        %v1468 = vsel %vm1456, %v1443, %v1444
        %v1469 = vsel %vm1456, %v1442, %v1443
        %v1470 = vsel %vm1456, %v1441, %v1442
        %v1471 = vsel %vm1456, %v1440, %v1441
        %v1472 = vsel %vm1456, %v1439, %v1440
        %v1473 = vsel %vm1456, %v1438, %v1439
        %v1474 = vsel %vm1456, %v1437, %v1438
        %v1475 = vsel %vm1456, %v1436, %v1437
        %v1476 = vsel %vm1456, %v1435, %v1436
        %v1477 = vsel %vm1456, %v1434, %v1435
        %v1478 = vsel %vm1456, %v1433, %v1434
        %v1479 = vsel %vm1456, %v1432, %v1433
        %v1480 = vsel %vm1456, %v1431, %v1432
        %v1481 = vsel %vm1456, %v1430, %v1431
        %v1482 = vsel %vm1456, %v1429, %v1430
        %v1483 = vsel %vm1456, %v1428, %v1429
        %v1484 = vsel %vm1456, %v1427, %v1428
        %v1485 = vsel %vm1456, %v1426, %v1427
        %v1486 = vsel %vm1456, %v1425, %v1426
        %v1487 = vsel %vm1456, %v1424, %v1425
        %v1488 = vsel %vm1456, %v1455, %v1424
        %v1489 = vsel %vm785, %v1487, 0.0
        %v1490 = vsel %vm786, %v1486, 0.0
        %v1491 = vsel %vm787, %v1485, 0.0
        %v1492 = vsel %vm788, %v1484, 0.0
        %v1493 = vsel %vm789, %v1483, 0.0
        %v1494 = vsel %vm790, %v1482, 0.0
        %v1495 = vsel %vm791, %v1481, 0.0
        %v1496 = vsel %vm792, %v1480, 0.0
        %v1497 = vsel %vm793, %v1479, 0.0
        %v1498 = vsel %vm794, %v1478, 0.0
        %v1499 = vsel %vm795, %v1477, 0.0
        %v1500 = vsel %vm796, %v1476, 0.0
        %v1501 = vsel %vm797, %v1475, 0.0
        %v1502 = vsel %vm798, %v1474, 0.0
        %v1503 = vsel %vm799, %v1473, 0.0
        %v1504 = vsel %vm800, %v1472, 0.0
        %v1505 = vsel %vm801, %v1471, 0.0
        %v1506 = vsel %vm802, %v1470, 0.0
        %v1507 = vsel %vm803, %v1469, 0.0
        %v1508 = vsel %vm804, %v1468, 0.0
        %v1509 = vsel %vm805, %v1467, 0.0
        %v1510 = vsel %vm806, %v1466, 0.0
        %v1511 = vsel %vm807, %v1465, 0.0
        %v1512 = vsel %vm808, %v1464, 0.0
        %v1513 = vsel %vm809, %v1463, 0.0
        %v1514 = vsel %vm810, %v1462, 0.0
        %v1515 = vsel %vm811, %v1461, 0.0
        %v1516 = vsel %vm812, %v1460, 0.0
        %v1517 = vsel %vm813, %v1459, 0.0
        %v1518 = vsel %vm814, %v1458, 0.0
        %v1519 = vsel %vm815, %v1457, 0.0
        %v1520 = vsel %vm816, %v1488, 0.0
        %v1521 = vpack.c.bf16 %v1392, %v1392
        %v1522 = vpack.c.bf16 %v1393, %v1393
        %v1523 = vpack.c.bf16 %v1394, %v1394
        %v1524 = vpack.c.bf16 %v1395, %v1395
        %v1525 = vpack.c.bf16 %v1396, %v1396
        %v1526 = vpack.c.bf16 %v1397, %v1397
        %v1527 = vpack.c.bf16 %v1398, %v1398
        %v1528 = vpack.c.bf16 %v1399, %v1399
        %v1529 = vpack.c.bf16 %v1400, %v1400
        %v1530 = vpack.c.bf16 %v1401, %v1401
        %v1531 = vpack.c.bf16 %v1402, %v1402
        %v1532 = vpack.c.bf16 %v1403, %v1403
        %v1533 = vpack.c.bf16 %v1404, %v1404
        %v1534 = vpack.c.bf16 %v1405, %v1405
        %v1535 = vpack.c.bf16 %v1406, %v1406
        %v1536 = vpack.c.bf16 %v1407, %v1407
        %v1537 = vpack.c.bf16 %v1408, %v1408
        %v1538 = vpack.c.bf16 %v1409, %v1409
        %v1539 = vpack.c.bf16 %v1410, %v1410
        %v1540 = vpack.c.bf16 %v1411, %v1411
        %v1541 = vpack.c.bf16 %v1412, %v1412
        %v1542 = vpack.c.bf16 %v1413, %v1413
        %v1543 = vpack.c.bf16 %v1414, %v1414
        %v1544 = vpack.c.bf16 %v1415, %v1415
        %v1545 = vpack.c.bf16 %v1416, %v1416
        %v1546 = vpack.c.bf16 %v1417, %v1417
        %v1547 = vpack.c.bf16 %v1418, %v1418
        %v1548 = vpack.c.bf16 %v1419, %v1419
        %v1549 = vpack.c.bf16 %v1420, %v1420
        %v1550 = vpack.c.bf16 %v1421, %v1421
        %v1551 = vpack.c.bf16 %v1422, %v1422
        %v1552 = vpack.c.bf16 %v1423, %v1423
        %1553 = vst [vmem:[#allocation3] sm:$0xf] %v1521
        %1554 = vst [vmem:[#allocation3 + $0x24] sm:$0xf] %v1522
        %1555 = vst [vmem:[#allocation3 + $0x48] sm:$0xf] %v1523
        %1556 = vst [vmem:[#allocation3 + $0x6c] sm:$0xf] %v1524
        %1557 = vst [vmem:[#allocation3 + $0x90] sm:$0xf] %v1525
        %1558 = vst [vmem:[#allocation3 + $0xb4] sm:$0xf] %v1526
        %1559 = vst [vmem:[#allocation3 + $0xd8] sm:$0xf] %v1527
        %1560 = vst [vmem:[#allocation3 + $0xfc] sm:$0xf] %v1528
        %1561 = vst [vmem:[#allocation3 + $0x120] sm:$0xf] %v1529
        %1562 = vst [vmem:[#allocation3 + $0x144] sm:$0xf] %v1530
        %1563 = vst [vmem:[#allocation3 + $0x168] sm:$0xf] %v1531
        %1564 = vst [vmem:[#allocation3 + $0x18c] sm:$0xf] %v1532
        %1565 = vst [vmem:[#allocation3 + $0x1b0] sm:$0xf] %v1533
        %1566 = vst [vmem:[#allocation3 + $0x1d4] sm:$0xf] %v1534
        %1567 = vst [vmem:[#allocation3 + $0x1f8] sm:$0xf] %v1535
        %1568 = vst [vmem:[#allocation3 + $0x21c] sm:$0xf] %v1536
        %1569 = vst [vmem:[#allocation3 + $0x240] sm:$0xf] %v1537
        %1570 = vst [vmem:[#allocation3 + $0x264] sm:$0xf] %v1538
        %1571 = vst [vmem:[#allocation3 + $0x288] sm:$0xf] %v1539
        %1572 = vst [vmem:[#allocation3 + $0x2ac] sm:$0xf] %v1540
        %1573 = vst [vmem:[#allocation3 + $0x2d0] sm:$0xf] %v1541
        %1574 = vst [vmem:[#allocation3 + $0x2f4] sm:$0xf] %v1542
        %1575 = vst [vmem:[#allocation3 + $0x318] sm:$0xf] %v1543
        %1576 = vst [vmem:[#allocation3 + $0x33c] sm:$0xf] %v1544
        %1577 = vst [vmem:[#allocation3 + $0x360] sm:$0xf] %v1545
        %1578 = vst [vmem:[#allocation3 + $0x384] sm:$0xf] %v1546
        %1579 = vst [vmem:[#allocation3 + $0x3a8] sm:$0xf] %v1547
        %1580 = vst [vmem:[#allocation3 + $0x3cc] sm:$0xf] %v1548
        %1581 = vst [vmem:[#allocation3 + $0x3f0] sm:$0xf] %v1549
        %1582 = vst [vmem:[#allocation3 + $0x414] sm:$0xf] %v1550
        %1583 = vst [vmem:[#allocation3 + $0x438] sm:$0xf] %v1551
        %1584 = vst [vmem:[#allocation3 + $0x45c] sm:$0xf] %v1552
        %v1585 = vpack.c.bf16 %v1489, %v1489
        %v1586 = vpack.c.bf16 %v1490, %v1490
        %v1587 = vpack.c.bf16 %v1491, %v1491
        %v1588 = vpack.c.bf16 %v1492, %v1492
        %v1589 = vpack.c.bf16 %v1493, %v1493
        %v1590 = vpack.c.bf16 %v1494, %v1494
        %v1591 = vpack.c.bf16 %v1495, %v1495
        %v1592 = vpack.c.bf16 %v1496, %v1496
        %v1593 = vpack.c.bf16 %v1497, %v1497
        %v1594 = vpack.c.bf16 %v1498, %v1498
        %v1595 = vpack.c.bf16 %v1499, %v1499
        %v1596 = vpack.c.bf16 %v1500, %v1500
        %v1597 = vpack.c.bf16 %v1501, %v1501
        %v1598 = vpack.c.bf16 %v1502, %v1502
        %v1599 = vpack.c.bf16 %v1503, %v1503
        %v1600 = vpack.c.bf16 %v1504, %v1504
        %v1601 = vpack.c.bf16 %v1505, %v1505
        %v1602 = vpack.c.bf16 %v1506, %v1506
        %v1603 = vpack.c.bf16 %v1507, %v1507
        %v1604 = vpack.c.bf16 %v1508, %v1508
        %v1605 = vpack.c.bf16 %v1509, %v1509
        %v1606 = vpack.c.bf16 %v1510, %v1510
        %v1607 = vpack.c.bf16 %v1511, %v1511
        %v1608 = vpack.c.bf16 %v1512, %v1512
        %v1609 = vpack.c.bf16 %v1513, %v1513
        %v1610 = vpack.c.bf16 %v1514, %v1514
        %v1611 = vpack.c.bf16 %v1515, %v1515
        %v1612 = vpack.c.bf16 %v1516, %v1516
        %v1613 = vpack.c.bf16 %v1517, %v1517
        %v1614 = vpack.c.bf16 %v1518, %v1518
        %v1615 = vpack.c.bf16 %v1519, %v1519
        %v1616 = vpack.c.bf16 %v1520, %v1520
        %1617 = vst [vmem:[#allocation3 + $0x8] sm:$0xf] %v1585
        %1618 = vst [vmem:[#allocation3 + $0x2c] sm:$0xf] %v1586
        %1619 = vst [vmem:[#allocation3 + $0x50] sm:$0xf] %v1587
        %1620 = vst [vmem:[#allocation3 + $0x74] sm:$0xf] %v1588
        %1621 = vst [vmem:[#allocation3 + $0x98] sm:$0xf] %v1589
        %1622 = vst [vmem:[#allocation3 + $0xbc] sm:$0xf] %v1590
        %1623 = vst [vmem:[#allocation3 + $0xe0] sm:$0xf] %v1591
        %1624 = vst [vmem:[#allocation3 + $0x104] sm:$0xf] %v1592
        %1625 = vst [vmem:[#allocation3 + $0x128] sm:$0xf] %v1593
        %1626 = vst [vmem:[#allocation3 + $0x14c] sm:$0xf] %v1594
        %1627 = vst [vmem:[#allocation3 + $0x170] sm:$0xf] %v1595
        %1628 = vst [vmem:[#allocation3 + $0x194] sm:$0xf] %v1596
        %1629 = vst [vmem:[#allocation3 + $0x1b8] sm:$0xf] %v1597
        %1630 = vst [vmem:[#allocation3 + $0x1dc] sm:$0xf] %v1598
        %1631 = vst [vmem:[#allocation3 + $0x200] sm:$0xf] %v1599
        %1632 = vst [vmem:[#allocation3 + $0x224] sm:$0xf] %v1600
        %1633 = vst [vmem:[#allocation3 + $0x248] sm:$0xf] %v1601
        %1634 = vst [vmem:[#allocation3 + $0x26c] sm:$0xf] %v1602
        %1635 = vst [vmem:[#allocation3 + $0x290] sm:$0xf] %v1603
        %1636 = vst [vmem:[#allocation3 + $0x2b4] sm:$0xf] %v1604
        %1637 = vst [vmem:[#allocation3 + $0x2d8] sm:$0xf] %v1605
        %1638 = vst [vmem:[#allocation3 + $0x2fc] sm:$0xf] %v1606
        %1639 = vst [vmem:[#allocation3 + $0x320] sm:$0xf] %v1607
        %1640 = vst [vmem:[#allocation3 + $0x344] sm:$0xf] %v1608
        %1641 = vst [vmem:[#allocation3 + $0x368] sm:$0xf] %v1609
        %1642 = vst [vmem:[#allocation3 + $0x38c] sm:$0xf] %v1610
        %1643 = vst [vmem:[#allocation3 + $0x3b0] sm:$0xf] %v1611
        %1644 = vst [vmem:[#allocation3 + $0x3d4] sm:$0xf] %v1612
        %1645 = vst [vmem:[#allocation3 + $0x3f8] sm:$0xf] %v1613
        %1646 = vst [vmem:[#allocation3 + $0x41c] sm:$0xf] %v1614
        %1647 = vst [vmem:[#allocation3 + $0x440] sm:$0xf] %v1615
        %1648 = vst [vmem:[#allocation3 + $0x464] sm:$0xf] %v1616
        %v1649 = vld [vmem:[%s1198] sm:$0xf]
        %v1650 = vld [vmem:[%s1198 + $0x4] sm:$0xf]
        %v1651 = vld [vmem:[%s1198 + $0x8] sm:$0xf]
        %v1652 = vld [vmem:[%s1198 + $0xc] sm:$0xf]
        %v1653 = vld [vmem:[%s1198 + $0x10] sm:$0xf]
        %v1654 = vld [vmem:[%s1198 + $0x14] sm:$0xf]
        %v1655 = vld [vmem:[%s1198 + $0x18] sm:$0xf]
        %v1656 = vld [vmem:[%s1198 + $0x1c] sm:$0xf]
        %v1657 = vld [vmem:[%s1198 + $0x20] sm:$0xf]
        %v1658 = vld [vmem:[%s1198 + $0x24] sm:$0xf]
        %v1659 = vld [vmem:[%s1198 + $0x28] sm:$0xf]
        %v1660 = vld [vmem:[%s1198 + $0x2c] sm:$0xf]
        %v1661 = vld [vmem:[%s1198 + $0x30] sm:$0xf]
        %v1662 = vld [vmem:[%s1198 + $0x34] sm:$0xf]
        %v1663 = vld [vmem:[%s1198 + $0x38] sm:$0xf]
        %v1664 = vld [vmem:[%s1198 + $0x3c] sm:$0xf]
        %v1665 = vld [vmem:[%s1198 + $0x40] sm:$0xf]
        %v1666 = vld [vmem:[%s1198 + $0x44] sm:$0xf]
        %v1667 = vld [vmem:[%s1198 + $0x48] sm:$0xf]
        %v1668 = vld [vmem:[%s1198 + $0x4c] sm:$0xf]
        %v1669 = vld [vmem:[%s1198 + $0x50] sm:$0xf]
        %v1670 = vld [vmem:[%s1198 + $0x54] sm:$0xf]
        %v1671 = vld [vmem:[%s1198 + $0x58] sm:$0xf]
        %v1672 = vld [vmem:[%s1198 + $0x5c] sm:$0xf]
        %v1673 = vld [vmem:[%s1198 + $0x60] sm:$0xf]
        %v1674 = vld [vmem:[%s1198 + $0x64] sm:$0xf]
        %v1675 = vld [vmem:[%s1198 + $0x68] sm:$0xf]
        %v1676 = vld [vmem:[%s1198 + $0x6c] sm:$0xf]
        %v1677 = vld [vmem:[%s1198 + $0x70] sm:$0xf]
        %v1678 = vld [vmem:[%s1198 + $0x74] sm:$0xf]
        %v1679 = vld [vmem:[%s1198 + $0x78] sm:$0xf]
        %v1680 = vld [vmem:[%s1198 + $0x7c] sm:$0xf]
        %1681 = vst [vmem:[#allocation3 + $0x10] sm:$0xf] %v1649
        %1682 = vst [vmem:[#allocation3 + $0x34] sm:$0xf] %v1650
        %1683 = vst [vmem:[#allocation3 + $0x58] sm:$0xf] %v1651
        %1684 = vst [vmem:[#allocation3 + $0x7c] sm:$0xf] %v1652
        %1685 = vst [vmem:[#allocation3 + $0xa0] sm:$0xf] %v1653
        %1686 = vst [vmem:[#allocation3 + $0xc4] sm:$0xf] %v1654
        %1687 = vst [vmem:[#allocation3 + $0xe8] sm:$0xf] %v1655
        %1688 = vst [vmem:[#allocation3 + $0x10c] sm:$0xf] %v1656
        %1689 = vst [vmem:[#allocation3 + $0x130] sm:$0xf] %v1657
        %1690 = vst [vmem:[#allocation3 + $0x154] sm:$0xf] %v1658
        %1691 = vst [vmem:[#allocation3 + $0x178] sm:$0xf] %v1659
        %1692 = vst [vmem:[#allocation3 + $0x19c] sm:$0xf] %v1660
        %1693 = vst [vmem:[#allocation3 + $0x1c0] sm:$0xf] %v1661
        %1694 = vst [vmem:[#allocation3 + $0x1e4] sm:$0xf] %v1662
        %1695 = vst [vmem:[#allocation3 + $0x208] sm:$0xf] %v1663
        %1696 = vst [vmem:[#allocation3 + $0x22c] sm:$0xf] %v1664
        %1697 = vst [vmem:[#allocation3 + $0x250] sm:$0xf] %v1665
        %1698 = vst [vmem:[#allocation3 + $0x274] sm:$0xf] %v1666
        %1699 = vst [vmem:[#allocation3 + $0x298] sm:$0xf] %v1667
        %1700 = vst [vmem:[#allocation3 + $0x2bc] sm:$0xf] %v1668
        %1701 = vst [vmem:[#allocation3 + $0x2e0] sm:$0xf] %v1669
        %1702 = vst [vmem:[#allocation3 + $0x304] sm:$0xf] %v1670
        %1703 = vst [vmem:[#allocation3 + $0x328] sm:$0xf] %v1671
        %1704 = vst [vmem:[#allocation3 + $0x34c] sm:$0xf] %v1672
        %1705 = vst [vmem:[#allocation3 + $0x370] sm:$0xf] %v1673
        %1706 = vst [vmem:[#allocation3 + $0x394] sm:$0xf] %v1674
        %1707 = vst [vmem:[#allocation3 + $0x3b8] sm:$0xf] %v1675
        %1708 = vst [vmem:[#allocation3 + $0x3dc] sm:$0xf] %v1676
        %1709 = vst [vmem:[#allocation3 + $0x400] sm:$0xf] %v1677
        %1710 = vst [vmem:[#allocation3 + $0x424] sm:$0xf] %v1678
        %1711 = vst [vmem:[#allocation3 + $0x448] sm:$0xf] %v1679
        %1712 = vst [vmem:[#allocation3 + $0x46c] sm:$0xf] %v1680
        %v1713 = vunpack.c.l.bf16 %v1649
        %v1714 = vunpack.c.l.bf16 %v1650
        %v1715 = vunpack.c.l.bf16 %v1651
        %v1716 = vunpack.c.l.bf16 %v1652
        %v1717 = vunpack.c.l.bf16 %v1653
        %v1718 = vunpack.c.l.bf16 %v1654
        %v1719 = vunpack.c.l.bf16 %v1655
        %v1720 = vunpack.c.l.bf16 %v1656
        %v1721 = vunpack.c.l.bf16 %v1657
        %v1722 = vunpack.c.l.bf16 %v1658
        %v1723 = vunpack.c.l.bf16 %v1659
        %v1724 = vunpack.c.l.bf16 %v1660
        %v1725 = vunpack.c.l.bf16 %v1661
        %v1726 = vunpack.c.l.bf16 %v1662
        %v1727 = vunpack.c.l.bf16 %v1663
        %v1728 = vunpack.c.l.bf16 %v1664
        %v1729 = vunpack.c.l.bf16 %v1665
        %v1730 = vunpack.c.l.bf16 %v1666
        %v1731 = vunpack.c.l.bf16 %v1667
        %v1732 = vunpack.c.l.bf16 %v1668
        %v1733 = vunpack.c.l.bf16 %v1669
        %v1734 = vunpack.c.l.bf16 %v1670
        %v1735 = vunpack.c.l.bf16 %v1671
        %v1736 = vunpack.c.l.bf16 %v1672
        %v1737 = vunpack.c.l.bf16 %v1673
        %v1738 = vunpack.c.l.bf16 %v1674
        %v1739 = vunpack.c.l.bf16 %v1675
        %v1740 = vunpack.c.l.bf16 %v1676
        %v1741 = vunpack.c.l.bf16 %v1677
        %v1742 = vunpack.c.l.bf16 %v1678
        %v1743 = vunpack.c.l.bf16 %v1679
        %v1744 = vunpack.c.l.bf16 %v1680
        %v1745 = vrot.slane %v1713, 7
        %v1746 = vrot.slane %v1714, 7
        %v1747 = vrot.slane %v1715, 7
        %v1748 = vrot.slane %v1716, 7
        %v1749 = vrot.slane %v1717, 7
        %v1750 = vrot.slane %v1718, 7
        %v1751 = vrot.slane %v1719, 7
        %v1752 = vrot.slane %v1720, 7
        %v1753 = vrot.slane %v1721, 7
        %v1754 = vrot.slane %v1722, 7
        %v1755 = vrot.slane %v1723, 7
        %v1756 = vrot.slane %v1724, 7
        %v1757 = vrot.slane %v1725, 7
        %v1758 = vrot.slane %v1726, 7
        %v1759 = vrot.slane %v1727, 7
        %v1760 = vrot.slane %v1728, 7
        %v1761 = vrot.slane %v1729, 7
        %v1762 = vrot.slane %v1730, 7
        %v1763 = vrot.slane %v1731, 7
        %v1764 = vrot.slane %v1732, 7
        %v1765 = vrot.slane %v1733, 7
        %v1766 = vrot.slane %v1734, 7
        %v1767 = vrot.slane %v1735, 7
        %v1768 = vrot.slane %v1736, 7
        %v1769 = vrot.slane %v1737, 7
        %v1770 = vrot.slane %v1738, 7
        %v1771 = vrot.slane %v1739, 7
        %v1772 = vrot.slane %v1740, 7
        %v1773 = vrot.slane %v1741, 7
        %v1774 = vrot.slane %v1742, 7
        %v1775 = vrot.slane %v1743, 7
        %v1776 = vrot.slane %v1744, 7
        %v1777 = vsel %vm1359, %v1775, %v1776
        %v1778 = vsel %vm1359, %v1774, %v1775
        %v1779 = vsel %vm1359, %v1773, %v1774
        %v1780 = vsel %vm1359, %v1772, %v1773
        %v1781 = vsel %vm1359, %v1771, %v1772
        %v1782 = vsel %vm1359, %v1770, %v1771
        %v1783 = vsel %vm1359, %v1769, %v1770
        %v1784 = vsel %vm1359, %v1768, %v1769
        %v1785 = vsel %vm1359, %v1767, %v1768
        %v1786 = vsel %vm1359, %v1766, %v1767
        %v1787 = vsel %vm1359, %v1765, %v1766
        %v1788 = vsel %vm1359, %v1764, %v1765
        %v1789 = vsel %vm1359, %v1763, %v1764
        %v1790 = vsel %vm1359, %v1762, %v1763
        %v1791 = vsel %vm1359, %v1761, %v1762
        %v1792 = vsel %vm1359, %v1760, %v1761
        %v1793 = vsel %vm1359, %v1759, %v1760
        %v1794 = vsel %vm1359, %v1758, %v1759
        %v1795 = vsel %vm1359, %v1757, %v1758
        %v1796 = vsel %vm1359, %v1756, %v1757
        %v1797 = vsel %vm1359, %v1755, %v1756
        %v1798 = vsel %vm1359, %v1754, %v1755
        %v1799 = vsel %vm1359, %v1753, %v1754
        %v1800 = vsel %vm1359, %v1752, %v1753
        %v1801 = vsel %vm1359, %v1751, %v1752
        %v1802 = vsel %vm1359, %v1750, %v1751
        %v1803 = vsel %vm1359, %v1749, %v1750
        %v1804 = vsel %vm1359, %v1748, %v1749
        %v1805 = vsel %vm1359, %v1747, %v1748
        %v1806 = vsel %vm1359, %v1746, %v1747
        %v1807 = vsel %vm1359, %v1745, %v1746
        %v1808 = vsel %vm1359, %v1776, %v1745
        %v1809 = vsel %vm753, %v1808, 0.0
        %v1810 = vsel %vm754, %v1807, 0.0
        %v1811 = vsel %vm755, %v1806, 0.0
        %v1812 = vsel %vm756, %v1805, 0.0
        %v1813 = vsel %vm757, %v1804, 0.0
        %v1814 = vsel %vm758, %v1803, 0.0
        %v1815 = vsel %vm759, %v1802, 0.0
        %v1816 = vsel %vm760, %v1801, 0.0
        %v1817 = vsel %vm761, %v1800, 0.0
        %v1818 = vsel %vm762, %v1799, 0.0
        %v1819 = vsel %vm763, %v1798, 0.0
        %v1820 = vsel %vm764, %v1797, 0.0
        %v1821 = vsel %vm765, %v1796, 0.0
        %v1822 = vsel %vm766, %v1795, 0.0
        %v1823 = vsel %vm767, %v1794, 0.0
        %v1824 = vsel %vm768, %v1793, 0.0
        %v1825 = vsel %vm769, %v1792, 0.0
        %v1826 = vsel %vm770, %v1791, 0.0
        %v1827 = vsel %vm771, %v1790, 0.0
        %v1828 = vsel %vm772, %v1789, 0.0
        %v1829 = vsel %vm773, %v1788, 0.0
        %v1830 = vsel %vm774, %v1787, 0.0
        %v1831 = vsel %vm775, %v1786, 0.0
        %v1832 = vsel %vm776, %v1785, 0.0
        %v1833 = vsel %vm777, %v1784, 0.0
        %v1834 = vsel %vm778, %v1783, 0.0
        %v1835 = vsel %vm779, %v1782, 0.0
        %v1836 = vsel %vm780, %v1781, 0.0
        %v1837 = vsel %vm781, %v1780, 0.0
        %v1838 = vsel %vm782, %v1779, 0.0
        %v1839 = vsel %vm783, %v1778, 0.0
        %v1840 = vsel %vm784, %v1777, 0.0
        %v1841 = vrot.slane %v1713, 1
        %v1842 = vrot.slane %v1714, 1
        %v1843 = vrot.slane %v1715, 1
        %v1844 = vrot.slane %v1716, 1
        %v1845 = vrot.slane %v1717, 1
        %v1846 = vrot.slane %v1718, 1
        %v1847 = vrot.slane %v1719, 1
        %v1848 = vrot.slane %v1720, 1
        %v1849 = vrot.slane %v1721, 1
        %v1850 = vrot.slane %v1722, 1
        %v1851 = vrot.slane %v1723, 1
        %v1852 = vrot.slane %v1724, 1
        %v1853 = vrot.slane %v1725, 1
        %v1854 = vrot.slane %v1726, 1
        %v1855 = vrot.slane %v1727, 1
        %v1856 = vrot.slane %v1728, 1
        %v1857 = vrot.slane %v1729, 1
        %v1858 = vrot.slane %v1730, 1
        %v1859 = vrot.slane %v1731, 1
        %v1860 = vrot.slane %v1732, 1
        %v1861 = vrot.slane %v1733, 1
        %v1862 = vrot.slane %v1734, 1
        %v1863 = vrot.slane %v1735, 1
        %v1864 = vrot.slane %v1736, 1
        %v1865 = vrot.slane %v1737, 1
        %v1866 = vrot.slane %v1738, 1
        %v1867 = vrot.slane %v1739, 1
        %v1868 = vrot.slane %v1740, 1
        %v1869 = vrot.slane %v1741, 1
        %v1870 = vrot.slane %v1742, 1
        %v1871 = vrot.slane %v1743, 1
        %v1872 = vrot.slane %v1744, 1
        %v1873 = vsel %vm1456, %v1871, %v1872
        %v1874 = vsel %vm1456, %v1870, %v1871
        %v1875 = vsel %vm1456, %v1869, %v1870
        %v1876 = vsel %vm1456, %v1868, %v1869
        %v1877 = vsel %vm1456, %v1867, %v1868
        %v1878 = vsel %vm1456, %v1866, %v1867
        %v1879 = vsel %vm1456, %v1865, %v1866
        %v1880 = vsel %vm1456, %v1864, %v1865
        %v1881 = vsel %vm1456, %v1863, %v1864
        %v1882 = vsel %vm1456, %v1862, %v1863
        %v1883 = vsel %vm1456, %v1861, %v1862
        %v1884 = vsel %vm1456, %v1860, %v1861
        %v1885 = vsel %vm1456, %v1859, %v1860
        %v1886 = vsel %vm1456, %v1858, %v1859
        %v1887 = vsel %vm1456, %v1857, %v1858
        %v1888 = vsel %vm1456, %v1856, %v1857
        %v1889 = vsel %vm1456, %v1855, %v1856
        %v1890 = vsel %vm1456, %v1854, %v1855
        %v1891 = vsel %vm1456, %v1853, %v1854
        %v1892 = vsel %vm1456, %v1852, %v1853
        %v1893 = vsel %vm1456, %v1851, %v1852
        %v1894 = vsel %vm1456, %v1850, %v1851
        %v1895 = vsel %vm1456, %v1849, %v1850
        %v1896 = vsel %vm1456, %v1848, %v1849
        %v1897 = vsel %vm1456, %v1847, %v1848
        %v1898 = vsel %vm1456, %v1846, %v1847
        %v1899 = vsel %vm1456, %v1845, %v1846
        %v1900 = vsel %vm1456, %v1844, %v1845
        %v1901 = vsel %vm1456, %v1843, %v1844
        %v1902 = vsel %vm1456, %v1842, %v1843
        %v1903 = vsel %vm1456, %v1841, %v1842
        %v1904 = vsel %vm1456, %v1872, %v1841
        %v1905 = vsel %vm785, %v1903, 0.0
        %v1906 = vsel %vm786, %v1902, 0.0
        %v1907 = vsel %vm787, %v1901, 0.0
        %v1908 = vsel %vm788, %v1900, 0.0
        %v1909 = vsel %vm789, %v1899, 0.0
        %v1910 = vsel %vm790, %v1898, 0.0
        %v1911 = vsel %vm791, %v1897, 0.0
        %v1912 = vsel %vm792, %v1896, 0.0
        %v1913 = vsel %vm793, %v1895, 0.0
        %v1914 = vsel %vm794, %v1894, 0.0
        %v1915 = vsel %vm795, %v1893, 0.0
        %v1916 = vsel %vm796, %v1892, 0.0
        %v1917 = vsel %vm797, %v1891, 0.0
        %v1918 = vsel %vm798, %v1890, 0.0
        %v1919 = vsel %vm799, %v1889, 0.0
        %v1920 = vsel %vm800, %v1888, 0.0
        %v1921 = vsel %vm801, %v1887, 0.0
        %v1922 = vsel %vm802, %v1886, 0.0
        %v1923 = vsel %vm803, %v1885, 0.0
        %v1924 = vsel %vm804, %v1884, 0.0
        %v1925 = vsel %vm805, %v1883, 0.0
        %v1926 = vsel %vm806, %v1882, 0.0
        %v1927 = vsel %vm807, %v1881, 0.0
        %v1928 = vsel %vm808, %v1880, 0.0
        %v1929 = vsel %vm809, %v1879, 0.0
        %v1930 = vsel %vm810, %v1878, 0.0
        %v1931 = vsel %vm811, %v1877, 0.0
        %v1932 = vsel %vm812, %v1876, 0.0
        %v1933 = vsel %vm813, %v1875, 0.0
        %v1934 = vsel %vm814, %v1874, 0.0
        %v1935 = vsel %vm815, %v1873, 0.0
        %v1936 = vsel %vm816, %v1904, 0.0
        %v1937 = vpack.c.bf16 %v1809, %v1809
        %v1938 = vpack.c.bf16 %v1810, %v1810
        %v1939 = vpack.c.bf16 %v1811, %v1811
        %v1940 = vpack.c.bf16 %v1812, %v1812
        %v1941 = vpack.c.bf16 %v1813, %v1813
        %v1942 = vpack.c.bf16 %v1814, %v1814
        %v1943 = vpack.c.bf16 %v1815, %v1815
        %v1944 = vpack.c.bf16 %v1816, %v1816
        %v1945 = vpack.c.bf16 %v1817, %v1817
        %v1946 = vpack.c.bf16 %v1818, %v1818
        %v1947 = vpack.c.bf16 %v1819, %v1819
        %v1948 = vpack.c.bf16 %v1820, %v1820
        %v1949 = vpack.c.bf16 %v1821, %v1821
        %v1950 = vpack.c.bf16 %v1822, %v1822
        %v1951 = vpack.c.bf16 %v1823, %v1823
        %v1952 = vpack.c.bf16 %v1824, %v1824
        %v1953 = vpack.c.bf16 %v1825, %v1825
        %v1954 = vpack.c.bf16 %v1826, %v1826
        %v1955 = vpack.c.bf16 %v1827, %v1827
        %v1956 = vpack.c.bf16 %v1828, %v1828
        %v1957 = vpack.c.bf16 %v1829, %v1829
        %v1958 = vpack.c.bf16 %v1830, %v1830
        %v1959 = vpack.c.bf16 %v1831, %v1831
        %v1960 = vpack.c.bf16 %v1832, %v1832
        %v1961 = vpack.c.bf16 %v1833, %v1833
        %v1962 = vpack.c.bf16 %v1834, %v1834
        %v1963 = vpack.c.bf16 %v1835, %v1835
        %v1964 = vpack.c.bf16 %v1836, %v1836
        %v1965 = vpack.c.bf16 %v1837, %v1837
        %v1966 = vpack.c.bf16 %v1838, %v1838
        %v1967 = vpack.c.bf16 %v1839, %v1839
        %v1968 = vpack.c.bf16 %v1840, %v1840
        %1969 = vst [vmem:[#allocation3 + $0xc] sm:$0xf] %v1937
        %1970 = vst [vmem:[#allocation3 + $0x30] sm:$0xf] %v1938
        %1971 = vst [vmem:[#allocation3 + $0x54] sm:$0xf] %v1939
        %1972 = vst [vmem:[#allocation3 + $0x78] sm:$0xf] %v1940
        %1973 = vst [vmem:[#allocation3 + $0x9c] sm:$0xf] %v1941
        %1974 = vst [vmem:[#allocation3 + $0xc0] sm:$0xf] %v1942
        %1975 = vst [vmem:[#allocation3 + $0xe4] sm:$0xf] %v1943
        %1976 = vst [vmem:[#allocation3 + $0x108] sm:$0xf] %v1944
        %1977 = vst [vmem:[#allocation3 + $0x12c] sm:$0xf] %v1945
        %1978 = vst [vmem:[#allocation3 + $0x150] sm:$0xf] %v1946
        %1979 = vst [vmem:[#allocation3 + $0x174] sm:$0xf] %v1947
        %1980 = vst [vmem:[#allocation3 + $0x198] sm:$0xf] %v1948
        %1981 = vst [vmem:[#allocation3 + $0x1bc] sm:$0xf] %v1949
        %1982 = vst [vmem:[#allocation3 + $0x1e0] sm:$0xf] %v1950
        %1983 = vst [vmem:[#allocation3 + $0x204] sm:$0xf] %v1951
        %1984 = vst [vmem:[#allocation3 + $0x228] sm:$0xf] %v1952
        %1985 = vst [vmem:[#allocation3 + $0x24c] sm:$0xf] %v1953
        %1986 = vst [vmem:[#allocation3 + $0x270] sm:$0xf] %v1954
        %1987 = vst [vmem:[#allocation3 + $0x294] sm:$0xf] %v1955
        %1988 = vst [vmem:[#allocation3 + $0x2b8] sm:$0xf] %v1956
        %1989 = vst [vmem:[#allocation3 + $0x2dc] sm:$0xf] %v1957
        %1990 = vst [vmem:[#allocation3 + $0x300] sm:$0xf] %v1958
        %1991 = vst [vmem:[#allocation3 + $0x324] sm:$0xf] %v1959
        %1992 = vst [vmem:[#allocation3 + $0x348] sm:$0xf] %v1960
        %1993 = vst [vmem:[#allocation3 + $0x36c] sm:$0xf] %v1961
        %1994 = vst [vmem:[#allocation3 + $0x390] sm:$0xf] %v1962
        %1995 = vst [vmem:[#allocation3 + $0x3b4] sm:$0xf] %v1963
        %1996 = vst [vmem:[#allocation3 + $0x3d8] sm:$0xf] %v1964
        %1997 = vst [vmem:[#allocation3 + $0x3fc] sm:$0xf] %v1965
        %1998 = vst [vmem:[#allocation3 + $0x420] sm:$0xf] %v1966
        %1999 = vst [vmem:[#allocation3 + $0x444] sm:$0xf] %v1967
        %2000 = vst [vmem:[#allocation3 + $0x468] sm:$0xf] %v1968
        %v2001 = vpack.c.bf16 %v1905, %v1905
        %v2002 = vpack.c.bf16 %v1906, %v1906
        %v2003 = vpack.c.bf16 %v1907, %v1907
        %v2004 = vpack.c.bf16 %v1908, %v1908
        %v2005 = vpack.c.bf16 %v1909, %v1909
        %v2006 = vpack.c.bf16 %v1910, %v1910
        %v2007 = vpack.c.bf16 %v1911, %v1911
        %v2008 = vpack.c.bf16 %v1912, %v1912
        %v2009 = vpack.c.bf16 %v1913, %v1913
        %v2010 = vpack.c.bf16 %v1914, %v1914
        %v2011 = vpack.c.bf16 %v1915, %v1915
        %v2012 = vpack.c.bf16 %v1916, %v1916
        %v2013 = vpack.c.bf16 %v1917, %v1917
        %v2014 = vpack.c.bf16 %v1918, %v1918
        %v2015 = vpack.c.bf16 %v1919, %v1919
        %v2016 = vpack.c.bf16 %v1920, %v1920
        %v2017 = vpack.c.bf16 %v1921, %v1921
        %v2018 = vpack.c.bf16 %v1922, %v1922
        %v2019 = vpack.c.bf16 %v1923, %v1923
        %v2020 = vpack.c.bf16 %v1924, %v1924
        %v2021 = vpack.c.bf16 %v1925, %v1925
        %v2022 = vpack.c.bf16 %v1926, %v1926
        %v2023 = vpack.c.bf16 %v1927, %v1927
        %v2024 = vpack.c.bf16 %v1928, %v1928
        %v2025 = vpack.c.bf16 %v1929, %v1929
        %v2026 = vpack.c.bf16 %v1930, %v1930
        %v2027 = vpack.c.bf16 %v1931, %v1931
        %v2028 = vpack.c.bf16 %v1932, %v1932
        %v2029 = vpack.c.bf16 %v1933, %v1933
        %v2030 = vpack.c.bf16 %v1934, %v1934
        %v2031 = vpack.c.bf16 %v1935, %v1935
        %v2032 = vpack.c.bf16 %v1936, %v1936
        %2033 = vst [vmem:[#allocation3 + $0x14] sm:$0xf] %v2001
        %2034 = vst [vmem:[#allocation3 + $0x38] sm:$0xf] %v2002
        %2035 = vst [vmem:[#allocation3 + $0x5c] sm:$0xf] %v2003
        %2036 = vst [vmem:[#allocation3 + $0x80] sm:$0xf] %v2004
        %2037 = vst [vmem:[#allocation3 + $0xa4] sm:$0xf] %v2005
        %2038 = vst [vmem:[#allocation3 + $0xc8] sm:$0xf] %v2006
        %2039 = vst [vmem:[#allocation3 + $0xec] sm:$0xf] %v2007
        %2040 = vst [vmem:[#allocation3 + $0x110] sm:$0xf] %v2008
        %2041 = vst [vmem:[#allocation3 + $0x134] sm:$0xf] %v2009
        %2042 = vst [vmem:[#allocation3 + $0x158] sm:$0xf] %v2010
        %2043 = vst [vmem:[#allocation3 + $0x17c] sm:$0xf] %v2011
        %2044 = vst [vmem:[#allocation3 + $0x1a0] sm:$0xf] %v2012
        %2045 = vst [vmem:[#allocation3 + $0x1c4] sm:$0xf] %v2013
        %2046 = vst [vmem:[#allocation3 + $0x1e8] sm:$0xf] %v2014
        %2047 = vst [vmem:[#allocation3 + $0x20c] sm:$0xf] %v2015
        %2048 = vst [vmem:[#allocation3 + $0x230] sm:$0xf] %v2016
        %2049 = vst [vmem:[#allocation3 + $0x254] sm:$0xf] %v2017
        %2050 = vst [vmem:[#allocation3 + $0x278] sm:$0xf] %v2018
        %2051 = vst [vmem:[#allocation3 + $0x29c] sm:$0xf] %v2019
        %2052 = vst [vmem:[#allocation3 + $0x2c0] sm:$0xf] %v2020
        %2053 = vst [vmem:[#allocation3 + $0x2e4] sm:$0xf] %v2021
        %2054 = vst [vmem:[#allocation3 + $0x308] sm:$0xf] %v2022
        %2055 = vst [vmem:[#allocation3 + $0x32c] sm:$0xf] %v2023
        %2056 = vst [vmem:[#allocation3 + $0x350] sm:$0xf] %v2024
        %2057 = vst [vmem:[#allocation3 + $0x374] sm:$0xf] %v2025
        %2058 = vst [vmem:[#allocation3 + $0x398] sm:$0xf] %v2026
        %2059 = vst [vmem:[#allocation3 + $0x3bc] sm:$0xf] %v2027
        %2060 = vst [vmem:[#allocation3 + $0x3e0] sm:$0xf] %v2028
        %2061 = vst [vmem:[#allocation3 + $0x404] sm:$0xf] %v2029
        %2062 = vst [vmem:[#allocation3 + $0x428] sm:$0xf] %v2030
        %2063 = vst [vmem:[#allocation3 + $0x44c] sm:$0xf] %v2031
        %2064 = vst [vmem:[#allocation3 + $0x470] sm:$0xf] %v2032
        %s2065 = scalar_lea.vmem [#allocation2], 16
        %v2066 = vld [vmem:[%s2065] sm:$0xf]
        %v2067 = vld [vmem:[%s2065 + $0x4] sm:$0xf]
        %v2068 = vld [vmem:[%s2065 + $0x8] sm:$0xf]
        %v2069 = vld [vmem:[%s2065 + $0xc] sm:$0xf]
        %v2070 = vld [vmem:[%s2065 + $0x10] sm:$0xf]
        %v2071 = vld [vmem:[%s2065 + $0x14] sm:$0xf]
        %v2072 = vld [vmem:[%s2065 + $0x18] sm:$0xf]
        %v2073 = vld [vmem:[%s2065 + $0x1c] sm:$0xf]
        %v2074 = vld [vmem:[%s2065 + $0x20] sm:$0xf]
        %v2075 = vld [vmem:[%s2065 + $0x24] sm:$0xf]
        %v2076 = vld [vmem:[%s2065 + $0x28] sm:$0xf]
        %v2077 = vld [vmem:[%s2065 + $0x2c] sm:$0xf]
        %v2078 = vld [vmem:[%s2065 + $0x30] sm:$0xf]
        %v2079 = vld [vmem:[%s2065 + $0x34] sm:$0xf]
        %v2080 = vld [vmem:[%s2065 + $0x38] sm:$0xf]
        %v2081 = vld [vmem:[%s2065 + $0x3c] sm:$0xf]
        %v2082 = vld [vmem:[%s2065 + $0x40] sm:$0xf]
        %v2083 = vld [vmem:[%s2065 + $0x44] sm:$0xf]
        %v2084 = vld [vmem:[%s2065 + $0x48] sm:$0xf]
        %v2085 = vld [vmem:[%s2065 + $0x4c] sm:$0xf]
        %v2086 = vld [vmem:[%s2065 + $0x50] sm:$0xf]
        %v2087 = vld [vmem:[%s2065 + $0x54] sm:$0xf]
        %v2088 = vld [vmem:[%s2065 + $0x58] sm:$0xf]
        %v2089 = vld [vmem:[%s2065 + $0x5c] sm:$0xf]
        %v2090 = vld [vmem:[%s2065 + $0x60] sm:$0xf]
        %v2091 = vld [vmem:[%s2065 + $0x64] sm:$0xf]
        %v2092 = vld [vmem:[%s2065 + $0x68] sm:$0xf]
        %v2093 = vld [vmem:[%s2065 + $0x6c] sm:$0xf]
        %v2094 = vld [vmem:[%s2065 + $0x70] sm:$0xf]
        %v2095 = vld [vmem:[%s2065 + $0x74] sm:$0xf]
        %v2096 = vld [vmem:[%s2065 + $0x78] sm:$0xf]
        %v2097 = vld [vmem:[%s2065 + $0x7c] sm:$0xf]
        %2098 = vst [vmem:[#allocation3 + $0x1c] sm:$0xf] %v2066
        %2099 = vst [vmem:[#allocation3 + $0x40] sm:$0xf] %v2067
        %2100 = vst [vmem:[#allocation3 + $0x64] sm:$0xf] %v2068
        %2101 = vst [vmem:[#allocation3 + $0x88] sm:$0xf] %v2069
        %2102 = vst [vmem:[#allocation3 + $0xac] sm:$0xf] %v2070
        %2103 = vst [vmem:[#allocation3 + $0xd0] sm:$0xf] %v2071
        %2104 = vst [vmem:[#allocation3 + $0xf4] sm:$0xf] %v2072
        %2105 = vst [vmem:[#allocation3 + $0x118] sm:$0xf] %v2073
        %2106 = vst [vmem:[#allocation3 + $0x13c] sm:$0xf] %v2074
        %2107 = vst [vmem:[#allocation3 + $0x160] sm:$0xf] %v2075
        %2108 = vst [vmem:[#allocation3 + $0x184] sm:$0xf] %v2076
        %2109 = vst [vmem:[#allocation3 + $0x1a8] sm:$0xf] %v2077
        %2110 = vst [vmem:[#allocation3 + $0x1cc] sm:$0xf] %v2078
        %2111 = vst [vmem:[#allocation3 + $0x1f0] sm:$0xf] %v2079
        %2112 = vst [vmem:[#allocation3 + $0x214] sm:$0xf] %v2080
        %2113 = vst [vmem:[#allocation3 + $0x238] sm:$0xf] %v2081
        %2114 = vst [vmem:[#allocation3 + $0x25c] sm:$0xf] %v2082
        %2115 = vst [vmem:[#allocation3 + $0x280] sm:$0xf] %v2083
        %2116 = vst [vmem:[#allocation3 + $0x2a4] sm:$0xf] %v2084
        %2117 = vst [vmem:[#allocation3 + $0x2c8] sm:$0xf] %v2085
        %2118 = vst [vmem:[#allocation3 + $0x2ec] sm:$0xf] %v2086
        %2119 = vst [vmem:[#allocation3 + $0x310] sm:$0xf] %v2087
        %2120 = vst [vmem:[#allocation3 + $0x334] sm:$0xf] %v2088
        %2121 = vst [vmem:[#allocation3 + $0x358] sm:$0xf] %v2089
        %2122 = vst [vmem:[#allocation3 + $0x37c] sm:$0xf] %v2090
        %2123 = vst [vmem:[#allocation3 + $0x3a0] sm:$0xf] %v2091
        %2124 = vst [vmem:[#allocation3 + $0x3c4] sm:$0xf] %v2092
        %2125 = vst [vmem:[#allocation3 + $0x3e8] sm:$0xf] %v2093
        %2126 = vst [vmem:[#allocation3 + $0x40c] sm:$0xf] %v2094
        %2127 = vst [vmem:[#allocation3 + $0x430] sm:$0xf] %v2095
        %2128 = vst [vmem:[#allocation3 + $0x454] sm:$0xf] %v2096
        %2129 = vst [vmem:[#allocation3 + $0x478] sm:$0xf] %v2097
        %v2130 = vunpack.c.l.bf16 %v2066
        %v2131 = vunpack.c.l.bf16 %v2067
        %v2132 = vunpack.c.l.bf16 %v2068
        %v2133 = vunpack.c.l.bf16 %v2069
        %v2134 = vunpack.c.l.bf16 %v2070
        %v2135 = vunpack.c.l.bf16 %v2071
        %v2136 = vunpack.c.l.bf16 %v2072
        %v2137 = vunpack.c.l.bf16 %v2073
        %v2138 = vunpack.c.l.bf16 %v2074
        %v2139 = vunpack.c.l.bf16 %v2075
        %v2140 = vunpack.c.l.bf16 %v2076
        %v2141 = vunpack.c.l.bf16 %v2077
        %v2142 = vunpack.c.l.bf16 %v2078
        %v2143 = vunpack.c.l.bf16 %v2079
        %v2144 = vunpack.c.l.bf16 %v2080
        %v2145 = vunpack.c.l.bf16 %v2081
        %v2146 = vunpack.c.l.bf16 %v2082
        %v2147 = vunpack.c.l.bf16 %v2083
        %v2148 = vunpack.c.l.bf16 %v2084
        %v2149 = vunpack.c.l.bf16 %v2085
        %v2150 = vunpack.c.l.bf16 %v2086
        %v2151 = vunpack.c.l.bf16 %v2087
        %v2152 = vunpack.c.l.bf16 %v2088
        %v2153 = vunpack.c.l.bf16 %v2089
        %v2154 = vunpack.c.l.bf16 %v2090
        %v2155 = vunpack.c.l.bf16 %v2091
        %v2156 = vunpack.c.l.bf16 %v2092
        %v2157 = vunpack.c.l.bf16 %v2093
        %v2158 = vunpack.c.l.bf16 %v2094
        %v2159 = vunpack.c.l.bf16 %v2095
        %v2160 = vunpack.c.l.bf16 %v2096
        %v2161 = vunpack.c.l.bf16 %v2097
        %v2162 = vrot.slane %v2130, 7
        %v2163 = vrot.slane %v2131, 7
        %v2164 = vrot.slane %v2132, 7
        %v2165 = vrot.slane %v2133, 7
        %v2166 = vrot.slane %v2134, 7
        %v2167 = vrot.slane %v2135, 7
        %v2168 = vrot.slane %v2136, 7
        %v2169 = vrot.slane %v2137, 7
        %v2170 = vrot.slane %v2138, 7
        %v2171 = vrot.slane %v2139, 7
        %v2172 = vrot.slane %v2140, 7
        %v2173 = vrot.slane %v2141, 7
        %v2174 = vrot.slane %v2142, 7
        %v2175 = vrot.slane %v2143, 7
        %v2176 = vrot.slane %v2144, 7
        %v2177 = vrot.slane %v2145, 7
        %v2178 = vrot.slane %v2146, 7
        %v2179 = vrot.slane %v2147, 7
        %v2180 = vrot.slane %v2148, 7
        %v2181 = vrot.slane %v2149, 7
        %v2182 = vrot.slane %v2150, 7
        %v2183 = vrot.slane %v2151, 7
        %v2184 = vrot.slane %v2152, 7
        %v2185 = vrot.slane %v2153, 7
        %v2186 = vrot.slane %v2154, 7
        %v2187 = vrot.slane %v2155, 7
        %v2188 = vrot.slane %v2156, 7
        %v2189 = vrot.slane %v2157, 7
        %v2190 = vrot.slane %v2158, 7
        %v2191 = vrot.slane %v2159, 7
        %v2192 = vrot.slane %v2160, 7
        %v2193 = vrot.slane %v2161, 7
        %v2194 = vsel %vm1359, %v2192, %v2193
        %v2195 = vsel %vm1359, %v2191, %v2192
        %v2196 = vsel %vm1359, %v2190, %v2191
        %v2197 = vsel %vm1359, %v2189, %v2190
        %v2198 = vsel %vm1359, %v2188, %v2189
        %v2199 = vsel %vm1359, %v2187, %v2188
        %v2200 = vsel %vm1359, %v2186, %v2187
        %v2201 = vsel %vm1359, %v2185, %v2186
        %v2202 = vsel %vm1359, %v2184, %v2185
        %v2203 = vsel %vm1359, %v2183, %v2184
        %v2204 = vsel %vm1359, %v2182, %v2183
        %v2205 = vsel %vm1359, %v2181, %v2182
        %v2206 = vsel %vm1359, %v2180, %v2181
        %v2207 = vsel %vm1359, %v2179, %v2180
        %v2208 = vsel %vm1359, %v2178, %v2179
        %v2209 = vsel %vm1359, %v2177, %v2178
        %v2210 = vsel %vm1359, %v2176, %v2177
        %v2211 = vsel %vm1359, %v2175, %v2176
        %v2212 = vsel %vm1359, %v2174, %v2175
        %v2213 = vsel %vm1359, %v2173, %v2174
        %v2214 = vsel %vm1359, %v2172, %v2173
        %v2215 = vsel %vm1359, %v2171, %v2172
        %v2216 = vsel %vm1359, %v2170, %v2171
        %v2217 = vsel %vm1359, %v2169, %v2170
        %v2218 = vsel %vm1359, %v2168, %v2169
        %v2219 = vsel %vm1359, %v2167, %v2168
        %v2220 = vsel %vm1359, %v2166, %v2167
        %v2221 = vsel %vm1359, %v2165, %v2166
        %v2222 = vsel %vm1359, %v2164, %v2165
        %v2223 = vsel %vm1359, %v2163, %v2164
        %v2224 = vsel %vm1359, %v2162, %v2163
        %v2225 = vsel %vm1359, %v2193, %v2162
        %v2226 = vsel %vm753, %v2225, 0.0
        %v2227 = vsel %vm754, %v2224, 0.0
        %v2228 = vsel %vm755, %v2223, 0.0
        %v2229 = vsel %vm756, %v2222, 0.0
        %v2230 = vsel %vm757, %v2221, 0.0
        %v2231 = vsel %vm758, %v2220, 0.0
        %v2232 = vsel %vm759, %v2219, 0.0
        %v2233 = vsel %vm760, %v2218, 0.0
        %v2234 = vsel %vm761, %v2217, 0.0
        %v2235 = vsel %vm762, %v2216, 0.0
        %v2236 = vsel %vm763, %v2215, 0.0
        %v2237 = vsel %vm764, %v2214, 0.0
        %v2238 = vsel %vm765, %v2213, 0.0
        %v2239 = vsel %vm766, %v2212, 0.0
        %v2240 = vsel %vm767, %v2211, 0.0
        %v2241 = vsel %vm768, %v2210, 0.0
        %v2242 = vsel %vm769, %v2209, 0.0
        %v2243 = vsel %vm770, %v2208, 0.0
        %v2244 = vsel %vm771, %v2207, 0.0
        %v2245 = vsel %vm772, %v2206, 0.0
        %v2246 = vsel %vm773, %v2205, 0.0
        %v2247 = vsel %vm774, %v2204, 0.0
        %v2248 = vsel %vm775, %v2203, 0.0
        %v2249 = vsel %vm776, %v2202, 0.0
        %v2250 = vsel %vm777, %v2201, 0.0
        %v2251 = vsel %vm778, %v2200, 0.0
        %v2252 = vsel %vm779, %v2199, 0.0
        %v2253 = vsel %vm780, %v2198, 0.0
        %v2254 = vsel %vm781, %v2197, 0.0
        %v2255 = vsel %vm782, %v2196, 0.0
        %v2256 = vsel %vm783, %v2195, 0.0
        %v2257 = vsel %vm784, %v2194, 0.0
        %v2258 = vrot.slane %v2130, 1
        %v2259 = vrot.slane %v2131, 1
        %v2260 = vrot.slane %v2132, 1
        %v2261 = vrot.slane %v2133, 1
        %v2262 = vrot.slane %v2134, 1
        %v2263 = vrot.slane %v2135, 1
        %v2264 = vrot.slane %v2136, 1
        %v2265 = vrot.slane %v2137, 1
        %v2266 = vrot.slane %v2138, 1
        %v2267 = vrot.slane %v2139, 1
        %v2268 = vrot.slane %v2140, 1
        %v2269 = vrot.slane %v2141, 1
        %v2270 = vrot.slane %v2142, 1
        %v2271 = vrot.slane %v2143, 1
        %v2272 = vrot.slane %v2144, 1
        %v2273 = vrot.slane %v2145, 1
        %v2274 = vrot.slane %v2146, 1
        %v2275 = vrot.slane %v2147, 1
        %v2276 = vrot.slane %v2148, 1
        %v2277 = vrot.slane %v2149, 1
        %v2278 = vrot.slane %v2150, 1
        %v2279 = vrot.slane %v2151, 1
        %v2280 = vrot.slane %v2152, 1
        %v2281 = vrot.slane %v2153, 1
        %v2282 = vrot.slane %v2154, 1
        %v2283 = vrot.slane %v2155, 1
        %v2284 = vrot.slane %v2156, 1
        %v2285 = vrot.slane %v2157, 1
        %v2286 = vrot.slane %v2158, 1
        %v2287 = vrot.slane %v2159, 1
        %v2288 = vrot.slane %v2160, 1
        %v2289 = vrot.slane %v2161, 1
        %v2290 = vsel %vm1456, %v2288, %v2289
        %v2291 = vsel %vm1456, %v2287, %v2288
        %v2292 = vsel %vm1456, %v2286, %v2287
        %v2293 = vsel %vm1456, %v2285, %v2286
        %v2294 = vsel %vm1456, %v2284, %v2285
        %v2295 = vsel %vm1456, %v2283, %v2284
        %v2296 = vsel %vm1456, %v2282, %v2283
        %v2297 = vsel %vm1456, %v2281, %v2282
        %v2298 = vsel %vm1456, %v2280, %v2281
        %v2299 = vsel %vm1456, %v2279, %v2280
        %v2300 = vsel %vm1456, %v2278, %v2279
        %v2301 = vsel %vm1456, %v2277, %v2278
        %v2302 = vsel %vm1456, %v2276, %v2277
        %v2303 = vsel %vm1456, %v2275, %v2276
        %v2304 = vsel %vm1456, %v2274, %v2275
        %v2305 = vsel %vm1456, %v2273, %v2274
        %v2306 = vsel %vm1456, %v2272, %v2273
        %v2307 = vsel %vm1456, %v2271, %v2272
        %v2308 = vsel %vm1456, %v2270, %v2271
        %v2309 = vsel %vm1456, %v2269, %v2270
        %v2310 = vsel %vm1456, %v2268, %v2269
        %v2311 = vsel %vm1456, %v2267, %v2268
        %v2312 = vsel %vm1456, %v2266, %v2267
        %v2313 = vsel %vm1456, %v2265, %v2266
        %v2314 = vsel %vm1456, %v2264, %v2265
        %v2315 = vsel %vm1456, %v2263, %v2264
        %v2316 = vsel %vm1456, %v2262, %v2263
        %v2317 = vsel %vm1456, %v2261, %v2262
        %v2318 = vsel %vm1456, %v2260, %v2261
        %v2319 = vsel %vm1456, %v2259, %v2260
        %v2320 = vsel %vm1456, %v2258, %v2259
        %v2321 = vsel %vm1456, %v2289, %v2258
        %v2322 = vsel %vm785, %v2320, 0.0
        %v2323 = vsel %vm786, %v2319, 0.0
        %v2324 = vsel %vm787, %v2318, 0.0
        %v2325 = vsel %vm788, %v2317, 0.0
        %v2326 = vsel %vm789, %v2316, 0.0
        %v2327 = vsel %vm790, %v2315, 0.0
        %v2328 = vsel %vm791, %v2314, 0.0
        %v2329 = vsel %vm792, %v2313, 0.0
        %v2330 = vsel %vm793, %v2312, 0.0
        %v2331 = vsel %vm794, %v2311, 0.0
        %v2332 = vsel %vm795, %v2310, 0.0
        %v2333 = vsel %vm796, %v2309, 0.0
        %v2334 = vsel %vm797, %v2308, 0.0
        %v2335 = vsel %vm798, %v2307, 0.0
        %v2336 = vsel %vm799, %v2306, 0.0
        %v2337 = vsel %vm800, %v2305, 0.0
        %v2338 = vsel %vm801, %v2304, 0.0
        %v2339 = vsel %vm802, %v2303, 0.0
        %v2340 = vsel %vm803, %v2302, 0.0
        %v2341 = vsel %vm804, %v2301, 0.0
        %v2342 = vsel %vm805, %v2300, 0.0
        %v2343 = vsel %vm806, %v2299, 0.0
        %v2344 = vsel %vm807, %v2298, 0.0
        %v2345 = vsel %vm808, %v2297, 0.0
        %v2346 = vsel %vm809, %v2296, 0.0
        %v2347 = vsel %vm810, %v2295, 0.0
        %v2348 = vsel %vm811, %v2294, 0.0
        %v2349 = vsel %vm812, %v2293, 0.0
        %v2350 = vsel %vm813, %v2292, 0.0
        %v2351 = vsel %vm814, %v2291, 0.0
        %v2352 = vsel %vm815, %v2290, 0.0
        %v2353 = vsel %vm816, %v2321, 0.0
        %v2354 = vpack.c.bf16 %v2226, %v2226
        %v2355 = vpack.c.bf16 %v2227, %v2227
        %v2356 = vpack.c.bf16 %v2228, %v2228
        %v2357 = vpack.c.bf16 %v2229, %v2229
        %v2358 = vpack.c.bf16 %v2230, %v2230
        %v2359 = vpack.c.bf16 %v2231, %v2231
        %v2360 = vpack.c.bf16 %v2232, %v2232
        %v2361 = vpack.c.bf16 %v2233, %v2233
        %v2362 = vpack.c.bf16 %v2234, %v2234
        %v2363 = vpack.c.bf16 %v2235, %v2235
        %v2364 = vpack.c.bf16 %v2236, %v2236
        %v2365 = vpack.c.bf16 %v2237, %v2237
        %v2366 = vpack.c.bf16 %v2238, %v2238
        %v2367 = vpack.c.bf16 %v2239, %v2239
        %v2368 = vpack.c.bf16 %v2240, %v2240
        %v2369 = vpack.c.bf16 %v2241, %v2241
        %v2370 = vpack.c.bf16 %v2242, %v2242
        %v2371 = vpack.c.bf16 %v2243, %v2243
        %v2372 = vpack.c.bf16 %v2244, %v2244
        %v2373 = vpack.c.bf16 %v2245, %v2245
        %v2374 = vpack.c.bf16 %v2246, %v2246
        %v2375 = vpack.c.bf16 %v2247, %v2247
        %v2376 = vpack.c.bf16 %v2248, %v2248
        %v2377 = vpack.c.bf16 %v2249, %v2249
        %v2378 = vpack.c.bf16 %v2250, %v2250
        %v2379 = vpack.c.bf16 %v2251, %v2251
        %v2380 = vpack.c.bf16 %v2252, %v2252
        %v2381 = vpack.c.bf16 %v2253, %v2253
        %v2382 = vpack.c.bf16 %v2254, %v2254
        %v2383 = vpack.c.bf16 %v2255, %v2255
        %v2384 = vpack.c.bf16 %v2256, %v2256
        %v2385 = vpack.c.bf16 %v2257, %v2257
        %2386 = vst [vmem:[#allocation3 + $0x18] sm:$0xf] %v2354
        %2387 = vst [vmem:[#allocation3 + $0x3c] sm:$0xf] %v2355
        %2388 = vst [vmem:[#allocation3 + $0x60] sm:$0xf] %v2356
        %2389 = vst [vmem:[#allocation3 + $0x84] sm:$0xf] %v2357
        %2390 = vst [vmem:[#allocation3 + $0xa8] sm:$0xf] %v2358
        %2391 = vst [vmem:[#allocation3 + $0xcc] sm:$0xf] %v2359
        %2392 = vst [vmem:[#allocation3 + $0xf0] sm:$0xf] %v2360
        %2393 = vst [vmem:[#allocation3 + $0x114] sm:$0xf] %v2361
        %2394 = vst [vmem:[#allocation3 + $0x138] sm:$0xf] %v2362
        %2395 = vst [vmem:[#allocation3 + $0x15c] sm:$0xf] %v2363
        %2396 = vst [vmem:[#allocation3 + $0x180] sm:$0xf] %v2364
        %2397 = vst [vmem:[#allocation3 + $0x1a4] sm:$0xf] %v2365
        %2398 = vst [vmem:[#allocation3 + $0x1c8] sm:$0xf] %v2366
        %2399 = vst [vmem:[#allocation3 + $0x1ec] sm:$0xf] %v2367
        %2400 = vst [vmem:[#allocation3 + $0x210] sm:$0xf] %v2368
        %2401 = vst [vmem:[#allocation3 + $0x234] sm:$0xf] %v2369
        %2402 = vst [vmem:[#allocation3 + $0x258] sm:$0xf] %v2370
        %2403 = vst [vmem:[#allocation3 + $0x27c] sm:$0xf] %v2371
        %2404 = vst [vmem:[#allocation3 + $0x2a0] sm:$0xf] %v2372
        %2405 = vst [vmem:[#allocation3 + $0x2c4] sm:$0xf] %v2373
        %2406 = vst [vmem:[#allocation3 + $0x2e8] sm:$0xf] %v2374
        %2407 = vst [vmem:[#allocation3 + $0x30c] sm:$0xf] %v2375
        %2408 = vst [vmem:[#allocation3 + $0x330] sm:$0xf] %v2376
        %2409 = vst [vmem:[#allocation3 + $0x354] sm:$0xf] %v2377
        %2410 = vst [vmem:[#allocation3 + $0x378] sm:$0xf] %v2378
        %2411 = vst [vmem:[#allocation3 + $0x39c] sm:$0xf] %v2379
        %2412 = vst [vmem:[#allocation3 + $0x3c0] sm:$0xf] %v2380
        %2413 = vst [vmem:[#allocation3 + $0x3e4] sm:$0xf] %v2381
        %2414 = vst [vmem:[#allocation3 + $0x408] sm:$0xf] %v2382
        %2415 = vst [vmem:[#allocation3 + $0x42c] sm:$0xf] %v2383
        %2416 = vst [vmem:[#allocation3 + $0x450] sm:$0xf] %v2384
        %2417 = vst [vmem:[#allocation3 + $0x474] sm:$0xf] %v2385
        %v2418 = vpack.c.bf16 %v2322, %v2322
        %v2419 = vpack.c.bf16 %v2323, %v2323
        %v2420 = vpack.c.bf16 %v2324, %v2324
        %v2421 = vpack.c.bf16 %v2325, %v2325
        %v2422 = vpack.c.bf16 %v2326, %v2326
        %v2423 = vpack.c.bf16 %v2327, %v2327
        %v2424 = vpack.c.bf16 %v2328, %v2328
        %v2425 = vpack.c.bf16 %v2329, %v2329
        %v2426 = vpack.c.bf16 %v2330, %v2330
        %v2427 = vpack.c.bf16 %v2331, %v2331
        %v2428 = vpack.c.bf16 %v2332, %v2332
        %v2429 = vpack.c.bf16 %v2333, %v2333
        %v2430 = vpack.c.bf16 %v2334, %v2334
        %v2431 = vpack.c.bf16 %v2335, %v2335
        %v2432 = vpack.c.bf16 %v2336, %v2336
        %v2433 = vpack.c.bf16 %v2337, %v2337
        %v2434 = vpack.c.bf16 %v2338, %v2338
        %v2435 = vpack.c.bf16 %v2339, %v2339
        %v2436 = vpack.c.bf16 %v2340, %v2340
        %v2437 = vpack.c.bf16 %v2341, %v2341
        %v2438 = vpack.c.bf16 %v2342, %v2342
        %v2439 = vpack.c.bf16 %v2343, %v2343
        %v2440 = vpack.c.bf16 %v2344, %v2344
        %v2441 = vpack.c.bf16 %v2345, %v2345
        %v2442 = vpack.c.bf16 %v2346, %v2346
        %v2443 = vpack.c.bf16 %v2347, %v2347
        %v2444 = vpack.c.bf16 %v2348, %v2348
        %v2445 = vpack.c.bf16 %v2349, %v2349
        %v2446 = vpack.c.bf16 %v2350, %v2350
        %v2447 = vpack.c.bf16 %v2351, %v2351
        %v2448 = vpack.c.bf16 %v2352, %v2352
        %v2449 = vpack.c.bf16 %v2353, %v2353
        %2450 = vst [vmem:[#allocation3 + $0x20] sm:$0xf] %v2418
        %2451 = vst [vmem:[#allocation3 + $0x44] sm:$0xf] %v2419
        %2452 = vst [vmem:[#allocation3 + $0x68] sm:$0xf] %v2420
        %2453 = vst [vmem:[#allocation3 + $0x8c] sm:$0xf] %v2421
        %2454 = vst [vmem:[#allocation3 + $0xb0] sm:$0xf] %v2422
        %2455 = vst [vmem:[#allocation3 + $0xd4] sm:$0xf] %v2423
        %2456 = vst [vmem:[#allocation3 + $0xf8] sm:$0xf] %v2424
        %2457 = vst [vmem:[#allocation3 + $0x11c] sm:$0xf] %v2425
        %2458 = vst [vmem:[#allocation3 + $0x140] sm:$0xf] %v2426
        %2459 = vst [vmem:[#allocation3 + $0x164] sm:$0xf] %v2427
        %2460 = vst [vmem:[#allocation3 + $0x188] sm:$0xf] %v2428
        %2461 = vst [vmem:[#allocation3 + $0x1ac] sm:$0xf] %v2429
        %2462 = vst [vmem:[#allocation3 + $0x1d0] sm:$0xf] %v2430
        %2463 = vst [vmem:[#allocation3 + $0x1f4] sm:$0xf] %v2431
        %2464 = vst [vmem:[#allocation3 + $0x218] sm:$0xf] %v2432
        %2465 = vst [vmem:[#allocation3 + $0x23c] sm:$0xf] %v2433
        %2466 = vst [vmem:[#allocation3 + $0x260] sm:$0xf] %v2434
        %2467 = vst [vmem:[#allocation3 + $0x284] sm:$0xf] %v2435
        %2468 = vst [vmem:[#allocation3 + $0x2a8] sm:$0xf] %v2436
        %2469 = vst [vmem:[#allocation3 + $0x2cc] sm:$0xf] %v2437
        %2470 = vst [vmem:[#allocation3 + $0x2f0] sm:$0xf] %v2438
        %2471 = vst [vmem:[#allocation3 + $0x314] sm:$0xf] %v2439
        %2472 = vst [vmem:[#allocation3 + $0x338] sm:$0xf] %v2440
        %2473 = vst [vmem:[#allocation3 + $0x35c] sm:$0xf] %v2441
        %2474 = vst [vmem:[#allocation3 + $0x380] sm:$0xf] %v2442
        %2475 = vst [vmem:[#allocation3 + $0x3a4] sm:$0xf] %v2443
        %2476 = vst [vmem:[#allocation3 + $0x3c8] sm:$0xf] %v2444
        %2477 = vst [vmem:[#allocation3 + $0x3ec] sm:$0xf] %v2445
        %2478 = vst [vmem:[#allocation3 + $0x410] sm:$0xf] %v2446
        %2479 = vst [vmem:[#allocation3 + $0x434] sm:$0xf] %v2447
        %2480 = vst [vmem:[#allocation3 + $0x458] sm:$0xf] %v2448
        %2481 = vst [vmem:[#allocation3 + $0x47c] sm:$0xf] %v2449
        %v2482 = vld [vmem:[#allocation3] sm:$0xff]
        %v2483 = vld [vmem:[#allocation3 + $0x8] sm:$0xff]
        %v2484 = vld [vmem:[#allocation3 + $0x10] sm:$0xff]
        %v2485 = vld [vmem:[#allocation3 + $0x18] sm:$0xff]
        %v2486 = vld [vmem:[#allocation3 + $0x20] sm:$0xf]
        %v2487 = vld [vmem:[#allocation3 + $0x24] sm:$0xff]
        %v2488 = vld [vmem:[#allocation3 + $0x2c] sm:$0xff]
        %v2489 = vld [vmem:[#allocation3 + $0x34] sm:$0xff]
        %v2490 = vld [vmem:[#allocation3 + $0x3c] sm:$0xff]
        %v2491 = vld [vmem:[#allocation3 + $0x44] sm:$0xf]
        %v2492 = vld [vmem:[#allocation3 + $0x48] sm:$0xff]
        %v2493 = vld [vmem:[#allocation3 + $0x50] sm:$0xff]
        %v2494 = vld [vmem:[#allocation3 + $0x58] sm:$0xff]
        %v2495 = vld [vmem:[#allocation3 + $0x60] sm:$0xff]
        %v2496 = vld [vmem:[#allocation3 + $0x68] sm:$0xf]
        %v2497 = vld [vmem:[#allocation3 + $0x6c] sm:$0xff]
        %v2498 = vld [vmem:[#allocation3 + $0x74] sm:$0xff]
        %v2499 = vld [vmem:[#allocation3 + $0x7c] sm:$0xff]
        %v2500 = vld [vmem:[#allocation3 + $0x84] sm:$0xff]
        %v2501 = vld [vmem:[#allocation3 + $0x8c] sm:$0xf]
        %v2502 = vld [vmem:[#allocation3 + $0x90] sm:$0xff]
        %v2503 = vld [vmem:[#allocation3 + $0x98] sm:$0xff]
        %v2504 = vld [vmem:[#allocation3 + $0xa0] sm:$0xff]
        %v2505 = vld [vmem:[#allocation3 + $0xa8] sm:$0xff]
        %v2506 = vld [vmem:[#allocation3 + $0xb0] sm:$0xf]
        %v2507 = vld [vmem:[#allocation3 + $0xb4] sm:$0xff]
        %v2508 = vld [vmem:[#allocation3 + $0xbc] sm:$0xff]
        %v2509 = vld [vmem:[#allocation3 + $0xc4] sm:$0xff]
        %v2510 = vld [vmem:[#allocation3 + $0xcc] sm:$0xff]
        %v2511 = vld [vmem:[#allocation3 + $0xd4] sm:$0xf]
        %v2512 = vld [vmem:[#allocation3 + $0xd8] sm:$0xff]
        %v2513 = vld [vmem:[#allocation3 + $0xe0] sm:$0xff]
        %v2514 = vld [vmem:[#allocation3 + $0xe8] sm:$0xff]
        %v2515 = vld [vmem:[#allocation3 + $0xf0] sm:$0xff]
        %v2516 = vld [vmem:[#allocation3 + $0xf8] sm:$0xf]
        %v2517 = vld [vmem:[#allocation3 + $0xfc] sm:$0xff]
        %v2518 = vld [vmem:[#allocation3 + $0x104] sm:$0xff]
        %v2519 = vld [vmem:[#allocation3 + $0x10c] sm:$0xff]
        %v2520 = vld [vmem:[#allocation3 + $0x114] sm:$0xff]
        %v2521 = vld [vmem:[#allocation3 + $0x11c] sm:$0xf]
        %v2522 = vld [vmem:[#allocation3 + $0x120] sm:$0xff]
        %v2523 = vld [vmem:[#allocation3 + $0x128] sm:$0xff]
        %v2524 = vld [vmem:[#allocation3 + $0x130] sm:$0xff]
        %v2525 = vld [vmem:[#allocation3 + $0x138] sm:$0xff]
        %v2526 = vld [vmem:[#allocation3 + $0x140] sm:$0xf]
        %v2527 = vld [vmem:[#allocation3 + $0x144] sm:$0xff]
        %v2528 = vld [vmem:[#allocation3 + $0x14c] sm:$0xff]
        %v2529 = vld [vmem:[#allocation3 + $0x154] sm:$0xff]
        %v2530 = vld [vmem:[#allocation3 + $0x15c] sm:$0xff]
        %v2531 = vld [vmem:[#allocation3 + $0x164] sm:$0xf]
        %v2532 = vld [vmem:[#allocation3 + $0x168] sm:$0xff]
        %v2533 = vld [vmem:[#allocation3 + $0x170] sm:$0xff]
        %v2534 = vld [vmem:[#allocation3 + $0x178] sm:$0xff]
        %v2535 = vld [vmem:[#allocation3 + $0x180] sm:$0xff]
        %v2536 = vld [vmem:[#allocation3 + $0x188] sm:$0xf]
        %v2537 = vld [vmem:[#allocation3 + $0x18c] sm:$0xff]
        %v2538 = vld [vmem:[#allocation3 + $0x194] sm:$0xff]
        %v2539 = vld [vmem:[#allocation3 + $0x19c] sm:$0xff]
        %v2540 = vld [vmem:[#allocation3 + $0x1a4] sm:$0xff]
        %v2541 = vld [vmem:[#allocation3 + $0x1ac] sm:$0xf]
        %v2542 = vld [vmem:[#allocation3 + $0x1b0] sm:$0xff]
        %v2543 = vld [vmem:[#allocation3 + $0x1b8] sm:$0xff]
        %v2544 = vld [vmem:[#allocation3 + $0x1c0] sm:$0xff]
        %v2545 = vld [vmem:[#allocation3 + $0x1c8] sm:$0xff]
        %v2546 = vld [vmem:[#allocation3 + $0x1d0] sm:$0xf]
        %v2547 = vld [vmem:[#allocation3 + $0x1d4] sm:$0xff]
        %v2548 = vld [vmem:[#allocation3 + $0x1dc] sm:$0xff]
        %v2549 = vld [vmem:[#allocation3 + $0x1e4] sm:$0xff]
        %v2550 = vld [vmem:[#allocation3 + $0x1ec] sm:$0xff]
        %v2551 = vld [vmem:[#allocation3 + $0x1f4] sm:$0xf]
        %v2552 = vld [vmem:[#allocation3 + $0x1f8] sm:$0xff]
        %v2553 = vld [vmem:[#allocation3 + $0x200] sm:$0xff]
        %v2554 = vld [vmem:[#allocation3 + $0x208] sm:$0xff]
        %v2555 = vld [vmem:[#allocation3 + $0x210] sm:$0xff]
        %v2556 = vld [vmem:[#allocation3 + $0x218] sm:$0xf]
        %v2557 = vld [vmem:[#allocation3 + $0x21c] sm:$0xff]
        %v2558 = vld [vmem:[#allocation3 + $0x224] sm:$0xff]
        %v2559 = vld [vmem:[#allocation3 + $0x22c] sm:$0xff]
        %v2560 = vld [vmem:[#allocation3 + $0x234] sm:$0xff]
        %v2561 = vld [vmem:[#allocation3 + $0x23c] sm:$0xf]
        %v2562 = vld [vmem:[#allocation3 + $0x240] sm:$0xff]
        %v2563 = vld [vmem:[#allocation3 + $0x248] sm:$0xff]
        %v2564 = vld [vmem:[#allocation3 + $0x250] sm:$0xff]
        %v2565 = vld [vmem:[#allocation3 + $0x258] sm:$0xff]
        %v2566 = vld [vmem:[#allocation3 + $0x260] sm:$0xf]
        %v2567 = vld [vmem:[#allocation3 + $0x264] sm:$0xff]
        %v2568 = vld [vmem:[#allocation3 + $0x26c] sm:$0xff]
        %v2569 = vld [vmem:[#allocation3 + $0x274] sm:$0xff]
        %v2570 = vld [vmem:[#allocation3 + $0x27c] sm:$0xff]
        %v2571 = vld [vmem:[#allocation3 + $0x284] sm:$0xf]
        %v2572 = vld [vmem:[#allocation3 + $0x288] sm:$0xff]
        %v2573 = vld [vmem:[#allocation3 + $0x290] sm:$0xff]
        %v2574 = vld [vmem:[#allocation3 + $0x298] sm:$0xff]
        %v2575 = vld [vmem:[#allocation3 + $0x2a0] sm:$0xff]
        %v2576 = vld [vmem:[#allocation3 + $0x2a8] sm:$0xf]
        %v2577 = vld [vmem:[#allocation3 + $0x2ac] sm:$0xff]
        %v2578 = vld [vmem:[#allocation3 + $0x2b4] sm:$0xff]
        %v2579 = vld [vmem:[#allocation3 + $0x2bc] sm:$0xff]
        %v2580 = vld [vmem:[#allocation3 + $0x2c4] sm:$0xff]
        %v2581 = vld [vmem:[#allocation3 + $0x2cc] sm:$0xf]
        %v2582 = vld [vmem:[#allocation3 + $0x2d0] sm:$0xff]
        %v2583 = vld [vmem:[#allocation3 + $0x2d8] sm:$0xff]
        %v2584 = vld [vmem:[#allocation3 + $0x2e0] sm:$0xff]
        %v2585 = vld [vmem:[#allocation3 + $0x2e8] sm:$0xff]
        %v2586 = vld [vmem:[#allocation3 + $0x2f0] sm:$0xf]
        %v2587 = vld [vmem:[#allocation3 + $0x2f4] sm:$0xff]
        %v2588 = vld [vmem:[#allocation3 + $0x2fc] sm:$0xff]
        %v2589 = vld [vmem:[#allocation3 + $0x304] sm:$0xff]
        %v2590 = vld [vmem:[#allocation3 + $0x30c] sm:$0xff]
        %v2591 = vld [vmem:[#allocation3 + $0x314] sm:$0xf]
        %v2592 = vld [vmem:[#allocation3 + $0x318] sm:$0xff]
        %v2593 = vld [vmem:[#allocation3 + $0x320] sm:$0xff]
        %v2594 = vld [vmem:[#allocation3 + $0x328] sm:$0xff]
        %v2595 = vld [vmem:[#allocation3 + $0x330] sm:$0xff]
        %v2596 = vld [vmem:[#allocation3 + $0x338] sm:$0xf]
        %v2597 = vld [vmem:[#allocation3 + $0x33c] sm:$0xff]
        %v2598 = vld [vmem:[#allocation3 + $0x344] sm:$0xff]
        %v2599 = vld [vmem:[#allocation3 + $0x34c] sm:$0xff]
        %v2600 = vld [vmem:[#allocation3 + $0x354] sm:$0xff]
        %v2601 = vld [vmem:[#allocation3 + $0x35c] sm:$0xf]
        %v2602 = vld [vmem:[#allocation3 + $0x360] sm:$0xff]
        %v2603 = vld [vmem:[#allocation3 + $0x368] sm:$0xff]
        %v2604 = vld [vmem:[#allocation3 + $0x370] sm:$0xff]
        %v2605 = vld [vmem:[#allocation3 + $0x378] sm:$0xff]
        %v2606 = vld [vmem:[#allocation3 + $0x380] sm:$0xf]
        %v2607 = vld [vmem:[#allocation3 + $0x384] sm:$0xff]
        %v2608 = vld [vmem:[#allocation3 + $0x38c] sm:$0xff]
        %v2609 = vld [vmem:[#allocation3 + $0x394] sm:$0xff]
        %v2610 = vld [vmem:[#allocation3 + $0x39c] sm:$0xff]
        %v2611 = vld [vmem:[#allocation3 + $0x3a4] sm:$0xf]
        %v2612 = vld [vmem:[#allocation3 + $0x3a8] sm:$0xff]
        %v2613 = vld [vmem:[#allocation3 + $0x3b0] sm:$0xff]
        %v2614 = vld [vmem:[#allocation3 + $0x3b8] sm:$0xff]
        %v2615 = vld [vmem:[#allocation3 + $0x3c0] sm:$0xff]
        %v2616 = vld [vmem:[#allocation3 + $0x3c8] sm:$0xf]
        %v2617 = vld [vmem:[#allocation3 + $0x3cc] sm:$0xff]
        %v2618 = vld [vmem:[#allocation3 + $0x3d4] sm:$0xff]
        %v2619 = vld [vmem:[#allocation3 + $0x3dc] sm:$0xff]
        %v2620 = vld [vmem:[#allocation3 + $0x3e4] sm:$0xff]
        %v2621 = vld [vmem:[#allocation3 + $0x3ec] sm:$0xf]
        %v2622 = vld [vmem:[#allocation3 + $0x3f0] sm:$0xff]
        %v2623 = vld [vmem:[#allocation3 + $0x3f8] sm:$0xff]
        %v2624 = vld [vmem:[#allocation3 + $0x400] sm:$0xff]
        %v2625 = vld [vmem:[#allocation3 + $0x408] sm:$0xff]
        %v2626 = vld [vmem:[#allocation3 + $0x410] sm:$0xf]
        %v2627 = vld [vmem:[#allocation3 + $0x414] sm:$0xff]
        %v2628 = vld [vmem:[#allocation3 + $0x41c] sm:$0xff]
        %v2629 = vld [vmem:[#allocation3 + $0x424] sm:$0xff]
        %v2630 = vld [vmem:[#allocation3 + $0x42c] sm:$0xff]
        %v2631 = vld [vmem:[#allocation3 + $0x434] sm:$0xf]
        %v2632 = vld [vmem:[#allocation3 + $0x438] sm:$0xff]
        %v2633 = vld [vmem:[#allocation3 + $0x440] sm:$0xff]
        %v2634 = vld [vmem:[#allocation3 + $0x448] sm:$0xff]
        %v2635 = vld [vmem:[#allocation3 + $0x450] sm:$0xff]
        %v2636 = vld [vmem:[#allocation3 + $0x458] sm:$0xf]
        %v2637 = vld [vmem:[#allocation3 + $0x45c] sm:$0xff]
        %v2638 = vld [vmem:[#allocation3 + $0x464] sm:$0xff]
        %v2639 = vld [vmem:[#allocation3 + $0x46c] sm:$0xff]
        %v2640 = vld [vmem:[#allocation3 + $0x474] sm:$0xff]
        %v2641 = vld [vmem:[#allocation3 + $0x47c] sm:$0xf]
        %v2642 = vld [vmem:[%s3] sm:$0xf]
        %v2643 = vld [vmem:[%s3 + $0x4] sm:$0xf]
        %v2644 = vld [vmem:[%s3 + $0x8] sm:$0xf]
        %v2645 = vld [vmem:[%s3 + $0xc] sm:$0xf]
        %v2646 = vld [vmem:[%s3 + $0x10] sm:$0xf]
        %v2647 = vld [vmem:[%s3 + $0x14] sm:$0xf]
        %v2648 = vld [vmem:[%s3 + $0x18] sm:$0xf]
        %v2649 = vld [vmem:[%s3 + $0x1c] sm:$0xf]
        %v2650 = vld [vmem:[%s3 + $0x20] sm:$0xf]
        %v2651 = vld [vmem:[%s3 + $0x24] sm:$0xf]
        %v2652 = vld [vmem:[%s3 + $0x28] sm:$0xf]
        %v2653 = vld [vmem:[%s3 + $0x2c] sm:$0xf]
        %v2654 = vld [vmem:[%s3 + $0x30] sm:$0xf]
        %v2655 = vld [vmem:[%s3 + $0x34] sm:$0xf]
        %v2656 = vld [vmem:[%s3 + $0x38] sm:$0xf]
        %v2657 = vld [vmem:[%s3 + $0x3c] sm:$0xf]
        %v2658 = vld [vmem:[%s3 + $0x40] sm:$0xf]
        %v2659 = vld [vmem:[%s3 + $0x44] sm:$0xf]
        %v2660 = vld [vmem:[%s3 + $0x48] sm:$0xf]
        %v2661 = vld [vmem:[%s3 + $0x4c] sm:$0xf]
        %v2662 = vld [vmem:[%s3 + $0x50] sm:$0xf]
        %v2663 = vld [vmem:[%s3 + $0x54] sm:$0xf]
        %v2664 = vld [vmem:[%s3 + $0x58] sm:$0xf]
        %v2665 = vld [vmem:[%s3 + $0x5c] sm:$0xf]
        %v2666 = vld [vmem:[%s3 + $0x60] sm:$0xf]
        %v2667 = vld [vmem:[%s3 + $0x64] sm:$0xf]
        %v2668 = vld [vmem:[%s3 + $0x68] sm:$0xf]
        %v2669 = vld [vmem:[%s3 + $0x6c] sm:$0xf]
        %v2670 = vld [vmem:[%s3 + $0x70] sm:$0xf]
        %v2671 = vld [vmem:[%s3 + $0x74] sm:$0xf]
        %v2672 = vld [vmem:[%s3 + $0x78] sm:$0xf]
        %v2673 = vld [vmem:[%s3 + $0x7c] sm:$0xf]
        %v2674 = vld [vmem:[%s3 + $0x80] sm:$0xf]
        %v2675 = vld [vmem:[%s3 + $0x84] sm:$0xf]
        %v2676 = vld [vmem:[%s3 + $0x88] sm:$0xf]
        %v2677 = vld [vmem:[%s3 + $0x8c] sm:$0xf]
        %v2678 = vld [vmem:[%s3 + $0x90] sm:$0xf]
        %v2679 = vld [vmem:[%s3 + $0x94] sm:$0xf]
        %v2680 = vld [vmem:[%s3 + $0x98] sm:$0xf]
        %v2681 = vld [vmem:[%s3 + $0x9c] sm:$0xf]
        %v2682 = vld [vmem:[%s3 + $0xa0] sm:$0xf]
        %v2683 = vld [vmem:[%s3 + $0xa4] sm:$0xf]
        %v2684 = vld [vmem:[%s3 + $0xa8] sm:$0xf]
        %v2685 = vld [vmem:[%s3 + $0xac] sm:$0xf]
        %v2686 = vld [vmem:[%s3 + $0xb0] sm:$0xf]
        %v2687 = vld [vmem:[%s3 + $0xb4] sm:$0xf]
        %v2688 = vld [vmem:[%s3 + $0xb8] sm:$0xf]
        %v2689 = vld [vmem:[%s3 + $0xbc] sm:$0xf]
        %v2690 = vld [vmem:[%s3 + $0xc0] sm:$0xf]
        %v2691 = vld [vmem:[%s3 + $0xc4] sm:$0xf]
        %v2692 = vld [vmem:[%s3 + $0xc8] sm:$0xf]
        %v2693 = vld [vmem:[%s3 + $0xcc] sm:$0xf]
        %v2694 = vld [vmem:[%s3 + $0xd0] sm:$0xf]
        %v2695 = vld [vmem:[%s3 + $0xd4] sm:$0xf]
        %v2696 = vld [vmem:[%s3 + $0xd8] sm:$0xf]
        %v2697 = vld [vmem:[%s3 + $0xdc] sm:$0xf]
        %v2698 = vld [vmem:[%s3 + $0xe0] sm:$0xf]
        %v2699 = vld [vmem:[%s3 + $0xe4] sm:$0xf]
        %v2700 = vld [vmem:[%s3 + $0xe8] sm:$0xf]
        %v2701 = vld [vmem:[%s3 + $0xec] sm:$0xf]
        %v2702 = vld [vmem:[%s3 + $0xf0] sm:$0xf]
        %v2703 = vld [vmem:[%s3 + $0xf4] sm:$0xf]
        %v2704 = vld [vmem:[%s3 + $0xf8] sm:$0xf]
        %v2705 = vld [vmem:[%s3 + $0xfc] sm:$0xf]
        %v2706 = vld [vmem:[%s3 + $0x100] sm:$0xf]
        %v2707 = vld [vmem:[%s3 + $0x104] sm:$0xf]
        %v2708 = vld [vmem:[%s3 + $0x108] sm:$0xf]
        %v2709 = vld [vmem:[%s3 + $0x10c] sm:$0xf]
        %v2710 = vld [vmem:[%s3 + $0x110] sm:$0xf]
        %v2711 = vld [vmem:[%s3 + $0x114] sm:$0xf]
        %v2712 = vld [vmem:[%s3 + $0x118] sm:$0xf]
        %v2713 = vld [vmem:[%s3 + $0x11c] sm:$0xf]
        %v2714 = vld [vmem:[%s3 + $0x120] sm:$0xf]
        %v2715 = vld [vmem:[%s3 + $0x124] sm:$0xf]
        %v2716 = vld [vmem:[%s3 + $0x128] sm:$0xf]
        %v2717 = vld [vmem:[%s3 + $0x12c] sm:$0xf]
        %v2718 = vld [vmem:[%s3 + $0x130] sm:$0xf]
        %v2719 = vld [vmem:[%s3 + $0x134] sm:$0xf]
        %v2720 = vld [vmem:[%s3 + $0x138] sm:$0xf]
        %v2721 = vld [vmem:[%s3 + $0x13c] sm:$0xf]
        %v2722 = vld [vmem:[%s3 + $0x140] sm:$0xf]
        %v2723 = vld [vmem:[%s3 + $0x144] sm:$0xf]
        %v2724 = vld [vmem:[%s3 + $0x148] sm:$0xf]
        %v2725 = vld [vmem:[%s3 + $0x14c] sm:$0xf]
        %v2726 = vld [vmem:[%s3 + $0x150] sm:$0xf]
        %v2727 = vld [vmem:[%s3 + $0x154] sm:$0xf]
        %v2728 = vld [vmem:[%s3 + $0x158] sm:$0xf]
        %v2729 = vld [vmem:[%s3 + $0x15c] sm:$0xf]
        %v2730 = vld [vmem:[%s3 + $0x160] sm:$0xf]
        %v2731 = vld [vmem:[%s3 + $0x164] sm:$0xf]
        %v2732 = vld [vmem:[%s3 + $0x168] sm:$0xf]
        %v2733 = vld [vmem:[%s3 + $0x16c] sm:$0xf]
        %v2734 = vld [vmem:[%s3 + $0x170] sm:$0xf]
        %v2735 = vld [vmem:[%s3 + $0x174] sm:$0xf]
        %v2736 = vld [vmem:[%s3 + $0x178] sm:$0xf]
        %v2737 = vld [vmem:[%s3 + $0x17c] sm:$0xf]
        %v2738 = vld [vmem:[%s3 + $0x180] sm:$0xf]
        %v2739 = vld [vmem:[%s3 + $0x184] sm:$0xf]
        %v2740 = vld [vmem:[%s3 + $0x188] sm:$0xf]
        %v2741 = vld [vmem:[%s3 + $0x18c] sm:$0xf]
        %v2742 = vld [vmem:[%s3 + $0x190] sm:$0xf]
        %v2743 = vld [vmem:[%s3 + $0x194] sm:$0xf]
        %v2744 = vld [vmem:[%s3 + $0x198] sm:$0xf]
        %v2745 = vld [vmem:[%s3 + $0x19c] sm:$0xf]
        %v2746 = vld [vmem:[%s3 + $0x1a0] sm:$0xf]
        %v2747 = vld [vmem:[%s3 + $0x1a4] sm:$0xf]
        %v2748 = vld [vmem:[%s3 + $0x1a8] sm:$0xf]
        %v2749 = vld [vmem:[%s3 + $0x1ac] sm:$0xf]
        %v2750 = vld [vmem:[%s3 + $0x1b0] sm:$0xf]
        %v2751 = vld [vmem:[%s3 + $0x1b4] sm:$0xf]
        %v2752 = vld [vmem:[%s3 + $0x1b8] sm:$0xf]
        %v2753 = vld [vmem:[%s3 + $0x1bc] sm:$0xf]
        %v2754 = vld [vmem:[%s3 + $0x1c0] sm:$0xf]
        %v2755 = vld [vmem:[%s3 + $0x1c4] sm:$0xf]
        %v2756 = vld [vmem:[%s3 + $0x1c8] sm:$0xf]
        %v2757 = vld [vmem:[%s3 + $0x1cc] sm:$0xf]
        %v2758 = vld [vmem:[%s3 + $0x1d0] sm:$0xf]
        %v2759 = vld [vmem:[%s3 + $0x1d4] sm:$0xf]
        %v2760 = vld [vmem:[%s3 + $0x1d8] sm:$0xf]
        %v2761 = vld [vmem:[%s3 + $0x1dc] sm:$0xf]
        %v2762 = vld [vmem:[%s3 + $0x1e0] sm:$0xf]
        %v2763 = vld [vmem:[%s3 + $0x1e4] sm:$0xf]
        %v2764 = vld [vmem:[%s3 + $0x1e8] sm:$0xf]
        %v2765 = vld [vmem:[%s3 + $0x1ec] sm:$0xf]
        %v2766 = vld [vmem:[%s3 + $0x1f0] sm:$0xf]
        %v2767 = vld [vmem:[%s3 + $0x1f4] sm:$0xf]
        %v2768 = vld [vmem:[%s3 + $0x1f8] sm:$0xf]
        %v2769 = vld [vmem:[%s3 + $0x1fc] sm:$0xf]
        %v2770 = vld [vmem:[%s3 + $0x200] sm:$0xf]
        %v2771 = vld [vmem:[%s3 + $0x204] sm:$0xf]
        %v2772 = vld [vmem:[%s3 + $0x208] sm:$0xf]
        %v2773 = vld [vmem:[%s3 + $0x20c] sm:$0xf]
        %v2774 = vld [vmem:[%s3 + $0x210] sm:$0xf]
        %v2775 = vld [vmem:[%s3 + $0x214] sm:$0xf]
        %v2776 = vld [vmem:[%s3 + $0x218] sm:$0xf]
        %v2777 = vld [vmem:[%s3 + $0x21c] sm:$0xf]
        %v2778 = vld [vmem:[%s3 + $0x220] sm:$0xf]
        %v2779 = vld [vmem:[%s3 + $0x224] sm:$0xf]
        %v2780 = vld [vmem:[%s3 + $0x228] sm:$0xf]
        %v2781 = vld [vmem:[%s3 + $0x22c] sm:$0xf]
        %v2782 = vld [vmem:[%s3 + $0x230] sm:$0xf]
        %v2783 = vld [vmem:[%s3 + $0x234] sm:$0xf]
        %v2784 = vld [vmem:[%s3 + $0x238] sm:$0xf]
        %v2785 = vld [vmem:[%s3 + $0x23c] sm:$0xf]
        %v2786 = vld [vmem:[%s4] sm:$0x1]
        %v2788 = vperm.slane %v2786, 0
        %v2950 = vunpack.c.l.b16 %v2482
        %v2951 = vunpack.c.h.b16 %v2482
        %v2952 = vunpack.c.l.b16 %v2483
        %v2953 = vunpack.c.h.b16 %v2483
        %v2954 = vunpack.c.l.b16 %v2484
        %v2955 = vunpack.c.h.b16 %v2484
        %v2956 = vunpack.c.l.b16 %v2485
        %v2957 = vunpack.c.h.b16 %v2485
        %v2958 = vunpack.c.l.b16 %v2486
        %v2959 = vunpack.c.l.b16 %v2487
        %v2960 = vunpack.c.h.b16 %v2487
        %v2961 = vunpack.c.l.b16 %v2488
        %v2962 = vunpack.c.h.b16 %v2488
        %v2963 = vunpack.c.l.b16 %v2489
        %v2964 = vunpack.c.h.b16 %v2489
        %v2965 = vunpack.c.l.b16 %v2490
        %v2966 = vunpack.c.h.b16 %v2490
        %v2967 = vunpack.c.l.b16 %v2491
        %v2968 = vunpack.c.l.b16 %v2492
        %v2969 = vunpack.c.h.b16 %v2492
        %v2970 = vunpack.c.l.b16 %v2493
        %v2971 = vunpack.c.h.b16 %v2493
        %v2972 = vunpack.c.l.b16 %v2494
        %v2973 = vunpack.c.h.b16 %v2494
        %v2974 = vunpack.c.l.b16 %v2495
        %v2975 = vunpack.c.h.b16 %v2495
        %v2976 = vunpack.c.l.b16 %v2496
        %v2977 = vunpack.c.l.b16 %v2497
        %v2978 = vunpack.c.h.b16 %v2497
        %v2979 = vunpack.c.l.b16 %v2498
        %v2980 = vunpack.c.h.b16 %v2498
        %v2981 = vunpack.c.l.b16 %v2499
        %v2982 = vunpack.c.h.b16 %v2499
        %v2983 = vunpack.c.l.b16 %v2500
        %v2984 = vunpack.c.h.b16 %v2500
        %v2985 = vunpack.c.l.b16 %v2501
        %v2986 = vunpack.c.l.b16 %v2502
        %v2987 = vunpack.c.h.b16 %v2502
        %v2988 = vunpack.c.l.b16 %v2503
        %v2989 = vunpack.c.h.b16 %v2503
        %v2990 = vunpack.c.l.b16 %v2504
        %v2991 = vunpack.c.h.b16 %v2504
        %v2992 = vunpack.c.l.b16 %v2505
        %v2993 = vunpack.c.h.b16 %v2505
        %v2994 = vunpack.c.l.b16 %v2506
        %v2995 = vunpack.c.l.b16 %v2507
        %v2996 = vunpack.c.h.b16 %v2507
        %v2997 = vunpack.c.l.b16 %v2508
        %v2998 = vunpack.c.h.b16 %v2508
        %v2999 = vunpack.c.l.b16 %v2509
        %v3000 = vunpack.c.h.b16 %v2509
        %v3001 = vunpack.c.l.b16 %v2510
        %v3002 = vunpack.c.h.b16 %v2510
        %v3003 = vunpack.c.l.b16 %v2511
        %v3004 = vunpack.c.l.b16 %v2512
        %v3005 = vunpack.c.h.b16 %v2512
        %v3006 = vunpack.c.l.b16 %v2513
        %v3007 = vunpack.c.h.b16 %v2513
        %v3008 = vunpack.c.l.b16 %v2514
        %v3009 = vunpack.c.h.b16 %v2514
        %v3010 = vunpack.c.l.b16 %v2515
        %v3011 = vunpack.c.h.b16 %v2515
        %v3012 = vunpack.c.l.b16 %v2516
        %v3013 = vunpack.c.l.b16 %v2517
        %v3014 = vunpack.c.h.b16 %v2517
        %v3015 = vunpack.c.l.b16 %v2518
        %v3016 = vunpack.c.h.b16 %v2518
        %v3017 = vunpack.c.l.b16 %v2519
        %v3018 = vunpack.c.h.b16 %v2519
        %v3019 = vunpack.c.l.b16 %v2520
        %v3020 = vunpack.c.h.b16 %v2520
        %v3021 = vunpack.c.l.b16 %v2521
        %v3022 = vunpack.c.l.b16 %v2522
        %v3023 = vunpack.c.h.b16 %v2522
        %v3024 = vunpack.c.l.b16 %v2523
        %v3025 = vunpack.c.h.b16 %v2523
        %v3026 = vunpack.c.l.b16 %v2524
        %v3027 = vunpack.c.h.b16 %v2524
        %v3028 = vunpack.c.l.b16 %v2525
        %v3029 = vunpack.c.h.b16 %v2525
        %v3030 = vunpack.c.l.b16 %v2526
        %v3031 = vunpack.c.l.b16 %v2527
        %v3032 = vunpack.c.h.b16 %v2527
        %v3033 = vunpack.c.l.b16 %v2528
        %v3034 = vunpack.c.h.b16 %v2528
        %v3035 = vunpack.c.l.b16 %v2529
        %v3036 = vunpack.c.h.b16 %v2529
        %v3037 = vunpack.c.l.b16 %v2530
        %v3038 = vunpack.c.h.b16 %v2530
        %v3039 = vunpack.c.l.b16 %v2531
        %v3040 = vunpack.c.l.b16 %v2532
        %v3041 = vunpack.c.h.b16 %v2532
        %v3042 = vunpack.c.l.b16 %v2533
        %v3043 = vunpack.c.h.b16 %v2533
        %v3044 = vunpack.c.l.b16 %v2534
        %v3045 = vunpack.c.h.b16 %v2534
        %v3046 = vunpack.c.l.b16 %v2535
        %v3047 = vunpack.c.h.b16 %v2535
        %v3048 = vunpack.c.l.b16 %v2536
        %v3049 = vunpack.c.l.b16 %v2537
        %v3050 = vunpack.c.h.b16 %v2537
        %v3051 = vunpack.c.l.b16 %v2538
        %v3052 = vunpack.c.h.b16 %v2538
        %v3053 = vunpack.c.l.b16 %v2539
        %v3054 = vunpack.c.h.b16 %v2539
        %v3055 = vunpack.c.l.b16 %v2540
        %v3056 = vunpack.c.h.b16 %v2540
        %v3057 = vunpack.c.l.b16 %v2541
        %v3058 = vunpack.c.l.b16 %v2542
        %v3059 = vunpack.c.h.b16 %v2542
        %v3060 = vunpack.c.l.b16 %v2543
        %v3061 = vunpack.c.h.b16 %v2543
        %v3062 = vunpack.c.l.b16 %v2544
        %v3063 = vunpack.c.h.b16 %v2544
        %v3064 = vunpack.c.l.b16 %v2545
        %v3065 = vunpack.c.h.b16 %v2545
        %v3066 = vunpack.c.l.b16 %v2546
        %v3067 = vunpack.c.l.b16 %v2547
        %v3068 = vunpack.c.h.b16 %v2547
        %v3069 = vunpack.c.l.b16 %v2548
        %v3070 = vunpack.c.h.b16 %v2548
        %v3071 = vunpack.c.l.b16 %v2549
        %v3072 = vunpack.c.h.b16 %v2549
        %v3073 = vunpack.c.l.b16 %v2550
        %v3074 = vunpack.c.h.b16 %v2550
        %v3075 = vunpack.c.l.b16 %v2551
        %v3076 = vunpack.c.l.b16 %v2552
        %v3077 = vunpack.c.h.b16 %v2552
        %v3078 = vunpack.c.l.b16 %v2553
        %v3079 = vunpack.c.h.b16 %v2553
        %v3080 = vunpack.c.l.b16 %v2554
        %v3081 = vunpack.c.h.b16 %v2554
        %v3082 = vunpack.c.l.b16 %v2555
        %v3083 = vunpack.c.h.b16 %v2555
        %v3084 = vunpack.c.l.b16 %v2556
        %v3085 = vunpack.c.l.b16 %v2557
        %v3086 = vunpack.c.h.b16 %v2557
        %v3087 = vunpack.c.l.b16 %v2558
        %v3088 = vunpack.c.h.b16 %v2558
        %v3089 = vunpack.c.l.b16 %v2559
        %v3090 = vunpack.c.h.b16 %v2559
        %v3091 = vunpack.c.l.b16 %v2560
        %v3092 = vunpack.c.h.b16 %v2560
        %v3093 = vunpack.c.l.b16 %v2561
        %v3094 = vunpack.c.l.b16 %v2562
        %v3095 = vunpack.c.h.b16 %v2562
        %v3096 = vunpack.c.l.b16 %v2563
        %v3097 = vunpack.c.h.b16 %v2563
        %v3098 = vunpack.c.l.b16 %v2564
        %v3099 = vunpack.c.h.b16 %v2564
        %v3100 = vunpack.c.l.b16 %v2565
        %v3101 = vunpack.c.h.b16 %v2565
        %v3102 = vunpack.c.l.b16 %v2566
        %v3103 = vunpack.c.l.b16 %v2567
        %v3104 = vunpack.c.h.b16 %v2567
        %v3105 = vunpack.c.l.b16 %v2568
        %v3106 = vunpack.c.h.b16 %v2568
        %v3107 = vunpack.c.l.b16 %v2569
        %v3108 = vunpack.c.h.b16 %v2569
        %v3109 = vunpack.c.l.b16 %v2570
        %v3110 = vunpack.c.h.b16 %v2570
        %v3111 = vunpack.c.l.b16 %v2571
        %v3112 = vunpack.c.l.b16 %v2572
        %v3113 = vunpack.c.h.b16 %v2572
        %v3114 = vunpack.c.l.b16 %v2573
        %v3115 = vunpack.c.h.b16 %v2573
        %v3116 = vunpack.c.l.b16 %v2574
        %v3117 = vunpack.c.h.b16 %v2574
        %v3118 = vunpack.c.l.b16 %v2575
        %v3119 = vunpack.c.h.b16 %v2575
        %v3120 = vunpack.c.l.b16 %v2576
        %v3121 = vunpack.c.l.b16 %v2577
        %v3122 = vunpack.c.h.b16 %v2577
        %v3123 = vunpack.c.l.b16 %v2578
        %v3124 = vunpack.c.h.b16 %v2578
        %v3125 = vunpack.c.l.b16 %v2579
        %v3126 = vunpack.c.h.b16 %v2579
        %v3127 = vunpack.c.l.b16 %v2580
        %v3128 = vunpack.c.h.b16 %v2580
        %v3129 = vunpack.c.l.b16 %v2581
        %v3130 = vunpack.c.l.b16 %v2582
        %v3131 = vunpack.c.h.b16 %v2582
        %v3132 = vunpack.c.l.b16 %v2583
        %v3133 = vunpack.c.h.b16 %v2583
        %v3134 = vunpack.c.l.b16 %v2584
        %v3135 = vunpack.c.h.b16 %v2584
        %v3136 = vunpack.c.l.b16 %v2585
        %v3137 = vunpack.c.h.b16 %v2585
        %v3138 = vunpack.c.l.b16 %v2586
        %v3139 = vunpack.c.l.b16 %v2587
        %v3140 = vunpack.c.h.b16 %v2587
        %v3141 = vunpack.c.l.b16 %v2588
        %v3142 = vunpack.c.h.b16 %v2588
        %v3143 = vunpack.c.l.b16 %v2589
        %v3144 = vunpack.c.h.b16 %v2589
        %v3145 = vunpack.c.l.b16 %v2590
        %v3146 = vunpack.c.h.b16 %v2590
        %v3147 = vunpack.c.l.b16 %v2591
        %v3148 = vunpack.c.l.b16 %v2592
        %v3149 = vunpack.c.h.b16 %v2592
        %v3150 = vunpack.c.l.b16 %v2593
        %v3151 = vunpack.c.h.b16 %v2593
        %v3152 = vunpack.c.l.b16 %v2594
        %v3153 = vunpack.c.h.b16 %v2594
        %v3154 = vunpack.c.l.b16 %v2595
        %v3155 = vunpack.c.h.b16 %v2595
        %v3156 = vunpack.c.l.b16 %v2596
        %v3157 = vunpack.c.l.b16 %v2597
        %v3158 = vunpack.c.h.b16 %v2597
        %v3159 = vunpack.c.l.b16 %v2598
        %v3160 = vunpack.c.h.b16 %v2598
        %v3161 = vunpack.c.l.b16 %v2599
        %v3162 = vunpack.c.h.b16 %v2599
        %v3163 = vunpack.c.l.b16 %v2600
        %v3164 = vunpack.c.h.b16 %v2600
        %v3165 = vunpack.c.l.b16 %v2601
        %v3166 = vunpack.c.l.b16 %v2602
        %v3167 = vunpack.c.h.b16 %v2602
        %v3168 = vunpack.c.l.b16 %v2603
        %v3169 = vunpack.c.h.b16 %v2603
        %v3170 = vunpack.c.l.b16 %v2604
        %v3171 = vunpack.c.h.b16 %v2604
        %v3172 = vunpack.c.l.b16 %v2605
        %v3173 = vunpack.c.h.b16 %v2605
        %v3174 = vunpack.c.l.b16 %v2606
        %v3175 = vunpack.c.l.b16 %v2607
        %v3176 = vunpack.c.h.b16 %v2607
        %v3177 = vunpack.c.l.b16 %v2608
        %v3178 = vunpack.c.h.b16 %v2608
        %v3179 = vunpack.c.l.b16 %v2609
        %v3180 = vunpack.c.h.b16 %v2609
        %v3181 = vunpack.c.l.b16 %v2610
        %v3182 = vunpack.c.h.b16 %v2610
        %v3183 = vunpack.c.l.b16 %v2611
        %v3184 = vunpack.c.l.b16 %v2612
        %v3185 = vunpack.c.h.b16 %v2612
        %v3186 = vunpack.c.l.b16 %v2613
        %v3187 = vunpack.c.h.b16 %v2613
        %v3188 = vunpack.c.l.b16 %v2614
        %v3189 = vunpack.c.h.b16 %v2614
        %v3190 = vunpack.c.l.b16 %v2615
        %v3191 = vunpack.c.h.b16 %v2615
        %v3192 = vunpack.c.l.b16 %v2616
        %v3193 = vunpack.c.l.b16 %v2617
        %v3194 = vunpack.c.h.b16 %v2617
        %v3195 = vunpack.c.l.b16 %v2618
        %v3196 = vunpack.c.h.b16 %v2618
        %v3197 = vunpack.c.l.b16 %v2619
        %v3198 = vunpack.c.h.b16 %v2619
        %v3199 = vunpack.c.l.b16 %v2620
        %v3200 = vunpack.c.h.b16 %v2620
        %v3201 = vunpack.c.l.b16 %v2621
        %v3202 = vunpack.c.l.b16 %v2622
        %v3203 = vunpack.c.h.b16 %v2622
        %v3204 = vunpack.c.l.b16 %v2623
        %v3205 = vunpack.c.h.b16 %v2623
        %v3206 = vunpack.c.l.b16 %v2624
        %v3207 = vunpack.c.h.b16 %v2624
        %v3208 = vunpack.c.l.b16 %v2625
        %v3209 = vunpack.c.h.b16 %v2625
        %v3210 = vunpack.c.l.b16 %v2626
        %v3211 = vunpack.c.l.b16 %v2627
        %v3212 = vunpack.c.h.b16 %v2627
        %v3213 = vunpack.c.l.b16 %v2628
        %v3214 = vunpack.c.h.b16 %v2628
        %v3215 = vunpack.c.l.b16 %v2629
        %v3216 = vunpack.c.h.b16 %v2629
        %v3217 = vunpack.c.l.b16 %v2630
        %v3218 = vunpack.c.h.b16 %v2630
        %v3219 = vunpack.c.l.b16 %v2631
        %v3220 = vunpack.c.l.b16 %v2632
        %v3221 = vunpack.c.h.b16 %v2632
        %v3222 = vunpack.c.l.b16 %v2633
        %v3223 = vunpack.c.h.b16 %v2633
        %v3224 = vunpack.c.l.b16 %v2634
        %v3225 = vunpack.c.h.b16 %v2634
        %v3226 = vunpack.c.l.b16 %v2635
        %v3227 = vunpack.c.h.b16 %v2635
        %v3228 = vunpack.c.l.b16 %v2636
        %v3229 = vunpack.c.l.b16 %v2637
        %v3230 = vunpack.c.h.b16 %v2637
        %v3231 = vunpack.c.l.b16 %v2638
        %v3232 = vunpack.c.h.b16 %v2638
        %v3233 = vunpack.c.l.b16 %v2639
        %v3234 = vunpack.c.h.b16 %v2639
        %v3235 = vunpack.c.l.b16 %v2640
        %v3236 = vunpack.c.h.b16 %v2640
        %v3237 = vunpack.c.l.b16 %v2641
        %v3238 = vpack.c.b16 %v2959, %v2950
        %v3239 = vpack.c.b16 %v2960, %v2951
        %v3240 = vpack.c.b16 %v2961, %v2952
        %v3241 = vpack.c.b16 %v2962, %v2953
        %v3242 = vpack.c.b16 %v2963, %v2954
        %v3243 = vpack.c.b16 %v2964, %v2955
        %v3244 = vpack.c.b16 %v2965, %v2956
        %v3245 = vpack.c.b16 %v2966, %v2957
        %v3246 = vpack.c.b16 %v2967, %v2958
        %v3247 = vpack.c.b16 %v2977, %v2968
        %v3248 = vpack.c.b16 %v2978, %v2969
        %v3249 = vpack.c.b16 %v2979, %v2970
        %v3250 = vpack.c.b16 %v2980, %v2971
        %v3251 = vpack.c.b16 %v2981, %v2972
        %v3252 = vpack.c.b16 %v2982, %v2973
        %v3253 = vpack.c.b16 %v2983, %v2974
        %v3254 = vpack.c.b16 %v2984, %v2975
        %v3255 = vpack.c.b16 %v2985, %v2976
        %v3256 = vpack.c.b16 %v2995, %v2986
        %v3257 = vpack.c.b16 %v2996, %v2987
        %v3258 = vpack.c.b16 %v2997, %v2988
        %v3259 = vpack.c.b16 %v2998, %v2989
        %v3260 = vpack.c.b16 %v2999, %v2990
        %v3261 = vpack.c.b16 %v3000, %v2991
        %v3262 = vpack.c.b16 %v3001, %v2992
        %v3263 = vpack.c.b16 %v3002, %v2993
        %v3264 = vpack.c.b16 %v3003, %v2994
        %v3265 = vpack.c.b16 %v3013, %v3004
        %v3266 = vpack.c.b16 %v3014, %v3005
        %v3267 = vpack.c.b16 %v3015, %v3006
        %v3268 = vpack.c.b16 %v3016, %v3007
        %v3269 = vpack.c.b16 %v3017, %v3008
        %v3270 = vpack.c.b16 %v3018, %v3009
        %v3271 = vpack.c.b16 %v3019, %v3010
        %v3272 = vpack.c.b16 %v3020, %v3011
        %v3273 = vpack.c.b16 %v3021, %v3012
        %v3274 = vpack.c.b16 %v3031, %v3022
        %v3275 = vpack.c.b16 %v3032, %v3023
        %v3276 = vpack.c.b16 %v3033, %v3024
        %v3277 = vpack.c.b16 %v3034, %v3025
        %v3278 = vpack.c.b16 %v3035, %v3026
        %v3279 = vpack.c.b16 %v3036, %v3027
        %v3280 = vpack.c.b16 %v3037, %v3028
        %v3281 = vpack.c.b16 %v3038, %v3029
        %v3282 = vpack.c.b16 %v3039, %v3030
        %v3283 = vpack.c.b16 %v3049, %v3040
        %v3284 = vpack.c.b16 %v3050, %v3041
        %v3285 = vpack.c.b16 %v3051, %v3042
        %v3286 = vpack.c.b16 %v3052, %v3043
        %v3287 = vpack.c.b16 %v3053, %v3044
        %v3288 = vpack.c.b16 %v3054, %v3045
        %v3289 = vpack.c.b16 %v3055, %v3046
        %v3290 = vpack.c.b16 %v3056, %v3047
        %v3291 = vpack.c.b16 %v3057, %v3048
        %v3292 = vpack.c.b16 %v3067, %v3058
        %v3293 = vpack.c.b16 %v3068, %v3059
        %v3294 = vpack.c.b16 %v3069, %v3060
        %v3295 = vpack.c.b16 %v3070, %v3061
        %v3296 = vpack.c.b16 %v3071, %v3062
        %v3297 = vpack.c.b16 %v3072, %v3063
        %v3298 = vpack.c.b16 %v3073, %v3064
        %v3299 = vpack.c.b16 %v3074, %v3065
        %v3300 = vpack.c.b16 %v3075, %v3066
        %v3301 = vpack.c.b16 %v3085, %v3076
        %v3302 = vpack.c.b16 %v3086, %v3077
        %v3303 = vpack.c.b16 %v3087, %v3078
        %v3304 = vpack.c.b16 %v3088, %v3079
        %v3305 = vpack.c.b16 %v3089, %v3080
        %v3306 = vpack.c.b16 %v3090, %v3081
        %v3307 = vpack.c.b16 %v3091, %v3082
        %v3308 = vpack.c.b16 %v3092, %v3083
        %v3309 = vpack.c.b16 %v3093, %v3084
        %v3310 = vpack.c.b16 %v3103, %v3094
        %v3311 = vpack.c.b16 %v3104, %v3095
        %v3312 = vpack.c.b16 %v3105, %v3096
        %v3313 = vpack.c.b16 %v3106, %v3097
        %v3314 = vpack.c.b16 %v3107, %v3098
        %v3315 = vpack.c.b16 %v3108, %v3099
        %v3316 = vpack.c.b16 %v3109, %v3100
        %v3317 = vpack.c.b16 %v3110, %v3101
        %v3318 = vpack.c.b16 %v3111, %v3102
        %v3319 = vpack.c.b16 %v3121, %v3112
        %v3320 = vpack.c.b16 %v3122, %v3113
        %v3321 = vpack.c.b16 %v3123, %v3114
        %v3322 = vpack.c.b16 %v3124, %v3115
        %v3323 = vpack.c.b16 %v3125, %v3116
        %v3324 = vpack.c.b16 %v3126, %v3117
        %v3325 = vpack.c.b16 %v3127, %v3118
        %v3326 = vpack.c.b16 %v3128, %v3119
        %v3327 = vpack.c.b16 %v3129, %v3120
        %v3328 = vpack.c.b16 %v3139, %v3130
        %v3329 = vpack.c.b16 %v3140, %v3131
        %v3330 = vpack.c.b16 %v3141, %v3132
        %v3331 = vpack.c.b16 %v3142, %v3133
        %v3332 = vpack.c.b16 %v3143, %v3134
        %v3333 = vpack.c.b16 %v3144, %v3135
        %v3334 = vpack.c.b16 %v3145, %v3136
        %v3335 = vpack.c.b16 %v3146, %v3137
        %v3336 = vpack.c.b16 %v3147, %v3138
        %v3337 = vpack.c.b16 %v3157, %v3148
        %v3338 = vpack.c.b16 %v3158, %v3149
        %v3339 = vpack.c.b16 %v3159, %v3150
        %v3340 = vpack.c.b16 %v3160, %v3151
        %v3341 = vpack.c.b16 %v3161, %v3152
        %v3342 = vpack.c.b16 %v3162, %v3153
        %v3343 = vpack.c.b16 %v3163, %v3154
        %v3344 = vpack.c.b16 %v3164, %v3155
        %v3345 = vpack.c.b16 %v3165, %v3156
        %v3346 = vpack.c.b16 %v3175, %v3166
        %v3347 = vpack.c.b16 %v3176, %v3167
        %v3348 = vpack.c.b16 %v3177, %v3168
        %v3349 = vpack.c.b16 %v3178, %v3169
        %v3350 = vpack.c.b16 %v3179, %v3170
        %v3351 = vpack.c.b16 %v3180, %v3171
        %v3352 = vpack.c.b16 %v3181, %v3172
        %v3353 = vpack.c.b16 %v3182, %v3173
        %v3354 = vpack.c.b16 %v3183, %v3174
        %v3355 = vpack.c.b16 %v3193, %v3184
        %v3356 = vpack.c.b16 %v3194, %v3185
        %v3357 = vpack.c.b16 %v3195, %v3186
        %v3358 = vpack.c.b16 %v3196, %v3187
        %v3359 = vpack.c.b16 %v3197, %v3188
        %v3360 = vpack.c.b16 %v3198, %v3189
        %v3361 = vpack.c.b16 %v3199, %v3190
        %v3362 = vpack.c.b16 %v3200, %v3191
        %v3363 = vpack.c.b16 %v3201, %v3192
        %v3364 = vpack.c.b16 %v3211, %v3202
        %v3365 = vpack.c.b16 %v3212, %v3203
        %v3366 = vpack.c.b16 %v3213, %v3204
        %v3367 = vpack.c.b16 %v3214, %v3205
        %v3368 = vpack.c.b16 %v3215, %v3206
        %v3369 = vpack.c.b16 %v3216, %v3207
        %v3370 = vpack.c.b16 %v3217, %v3208
        %v3371 = vpack.c.b16 %v3218, %v3209
        %v3372 = vpack.c.b16 %v3219, %v3210
        %v3373 = vpack.c.b16 %v3229, %v3220
        %v3374 = vpack.c.b16 %v3230, %v3221
        %v3375 = vpack.c.b16 %v3231, %v3222
        %v3376 = vpack.c.b16 %v3232, %v3223
        %v3377 = vpack.c.b16 %v3233, %v3224
        %v3378 = vpack.c.b16 %v3234, %v3225
        %v3379 = vpack.c.b16 %v3235, %v3226
        %v3380 = vpack.c.b16 %v3236, %v3227
        %v3381 = vpack.c.b16 %v3237, %v3228
        %v3670 = vunpack.c.l.b16 %v2642
        %v3671 = vunpack.c.l.b16 %v2643
        %v3672 = vunpack.c.l.b16 %v2644
        %v3673 = vunpack.c.l.b16 %v2645
        %v3674 = vunpack.c.l.b16 %v2646
        %v3675 = vunpack.c.l.b16 %v2647
        %v3676 = vunpack.c.l.b16 %v2648
        %v3677 = vunpack.c.l.b16 %v2649
        %v3678 = vunpack.c.l.b16 %v2650
        %v3679 = vunpack.c.l.b16 %v2651
        %v3680 = vunpack.c.l.b16 %v2652
        %v3681 = vunpack.c.l.b16 %v2653
        %v3682 = vunpack.c.l.b16 %v2654
        %v3683 = vunpack.c.l.b16 %v2655
        %v3684 = vunpack.c.l.b16 %v2656
        %v3685 = vunpack.c.l.b16 %v2657
        %v3686 = vunpack.c.l.b16 %v2658
        %v3687 = vunpack.c.l.b16 %v2659
        %v3688 = vunpack.c.l.b16 %v2660
        %v3689 = vunpack.c.l.b16 %v2661
        %v3690 = vunpack.c.l.b16 %v2662
        %v3691 = vunpack.c.l.b16 %v2663
        %v3692 = vunpack.c.l.b16 %v2664
        %v3693 = vunpack.c.l.b16 %v2665
        %v3694 = vunpack.c.l.b16 %v2666
        %v3695 = vunpack.c.l.b16 %v2667
        %v3696 = vunpack.c.l.b16 %v2668
        %v3697 = vunpack.c.l.b16 %v2669
        %v3698 = vunpack.c.l.b16 %v2670
        %v3699 = vunpack.c.l.b16 %v2671
        %v3700 = vunpack.c.l.b16 %v2672
        %v3701 = vunpack.c.l.b16 %v2673
        %v3702 = vunpack.c.l.b16 %v2674
        %v3703 = vunpack.c.l.b16 %v2675
        %v3704 = vunpack.c.l.b16 %v2676
        %v3705 = vunpack.c.l.b16 %v2677
        %v3706 = vunpack.c.l.b16 %v2678
        %v3707 = vunpack.c.l.b16 %v2679
        %v3708 = vunpack.c.l.b16 %v2680
        %v3709 = vunpack.c.l.b16 %v2681
        %v3710 = vunpack.c.l.b16 %v2682
        %v3711 = vunpack.c.l.b16 %v2683
        %v3712 = vunpack.c.l.b16 %v2684
        %v3713 = vunpack.c.l.b16 %v2685
        %v3714 = vunpack.c.l.b16 %v2686
        %v3715 = vunpack.c.l.b16 %v2687
        %v3716 = vunpack.c.l.b16 %v2688
        %v3717 = vunpack.c.l.b16 %v2689
        %v3718 = vunpack.c.l.b16 %v2690
        %v3719 = vunpack.c.l.b16 %v2691
        %v3720 = vunpack.c.l.b16 %v2692
        %v3721 = vunpack.c.l.b16 %v2693
        %v3722 = vunpack.c.l.b16 %v2694
        %v3723 = vunpack.c.l.b16 %v2695
        %v3724 = vunpack.c.l.b16 %v2696
        %v3725 = vunpack.c.l.b16 %v2697
        %v3726 = vunpack.c.l.b16 %v2698
        %v3727 = vunpack.c.l.b16 %v2699
        %v3728 = vunpack.c.l.b16 %v2700
        %v3729 = vunpack.c.l.b16 %v2701
        %v3730 = vunpack.c.l.b16 %v2702
        %v3731 = vunpack.c.l.b16 %v2703
        %v3732 = vunpack.c.l.b16 %v2704
        %v3733 = vunpack.c.l.b16 %v2705
        %v3734 = vunpack.c.l.b16 %v2706
        %v3735 = vunpack.c.l.b16 %v2707
        %v3736 = vunpack.c.l.b16 %v2708
        %v3737 = vunpack.c.l.b16 %v2709
        %v3738 = vunpack.c.l.b16 %v2710
        %v3739 = vunpack.c.l.b16 %v2711
        %v3740 = vunpack.c.l.b16 %v2712
        %v3741 = vunpack.c.l.b16 %v2713
        %v3742 = vunpack.c.l.b16 %v2714
        %v3743 = vunpack.c.l.b16 %v2715
        %v3744 = vunpack.c.l.b16 %v2716
        %v3745 = vunpack.c.l.b16 %v2717
        %v3746 = vunpack.c.l.b16 %v2718
        %v3747 = vunpack.c.l.b16 %v2719
        %v3748 = vunpack.c.l.b16 %v2720
        %v3749 = vunpack.c.l.b16 %v2721
        %v3750 = vunpack.c.l.b16 %v2722
        %v3751 = vunpack.c.l.b16 %v2723
        %v3752 = vunpack.c.l.b16 %v2724
        %v3753 = vunpack.c.l.b16 %v2725
        %v3754 = vunpack.c.l.b16 %v2726
        %v3755 = vunpack.c.l.b16 %v2727
        %v3756 = vunpack.c.l.b16 %v2728
        %v3757 = vunpack.c.l.b16 %v2729
        %v3758 = vunpack.c.l.b16 %v2730
        %v3759 = vunpack.c.l.b16 %v2731
        %v3760 = vunpack.c.l.b16 %v2732
        %v3761 = vunpack.c.l.b16 %v2733
        %v3762 = vunpack.c.l.b16 %v2734
        %v3763 = vunpack.c.l.b16 %v2735
        %v3764 = vunpack.c.l.b16 %v2736
        %v3765 = vunpack.c.l.b16 %v2737
        %v3766 = vunpack.c.l.b16 %v2738
        %v3767 = vunpack.c.l.b16 %v2739
        %v3768 = vunpack.c.l.b16 %v2740
        %v3769 = vunpack.c.l.b16 %v2741
        %v3770 = vunpack.c.l.b16 %v2742
        %v3771 = vunpack.c.l.b16 %v2743
        %v3772 = vunpack.c.l.b16 %v2744
        %v3773 = vunpack.c.l.b16 %v2745
        %v3774 = vunpack.c.l.b16 %v2746
        %v3775 = vunpack.c.l.b16 %v2747
        %v3776 = vunpack.c.l.b16 %v2748
        %v3777 = vunpack.c.l.b16 %v2749
        %v3778 = vunpack.c.l.b16 %v2750
        %v3779 = vunpack.c.l.b16 %v2751
        %v3780 = vunpack.c.l.b16 %v2752
        %v3781 = vunpack.c.l.b16 %v2753
        %v3782 = vunpack.c.l.b16 %v2754
        %v3783 = vunpack.c.l.b16 %v2755
        %v3784 = vunpack.c.l.b16 %v2756
        %v3785 = vunpack.c.l.b16 %v2757
        %v3786 = vunpack.c.l.b16 %v2758
        %v3787 = vunpack.c.l.b16 %v2759
        %v3788 = vunpack.c.l.b16 %v2760
        %v3789 = vunpack.c.l.b16 %v2761
        %v3790 = vunpack.c.l.b16 %v2762
        %v3791 = vunpack.c.l.b16 %v2763
        %v3792 = vunpack.c.l.b16 %v2764
        %v3793 = vunpack.c.l.b16 %v2765
        %v3794 = vunpack.c.l.b16 %v2766
        %v3795 = vunpack.c.l.b16 %v2767
        %v3796 = vunpack.c.l.b16 %v2768
        %v3797 = vunpack.c.l.b16 %v2769
        %v3798 = vunpack.c.l.b16 %v2770
        %v3799 = vunpack.c.l.b16 %v2771
        %v3800 = vunpack.c.l.b16 %v2772
        %v3801 = vunpack.c.l.b16 %v2773
        %v3802 = vunpack.c.l.b16 %v2774
        %v3803 = vunpack.c.l.b16 %v2775
        %v3804 = vunpack.c.l.b16 %v2776
        %v3805 = vunpack.c.l.b16 %v2777
        %v3806 = vunpack.c.l.b16 %v2778
        %v3807 = vunpack.c.l.b16 %v2779
        %v3808 = vunpack.c.l.b16 %v2780
        %v3809 = vunpack.c.l.b16 %v2781
        %v3810 = vunpack.c.l.b16 %v2782
        %v3811 = vunpack.c.l.b16 %v2783
        %v3812 = vunpack.c.l.b16 %v2784
        %v3813 = vunpack.c.l.b16 %v2785
        %v3814 = vpack.c.b16 %v3671, %v3670
        %v3815 = vpack.c.b16 %v3673, %v3672
        %v3816 = vpack.c.b16 %v3675, %v3674
        %v3817 = vpack.c.b16 %v3677, %v3676
        %v3818 = vpack.c.b16 %v3679, %v3678
        %v3819 = vpack.c.b16 %v3681, %v3680
        %v3820 = vpack.c.b16 %v3683, %v3682
        %v3821 = vpack.c.b16 %v3685, %v3684
        %v3822 = vpack.c.b16 %v3687, %v3686
        %v3823 = vpack.c.b16 %v3689, %v3688
        %v3824 = vpack.c.b16 %v3691, %v3690
        %v3825 = vpack.c.b16 %v3693, %v3692
        %v3826 = vpack.c.b16 %v3695, %v3694
        %v3827 = vpack.c.b16 %v3697, %v3696
        %v3828 = vpack.c.b16 %v3699, %v3698
        %v3829 = vpack.c.b16 %v3701, %v3700
        %v3830 = vpack.c.b16 %v3703, %v3702
        %v3831 = vpack.c.b16 %v3705, %v3704
        %v3832 = vpack.c.b16 %v3707, %v3706
        %v3833 = vpack.c.b16 %v3709, %v3708
        %v3834 = vpack.c.b16 %v3711, %v3710
        %v3835 = vpack.c.b16 %v3713, %v3712
        %v3836 = vpack.c.b16 %v3715, %v3714
        %v3837 = vpack.c.b16 %v3717, %v3716
        %v3838 = vpack.c.b16 %v3719, %v3718
        %v3839 = vpack.c.b16 %v3721, %v3720
        %v3840 = vpack.c.b16 %v3723, %v3722
        %v3841 = vpack.c.b16 %v3725, %v3724
        %v3842 = vpack.c.b16 %v3727, %v3726
        %v3843 = vpack.c.b16 %v3729, %v3728
        %v3844 = vpack.c.b16 %v3731, %v3730
        %v3845 = vpack.c.b16 %v3733, %v3732
        %v3846 = vpack.c.b16 %v3735, %v3734
        %v3847 = vpack.c.b16 %v3737, %v3736
        %v3848 = vpack.c.b16 %v3739, %v3738
        %v3849 = vpack.c.b16 %v3741, %v3740
        %v3850 = vpack.c.b16 %v3743, %v3742
        %v3851 = vpack.c.b16 %v3745, %v3744
        %v3852 = vpack.c.b16 %v3747, %v3746
        %v3853 = vpack.c.b16 %v3749, %v3748
        %v3854 = vpack.c.b16 %v3751, %v3750
        %v3855 = vpack.c.b16 %v3753, %v3752
        %v3856 = vpack.c.b16 %v3755, %v3754
        %v3857 = vpack.c.b16 %v3757, %v3756
        %v3858 = vpack.c.b16 %v3759, %v3758
        %v3859 = vpack.c.b16 %v3761, %v3760
        %v3860 = vpack.c.b16 %v3763, %v3762
        %v3861 = vpack.c.b16 %v3765, %v3764
        %v3862 = vpack.c.b16 %v3767, %v3766
        %v3863 = vpack.c.b16 %v3769, %v3768
        %v3864 = vpack.c.b16 %v3771, %v3770
        %v3865 = vpack.c.b16 %v3773, %v3772
        %v3866 = vpack.c.b16 %v3775, %v3774
        %v3867 = vpack.c.b16 %v3777, %v3776
        %v3868 = vpack.c.b16 %v3779, %v3778
        %v3869 = vpack.c.b16 %v3781, %v3780
        %v3870 = vpack.c.b16 %v3783, %v3782
        %v3871 = vpack.c.b16 %v3785, %v3784
        %v3872 = vpack.c.b16 %v3787, %v3786
        %v3873 = vpack.c.b16 %v3789, %v3788
        %v3874 = vpack.c.b16 %v3791, %v3790
        %v3875 = vpack.c.b16 %v3793, %v3792
        %v3876 = vpack.c.b16 %v3795, %v3794
        %v3877 = vpack.c.b16 %v3797, %v3796
        %v3878 = vpack.c.b16 %v3799, %v3798
        %v3879 = vpack.c.b16 %v3801, %v3800
        %v3880 = vpack.c.b16 %v3803, %v3802
        %v3881 = vpack.c.b16 %v3805, %v3804
        %v3882 = vpack.c.b16 %v3807, %v3806
        %v3883 = vpack.c.b16 %v3809, %v3808
        %v3884 = vpack.c.b16 %v3811, %v3810
        %v3885 = vpack.c.b16 %v3813, %v3812
        %3958 = vmatpush.bf16.msra.mxu0 %v3821
        %3959 = vmatpush.bf16.msra.mxu0 %v3820
        %3960 = vmatpush.bf16.msra.mxu0 %v3819
        %3961 = vmatpush.bf16.msra.mxu0 %v3818
        %3962 = vmatpush.bf16.msra.mxu0 %v3817
        %3963 = vmatpush.bf16.msra.mxu0 %v3816
        %3964 = vmatpush.bf16.msra.mxu0 %v3815
        %3965 = vmatpush.bf16.msra.mxu0 %v3814
        %3966 = vmatmul.bf16.gmra.mxu0 %v3238
        %v3967 = vpop.f32.mrf.mxu0
        %v3968 = vadd.f32 %v2788, %v3967
        %v3969 = vpop.f32.mrf.mxu0
        %v3970 = vadd.f32 %v2788, %v3969
        %3971 = vmatmul.bf16.gmra.mxu0 %v3247
        %v3972 = vpop.f32.mrf.mxu0
        %v3973 = vadd.f32 %v2788, %v3972
        %v3974 = vpop.f32.mrf.mxu0
        %v3975 = vadd.f32 %v2788, %v3974
        %3976 = vmatmul.bf16.gmra.mxu0 %v3256
        %v3977 = vpop.f32.mrf.mxu0
        %v3978 = vadd.f32 %v2788, %v3977
        %v3979 = vpop.f32.mrf.mxu0
        %v3980 = vadd.f32 %v2788, %v3979
        %3981 = vmatmul.bf16.gmra.mxu0 %v3265
        %v3982 = vpop.f32.mrf.mxu0
        %v3983 = vadd.f32 %v2788, %v3982
        %v3984 = vpop.f32.mrf.mxu0
        %v3985 = vadd.f32 %v2788, %v3984
        %3986 = vmatmul.bf16.gmra.mxu0 %v3274
        %v3987 = vpop.f32.mrf.mxu0
        %v3988 = vadd.f32 %v2788, %v3987
        %v3989 = vpop.f32.mrf.mxu0
        %v3990 = vadd.f32 %v2788, %v3989
        %3991 = vmatmul.bf16.gmra.mxu0 %v3283
        %v3992 = vpop.f32.mrf.mxu0
        %v3993 = vadd.f32 %v2788, %v3992
        %v3994 = vpop.f32.mrf.mxu0
        %v3995 = vadd.f32 %v2788, %v3994
        %3996 = vmatmul.bf16.gmra.mxu0 %v3292
        %v3997 = vpop.f32.mrf.mxu0
        %v3998 = vadd.f32 %v2788, %v3997
        %v3999 = vpop.f32.mrf.mxu0
        %v4000 = vadd.f32 %v2788, %v3999
        %4001 = vmatmul.bf16.gmra.mxu0 %v3301
        %v4002 = vpop.f32.mrf.mxu0
        %v4003 = vadd.f32 %v2788, %v4002
        %v4004 = vpop.f32.mrf.mxu0
        %v4005 = vadd.f32 %v2788, %v4004
        %4006 = vmatmul.bf16.gmra.mxu0 %v3310
        %v4007 = vpop.f32.mrf.mxu0
        %v4008 = vadd.f32 %v2788, %v4007
        %v4009 = vpop.f32.mrf.mxu0
        %v4010 = vadd.f32 %v2788, %v4009
        %4011 = vmatmul.bf16.gmra.mxu0 %v3319
        %v4012 = vpop.f32.mrf.mxu0
        %v4013 = vadd.f32 %v2788, %v4012
        %v4014 = vpop.f32.mrf.mxu0
        %v4015 = vadd.f32 %v2788, %v4014
        %4016 = vmatmul.bf16.gmra.mxu0 %v3328
        %v4017 = vpop.f32.mrf.mxu0
        %v4018 = vadd.f32 %v2788, %v4017
        %v4019 = vpop.f32.mrf.mxu0
        %v4020 = vadd.f32 %v2788, %v4019
        %4021 = vmatmul.bf16.gmra.mxu0 %v3337
        %v4022 = vpop.f32.mrf.mxu0
        %v4023 = vadd.f32 %v2788, %v4022
        %v4024 = vpop.f32.mrf.mxu0
        %v4025 = vadd.f32 %v2788, %v4024
        %4026 = vmatmul.bf16.gmra.mxu0 %v3346
        %v4027 = vpop.f32.mrf.mxu0
        %v4028 = vadd.f32 %v2788, %v4027
        %v4029 = vpop.f32.mrf.mxu0
        %v4030 = vadd.f32 %v2788, %v4029
        %4031 = vmatmul.bf16.gmra.mxu0 %v3355
        %v4032 = vpop.f32.mrf.mxu0
        %v4033 = vadd.f32 %v2788, %v4032
        %v4034 = vpop.f32.mrf.mxu0
        %v4035 = vadd.f32 %v2788, %v4034
        %4036 = vmatmul.bf16.gmra.mxu0 %v3364
        %v4037 = vpop.f32.mrf.mxu0
        %v4038 = vadd.f32 %v2788, %v4037
        %v4039 = vpop.f32.mrf.mxu0
        %v4040 = vadd.f32 %v2788, %v4039
        %4041 = vmatmul.bf16.gmra.mxu0 %v3373
        %v4042 = vpop.f32.mrf.mxu0
        %v4043 = vadd.f32 %v2788, %v4042
        %v4044 = vpop.f32.mrf.mxu0
        %v4045 = vadd.f32 %v2788, %v4044
        %4046 = vdwg.mxu0
        %4047 = vmatpush.bf16.msra.mxu0 %v3829
        %4048 = vmatpush.bf16.msra.mxu0 %v3828
        %4049 = vmatpush.bf16.msra.mxu0 %v3827
        %4050 = vmatpush.bf16.msra.mxu0 %v3826
        %4051 = vmatpush.bf16.msra.mxu0 %v3825
        %4052 = vmatpush.bf16.msra.mxu0 %v3824
        %4053 = vmatpush.bf16.msra.mxu0 %v3823
        %4054 = vmatpush.bf16.msra.mxu0 %v3822
        %4055 = vmatmul.bf16.gmra.mxu0 %v3239
        %v4056 = vpop.f32.mrf.mxu0
        %v4057 = vadd.f32 %v3968, %v4056
        %v4058 = vpop.f32.mrf.mxu0
        %v4059 = vadd.f32 %v3970, %v4058
        %4060 = vmatmul.bf16.gmra.mxu0 %v3248
        %v4061 = vpop.f32.mrf.mxu0
        %v4062 = vadd.f32 %v3973, %v4061
        %v4063 = vpop.f32.mrf.mxu0
        %v4064 = vadd.f32 %v3975, %v4063
        %4065 = vmatmul.bf16.gmra.mxu0 %v3257
        %v4066 = vpop.f32.mrf.mxu0
        %v4067 = vadd.f32 %v3978, %v4066
        %v4068 = vpop.f32.mrf.mxu0
        %v4069 = vadd.f32 %v3980, %v4068
        %4070 = vmatmul.bf16.gmra.mxu0 %v3266
        %v4071 = vpop.f32.mrf.mxu0
        %v4072 = vadd.f32 %v3983, %v4071
        %v4073 = vpop.f32.mrf.mxu0
        %v4074 = vadd.f32 %v3985, %v4073
        %4075 = vmatmul.bf16.gmra.mxu0 %v3275
        %v4076 = vpop.f32.mrf.mxu0
        %v4077 = vadd.f32 %v3988, %v4076
        %v4078 = vpop.f32.mrf.mxu0
        %v4079 = vadd.f32 %v3990, %v4078
        %4080 = vmatmul.bf16.gmra.mxu0 %v3284
        %v4081 = vpop.f32.mrf.mxu0
        %v4082 = vadd.f32 %v3993, %v4081
        %v4083 = vpop.f32.mrf.mxu0
        %v4084 = vadd.f32 %v3995, %v4083
        %4085 = vmatmul.bf16.gmra.mxu0 %v3293
        %v4086 = vpop.f32.mrf.mxu0
        %v4087 = vadd.f32 %v3998, %v4086
        %v4088 = vpop.f32.mrf.mxu0
        %v4089 = vadd.f32 %v4000, %v4088
        %4090 = vmatmul.bf16.gmra.mxu0 %v3302
        %v4091 = vpop.f32.mrf.mxu0
        %v4092 = vadd.f32 %v4003, %v4091
        %v4093 = vpop.f32.mrf.mxu0
        %v4094 = vadd.f32 %v4005, %v4093
        %4095 = vmatmul.bf16.gmra.mxu0 %v3311
        %v4096 = vpop.f32.mrf.mxu0
        %v4097 = vadd.f32 %v4008, %v4096
        %v4098 = vpop.f32.mrf.mxu0
        %v4099 = vadd.f32 %v4010, %v4098
        %4100 = vmatmul.bf16.gmra.mxu0 %v3320
        %v4101 = vpop.f32.mrf.mxu0
        %v4102 = vadd.f32 %v4013, %v4101
        %v4103 = vpop.f32.mrf.mxu0
        %v4104 = vadd.f32 %v4015, %v4103
        %4105 = vmatmul.bf16.gmra.mxu0 %v3329
        %v4106 = vpop.f32.mrf.mxu0
        %v4107 = vadd.f32 %v4018, %v4106
        %v4108 = vpop.f32.mrf.mxu0
        %v4109 = vadd.f32 %v4020, %v4108
        %4110 = vmatmul.bf16.gmra.mxu0 %v3338
        %v4111 = vpop.f32.mrf.mxu0
        %v4112 = vadd.f32 %v4023, %v4111
        %v4113 = vpop.f32.mrf.mxu0
        %v4114 = vadd.f32 %v4025, %v4113
        %4115 = vmatmul.bf16.gmra.mxu0 %v3347
        %v4116 = vpop.f32.mrf.mxu0
        %v4117 = vadd.f32 %v4028, %v4116
        %v4118 = vpop.f32.mrf.mxu0
        %v4119 = vadd.f32 %v4030, %v4118
        %4120 = vmatmul.bf16.gmra.mxu0 %v3356
        %v4121 = vpop.f32.mrf.mxu0
        %v4122 = vadd.f32 %v4033, %v4121
        %v4123 = vpop.f32.mrf.mxu0
        %v4124 = vadd.f32 %v4035, %v4123
        %4125 = vmatmul.bf16.gmra.mxu0 %v3365
        %v4126 = vpop.f32.mrf.mxu0
        %v4127 = vadd.f32 %v4038, %v4126
        %v4128 = vpop.f32.mrf.mxu0
        %v4129 = vadd.f32 %v4040, %v4128
        %4130 = vmatmul.bf16.gmra.mxu0 %v3374
        %v4131 = vpop.f32.mrf.mxu0
        %v4132 = vadd.f32 %v4043, %v4131
        %v4133 = vpop.f32.mrf.mxu0
        %v4134 = vadd.f32 %v4045, %v4133
        %4135 = vdwg.mxu0
        %4136 = vmatpush.bf16.msra.mxu0 %v3837
        %4137 = vmatpush.bf16.msra.mxu0 %v3836
        %4138 = vmatpush.bf16.msra.mxu0 %v3835
        %4139 = vmatpush.bf16.msra.mxu0 %v3834
        %4140 = vmatpush.bf16.msra.mxu0 %v3833
        %4141 = vmatpush.bf16.msra.mxu0 %v3832
        %4142 = vmatpush.bf16.msra.mxu0 %v3831
        %4143 = vmatpush.bf16.msra.mxu0 %v3830
        %4144 = vmatmul.bf16.gmra.mxu0 %v3240
        %v4145 = vpop.f32.mrf.mxu0
        %v4146 = vadd.f32 %v4057, %v4145
        %v4147 = vpop.f32.mrf.mxu0
        %v4148 = vadd.f32 %v4059, %v4147
        %4149 = vmatmul.bf16.gmra.mxu0 %v3249
        %v4150 = vpop.f32.mrf.mxu0
        %v4151 = vadd.f32 %v4062, %v4150
        %v4152 = vpop.f32.mrf.mxu0
        %v4153 = vadd.f32 %v4064, %v4152
        %4154 = vmatmul.bf16.gmra.mxu0 %v3258
        %v4155 = vpop.f32.mrf.mxu0
        %v4156 = vadd.f32 %v4067, %v4155
        %v4157 = vpop.f32.mrf.mxu0
        %v4158 = vadd.f32 %v4069, %v4157
        %4159 = vmatmul.bf16.gmra.mxu0 %v3267
        %v4160 = vpop.f32.mrf.mxu0
        %v4161 = vadd.f32 %v4072, %v4160
        %v4162 = vpop.f32.mrf.mxu0
        %v4163 = vadd.f32 %v4074, %v4162
        %4164 = vmatmul.bf16.gmra.mxu0 %v3276
        %v4165 = vpop.f32.mrf.mxu0
        %v4166 = vadd.f32 %v4077, %v4165
        %v4167 = vpop.f32.mrf.mxu0
        %v4168 = vadd.f32 %v4079, %v4167
        %4169 = vmatmul.bf16.gmra.mxu0 %v3285
        %v4170 = vpop.f32.mrf.mxu0
        %v4171 = vadd.f32 %v4082, %v4170
        %v4172 = vpop.f32.mrf.mxu0
        %v4173 = vadd.f32 %v4084, %v4172
        %4174 = vmatmul.bf16.gmra.mxu0 %v3294
        %v4175 = vpop.f32.mrf.mxu0
        %v4176 = vadd.f32 %v4087, %v4175
        %v4177 = vpop.f32.mrf.mxu0
        %v4178 = vadd.f32 %v4089, %v4177
        %4179 = vmatmul.bf16.gmra.mxu0 %v3303
        %v4180 = vpop.f32.mrf.mxu0
        %v4181 = vadd.f32 %v4092, %v4180
        %v4182 = vpop.f32.mrf.mxu0
        %v4183 = vadd.f32 %v4094, %v4182
        %4184 = vmatmul.bf16.gmra.mxu0 %v3312
        %v4185 = vpop.f32.mrf.mxu0
        %v4186 = vadd.f32 %v4097, %v4185
        %v4187 = vpop.f32.mrf.mxu0
        %v4188 = vadd.f32 %v4099, %v4187
        %4189 = vmatmul.bf16.gmra.mxu0 %v3321
        %v4190 = vpop.f32.mrf.mxu0
        %v4191 = vadd.f32 %v4102, %v4190
        %v4192 = vpop.f32.mrf.mxu0
        %v4193 = vadd.f32 %v4104, %v4192
        %4194 = vmatmul.bf16.gmra.mxu0 %v3330
        %v4195 = vpop.f32.mrf.mxu0
        %v4196 = vadd.f32 %v4107, %v4195
        %v4197 = vpop.f32.mrf.mxu0
        %v4198 = vadd.f32 %v4109, %v4197
        %4199 = vmatmul.bf16.gmra.mxu0 %v3339
        %v4200 = vpop.f32.mrf.mxu0
        %v4201 = vadd.f32 %v4112, %v4200
        %v4202 = vpop.f32.mrf.mxu0
        %v4203 = vadd.f32 %v4114, %v4202
        %4204 = vmatmul.bf16.gmra.mxu0 %v3348
        %v4205 = vpop.f32.mrf.mxu0
        %v4206 = vadd.f32 %v4117, %v4205
        %v4207 = vpop.f32.mrf.mxu0
        %v4208 = vadd.f32 %v4119, %v4207
        %4209 = vmatmul.bf16.gmra.mxu0 %v3357
        %v4210 = vpop.f32.mrf.mxu0
        %v4211 = vadd.f32 %v4122, %v4210
        %v4212 = vpop.f32.mrf.mxu0
        %v4213 = vadd.f32 %v4124, %v4212
        %4214 = vmatmul.bf16.gmra.mxu0 %v3366
        %v4215 = vpop.f32.mrf.mxu0
        %v4216 = vadd.f32 %v4127, %v4215
        %v4217 = vpop.f32.mrf.mxu0
        %v4218 = vadd.f32 %v4129, %v4217
        %4219 = vmatmul.bf16.gmra.mxu0 %v3375
        %v4220 = vpop.f32.mrf.mxu0
        %v4221 = vadd.f32 %v4132, %v4220
        %v4222 = vpop.f32.mrf.mxu0
        %v4223 = vadd.f32 %v4134, %v4222
        %4224 = vdwg.mxu0
        %4225 = vmatpush.bf16.msra.mxu0 %v3845
        %4226 = vmatpush.bf16.msra.mxu0 %v3844
        %4227 = vmatpush.bf16.msra.mxu0 %v3843
        %4228 = vmatpush.bf16.msra.mxu0 %v3842
        %4229 = vmatpush.bf16.msra.mxu0 %v3841
        %4230 = vmatpush.bf16.msra.mxu0 %v3840
        %4231 = vmatpush.bf16.msra.mxu0 %v3839
        %4232 = vmatpush.bf16.msra.mxu0 %v3838
        %4233 = vmatmul.bf16.gmra.mxu0 %v3241
        %v4234 = vpop.f32.mrf.mxu0
        %v4235 = vadd.f32 %v4146, %v4234
        %v4236 = vpop.f32.mrf.mxu0
        %v4237 = vadd.f32 %v4148, %v4236
        %4238 = vmatmul.bf16.gmra.mxu0 %v3250
        %v4239 = vpop.f32.mrf.mxu0
        %v4240 = vadd.f32 %v4151, %v4239
        %v4241 = vpop.f32.mrf.mxu0
        %v4242 = vadd.f32 %v4153, %v4241
        %4243 = vmatmul.bf16.gmra.mxu0 %v3259
        %v4244 = vpop.f32.mrf.mxu0
        %v4245 = vadd.f32 %v4156, %v4244
        %v4246 = vpop.f32.mrf.mxu0
        %v4247 = vadd.f32 %v4158, %v4246
        %4248 = vmatmul.bf16.gmra.mxu0 %v3268
        %v4249 = vpop.f32.mrf.mxu0
        %v4250 = vadd.f32 %v4161, %v4249
        %v4251 = vpop.f32.mrf.mxu0
        %v4252 = vadd.f32 %v4163, %v4251
        %4253 = vmatmul.bf16.gmra.mxu0 %v3277
        %v4254 = vpop.f32.mrf.mxu0
        %v4255 = vadd.f32 %v4166, %v4254
        %v4256 = vpop.f32.mrf.mxu0
        %v4257 = vadd.f32 %v4168, %v4256
        %4258 = vmatmul.bf16.gmra.mxu0 %v3286
        %v4259 = vpop.f32.mrf.mxu0
        %v4260 = vadd.f32 %v4171, %v4259
        %v4261 = vpop.f32.mrf.mxu0
        %v4262 = vadd.f32 %v4173, %v4261
        %4263 = vmatmul.bf16.gmra.mxu0 %v3295
        %v4264 = vpop.f32.mrf.mxu0
        %v4265 = vadd.f32 %v4176, %v4264
        %v4266 = vpop.f32.mrf.mxu0
        %v4267 = vadd.f32 %v4178, %v4266
        %4268 = vmatmul.bf16.gmra.mxu0 %v3304
        %v4269 = vpop.f32.mrf.mxu0
        %v4270 = vadd.f32 %v4181, %v4269
        %v4271 = vpop.f32.mrf.mxu0
        %v4272 = vadd.f32 %v4183, %v4271
        %4273 = vmatmul.bf16.gmra.mxu0 %v3313
        %v4274 = vpop.f32.mrf.mxu0
        %v4275 = vadd.f32 %v4186, %v4274
        %v4276 = vpop.f32.mrf.mxu0
        %v4277 = vadd.f32 %v4188, %v4276
        %4278 = vmatmul.bf16.gmra.mxu0 %v3322
        %v4279 = vpop.f32.mrf.mxu0
        %v4280 = vadd.f32 %v4191, %v4279
        %v4281 = vpop.f32.mrf.mxu0
        %v4282 = vadd.f32 %v4193, %v4281
        %4283 = vmatmul.bf16.gmra.mxu0 %v3331
        %v4284 = vpop.f32.mrf.mxu0
        %v4285 = vadd.f32 %v4196, %v4284
        %v4286 = vpop.f32.mrf.mxu0
        %v4287 = vadd.f32 %v4198, %v4286
        %4288 = vmatmul.bf16.gmra.mxu0 %v3340
        %v4289 = vpop.f32.mrf.mxu0
        %v4290 = vadd.f32 %v4201, %v4289
        %v4291 = vpop.f32.mrf.mxu0
        %v4292 = vadd.f32 %v4203, %v4291
        %4293 = vmatmul.bf16.gmra.mxu0 %v3349
        %v4294 = vpop.f32.mrf.mxu0
        %v4295 = vadd.f32 %v4206, %v4294
        %v4296 = vpop.f32.mrf.mxu0
        %v4297 = vadd.f32 %v4208, %v4296
        %4298 = vmatmul.bf16.gmra.mxu0 %v3358
        %v4299 = vpop.f32.mrf.mxu0
        %v4300 = vadd.f32 %v4211, %v4299
        %v4301 = vpop.f32.mrf.mxu0
        %v4302 = vadd.f32 %v4213, %v4301
        %4303 = vmatmul.bf16.gmra.mxu0 %v3367
        %v4304 = vpop.f32.mrf.mxu0
        %v4305 = vadd.f32 %v4216, %v4304
        %v4306 = vpop.f32.mrf.mxu0
        %v4307 = vadd.f32 %v4218, %v4306
        %4308 = vmatmul.bf16.gmra.mxu0 %v3376
        %v4309 = vpop.f32.mrf.mxu0
        %v4310 = vadd.f32 %v4221, %v4309
        %v4311 = vpop.f32.mrf.mxu0
        %v4312 = vadd.f32 %v4223, %v4311
        %4313 = vdwg.mxu0
        %4314 = vmatpush.bf16.msra.mxu0 %v3853
        %4315 = vmatpush.bf16.msra.mxu0 %v3852
        %4316 = vmatpush.bf16.msra.mxu0 %v3851
        %4317 = vmatpush.bf16.msra.mxu0 %v3850
        %4318 = vmatpush.bf16.msra.mxu0 %v3849
        %4319 = vmatpush.bf16.msra.mxu0 %v3848
        %4320 = vmatpush.bf16.msra.mxu0 %v3847
        %4321 = vmatpush.bf16.msra.mxu0 %v3846
        %4322 = vmatmul.bf16.gmra.mxu0 %v3242
        %v4323 = vpop.f32.mrf.mxu0
        %v4324 = vadd.f32 %v4235, %v4323
        %v4325 = vpop.f32.mrf.mxu0
        %v4326 = vadd.f32 %v4237, %v4325
        %4327 = vmatmul.bf16.gmra.mxu0 %v3251
        %v4328 = vpop.f32.mrf.mxu0
        %v4329 = vadd.f32 %v4240, %v4328
        %v4330 = vpop.f32.mrf.mxu0
        %v4331 = vadd.f32 %v4242, %v4330
        %4332 = vmatmul.bf16.gmra.mxu0 %v3260
        %v4333 = vpop.f32.mrf.mxu0
        %v4334 = vadd.f32 %v4245, %v4333
        %v4335 = vpop.f32.mrf.mxu0
        %v4336 = vadd.f32 %v4247, %v4335
        %4337 = vmatmul.bf16.gmra.mxu0 %v3269
        %v4338 = vpop.f32.mrf.mxu0
        %v4339 = vadd.f32 %v4250, %v4338
        %v4340 = vpop.f32.mrf.mxu0
        %v4341 = vadd.f32 %v4252, %v4340
        %4342 = vmatmul.bf16.gmra.mxu0 %v3278
        %v4343 = vpop.f32.mrf.mxu0
        %v4344 = vadd.f32 %v4255, %v4343
        %v4345 = vpop.f32.mrf.mxu0
        %v4346 = vadd.f32 %v4257, %v4345
        %4347 = vmatmul.bf16.gmra.mxu0 %v3287
        %v4348 = vpop.f32.mrf.mxu0
        %v4349 = vadd.f32 %v4260, %v4348
        %v4350 = vpop.f32.mrf.mxu0
        %v4351 = vadd.f32 %v4262, %v4350
        %4352 = vmatmul.bf16.gmra.mxu0 %v3296
        %v4353 = vpop.f32.mrf.mxu0
        %v4354 = vadd.f32 %v4265, %v4353
        %v4355 = vpop.f32.mrf.mxu0
        %v4356 = vadd.f32 %v4267, %v4355
        %4357 = vmatmul.bf16.gmra.mxu0 %v3305
        %v4358 = vpop.f32.mrf.mxu0
        %v4359 = vadd.f32 %v4270, %v4358
        %v4360 = vpop.f32.mrf.mxu0
        %v4361 = vadd.f32 %v4272, %v4360
        %4362 = vmatmul.bf16.gmra.mxu0 %v3314
        %v4363 = vpop.f32.mrf.mxu0
        %v4364 = vadd.f32 %v4275, %v4363
        %v4365 = vpop.f32.mrf.mxu0
        %v4366 = vadd.f32 %v4277, %v4365
        %4367 = vmatmul.bf16.gmra.mxu0 %v3323
        %v4368 = vpop.f32.mrf.mxu0
        %v4369 = vadd.f32 %v4280, %v4368
        %v4370 = vpop.f32.mrf.mxu0
        %v4371 = vadd.f32 %v4282, %v4370
        %4372 = vmatmul.bf16.gmra.mxu0 %v3332
        %v4373 = vpop.f32.mrf.mxu0
        %v4374 = vadd.f32 %v4285, %v4373
        %v4375 = vpop.f32.mrf.mxu0
        %v4376 = vadd.f32 %v4287, %v4375
        %4377 = vmatmul.bf16.gmra.mxu0 %v3341
        %v4378 = vpop.f32.mrf.mxu0
        %v4379 = vadd.f32 %v4290, %v4378
        %v4380 = vpop.f32.mrf.mxu0
        %v4381 = vadd.f32 %v4292, %v4380
        %4382 = vmatmul.bf16.gmra.mxu0 %v3350
        %v4383 = vpop.f32.mrf.mxu0
        %v4384 = vadd.f32 %v4295, %v4383
        %v4385 = vpop.f32.mrf.mxu0
        %v4386 = vadd.f32 %v4297, %v4385
        %4387 = vmatmul.bf16.gmra.mxu0 %v3359
        %v4388 = vpop.f32.mrf.mxu0
        %v4389 = vadd.f32 %v4300, %v4388
        %v4390 = vpop.f32.mrf.mxu0
        %v4391 = vadd.f32 %v4302, %v4390
        %4392 = vmatmul.bf16.gmra.mxu0 %v3368
        %v4393 = vpop.f32.mrf.mxu0
        %v4394 = vadd.f32 %v4305, %v4393
        %v4395 = vpop.f32.mrf.mxu0
        %v4396 = vadd.f32 %v4307, %v4395
        %4397 = vmatmul.bf16.gmra.mxu0 %v3377
        %v4398 = vpop.f32.mrf.mxu0
        %v4399 = vadd.f32 %v4310, %v4398
        %v4400 = vpop.f32.mrf.mxu0
        %v4401 = vadd.f32 %v4312, %v4400
        %4402 = vdwg.mxu0
        %4403 = vmatpush.bf16.msra.mxu0 %v3861
        %4404 = vmatpush.bf16.msra.mxu0 %v3860
        %4405 = vmatpush.bf16.msra.mxu0 %v3859
        %4406 = vmatpush.bf16.msra.mxu0 %v3858
        %4407 = vmatpush.bf16.msra.mxu0 %v3857
        %4408 = vmatpush.bf16.msra.mxu0 %v3856
        %4409 = vmatpush.bf16.msra.mxu0 %v3855
        %4410 = vmatpush.bf16.msra.mxu0 %v3854
        %4411 = vmatmul.bf16.gmra.mxu0 %v3243
        %v4412 = vpop.f32.mrf.mxu0
        %v4413 = vadd.f32 %v4324, %v4412
        %v4414 = vpop.f32.mrf.mxu0
        %v4415 = vadd.f32 %v4326, %v4414
        %4416 = vmatmul.bf16.gmra.mxu0 %v3252
        %v4417 = vpop.f32.mrf.mxu0
        %v4418 = vadd.f32 %v4329, %v4417
        %v4419 = vpop.f32.mrf.mxu0
        %v4420 = vadd.f32 %v4331, %v4419
        %4421 = vmatmul.bf16.gmra.mxu0 %v3261
        %v4422 = vpop.f32.mrf.mxu0
        %v4423 = vadd.f32 %v4334, %v4422
        %v4424 = vpop.f32.mrf.mxu0
        %v4425 = vadd.f32 %v4336, %v4424
        %4426 = vmatmul.bf16.gmra.mxu0 %v3270
        %v4427 = vpop.f32.mrf.mxu0
        %v4428 = vadd.f32 %v4339, %v4427
        %v4429 = vpop.f32.mrf.mxu0
        %v4430 = vadd.f32 %v4341, %v4429
        %4431 = vmatmul.bf16.gmra.mxu0 %v3279
        %v4432 = vpop.f32.mrf.mxu0
        %v4433 = vadd.f32 %v4344, %v4432
        %v4434 = vpop.f32.mrf.mxu0
        %v4435 = vadd.f32 %v4346, %v4434
        %4436 = vmatmul.bf16.gmra.mxu0 %v3288
        %v4437 = vpop.f32.mrf.mxu0
        %v4438 = vadd.f32 %v4349, %v4437
        %v4439 = vpop.f32.mrf.mxu0
        %v4440 = vadd.f32 %v4351, %v4439
        %4441 = vmatmul.bf16.gmra.mxu0 %v3297
        %v4442 = vpop.f32.mrf.mxu0
        %v4443 = vadd.f32 %v4354, %v4442
        %v4444 = vpop.f32.mrf.mxu0
        %v4445 = vadd.f32 %v4356, %v4444
        %4446 = vmatmul.bf16.gmra.mxu0 %v3306
        %v4447 = vpop.f32.mrf.mxu0
        %v4448 = vadd.f32 %v4359, %v4447
        %v4449 = vpop.f32.mrf.mxu0
        %v4450 = vadd.f32 %v4361, %v4449
        %4451 = vmatmul.bf16.gmra.mxu0 %v3315
        %v4452 = vpop.f32.mrf.mxu0
        %v4453 = vadd.f32 %v4364, %v4452
        %v4454 = vpop.f32.mrf.mxu0
        %v4455 = vadd.f32 %v4366, %v4454
        %4456 = vmatmul.bf16.gmra.mxu0 %v3324
        %v4457 = vpop.f32.mrf.mxu0
        %v4458 = vadd.f32 %v4369, %v4457
        %v4459 = vpop.f32.mrf.mxu0
        %v4460 = vadd.f32 %v4371, %v4459
        %4461 = vmatmul.bf16.gmra.mxu0 %v3333
        %v4462 = vpop.f32.mrf.mxu0
        %v4463 = vadd.f32 %v4374, %v4462
        %v4464 = vpop.f32.mrf.mxu0
        %v4465 = vadd.f32 %v4376, %v4464
        %4466 = vmatmul.bf16.gmra.mxu0 %v3342
        %v4467 = vpop.f32.mrf.mxu0
        %v4468 = vadd.f32 %v4379, %v4467
        %v4469 = vpop.f32.mrf.mxu0
        %v4470 = vadd.f32 %v4381, %v4469
        %4471 = vmatmul.bf16.gmra.mxu0 %v3351
        %v4472 = vpop.f32.mrf.mxu0
        %v4473 = vadd.f32 %v4384, %v4472
        %v4474 = vpop.f32.mrf.mxu0
        %v4475 = vadd.f32 %v4386, %v4474
        %4476 = vmatmul.bf16.gmra.mxu0 %v3360
        %v4477 = vpop.f32.mrf.mxu0
        %v4478 = vadd.f32 %v4389, %v4477
        %v4479 = vpop.f32.mrf.mxu0
        %v4480 = vadd.f32 %v4391, %v4479
        %4481 = vmatmul.bf16.gmra.mxu0 %v3369
        %v4482 = vpop.f32.mrf.mxu0
        %v4483 = vadd.f32 %v4394, %v4482
        %v4484 = vpop.f32.mrf.mxu0
        %v4485 = vadd.f32 %v4396, %v4484
        %4486 = vmatmul.bf16.gmra.mxu0 %v3378
        %v4487 = vpop.f32.mrf.mxu0
        %v4488 = vadd.f32 %v4399, %v4487
        %v4489 = vpop.f32.mrf.mxu0
        %v4490 = vadd.f32 %v4401, %v4489
        %4491 = vdwg.mxu0
        %4492 = vmatpush.bf16.msra.mxu0 %v3869
        %4493 = vmatpush.bf16.msra.mxu0 %v3868
        %4494 = vmatpush.bf16.msra.mxu0 %v3867
        %4495 = vmatpush.bf16.msra.mxu0 %v3866
        %4496 = vmatpush.bf16.msra.mxu0 %v3865
        %4497 = vmatpush.bf16.msra.mxu0 %v3864
        %4498 = vmatpush.bf16.msra.mxu0 %v3863
        %4499 = vmatpush.bf16.msra.mxu0 %v3862
        %4500 = vmatmul.bf16.gmra.mxu0 %v3244
        %v4501 = vpop.f32.mrf.mxu0
        %v4502 = vadd.f32 %v4413, %v4501
        %v4503 = vpop.f32.mrf.mxu0
        %v4504 = vadd.f32 %v4415, %v4503
        %4505 = vmatmul.bf16.gmra.mxu0 %v3253
        %v4506 = vpop.f32.mrf.mxu0
        %v4507 = vadd.f32 %v4418, %v4506
        %v4508 = vpop.f32.mrf.mxu0
        %v4509 = vadd.f32 %v4420, %v4508
        %4510 = vmatmul.bf16.gmra.mxu0 %v3262
        %v4511 = vpop.f32.mrf.mxu0
        %v4512 = vadd.f32 %v4423, %v4511
        %v4513 = vpop.f32.mrf.mxu0
        %v4514 = vadd.f32 %v4425, %v4513
        %4515 = vmatmul.bf16.gmra.mxu0 %v3271
        %v4516 = vpop.f32.mrf.mxu0
        %v4517 = vadd.f32 %v4428, %v4516
        %v4518 = vpop.f32.mrf.mxu0
        %v4519 = vadd.f32 %v4430, %v4518
        %4520 = vmatmul.bf16.gmra.mxu0 %v3280
        %v4521 = vpop.f32.mrf.mxu0
        %v4522 = vadd.f32 %v4433, %v4521
        %v4523 = vpop.f32.mrf.mxu0
        %v4524 = vadd.f32 %v4435, %v4523
        %4525 = vmatmul.bf16.gmra.mxu0 %v3289
        %v4526 = vpop.f32.mrf.mxu0
        %v4527 = vadd.f32 %v4438, %v4526
        %v4528 = vpop.f32.mrf.mxu0
        %v4529 = vadd.f32 %v4440, %v4528
        %4530 = vmatmul.bf16.gmra.mxu0 %v3298
        %v4531 = vpop.f32.mrf.mxu0
        %v4532 = vadd.f32 %v4443, %v4531
        %v4533 = vpop.f32.mrf.mxu0
        %v4534 = vadd.f32 %v4445, %v4533
        %4535 = vmatmul.bf16.gmra.mxu0 %v3307
        %v4536 = vpop.f32.mrf.mxu0
        %v4537 = vadd.f32 %v4448, %v4536
        %v4538 = vpop.f32.mrf.mxu0
        %v4539 = vadd.f32 %v4450, %v4538
        %4540 = vmatmul.bf16.gmra.mxu0 %v3316
        %v4541 = vpop.f32.mrf.mxu0
        %v4542 = vadd.f32 %v4453, %v4541
        %v4543 = vpop.f32.mrf.mxu0
        %v4544 = vadd.f32 %v4455, %v4543
        %4545 = vmatmul.bf16.gmra.mxu0 %v3325
        %v4546 = vpop.f32.mrf.mxu0
        %v4547 = vadd.f32 %v4458, %v4546
        %v4548 = vpop.f32.mrf.mxu0
        %v4549 = vadd.f32 %v4460, %v4548
        %4550 = vmatmul.bf16.gmra.mxu0 %v3334
        %v4551 = vpop.f32.mrf.mxu0
        %v4552 = vadd.f32 %v4463, %v4551
        %v4553 = vpop.f32.mrf.mxu0
        %v4554 = vadd.f32 %v4465, %v4553
        %4555 = vmatmul.bf16.gmra.mxu0 %v3343
        %v4556 = vpop.f32.mrf.mxu0
        %v4557 = vadd.f32 %v4468, %v4556
        %v4558 = vpop.f32.mrf.mxu0
        %v4559 = vadd.f32 %v4470, %v4558
        %4560 = vmatmul.bf16.gmra.mxu0 %v3352
        %v4561 = vpop.f32.mrf.mxu0
        %v4562 = vadd.f32 %v4473, %v4561
        %v4563 = vpop.f32.mrf.mxu0
        %v4564 = vadd.f32 %v4475, %v4563
        %4565 = vmatmul.bf16.gmra.mxu0 %v3361
        %v4566 = vpop.f32.mrf.mxu0
        %v4567 = vadd.f32 %v4478, %v4566
        %v4568 = vpop.f32.mrf.mxu0
        %v4569 = vadd.f32 %v4480, %v4568
        %4570 = vmatmul.bf16.gmra.mxu0 %v3370
        %v4571 = vpop.f32.mrf.mxu0
        %v4572 = vadd.f32 %v4483, %v4571
        %v4573 = vpop.f32.mrf.mxu0
        %v4574 = vadd.f32 %v4485, %v4573
        %4575 = vmatmul.bf16.gmra.mxu0 %v3379
        %v4576 = vpop.f32.mrf.mxu0
        %v4577 = vadd.f32 %v4488, %v4576
        %v4578 = vpop.f32.mrf.mxu0
        %v4579 = vadd.f32 %v4490, %v4578
        %4580 = vdwg.mxu0
        %4581 = vmatpush.bf16.msra.mxu0 %v3877
        %4582 = vmatpush.bf16.msra.mxu0 %v3876
        %4583 = vmatpush.bf16.msra.mxu0 %v3875
        %4584 = vmatpush.bf16.msra.mxu0 %v3874
        %4585 = vmatpush.bf16.msra.mxu0 %v3873
        %4586 = vmatpush.bf16.msra.mxu0 %v3872
        %4587 = vmatpush.bf16.msra.mxu0 %v3871
        %4588 = vmatpush.bf16.msra.mxu0 %v3870
        %4589 = vmatmul.bf16.gmra.mxu0 %v3245
        %v4590 = vpop.f32.mrf.mxu0
        %v4591 = vadd.f32 %v4502, %v4590
        %v4592 = vpop.f32.mrf.mxu0
        %v4593 = vadd.f32 %v4504, %v4592
        %4594 = vmatmul.bf16.gmra.mxu0 %v3254
        %v4595 = vpop.f32.mrf.mxu0
        %v4596 = vadd.f32 %v4507, %v4595
        %v4597 = vpop.f32.mrf.mxu0
        %v4598 = vadd.f32 %v4509, %v4597
        %4599 = vmatmul.bf16.gmra.mxu0 %v3263
        %v4600 = vpop.f32.mrf.mxu0
        %v4601 = vadd.f32 %v4512, %v4600
        %v4602 = vpop.f32.mrf.mxu0
        %v4603 = vadd.f32 %v4514, %v4602
        %4604 = vmatmul.bf16.gmra.mxu0 %v3272
        %v4605 = vpop.f32.mrf.mxu0
        %v4606 = vadd.f32 %v4517, %v4605
        %v4607 = vpop.f32.mrf.mxu0
        %v4608 = vadd.f32 %v4519, %v4607
        %4609 = vmatmul.bf16.gmra.mxu0 %v3281
        %v4610 = vpop.f32.mrf.mxu0
        %v4611 = vadd.f32 %v4522, %v4610
        %v4612 = vpop.f32.mrf.mxu0
        %v4613 = vadd.f32 %v4524, %v4612
        %4614 = vmatmul.bf16.gmra.mxu0 %v3290
        %v4615 = vpop.f32.mrf.mxu0
        %v4616 = vadd.f32 %v4527, %v4615
        %v4617 = vpop.f32.mrf.mxu0
        %v4618 = vadd.f32 %v4529, %v4617
        %4619 = vmatmul.bf16.gmra.mxu0 %v3299
        %v4620 = vpop.f32.mrf.mxu0
        %v4621 = vadd.f32 %v4532, %v4620
        %v4622 = vpop.f32.mrf.mxu0
        %v4623 = vadd.f32 %v4534, %v4622
        %4624 = vmatmul.bf16.gmra.mxu0 %v3308
        %v4625 = vpop.f32.mrf.mxu0
        %v4626 = vadd.f32 %v4537, %v4625
        %v4627 = vpop.f32.mrf.mxu0
        %v4628 = vadd.f32 %v4539, %v4627
        %4629 = vmatmul.bf16.gmra.mxu0 %v3317
        %v4630 = vpop.f32.mrf.mxu0
        %v4631 = vadd.f32 %v4542, %v4630
        %v4632 = vpop.f32.mrf.mxu0
        %v4633 = vadd.f32 %v4544, %v4632
        %4634 = vmatmul.bf16.gmra.mxu0 %v3326
        %v4635 = vpop.f32.mrf.mxu0
        %v4636 = vadd.f32 %v4547, %v4635
        %v4637 = vpop.f32.mrf.mxu0
        %v4638 = vadd.f32 %v4549, %v4637
        %4639 = vmatmul.bf16.gmra.mxu0 %v3335
        %v4640 = vpop.f32.mrf.mxu0
        %v4641 = vadd.f32 %v4552, %v4640
        %v4642 = vpop.f32.mrf.mxu0
        %v4643 = vadd.f32 %v4554, %v4642
        %4644 = vmatmul.bf16.gmra.mxu0 %v3344
        %v4645 = vpop.f32.mrf.mxu0
        %v4646 = vadd.f32 %v4557, %v4645
        %v4647 = vpop.f32.mrf.mxu0
        %v4648 = vadd.f32 %v4559, %v4647
        %4649 = vmatmul.bf16.gmra.mxu0 %v3353
        %v4650 = vpop.f32.mrf.mxu0
        %v4651 = vadd.f32 %v4562, %v4650
        %v4652 = vpop.f32.mrf.mxu0
        %v4653 = vadd.f32 %v4564, %v4652
        %4654 = vmatmul.bf16.gmra.mxu0 %v3362
        %v4655 = vpop.f32.mrf.mxu0
        %v4656 = vadd.f32 %v4567, %v4655
        %v4657 = vpop.f32.mrf.mxu0
        %v4658 = vadd.f32 %v4569, %v4657
        %4659 = vmatmul.bf16.gmra.mxu0 %v3371
        %v4660 = vpop.f32.mrf.mxu0
        %v4661 = vadd.f32 %v4572, %v4660
        %v4662 = vpop.f32.mrf.mxu0
        %v4663 = vadd.f32 %v4574, %v4662
        %4664 = vmatmul.bf16.gmra.mxu0 %v3380
        %v4665 = vpop.f32.mrf.mxu0
        %v4666 = vadd.f32 %v4577, %v4665
        %v4667 = vpop.f32.mrf.mxu0
        %v4668 = vadd.f32 %v4579, %v4667
        %4669 = vdwg.mxu0
        %4670 = vmatpush.bf16.msra.mxu0 %v3885
        %4671 = vmatpush.bf16.msra.mxu0 %v3884
        %4672 = vmatpush.bf16.msra.mxu0 %v3883
        %4673 = vmatpush.bf16.msra.mxu0 %v3882
        %4674 = vmatpush.bf16.msra.mxu0 %v3881
        %4675 = vmatpush.bf16.msra.mxu0 %v3880
        %4676 = vmatpush.bf16.msra.mxu0 %v3879
        %4677 = vmatpush.bf16.msra.mxu0 %v3878
        %4678 = vmatmul.bf16.gmra.mxu0 %v3246
        %v4679 = vpop.f32.mrf.mxu0
        %v4680 = vadd.f32 %v4591, %v4679
        %v4681 = vpop.f32.mrf.mxu0
        %v4682 = vadd.f32 %v4593, %v4681
        %4683 = vmatmul.bf16.gmra.mxu0 %v3255
        %v4684 = vpop.f32.mrf.mxu0
        %v4685 = vadd.f32 %v4596, %v4684
        %v4686 = vpop.f32.mrf.mxu0
        %v4687 = vadd.f32 %v4598, %v4686
        %4688 = vmatmul.bf16.gmra.mxu0 %v3264
        %v4689 = vpop.f32.mrf.mxu0
        %v4690 = vadd.f32 %v4601, %v4689
        %v4691 = vpop.f32.mrf.mxu0
        %v4692 = vadd.f32 %v4603, %v4691
        %4693 = vmatmul.bf16.gmra.mxu0 %v3273
        %v4694 = vpop.f32.mrf.mxu0
        %v4695 = vadd.f32 %v4606, %v4694
        %v4696 = vpop.f32.mrf.mxu0
        %v4697 = vadd.f32 %v4608, %v4696
        %4698 = vmatmul.bf16.gmra.mxu0 %v3282
        %v4699 = vpop.f32.mrf.mxu0
        %v4700 = vadd.f32 %v4611, %v4699
        %v4701 = vpop.f32.mrf.mxu0
        %v4702 = vadd.f32 %v4613, %v4701
        %4703 = vmatmul.bf16.gmra.mxu0 %v3291
        %v4704 = vpop.f32.mrf.mxu0
        %v4705 = vadd.f32 %v4616, %v4704
        %v4706 = vpop.f32.mrf.mxu0
        %v4707 = vadd.f32 %v4618, %v4706
        %4708 = vmatmul.bf16.gmra.mxu0 %v3300
        %v4709 = vpop.f32.mrf.mxu0
        %v4710 = vadd.f32 %v4621, %v4709
        %v4711 = vpop.f32.mrf.mxu0
        %v4712 = vadd.f32 %v4623, %v4711
        %4713 = vmatmul.bf16.gmra.mxu0 %v3309
        %v4714 = vpop.f32.mrf.mxu0
        %v4715 = vadd.f32 %v4626, %v4714
        %v4716 = vpop.f32.mrf.mxu0
        %v4717 = vadd.f32 %v4628, %v4716
        %4718 = vmatmul.bf16.gmra.mxu0 %v3318
        %v4719 = vpop.f32.mrf.mxu0
        %v4720 = vadd.f32 %v4631, %v4719
        %v4721 = vpop.f32.mrf.mxu0
        %v4722 = vadd.f32 %v4633, %v4721
        %4723 = vmatmul.bf16.gmra.mxu0 %v3327
        %v4724 = vpop.f32.mrf.mxu0
        %v4725 = vadd.f32 %v4636, %v4724
        %v4726 = vpop.f32.mrf.mxu0
        %v4727 = vadd.f32 %v4638, %v4726
        %4728 = vmatmul.bf16.gmra.mxu0 %v3336
        %v4729 = vpop.f32.mrf.mxu0
        %v4730 = vadd.f32 %v4641, %v4729
        %v4731 = vpop.f32.mrf.mxu0
        %v4732 = vadd.f32 %v4643, %v4731
        %4733 = vmatmul.bf16.gmra.mxu0 %v3345
        %v4734 = vpop.f32.mrf.mxu0
        %v4735 = vadd.f32 %v4646, %v4734
        %v4736 = vpop.f32.mrf.mxu0
        %v4737 = vadd.f32 %v4648, %v4736
        %4738 = vmatmul.bf16.gmra.mxu0 %v3354
        %v4739 = vpop.f32.mrf.mxu0
        %v4740 = vadd.f32 %v4651, %v4739
        %v4741 = vpop.f32.mrf.mxu0
        %v4742 = vadd.f32 %v4653, %v4741
        %4743 = vmatmul.bf16.gmra.mxu0 %v3363
        %v4744 = vpop.f32.mrf.mxu0
        %v4745 = vadd.f32 %v4656, %v4744
        %v4746 = vpop.f32.mrf.mxu0
        %v4747 = vadd.f32 %v4658, %v4746
        %4748 = vmatmul.bf16.gmra.mxu0 %v3372
        %v4749 = vpop.f32.mrf.mxu0
        %v4750 = vadd.f32 %v4661, %v4749
        %v4751 = vpop.f32.mrf.mxu0
        %v4752 = vadd.f32 %v4663, %v4751
        %4753 = vmatmul.bf16.gmra.mxu0 %v3381
        %v4754 = vpop.f32.mrf.mxu0
        %v4755 = vadd.f32 %v4666, %v4754
        %v4756 = vpop.f32.mrf.mxu0
        %v4757 = vadd.f32 %v4668, %v4756
        %4758 = vdwg.mxu0
        %v4759 = vmax.f32 %v4680, 0.0
        %v4760 = vmax.f32 %v4682, 0.0
        %v4761 = vmax.f32 %v4685, 0.0
        %v4762 = vmax.f32 %v4687, 0.0
        %v4763 = vmax.f32 %v4690, 0.0
        %v4764 = vmax.f32 %v4692, 0.0
        %v4765 = vmax.f32 %v4695, 0.0
        %v4766 = vmax.f32 %v4697, 0.0
        %v4767 = vmax.f32 %v4700, 0.0
        %v4768 = vmax.f32 %v4702, 0.0
        %v4769 = vmax.f32 %v4705, 0.0
        %v4770 = vmax.f32 %v4707, 0.0
        %v4771 = vmax.f32 %v4710, 0.0
        %v4772 = vmax.f32 %v4712, 0.0
        %v4773 = vmax.f32 %v4715, 0.0
        %v4774 = vmax.f32 %v4717, 0.0
        %v4775 = vmax.f32 %v4720, 0.0
        %v4776 = vmax.f32 %v4722, 0.0
        %v4777 = vmax.f32 %v4725, 0.0
        %v4778 = vmax.f32 %v4727, 0.0
        %v4779 = vmax.f32 %v4730, 0.0
        %v4780 = vmax.f32 %v4732, 0.0
        %v4781 = vmax.f32 %v4735, 0.0
        %v4782 = vmax.f32 %v4737, 0.0
        %v4783 = vmax.f32 %v4740, 0.0
        %v4784 = vmax.f32 %v4742, 0.0
        %v4785 = vmax.f32 %v4745, 0.0
        %v4786 = vmax.f32 %v4747, 0.0
        %v4787 = vmax.f32 %v4750, 0.0
        %v4788 = vmax.f32 %v4752, 0.0
        %v4789 = vmax.f32 %v4755, 0.0
        %v4790 = vmax.f32 %v4757, 0.0
        %v4791 = vpack.c.bf16 %v4759, %v4759
        %v4792 = vpack.c.bf16 %v4760, %v4760
        %v4793 = vpack.c.bf16 %v4761, %v4761
        %v4794 = vpack.c.bf16 %v4762, %v4762
        %v4795 = vpack.c.bf16 %v4763, %v4763
        %v4796 = vpack.c.bf16 %v4764, %v4764
        %v4797 = vpack.c.bf16 %v4765, %v4765
        %v4798 = vpack.c.bf16 %v4766, %v4766
        %v4799 = vpack.c.bf16 %v4767, %v4767
        %v4800 = vpack.c.bf16 %v4768, %v4768
        %v4801 = vpack.c.bf16 %v4769, %v4769
        %v4802 = vpack.c.bf16 %v4770, %v4770
        %v4803 = vpack.c.bf16 %v4771, %v4771
        %v4804 = vpack.c.bf16 %v4772, %v4772
        %v4805 = vpack.c.bf16 %v4773, %v4773
        %v4806 = vpack.c.bf16 %v4774, %v4774
        %v4807 = vpack.c.bf16 %v4775, %v4775
        %v4808 = vpack.c.bf16 %v4776, %v4776
        %v4809 = vpack.c.bf16 %v4777, %v4777
        %v4810 = vpack.c.bf16 %v4778, %v4778
        %v4811 = vpack.c.bf16 %v4779, %v4779
        %v4812 = vpack.c.bf16 %v4780, %v4780
        %v4813 = vpack.c.bf16 %v4781, %v4781
        %v4814 = vpack.c.bf16 %v4782, %v4782
        %v4815 = vpack.c.bf16 %v4783, %v4783
        %v4816 = vpack.c.bf16 %v4784, %v4784
        %v4817 = vpack.c.bf16 %v4785, %v4785
        %v4818 = vpack.c.bf16 %v4786, %v4786
        %v4819 = vpack.c.bf16 %v4787, %v4787
        %v4820 = vpack.c.bf16 %v4788, %v4788
        %v4821 = vpack.c.bf16 %v4789, %v4789
        %v4822 = vpack.c.bf16 %v4790, %v4790
        %4823 = vst [vmem:[%s1198] sm:$0xf] %v4791
        %4824 = vst [vmem:[%s1198 + $0x4] sm:$0xf] %v4792
        %4825 = vst [vmem:[%s1198 + $0x8] sm:$0xf] %v4793
        %4826 = vst [vmem:[%s1198 + $0xc] sm:$0xf] %v4794
        %4827 = vst [vmem:[%s1198 + $0x10] sm:$0xf] %v4795
        %4828 = vst [vmem:[%s1198 + $0x14] sm:$0xf] %v4796
        %4829 = vst [vmem:[%s1198 + $0x18] sm:$0xf] %v4797
        %4830 = vst [vmem:[%s1198 + $0x1c] sm:$0xf] %v4798
        %4831 = vst [vmem:[%s1198 + $0x20] sm:$0xf] %v4799
        %4832 = vst [vmem:[%s1198 + $0x24] sm:$0xf] %v4800
        %4833 = vst [vmem:[%s1198 + $0x28] sm:$0xf] %v4801
        %4834 = vst [vmem:[%s1198 + $0x2c] sm:$0xf] %v4802
        %4835 = vst [vmem:[%s1198 + $0x30] sm:$0xf] %v4803
        %4836 = vst [vmem:[%s1198 + $0x34] sm:$0xf] %v4804
        %4837 = vst [vmem:[%s1198 + $0x38] sm:$0xf] %v4805
        %4838 = vst [vmem:[%s1198 + $0x3c] sm:$0xf] %v4806
        %4839 = vst [vmem:[%s1198 + $0x40] sm:$0xf] %v4807
        %4840 = vst [vmem:[%s1198 + $0x44] sm:$0xf] %v4808
        %4841 = vst [vmem:[%s1198 + $0x48] sm:$0xf] %v4809
        %4842 = vst [vmem:[%s1198 + $0x4c] sm:$0xf] %v4810
        %4843 = vst [vmem:[%s1198 + $0x50] sm:$0xf] %v4811
        %4844 = vst [vmem:[%s1198 + $0x54] sm:$0xf] %v4812
        %4845 = vst [vmem:[%s1198 + $0x58] sm:$0xf] %v4813
        %4846 = vst [vmem:[%s1198 + $0x5c] sm:$0xf] %v4814
        %4847 = vst [vmem:[%s1198 + $0x60] sm:$0xf] %v4815
        %4848 = vst [vmem:[%s1198 + $0x64] sm:$0xf] %v4816
        %4849 = vst [vmem:[%s1198 + $0x68] sm:$0xf] %v4817
        %4850 = vst [vmem:[%s1198 + $0x6c] sm:$0xf] %v4818
        %4851 = vst [vmem:[%s1198 + $0x70] sm:$0xf] %v4819
        %4852 = vst [vmem:[%s1198 + $0x74] sm:$0xf] %v4820
        %4853 = vst [vmem:[%s1198 + $0x78] sm:$0xf] %v4821
        %4854 = vst [vmem:[%s1198 + $0x7c] sm:$0xf] %v4822
        %v4855 = vld [vmem:[#allocation2] sm:$0xf]
        %v4856 = vld [vmem:[#allocation2 + $0x4] sm:$0xf]
        %v4857 = vld [vmem:[#allocation2 + $0x8] sm:$0xf]
        %v4858 = vld [vmem:[#allocation2 + $0xc] sm:$0xf]
        %v4859 = vld [vmem:[#allocation2 + $0x10] sm:$0xf]
        %v4860 = vld [vmem:[#allocation2 + $0x14] sm:$0xf]
        %v4861 = vld [vmem:[#allocation2 + $0x18] sm:$0xf]
        %v4862 = vld [vmem:[#allocation2 + $0x1c] sm:$0xf]
        %v4863 = vld [vmem:[#allocation2 + $0x20] sm:$0xf]
        %v4864 = vld [vmem:[#allocation2 + $0x24] sm:$0xf]
        %v4865 = vld [vmem:[#allocation2 + $0x28] sm:$0xf]
        %v4866 = vld [vmem:[#allocation2 + $0x2c] sm:$0xf]
        %v4867 = vld [vmem:[#allocation2 + $0x30] sm:$0xf]
        %v4868 = vld [vmem:[#allocation2 + $0x34] sm:$0xf]
        %v4869 = vld [vmem:[#allocation2 + $0x38] sm:$0xf]
        %v4870 = vld [vmem:[#allocation2 + $0x3c] sm:$0xf]
        %v4871 = vld [vmem:[#allocation2 + $0x40] sm:$0xf]
        %v4872 = vld [vmem:[#allocation2 + $0x44] sm:$0xf]
        %v4873 = vld [vmem:[#allocation2 + $0x48] sm:$0xf]
        %v4874 = vld [vmem:[#allocation2 + $0x4c] sm:$0xf]
        %v4875 = vld [vmem:[#allocation2 + $0x50] sm:$0xf]
        %v4876 = vld [vmem:[#allocation2 + $0x54] sm:$0xf]
        %v4877 = vld [vmem:[#allocation2 + $0x58] sm:$0xf]
        %v4878 = vld [vmem:[#allocation2 + $0x5c] sm:$0xf]
        %v4879 = vld [vmem:[#allocation2 + $0x60] sm:$0xf]
        %v4880 = vld [vmem:[#allocation2 + $0x64] sm:$0xf]
        %v4881 = vld [vmem:[#allocation2 + $0x68] sm:$0xf]
        %v4882 = vld [vmem:[#allocation2 + $0x6c] sm:$0xf]
        %v4883 = vld [vmem:[#allocation2 + $0x70] sm:$0xf]
        %v4884 = vld [vmem:[#allocation2 + $0x74] sm:$0xf]
        %v4885 = vld [vmem:[#allocation2 + $0x78] sm:$0xf]
        %v4886 = vld [vmem:[#allocation2 + $0x7c] sm:$0xf]
        %4887 = vst [vmem:[#allocation3 + $0x4] sm:$0xf] %v4855
        %4888 = vst [vmem:[#allocation3 + $0x28] sm:$0xf] %v4856
        %4889 = vst [vmem:[#allocation3 + $0x4c] sm:$0xf] %v4857
        %4890 = vst [vmem:[#allocation3 + $0x70] sm:$0xf] %v4858
        %4891 = vst [vmem:[#allocation3 + $0x94] sm:$0xf] %v4859
        %4892 = vst [vmem:[#allocation3 + $0xb8] sm:$0xf] %v4860
        %4893 = vst [vmem:[#allocation3 + $0xdc] sm:$0xf] %v4861
        %4894 = vst [vmem:[#allocation3 + $0x100] sm:$0xf] %v4862
        %4895 = vst [vmem:[#allocation3 + $0x124] sm:$0xf] %v4863
        %4896 = vst [vmem:[#allocation3 + $0x148] sm:$0xf] %v4864
        %4897 = vst [vmem:[#allocation3 + $0x16c] sm:$0xf] %v4865
        %4898 = vst [vmem:[#allocation3 + $0x190] sm:$0xf] %v4866
        %4899 = vst [vmem:[#allocation3 + $0x1b4] sm:$0xf] %v4867
        %4900 = vst [vmem:[#allocation3 + $0x1d8] sm:$0xf] %v4868
        %4901 = vst [vmem:[#allocation3 + $0x1fc] sm:$0xf] %v4869
        %4902 = vst [vmem:[#allocation3 + $0x220] sm:$0xf] %v4870
        %4903 = vst [vmem:[#allocation3 + $0x244] sm:$0xf] %v4871
        %4904 = vst [vmem:[#allocation3 + $0x268] sm:$0xf] %v4872
        %4905 = vst [vmem:[#allocation3 + $0x28c] sm:$0xf] %v4873
        %4906 = vst [vmem:[#allocation3 + $0x2b0] sm:$0xf] %v4874
        %4907 = vst [vmem:[#allocation3 + $0x2d4] sm:$0xf] %v4875
        %4908 = vst [vmem:[#allocation3 + $0x2f8] sm:$0xf] %v4876
        %4909 = vst [vmem:[#allocation3 + $0x31c] sm:$0xf] %v4877
        %4910 = vst [vmem:[#allocation3 + $0x340] sm:$0xf] %v4878
        %4911 = vst [vmem:[#allocation3 + $0x364] sm:$0xf] %v4879
        %4912 = vst [vmem:[#allocation3 + $0x388] sm:$0xf] %v4880
        %4913 = vst [vmem:[#allocation3 + $0x3ac] sm:$0xf] %v4881
        %4914 = vst [vmem:[#allocation3 + $0x3d0] sm:$0xf] %v4882
        %4915 = vst [vmem:[#allocation3 + $0x3f4] sm:$0xf] %v4883
        %4916 = vst [vmem:[#allocation3 + $0x418] sm:$0xf] %v4884
        %4917 = vst [vmem:[#allocation3 + $0x43c] sm:$0xf] %v4885
        %4918 = vst [vmem:[#allocation3 + $0x460] sm:$0xf] %v4886
        %v4919 = vunpack.c.l.bf16 %v4855
        %v4920 = vunpack.c.l.bf16 %v4856
        %v4921 = vunpack.c.l.bf16 %v4857
        %v4922 = vunpack.c.l.bf16 %v4858
        %v4923 = vunpack.c.l.bf16 %v4859
        %v4924 = vunpack.c.l.bf16 %v4860
        %v4925 = vunpack.c.l.bf16 %v4861
        %v4926 = vunpack.c.l.bf16 %v4862
        %v4927 = vunpack.c.l.bf16 %v4863
        %v4928 = vunpack.c.l.bf16 %v4864
        %v4929 = vunpack.c.l.bf16 %v4865
        %v4930 = vunpack.c.l.bf16 %v4866
        %v4931 = vunpack.c.l.bf16 %v4867
        %v4932 = vunpack.c.l.bf16 %v4868
        %v4933 = vunpack.c.l.bf16 %v4869
        %v4934 = vunpack.c.l.bf16 %v4870
        %v4935 = vunpack.c.l.bf16 %v4871
        %v4936 = vunpack.c.l.bf16 %v4872
        %v4937 = vunpack.c.l.bf16 %v4873
        %v4938 = vunpack.c.l.bf16 %v4874
        %v4939 = vunpack.c.l.bf16 %v4875
        %v4940 = vunpack.c.l.bf16 %v4876
        %v4941 = vunpack.c.l.bf16 %v4877
        %v4942 = vunpack.c.l.bf16 %v4878
        %v4943 = vunpack.c.l.bf16 %v4879
        %v4944 = vunpack.c.l.bf16 %v4880
        %v4945 = vunpack.c.l.bf16 %v4881
        %v4946 = vunpack.c.l.bf16 %v4882
        %v4947 = vunpack.c.l.bf16 %v4883
        %v4948 = vunpack.c.l.bf16 %v4884
        %v4949 = vunpack.c.l.bf16 %v4885
        %v4950 = vunpack.c.l.bf16 %v4886
        %v4951 = vrot.slane %v4919, 7
        %v4952 = vrot.slane %v4920, 7
        %v4953 = vrot.slane %v4921, 7
        %v4954 = vrot.slane %v4922, 7
        %v4955 = vrot.slane %v4923, 7
        %v4956 = vrot.slane %v4924, 7
        %v4957 = vrot.slane %v4925, 7
        %v4958 = vrot.slane %v4926, 7
        %v4959 = vrot.slane %v4927, 7
        %v4960 = vrot.slane %v4928, 7
        %v4961 = vrot.slane %v4929, 7
        %v4962 = vrot.slane %v4930, 7
        %v4963 = vrot.slane %v4931, 7
        %v4964 = vrot.slane %v4932, 7
        %v4965 = vrot.slane %v4933, 7
        %v4966 = vrot.slane %v4934, 7
        %v4967 = vrot.slane %v4935, 7
        %v4968 = vrot.slane %v4936, 7
        %v4969 = vrot.slane %v4937, 7
        %v4970 = vrot.slane %v4938, 7
        %v4971 = vrot.slane %v4939, 7
        %v4972 = vrot.slane %v4940, 7
        %v4973 = vrot.slane %v4941, 7
        %v4974 = vrot.slane %v4942, 7
        %v4975 = vrot.slane %v4943, 7
        %v4976 = vrot.slane %v4944, 7
        %v4977 = vrot.slane %v4945, 7
        %v4978 = vrot.slane %v4946, 7
        %v4979 = vrot.slane %v4947, 7
        %v4980 = vrot.slane %v4948, 7
        %v4981 = vrot.slane %v4949, 7
        %v4982 = vrot.slane %v4950, 7
        %v4983 = vsel %vm1359, %v4981, %v4982
        %v4984 = vsel %vm1359, %v4980, %v4981
        %v4985 = vsel %vm1359, %v4979, %v4980
        %v4986 = vsel %vm1359, %v4978, %v4979
        %v4987 = vsel %vm1359, %v4977, %v4978
        %v4988 = vsel %vm1359, %v4976, %v4977
        %v4989 = vsel %vm1359, %v4975, %v4976
        %v4990 = vsel %vm1359, %v4974, %v4975
        %v4991 = vsel %vm1359, %v4973, %v4974
        %v4992 = vsel %vm1359, %v4972, %v4973
        %v4993 = vsel %vm1359, %v4971, %v4972
        %v4994 = vsel %vm1359, %v4970, %v4971
        %v4995 = vsel %vm1359, %v4969, %v4970
        %v4996 = vsel %vm1359, %v4968, %v4969
        %v4997 = vsel %vm1359, %v4967, %v4968
        %v4998 = vsel %vm1359, %v4966, %v4967
        %v4999 = vsel %vm1359, %v4965, %v4966
        %v5000 = vsel %vm1359, %v4964, %v4965
        %v5001 = vsel %vm1359, %v4963, %v4964
        %v5002 = vsel %vm1359, %v4962, %v4963
        %v5003 = vsel %vm1359, %v4961, %v4962
        %v5004 = vsel %vm1359, %v4960, %v4961
        %v5005 = vsel %vm1359, %v4959, %v4960
        %v5006 = vsel %vm1359, %v4958, %v4959
        %v5007 = vsel %vm1359, %v4957, %v4958
        %v5008 = vsel %vm1359, %v4956, %v4957
        %v5009 = vsel %vm1359, %v4955, %v4956
        %v5010 = vsel %vm1359, %v4954, %v4955
        %v5011 = vsel %vm1359, %v4953, %v4954
        %v5012 = vsel %vm1359, %v4952, %v4953
        %v5013 = vsel %vm1359, %v4951, %v4952
        %v5014 = vsel %vm1359, %v4982, %v4951
        %v5015 = vsel %vm753, %v5014, 0.0
        %v5016 = vsel %vm754, %v5013, 0.0
        %v5017 = vsel %vm755, %v5012, 0.0
        %v5018 = vsel %vm756, %v5011, 0.0
        %v5019 = vsel %vm757, %v5010, 0.0
        %v5020 = vsel %vm758, %v5009, 0.0
        %v5021 = vsel %vm759, %v5008, 0.0
        %v5022 = vsel %vm760, %v5007, 0.0
        %v5023 = vsel %vm761, %v5006, 0.0
        %v5024 = vsel %vm762, %v5005, 0.0
        %v5025 = vsel %vm763, %v5004, 0.0
        %v5026 = vsel %vm764, %v5003, 0.0
        %v5027 = vsel %vm765, %v5002, 0.0
        %v5028 = vsel %vm766, %v5001, 0.0
        %v5029 = vsel %vm767, %v5000, 0.0
        %v5030 = vsel %vm768, %v4999, 0.0
        %v5031 = vsel %vm769, %v4998, 0.0
        %v5032 = vsel %vm770, %v4997, 0.0
        %v5033 = vsel %vm771, %v4996, 0.0
        %v5034 = vsel %vm772, %v4995, 0.0
        %v5035 = vsel %vm773, %v4994, 0.0
        %v5036 = vsel %vm774, %v4993, 0.0
        %v5037 = vsel %vm775, %v4992, 0.0
        %v5038 = vsel %vm776, %v4991, 0.0
        %v5039 = vsel %vm777, %v4990, 0.0
        %v5040 = vsel %vm778, %v4989, 0.0
        %v5041 = vsel %vm779, %v4988, 0.0
        %v5042 = vsel %vm780, %v4987, 0.0
        %v5043 = vsel %vm781, %v4986, 0.0
        %v5044 = vsel %vm782, %v4985, 0.0
        %v5045 = vsel %vm783, %v4984, 0.0
        %v5046 = vsel %vm784, %v4983, 0.0
        %v5047 = vrot.slane %v4919, 1
        %v5048 = vrot.slane %v4920, 1
        %v5049 = vrot.slane %v4921, 1
        %v5050 = vrot.slane %v4922, 1
        %v5051 = vrot.slane %v4923, 1
        %v5052 = vrot.slane %v4924, 1
        %v5053 = vrot.slane %v4925, 1
        %v5054 = vrot.slane %v4926, 1
        %v5055 = vrot.slane %v4927, 1
        %v5056 = vrot.slane %v4928, 1
        %v5057 = vrot.slane %v4929, 1
        %v5058 = vrot.slane %v4930, 1
        %v5059 = vrot.slane %v4931, 1
        %v5060 = vrot.slane %v4932, 1
        %v5061 = vrot.slane %v4933, 1
        %v5062 = vrot.slane %v4934, 1
        %v5063 = vrot.slane %v4935, 1
        %v5064 = vrot.slane %v4936, 1
        %v5065 = vrot.slane %v4937, 1
        %v5066 = vrot.slane %v4938, 1
        %v5067 = vrot.slane %v4939, 1
        %v5068 = vrot.slane %v4940, 1
        %v5069 = vrot.slane %v4941, 1
        %v5070 = vrot.slane %v4942, 1
        %v5071 = vrot.slane %v4943, 1
        %v5072 = vrot.slane %v4944, 1
        %v5073 = vrot.slane %v4945, 1
        %v5074 = vrot.slane %v4946, 1
        %v5075 = vrot.slane %v4947, 1
        %v5076 = vrot.slane %v4948, 1
        %v5077 = vrot.slane %v4949, 1
        %v5078 = vrot.slane %v4950, 1
        %v5079 = vsel %vm1456, %v5077, %v5078
        %v5080 = vsel %vm1456, %v5076, %v5077
        %v5081 = vsel %vm1456, %v5075, %v5076
        %v5082 = vsel %vm1456, %v5074, %v5075
        %v5083 = vsel %vm1456, %v5073, %v5074
        %v5084 = vsel %vm1456, %v5072, %v5073
        %v5085 = vsel %vm1456, %v5071, %v5072
        %v5086 = vsel %vm1456, %v5070, %v5071
        %v5087 = vsel %vm1456, %v5069, %v5070
        %v5088 = vsel %vm1456, %v5068, %v5069
        %v5089 = vsel %vm1456, %v5067, %v5068
        %v5090 = vsel %vm1456, %v5066, %v5067
        %v5091 = vsel %vm1456, %v5065, %v5066
        %v5092 = vsel %vm1456, %v5064, %v5065
        %v5093 = vsel %vm1456, %v5063, %v5064
        %v5094 = vsel %vm1456, %v5062, %v5063
        %v5095 = vsel %vm1456, %v5061, %v5062
        %v5096 = vsel %vm1456, %v5060, %v5061
        %v5097 = vsel %vm1456, %v5059, %v5060
        %v5098 = vsel %vm1456, %v5058, %v5059
        %v5099 = vsel %vm1456, %v5057, %v5058
        %v5100 = vsel %vm1456, %v5056, %v5057
        %v5101 = vsel %vm1456, %v5055, %v5056
        %v5102 = vsel %vm1456, %v5054, %v5055
        %v5103 = vsel %vm1456, %v5053, %v5054
        %v5104 = vsel %vm1456, %v5052, %v5053
        %v5105 = vsel %vm1456, %v5051, %v5052
        %v5106 = vsel %vm1456, %v5050, %v5051
        %v5107 = vsel %vm1456, %v5049, %v5050
        %v5108 = vsel %vm1456, %v5048, %v5049
        %v5109 = vsel %vm1456, %v5047, %v5048
        %v5110 = vsel %vm1456, %v5078, %v5047
        %v5111 = vsel %vm785, %v5109, 0.0
        %v5112 = vsel %vm786, %v5108, 0.0
        %v5113 = vsel %vm787, %v5107, 0.0
        %v5114 = vsel %vm788, %v5106, 0.0
        %v5115 = vsel %vm789, %v5105, 0.0
        %v5116 = vsel %vm790, %v5104, 0.0
        %v5117 = vsel %vm791, %v5103, 0.0
        %v5118 = vsel %vm792, %v5102, 0.0
        %v5119 = vsel %vm793, %v5101, 0.0
        %v5120 = vsel %vm794, %v5100, 0.0
        %v5121 = vsel %vm795, %v5099, 0.0
        %v5122 = vsel %vm796, %v5098, 0.0
        %v5123 = vsel %vm797, %v5097, 0.0
        %v5124 = vsel %vm798, %v5096, 0.0
        %v5125 = vsel %vm799, %v5095, 0.0
        %v5126 = vsel %vm800, %v5094, 0.0
        %v5127 = vsel %vm801, %v5093, 0.0
        %v5128 = vsel %vm802, %v5092, 0.0
        %v5129 = vsel %vm803, %v5091, 0.0
        %v5130 = vsel %vm804, %v5090, 0.0
        %v5131 = vsel %vm805, %v5089, 0.0
        %v5132 = vsel %vm806, %v5088, 0.0
        %v5133 = vsel %vm807, %v5087, 0.0
        %v5134 = vsel %vm808, %v5086, 0.0
        %v5135 = vsel %vm809, %v5085, 0.0
        %v5136 = vsel %vm810, %v5084, 0.0
        %v5137 = vsel %vm811, %v5083, 0.0
        %v5138 = vsel %vm812, %v5082, 0.0
        %v5139 = vsel %vm813, %v5081, 0.0
        %v5140 = vsel %vm814, %v5080, 0.0
        %v5141 = vsel %vm815, %v5079, 0.0
        %v5142 = vsel %vm816, %v5110, 0.0
        %v5143 = vpack.c.bf16 %v5015, %v5015
        %v5144 = vpack.c.bf16 %v5016, %v5016
        %v5145 = vpack.c.bf16 %v5017, %v5017
        %v5146 = vpack.c.bf16 %v5018, %v5018
        %v5147 = vpack.c.bf16 %v5019, %v5019
        %v5148 = vpack.c.bf16 %v5020, %v5020
        %v5149 = vpack.c.bf16 %v5021, %v5021
        %v5150 = vpack.c.bf16 %v5022, %v5022
        %v5151 = vpack.c.bf16 %v5023, %v5023
        %v5152 = vpack.c.bf16 %v5024, %v5024
        %v5153 = vpack.c.bf16 %v5025, %v5025
        %v5154 = vpack.c.bf16 %v5026, %v5026
        %v5155 = vpack.c.bf16 %v5027, %v5027
        %v5156 = vpack.c.bf16 %v5028, %v5028
        %v5157 = vpack.c.bf16 %v5029, %v5029
        %v5158 = vpack.c.bf16 %v5030, %v5030
        %v5159 = vpack.c.bf16 %v5031, %v5031
        %v5160 = vpack.c.bf16 %v5032, %v5032
        %v5161 = vpack.c.bf16 %v5033, %v5033
        %v5162 = vpack.c.bf16 %v5034, %v5034
        %v5163 = vpack.c.bf16 %v5035, %v5035
        %v5164 = vpack.c.bf16 %v5036, %v5036
        %v5165 = vpack.c.bf16 %v5037, %v5037
        %v5166 = vpack.c.bf16 %v5038, %v5038
        %v5167 = vpack.c.bf16 %v5039, %v5039
        %v5168 = vpack.c.bf16 %v5040, %v5040
        %v5169 = vpack.c.bf16 %v5041, %v5041
        %v5170 = vpack.c.bf16 %v5042, %v5042
        %v5171 = vpack.c.bf16 %v5043, %v5043
        %v5172 = vpack.c.bf16 %v5044, %v5044
        %v5173 = vpack.c.bf16 %v5045, %v5045
        %v5174 = vpack.c.bf16 %v5046, %v5046
        %5175 = vst [vmem:[#allocation3] sm:$0xf] %v5143
        %5176 = vst [vmem:[#allocation3 + $0x24] sm:$0xf] %v5144
        %5177 = vst [vmem:[#allocation3 + $0x48] sm:$0xf] %v5145
        %5178 = vst [vmem:[#allocation3 + $0x6c] sm:$0xf] %v5146
        %5179 = vst [vmem:[#allocation3 + $0x90] sm:$0xf] %v5147
        %5180 = vst [vmem:[#allocation3 + $0xb4] sm:$0xf] %v5148
        %5181 = vst [vmem:[#allocation3 + $0xd8] sm:$0xf] %v5149
        %5182 = vst [vmem:[#allocation3 + $0xfc] sm:$0xf] %v5150
        %5183 = vst [vmem:[#allocation3 + $0x120] sm:$0xf] %v5151
        %5184 = vst [vmem:[#allocation3 + $0x144] sm:$0xf] %v5152
        %5185 = vst [vmem:[#allocation3 + $0x168] sm:$0xf] %v5153
        %5186 = vst [vmem:[#allocation3 + $0x18c] sm:$0xf] %v5154
        %5187 = vst [vmem:[#allocation3 + $0x1b0] sm:$0xf] %v5155
        %5188 = vst [vmem:[#allocation3 + $0x1d4] sm:$0xf] %v5156
        %5189 = vst [vmem:[#allocation3 + $0x1f8] sm:$0xf] %v5157
        %5190 = vst [vmem:[#allocation3 + $0x21c] sm:$0xf] %v5158
        %5191 = vst [vmem:[#allocation3 + $0x240] sm:$0xf] %v5159
        %5192 = vst [vmem:[#allocation3 + $0x264] sm:$0xf] %v5160
        %5193 = vst [vmem:[#allocation3 + $0x288] sm:$0xf] %v5161
        %5194 = vst [vmem:[#allocation3 + $0x2ac] sm:$0xf] %v5162
        %5195 = vst [vmem:[#allocation3 + $0x2d0] sm:$0xf] %v5163
        %5196 = vst [vmem:[#allocation3 + $0x2f4] sm:$0xf] %v5164
        %5197 = vst [vmem:[#allocation3 + $0x318] sm:$0xf] %v5165
        %5198 = vst [vmem:[#allocation3 + $0x33c] sm:$0xf] %v5166
        %5199 = vst [vmem:[#allocation3 + $0x360] sm:$0xf] %v5167
        %5200 = vst [vmem:[#allocation3 + $0x384] sm:$0xf] %v5168
        %5201 = vst [vmem:[#allocation3 + $0x3a8] sm:$0xf] %v5169
        %5202 = vst [vmem:[#allocation3 + $0x3cc] sm:$0xf] %v5170
        %5203 = vst [vmem:[#allocation3 + $0x3f0] sm:$0xf] %v5171
        %5204 = vst [vmem:[#allocation3 + $0x414] sm:$0xf] %v5172
        %5205 = vst [vmem:[#allocation3 + $0x438] sm:$0xf] %v5173
        %5206 = vst [vmem:[#allocation3 + $0x45c] sm:$0xf] %v5174
        %v5207 = vpack.c.bf16 %v5111, %v5111
        %v5208 = vpack.c.bf16 %v5112, %v5112
        %v5209 = vpack.c.bf16 %v5113, %v5113
        %v5210 = vpack.c.bf16 %v5114, %v5114
        %v5211 = vpack.c.bf16 %v5115, %v5115
        %v5212 = vpack.c.bf16 %v5116, %v5116
        %v5213 = vpack.c.bf16 %v5117, %v5117
        %v5214 = vpack.c.bf16 %v5118, %v5118
        %v5215 = vpack.c.bf16 %v5119, %v5119
        %v5216 = vpack.c.bf16 %v5120, %v5120
        %v5217 = vpack.c.bf16 %v5121, %v5121
        %v5218 = vpack.c.bf16 %v5122, %v5122
        %v5219 = vpack.c.bf16 %v5123, %v5123
        %v5220 = vpack.c.bf16 %v5124, %v5124
        %v5221 = vpack.c.bf16 %v5125, %v5125
        %v5222 = vpack.c.bf16 %v5126, %v5126
        %v5223 = vpack.c.bf16 %v5127, %v5127
        %v5224 = vpack.c.bf16 %v5128, %v5128
        %v5225 = vpack.c.bf16 %v5129, %v5129
        %v5226 = vpack.c.bf16 %v5130, %v5130
        %v5227 = vpack.c.bf16 %v5131, %v5131
        %v5228 = vpack.c.bf16 %v5132, %v5132
        %v5229 = vpack.c.bf16 %v5133, %v5133
        %v5230 = vpack.c.bf16 %v5134, %v5134
        %v5231 = vpack.c.bf16 %v5135, %v5135
        %v5232 = vpack.c.bf16 %v5136, %v5136
        %v5233 = vpack.c.bf16 %v5137, %v5137
        %v5234 = vpack.c.bf16 %v5138, %v5138
        %v5235 = vpack.c.bf16 %v5139, %v5139
        %v5236 = vpack.c.bf16 %v5140, %v5140
        %v5237 = vpack.c.bf16 %v5141, %v5141
        %v5238 = vpack.c.bf16 %v5142, %v5142
        %5239 = vst [vmem:[#allocation3 + $0x8] sm:$0xf] %v5207
        %5240 = vst [vmem:[#allocation3 + $0x2c] sm:$0xf] %v5208
        %5241 = vst [vmem:[#allocation3 + $0x50] sm:$0xf] %v5209
        %5242 = vst [vmem:[#allocation3 + $0x74] sm:$0xf] %v5210
        %5243 = vst [vmem:[#allocation3 + $0x98] sm:$0xf] %v5211
        %5244 = vst [vmem:[#allocation3 + $0xbc] sm:$0xf] %v5212
        %5245 = vst [vmem:[#allocation3 + $0xe0] sm:$0xf] %v5213
        %5246 = vst [vmem:[#allocation3 + $0x104] sm:$0xf] %v5214
        %5247 = vst [vmem:[#allocation3 + $0x128] sm:$0xf] %v5215
        %5248 = vst [vmem:[#allocation3 + $0x14c] sm:$0xf] %v5216
        %5249 = vst [vmem:[#allocation3 + $0x170] sm:$0xf] %v5217
        %5250 = vst [vmem:[#allocation3 + $0x194] sm:$0xf] %v5218
        %5251 = vst [vmem:[#allocation3 + $0x1b8] sm:$0xf] %v5219
        %5252 = vst [vmem:[#allocation3 + $0x1dc] sm:$0xf] %v5220
        %5253 = vst [vmem:[#allocation3 + $0x200] sm:$0xf] %v5221
        %5254 = vst [vmem:[#allocation3 + $0x224] sm:$0xf] %v5222
        %5255 = vst [vmem:[#allocation3 + $0x248] sm:$0xf] %v5223
        %5256 = vst [vmem:[#allocation3 + $0x26c] sm:$0xf] %v5224
        %5257 = vst [vmem:[#allocation3 + $0x290] sm:$0xf] %v5225
        %5258 = vst [vmem:[#allocation3 + $0x2b4] sm:$0xf] %v5226
        %5259 = vst [vmem:[#allocation3 + $0x2d8] sm:$0xf] %v5227
        %5260 = vst [vmem:[#allocation3 + $0x2fc] sm:$0xf] %v5228
        %5261 = vst [vmem:[#allocation3 + $0x320] sm:$0xf] %v5229
        %5262 = vst [vmem:[#allocation3 + $0x344] sm:$0xf] %v5230
        %5263 = vst [vmem:[#allocation3 + $0x368] sm:$0xf] %v5231
        %5264 = vst [vmem:[#allocation3 + $0x38c] sm:$0xf] %v5232
        %5265 = vst [vmem:[#allocation3 + $0x3b0] sm:$0xf] %v5233
        %5266 = vst [vmem:[#allocation3 + $0x3d4] sm:$0xf] %v5234
        %5267 = vst [vmem:[#allocation3 + $0x3f8] sm:$0xf] %v5235
        %5268 = vst [vmem:[#allocation3 + $0x41c] sm:$0xf] %v5236
        %5269 = vst [vmem:[#allocation3 + $0x440] sm:$0xf] %v5237
        %5270 = vst [vmem:[#allocation3 + $0x464] sm:$0xf] %v5238
        %v5271 = vld [vmem:[%s1198] sm:$0xf]
        %v5272 = vld [vmem:[%s1198 + $0x4] sm:$0xf]
        %v5273 = vld [vmem:[%s1198 + $0x8] sm:$0xf]
        %v5274 = vld [vmem:[%s1198 + $0xc] sm:$0xf]
        %v5275 = vld [vmem:[%s1198 + $0x10] sm:$0xf]
        %v5276 = vld [vmem:[%s1198 + $0x14] sm:$0xf]
        %v5277 = vld [vmem:[%s1198 + $0x18] sm:$0xf]
        %v5278 = vld [vmem:[%s1198 + $0x1c] sm:$0xf]
        %v5279 = vld [vmem:[%s1198 + $0x20] sm:$0xf]
        %v5280 = vld [vmem:[%s1198 + $0x24] sm:$0xf]
        %v5281 = vld [vmem:[%s1198 + $0x28] sm:$0xf]
        %v5282 = vld [vmem:[%s1198 + $0x2c] sm:$0xf]
        %v5283 = vld [vmem:[%s1198 + $0x30] sm:$0xf]
        %v5284 = vld [vmem:[%s1198 + $0x34] sm:$0xf]
        %v5285 = vld [vmem:[%s1198 + $0x38] sm:$0xf]
        %v5286 = vld [vmem:[%s1198 + $0x3c] sm:$0xf]
        %v5287 = vld [vmem:[%s1198 + $0x40] sm:$0xf]
        %v5288 = vld [vmem:[%s1198 + $0x44] sm:$0xf]
        %v5289 = vld [vmem:[%s1198 + $0x48] sm:$0xf]
        %v5290 = vld [vmem:[%s1198 + $0x4c] sm:$0xf]
        %v5291 = vld [vmem:[%s1198 + $0x50] sm:$0xf]
        %v5292 = vld [vmem:[%s1198 + $0x54] sm:$0xf]
        %v5293 = vld [vmem:[%s1198 + $0x58] sm:$0xf]
        %v5294 = vld [vmem:[%s1198 + $0x5c] sm:$0xf]
        %v5295 = vld [vmem:[%s1198 + $0x60] sm:$0xf]
        %v5296 = vld [vmem:[%s1198 + $0x64] sm:$0xf]
        %v5297 = vld [vmem:[%s1198 + $0x68] sm:$0xf]
        %v5298 = vld [vmem:[%s1198 + $0x6c] sm:$0xf]
        %v5299 = vld [vmem:[%s1198 + $0x70] sm:$0xf]
        %v5300 = vld [vmem:[%s1198 + $0x74] sm:$0xf]
        %v5301 = vld [vmem:[%s1198 + $0x78] sm:$0xf]
        %v5302 = vld [vmem:[%s1198 + $0x7c] sm:$0xf]
        %5303 = vst [vmem:[#allocation3 + $0x10] sm:$0xf] %v5271
        %5304 = vst [vmem:[#allocation3 + $0x34] sm:$0xf] %v5272
        %5305 = vst [vmem:[#allocation3 + $0x58] sm:$0xf] %v5273
        %5306 = vst [vmem:[#allocation3 + $0x7c] sm:$0xf] %v5274
        %5307 = vst [vmem:[#allocation3 + $0xa0] sm:$0xf] %v5275
        %5308 = vst [vmem:[#allocation3 + $0xc4] sm:$0xf] %v5276
        %5309 = vst [vmem:[#allocation3 + $0xe8] sm:$0xf] %v5277
        %5310 = vst [vmem:[#allocation3 + $0x10c] sm:$0xf] %v5278
        %5311 = vst [vmem:[#allocation3 + $0x130] sm:$0xf] %v5279
        %5312 = vst [vmem:[#allocation3 + $0x154] sm:$0xf] %v5280
        %5313 = vst [vmem:[#allocation3 + $0x178] sm:$0xf] %v5281
        %5314 = vst [vmem:[#allocation3 + $0x19c] sm:$0xf] %v5282
        %5315 = vst [vmem:[#allocation3 + $0x1c0] sm:$0xf] %v5283
        %5316 = vst [vmem:[#allocation3 + $0x1e4] sm:$0xf] %v5284
        %5317 = vst [vmem:[#allocation3 + $0x208] sm:$0xf] %v5285
        %5318 = vst [vmem:[#allocation3 + $0x22c] sm:$0xf] %v5286
        %5319 = vst [vmem:[#allocation3 + $0x250] sm:$0xf] %v5287
        %5320 = vst [vmem:[#allocation3 + $0x274] sm:$0xf] %v5288
        %5321 = vst [vmem:[#allocation3 + $0x298] sm:$0xf] %v5289
        %5322 = vst [vmem:[#allocation3 + $0x2bc] sm:$0xf] %v5290
        %5323 = vst [vmem:[#allocation3 + $0x2e0] sm:$0xf] %v5291
        %5324 = vst [vmem:[#allocation3 + $0x304] sm:$0xf] %v5292
        %5325 = vst [vmem:[#allocation3 + $0x328] sm:$0xf] %v5293
        %5326 = vst [vmem:[#allocation3 + $0x34c] sm:$0xf] %v5294
        %5327 = vst [vmem:[#allocation3 + $0x370] sm:$0xf] %v5295
        %5328 = vst [vmem:[#allocation3 + $0x394] sm:$0xf] %v5296
        %5329 = vst [vmem:[#allocation3 + $0x3b8] sm:$0xf] %v5297
        %5330 = vst [vmem:[#allocation3 + $0x3dc] sm:$0xf] %v5298
        %5331 = vst [vmem:[#allocation3 + $0x400] sm:$0xf] %v5299
        %5332 = vst [vmem:[#allocation3 + $0x424] sm:$0xf] %v5300
        %5333 = vst [vmem:[#allocation3 + $0x448] sm:$0xf] %v5301
        %5334 = vst [vmem:[#allocation3 + $0x46c] sm:$0xf] %v5302
        %v5335 = vunpack.c.l.bf16 %v5271
        %v5336 = vunpack.c.l.bf16 %v5272
        %v5337 = vunpack.c.l.bf16 %v5273
        %v5338 = vunpack.c.l.bf16 %v5274
        %v5339 = vunpack.c.l.bf16 %v5275
        %v5340 = vunpack.c.l.bf16 %v5276
        %v5341 = vunpack.c.l.bf16 %v5277
        %v5342 = vunpack.c.l.bf16 %v5278
        %v5343 = vunpack.c.l.bf16 %v5279
        %v5344 = vunpack.c.l.bf16 %v5280
        %v5345 = vunpack.c.l.bf16 %v5281
        %v5346 = vunpack.c.l.bf16 %v5282
        %v5347 = vunpack.c.l.bf16 %v5283
        %v5348 = vunpack.c.l.bf16 %v5284
        %v5349 = vunpack.c.l.bf16 %v5285
        %v5350 = vunpack.c.l.bf16 %v5286
        %v5351 = vunpack.c.l.bf16 %v5287
        %v5352 = vunpack.c.l.bf16 %v5288
        %v5353 = vunpack.c.l.bf16 %v5289
        %v5354 = vunpack.c.l.bf16 %v5290
        %v5355 = vunpack.c.l.bf16 %v5291
        %v5356 = vunpack.c.l.bf16 %v5292
        %v5357 = vunpack.c.l.bf16 %v5293
        %v5358 = vunpack.c.l.bf16 %v5294
        %v5359 = vunpack.c.l.bf16 %v5295
        %v5360 = vunpack.c.l.bf16 %v5296
        %v5361 = vunpack.c.l.bf16 %v5297
        %v5362 = vunpack.c.l.bf16 %v5298
        %v5363 = vunpack.c.l.bf16 %v5299
        %v5364 = vunpack.c.l.bf16 %v5300
        %v5365 = vunpack.c.l.bf16 %v5301
        %v5366 = vunpack.c.l.bf16 %v5302
        %v5367 = vrot.slane %v5335, 7
        %v5368 = vrot.slane %v5336, 7
        %v5369 = vrot.slane %v5337, 7
        %v5370 = vrot.slane %v5338, 7
        %v5371 = vrot.slane %v5339, 7
        %v5372 = vrot.slane %v5340, 7
        %v5373 = vrot.slane %v5341, 7
        %v5374 = vrot.slane %v5342, 7
        %v5375 = vrot.slane %v5343, 7
        %v5376 = vrot.slane %v5344, 7
        %v5377 = vrot.slane %v5345, 7
        %v5378 = vrot.slane %v5346, 7
        %v5379 = vrot.slane %v5347, 7
        %v5380 = vrot.slane %v5348, 7
        %v5381 = vrot.slane %v5349, 7
        %v5382 = vrot.slane %v5350, 7
        %v5383 = vrot.slane %v5351, 7
        %v5384 = vrot.slane %v5352, 7
        %v5385 = vrot.slane %v5353, 7
        %v5386 = vrot.slane %v5354, 7
        %v5387 = vrot.slane %v5355, 7
        %v5388 = vrot.slane %v5356, 7
        %v5389 = vrot.slane %v5357, 7
        %v5390 = vrot.slane %v5358, 7
        %v5391 = vrot.slane %v5359, 7
        %v5392 = vrot.slane %v5360, 7
        %v5393 = vrot.slane %v5361, 7
        %v5394 = vrot.slane %v5362, 7
        %v5395 = vrot.slane %v5363, 7
        %v5396 = vrot.slane %v5364, 7
        %v5397 = vrot.slane %v5365, 7
        %v5398 = vrot.slane %v5366, 7
        %v5399 = vsel %vm1359, %v5397, %v5398
        %v5400 = vsel %vm1359, %v5396, %v5397
        %v5401 = vsel %vm1359, %v5395, %v5396
        %v5402 = vsel %vm1359, %v5394, %v5395
        %v5403 = vsel %vm1359, %v5393, %v5394
        %v5404 = vsel %vm1359, %v5392, %v5393
        %v5405 = vsel %vm1359, %v5391, %v5392
        %v5406 = vsel %vm1359, %v5390, %v5391
        %v5407 = vsel %vm1359, %v5389, %v5390
        %v5408 = vsel %vm1359, %v5388, %v5389
        %v5409 = vsel %vm1359, %v5387, %v5388
        %v5410 = vsel %vm1359, %v5386, %v5387
        %v5411 = vsel %vm1359, %v5385, %v5386
        %v5412 = vsel %vm1359, %v5384, %v5385
        %v5413 = vsel %vm1359, %v5383, %v5384
        %v5414 = vsel %vm1359, %v5382, %v5383
        %v5415 = vsel %vm1359, %v5381, %v5382
        %v5416 = vsel %vm1359, %v5380, %v5381
        %v5417 = vsel %vm1359, %v5379, %v5380
        %v5418 = vsel %vm1359, %v5378, %v5379
        %v5419 = vsel %vm1359, %v5377, %v5378
        %v5420 = vsel %vm1359, %v5376, %v5377
        %v5421 = vsel %vm1359, %v5375, %v5376
        %v5422 = vsel %vm1359, %v5374, %v5375
        %v5423 = vsel %vm1359, %v5373, %v5374
        %v5424 = vsel %vm1359, %v5372, %v5373
        %v5425 = vsel %vm1359, %v5371, %v5372
        %v5426 = vsel %vm1359, %v5370, %v5371
        %v5427 = vsel %vm1359, %v5369, %v5370
        %v5428 = vsel %vm1359, %v5368, %v5369
        %v5429 = vsel %vm1359, %v5367, %v5368
        %v5430 = vsel %vm1359, %v5398, %v5367
        %v5431 = vsel %vm753, %v5430, 0.0
        %v5432 = vsel %vm754, %v5429, 0.0
        %v5433 = vsel %vm755, %v5428, 0.0
        %v5434 = vsel %vm756, %v5427, 0.0
        %v5435 = vsel %vm757, %v5426, 0.0
        %v5436 = vsel %vm758, %v5425, 0.0
        %v5437 = vsel %vm759, %v5424, 0.0
        %v5438 = vsel %vm760, %v5423, 0.0
        %v5439 = vsel %vm761, %v5422, 0.0
        %v5440 = vsel %vm762, %v5421, 0.0
        %v5441 = vsel %vm763, %v5420, 0.0
        %v5442 = vsel %vm764, %v5419, 0.0
        %v5443 = vsel %vm765, %v5418, 0.0
        %v5444 = vsel %vm766, %v5417, 0.0
        %v5445 = vsel %vm767, %v5416, 0.0
        %v5446 = vsel %vm768, %v5415, 0.0
        %v5447 = vsel %vm769, %v5414, 0.0
        %v5448 = vsel %vm770, %v5413, 0.0
        %v5449 = vsel %vm771, %v5412, 0.0
        %v5450 = vsel %vm772, %v5411, 0.0
        %v5451 = vsel %vm773, %v5410, 0.0
        %v5452 = vsel %vm774, %v5409, 0.0
        %v5453 = vsel %vm775, %v5408, 0.0
        %v5454 = vsel %vm776, %v5407, 0.0
        %v5455 = vsel %vm777, %v5406, 0.0
        %v5456 = vsel %vm778, %v5405, 0.0
        %v5457 = vsel %vm779, %v5404, 0.0
        %v5458 = vsel %vm780, %v5403, 0.0
        %v5459 = vsel %vm781, %v5402, 0.0
        %v5460 = vsel %vm782, %v5401, 0.0
        %v5461 = vsel %vm783, %v5400, 0.0
        %v5462 = vsel %vm784, %v5399, 0.0
        %v5463 = vrot.slane %v5335, 1
        %v5464 = vrot.slane %v5336, 1
        %v5465 = vrot.slane %v5337, 1
        %v5466 = vrot.slane %v5338, 1
        %v5467 = vrot.slane %v5339, 1
        %v5468 = vrot.slane %v5340, 1
        %v5469 = vrot.slane %v5341, 1
        %v5470 = vrot.slane %v5342, 1
        %v5471 = vrot.slane %v5343, 1
        %v5472 = vrot.slane %v5344, 1
        %v5473 = vrot.slane %v5345, 1
        %v5474 = vrot.slane %v5346, 1
        %v5475 = vrot.slane %v5347, 1
        %v5476 = vrot.slane %v5348, 1
        %v5477 = vrot.slane %v5349, 1
        %v5478 = vrot.slane %v5350, 1
        %v5479 = vrot.slane %v5351, 1
        %v5480 = vrot.slane %v5352, 1
        %v5481 = vrot.slane %v5353, 1
        %v5482 = vrot.slane %v5354, 1
        %v5483 = vrot.slane %v5355, 1
        %v5484 = vrot.slane %v5356, 1
        %v5485 = vrot.slane %v5357, 1
        %v5486 = vrot.slane %v5358, 1
        %v5487 = vrot.slane %v5359, 1
        %v5488 = vrot.slane %v5360, 1
        %v5489 = vrot.slane %v5361, 1
        %v5490 = vrot.slane %v5362, 1
        %v5491 = vrot.slane %v5363, 1
        %v5492 = vrot.slane %v5364, 1
        %v5493 = vrot.slane %v5365, 1
        %v5494 = vrot.slane %v5366, 1
        %v5495 = vsel %vm1456, %v5493, %v5494
        %v5496 = vsel %vm1456, %v5492, %v5493
        %v5497 = vsel %vm1456, %v5491, %v5492
        %v5498 = vsel %vm1456, %v5490, %v5491
        %v5499 = vsel %vm1456, %v5489, %v5490
        %v5500 = vsel %vm1456, %v5488, %v5489
        %v5501 = vsel %vm1456, %v5487, %v5488
        %v5502 = vsel %vm1456, %v5486, %v5487
        %v5503 = vsel %vm1456, %v5485, %v5486
        %v5504 = vsel %vm1456, %v5484, %v5485
        %v5505 = vsel %vm1456, %v5483, %v5484
        %v5506 = vsel %vm1456, %v5482, %v5483
        %v5507 = vsel %vm1456, %v5481, %v5482
        %v5508 = vsel %vm1456, %v5480, %v5481
        %v5509 = vsel %vm1456, %v5479, %v5480
        %v5510 = vsel %vm1456, %v5478, %v5479
        %v5511 = vsel %vm1456, %v5477, %v5478
        %v5512 = vsel %vm1456, %v5476, %v5477
        %v5513 = vsel %vm1456, %v5475, %v5476
        %v5514 = vsel %vm1456, %v5474, %v5475
        %v5515 = vsel %vm1456, %v5473, %v5474
        %v5516 = vsel %vm1456, %v5472, %v5473
        %v5517 = vsel %vm1456, %v5471, %v5472
        %v5518 = vsel %vm1456, %v5470, %v5471
        %v5519 = vsel %vm1456, %v5469, %v5470
        %v5520 = vsel %vm1456, %v5468, %v5469
        %v5521 = vsel %vm1456, %v5467, %v5468
        %v5522 = vsel %vm1456, %v5466, %v5467
        %v5523 = vsel %vm1456, %v5465, %v5466
        %v5524 = vsel %vm1456, %v5464, %v5465
        %v5525 = vsel %vm1456, %v5463, %v5464
        %v5526 = vsel %vm1456, %v5494, %v5463
        %v5527 = vsel %vm785, %v5525, 0.0
        %v5528 = vsel %vm786, %v5524, 0.0
        %v5529 = vsel %vm787, %v5523, 0.0
        %v5530 = vsel %vm788, %v5522, 0.0
        %v5531 = vsel %vm789, %v5521, 0.0
        %v5532 = vsel %vm790, %v5520, 0.0
        %v5533 = vsel %vm791, %v5519, 0.0
        %v5534 = vsel %vm792, %v5518, 0.0
        %v5535 = vsel %vm793, %v5517, 0.0
        %v5536 = vsel %vm794, %v5516, 0.0
        %v5537 = vsel %vm795, %v5515, 0.0
        %v5538 = vsel %vm796, %v5514, 0.0
        %v5539 = vsel %vm797, %v5513, 0.0
        %v5540 = vsel %vm798, %v5512, 0.0
        %v5541 = vsel %vm799, %v5511, 0.0
        %v5542 = vsel %vm800, %v5510, 0.0
        %v5543 = vsel %vm801, %v5509, 0.0
        %v5544 = vsel %vm802, %v5508, 0.0
        %v5545 = vsel %vm803, %v5507, 0.0
        %v5546 = vsel %vm804, %v5506, 0.0
        %v5547 = vsel %vm805, %v5505, 0.0
        %v5548 = vsel %vm806, %v5504, 0.0
        %v5549 = vsel %vm807, %v5503, 0.0
        %v5550 = vsel %vm808, %v5502, 0.0
        %v5551 = vsel %vm809, %v5501, 0.0
        %v5552 = vsel %vm810, %v5500, 0.0
        %v5553 = vsel %vm811, %v5499, 0.0
        %v5554 = vsel %vm812, %v5498, 0.0
        %v5555 = vsel %vm813, %v5497, 0.0
        %v5556 = vsel %vm814, %v5496, 0.0
        %v5557 = vsel %vm815, %v5495, 0.0
        %v5558 = vsel %vm816, %v5526, 0.0
        %v5559 = vpack.c.bf16 %v5431, %v5431
        %v5560 = vpack.c.bf16 %v5432, %v5432
        %v5561 = vpack.c.bf16 %v5433, %v5433
        %v5562 = vpack.c.bf16 %v5434, %v5434
        %v5563 = vpack.c.bf16 %v5435, %v5435
        %v5564 = vpack.c.bf16 %v5436, %v5436
        %v5565 = vpack.c.bf16 %v5437, %v5437
        %v5566 = vpack.c.bf16 %v5438, %v5438
        %v5567 = vpack.c.bf16 %v5439, %v5439
        %v5568 = vpack.c.bf16 %v5440, %v5440
        %v5569 = vpack.c.bf16 %v5441, %v5441
        %v5570 = vpack.c.bf16 %v5442, %v5442
        %v5571 = vpack.c.bf16 %v5443, %v5443
        %v5572 = vpack.c.bf16 %v5444, %v5444
        %v5573 = vpack.c.bf16 %v5445, %v5445
        %v5574 = vpack.c.bf16 %v5446, %v5446
        %v5575 = vpack.c.bf16 %v5447, %v5447
        %v5576 = vpack.c.bf16 %v5448, %v5448
        %v5577 = vpack.c.bf16 %v5449, %v5449
        %v5578 = vpack.c.bf16 %v5450, %v5450
        %v5579 = vpack.c.bf16 %v5451, %v5451
        %v5580 = vpack.c.bf16 %v5452, %v5452
        %v5581 = vpack.c.bf16 %v5453, %v5453
        %v5582 = vpack.c.bf16 %v5454, %v5454
        %v5583 = vpack.c.bf16 %v5455, %v5455
        %v5584 = vpack.c.bf16 %v5456, %v5456
        %v5585 = vpack.c.bf16 %v5457, %v5457
        %v5586 = vpack.c.bf16 %v5458, %v5458
        %v5587 = vpack.c.bf16 %v5459, %v5459
        %v5588 = vpack.c.bf16 %v5460, %v5460
        %v5589 = vpack.c.bf16 %v5461, %v5461
        %v5590 = vpack.c.bf16 %v5462, %v5462
        %5591 = vst [vmem:[#allocation3 + $0xc] sm:$0xf] %v5559
        %5592 = vst [vmem:[#allocation3 + $0x30] sm:$0xf] %v5560
        %5593 = vst [vmem:[#allocation3 + $0x54] sm:$0xf] %v5561
        %5594 = vst [vmem:[#allocation3 + $0x78] sm:$0xf] %v5562
        %5595 = vst [vmem:[#allocation3 + $0x9c] sm:$0xf] %v5563
        %5596 = vst [vmem:[#allocation3 + $0xc0] sm:$0xf] %v5564
        %5597 = vst [vmem:[#allocation3 + $0xe4] sm:$0xf] %v5565
        %5598 = vst [vmem:[#allocation3 + $0x108] sm:$0xf] %v5566
        %5599 = vst [vmem:[#allocation3 + $0x12c] sm:$0xf] %v5567
        %5600 = vst [vmem:[#allocation3 + $0x150] sm:$0xf] %v5568
        %5601 = vst [vmem:[#allocation3 + $0x174] sm:$0xf] %v5569
        %5602 = vst [vmem:[#allocation3 + $0x198] sm:$0xf] %v5570
        %5603 = vst [vmem:[#allocation3 + $0x1bc] sm:$0xf] %v5571
        %5604 = vst [vmem:[#allocation3 + $0x1e0] sm:$0xf] %v5572
        %5605 = vst [vmem:[#allocation3 + $0x204] sm:$0xf] %v5573
        %5606 = vst [vmem:[#allocation3 + $0x228] sm:$0xf] %v5574
        %5607 = vst [vmem:[#allocation3 + $0x24c] sm:$0xf] %v5575
        %5608 = vst [vmem:[#allocation3 + $0x270] sm:$0xf] %v5576
        %5609 = vst [vmem:[#allocation3 + $0x294] sm:$0xf] %v5577
        %5610 = vst [vmem:[#allocation3 + $0x2b8] sm:$0xf] %v5578
        %5611 = vst [vmem:[#allocation3 + $0x2dc] sm:$0xf] %v5579
        %5612 = vst [vmem:[#allocation3 + $0x300] sm:$0xf] %v5580
        %5613 = vst [vmem:[#allocation3 + $0x324] sm:$0xf] %v5581
        %5614 = vst [vmem:[#allocation3 + $0x348] sm:$0xf] %v5582
        %5615 = vst [vmem:[#allocation3 + $0x36c] sm:$0xf] %v5583
        %5616 = vst [vmem:[#allocation3 + $0x390] sm:$0xf] %v5584
        %5617 = vst [vmem:[#allocation3 + $0x3b4] sm:$0xf] %v5585
        %5618 = vst [vmem:[#allocation3 + $0x3d8] sm:$0xf] %v5586
        %5619 = vst [vmem:[#allocation3 + $0x3fc] sm:$0xf] %v5587
        %5620 = vst [vmem:[#allocation3 + $0x420] sm:$0xf] %v5588
        %5621 = vst [vmem:[#allocation3 + $0x444] sm:$0xf] %v5589
        %5622 = vst [vmem:[#allocation3 + $0x468] sm:$0xf] %v5590
        %v5623 = vpack.c.bf16 %v5527, %v5527
        %v5624 = vpack.c.bf16 %v5528, %v5528
        %v5625 = vpack.c.bf16 %v5529, %v5529
        %v5626 = vpack.c.bf16 %v5530, %v5530
        %v5627 = vpack.c.bf16 %v5531, %v5531
        %v5628 = vpack.c.bf16 %v5532, %v5532
        %v5629 = vpack.c.bf16 %v5533, %v5533
        %v5630 = vpack.c.bf16 %v5534, %v5534
        %v5631 = vpack.c.bf16 %v5535, %v5535
        %v5632 = vpack.c.bf16 %v5536, %v5536
        %v5633 = vpack.c.bf16 %v5537, %v5537
        %v5634 = vpack.c.bf16 %v5538, %v5538
        %v5635 = vpack.c.bf16 %v5539, %v5539
        %v5636 = vpack.c.bf16 %v5540, %v5540
        %v5637 = vpack.c.bf16 %v5541, %v5541
        %v5638 = vpack.c.bf16 %v5542, %v5542
        %v5639 = vpack.c.bf16 %v5543, %v5543
        %v5640 = vpack.c.bf16 %v5544, %v5544
        %v5641 = vpack.c.bf16 %v5545, %v5545
        %v5642 = vpack.c.bf16 %v5546, %v5546
        %v5643 = vpack.c.bf16 %v5547, %v5547
        %v5644 = vpack.c.bf16 %v5548, %v5548
        %v5645 = vpack.c.bf16 %v5549, %v5549
        %v5646 = vpack.c.bf16 %v5550, %v5550
        %v5647 = vpack.c.bf16 %v5551, %v5551
        %v5648 = vpack.c.bf16 %v5552, %v5552
        %v5649 = vpack.c.bf16 %v5553, %v5553
        %v5650 = vpack.c.bf16 %v5554, %v5554
        %v5651 = vpack.c.bf16 %v5555, %v5555
        %v5652 = vpack.c.bf16 %v5556, %v5556
        %v5653 = vpack.c.bf16 %v5557, %v5557
        %v5654 = vpack.c.bf16 %v5558, %v5558
        %5655 = vst [vmem:[#allocation3 + $0x14] sm:$0xf] %v5623
        %5656 = vst [vmem:[#allocation3 + $0x38] sm:$0xf] %v5624
        %5657 = vst [vmem:[#allocation3 + $0x5c] sm:$0xf] %v5625
        %5658 = vst [vmem:[#allocation3 + $0x80] sm:$0xf] %v5626
        %5659 = vst [vmem:[#allocation3 + $0xa4] sm:$0xf] %v5627
        %5660 = vst [vmem:[#allocation3 + $0xc8] sm:$0xf] %v5628
        %5661 = vst [vmem:[#allocation3 + $0xec] sm:$0xf] %v5629
        %5662 = vst [vmem:[#allocation3 + $0x110] sm:$0xf] %v5630
        %5663 = vst [vmem:[#allocation3 + $0x134] sm:$0xf] %v5631
        %5664 = vst [vmem:[#allocation3 + $0x158] sm:$0xf] %v5632
        %5665 = vst [vmem:[#allocation3 + $0x17c] sm:$0xf] %v5633
        %5666 = vst [vmem:[#allocation3 + $0x1a0] sm:$0xf] %v5634
        %5667 = vst [vmem:[#allocation3 + $0x1c4] sm:$0xf] %v5635
        %5668 = vst [vmem:[#allocation3 + $0x1e8] sm:$0xf] %v5636
        %5669 = vst [vmem:[#allocation3 + $0x20c] sm:$0xf] %v5637
        %5670 = vst [vmem:[#allocation3 + $0x230] sm:$0xf] %v5638
        %5671 = vst [vmem:[#allocation3 + $0x254] sm:$0xf] %v5639
        %5672 = vst [vmem:[#allocation3 + $0x278] sm:$0xf] %v5640
        %5673 = vst [vmem:[#allocation3 + $0x29c] sm:$0xf] %v5641
        %5674 = vst [vmem:[#allocation3 + $0x2c0] sm:$0xf] %v5642
        %5675 = vst [vmem:[#allocation3 + $0x2e4] sm:$0xf] %v5643
        %5676 = vst [vmem:[#allocation3 + $0x308] sm:$0xf] %v5644
        %5677 = vst [vmem:[#allocation3 + $0x32c] sm:$0xf] %v5645
        %5678 = vst [vmem:[#allocation3 + $0x350] sm:$0xf] %v5646
        %5679 = vst [vmem:[#allocation3 + $0x374] sm:$0xf] %v5647
        %5680 = vst [vmem:[#allocation3 + $0x398] sm:$0xf] %v5648
        %5681 = vst [vmem:[#allocation3 + $0x3bc] sm:$0xf] %v5649
        %5682 = vst [vmem:[#allocation3 + $0x3e0] sm:$0xf] %v5650
        %5683 = vst [vmem:[#allocation3 + $0x404] sm:$0xf] %v5651
        %5684 = vst [vmem:[#allocation3 + $0x428] sm:$0xf] %v5652
        %5685 = vst [vmem:[#allocation3 + $0x44c] sm:$0xf] %v5653
        %5686 = vst [vmem:[#allocation3 + $0x470] sm:$0xf] %v5654
        %v5687 = vld [vmem:[%s2065] sm:$0xf]
        %v5688 = vld [vmem:[%s2065 + $0x4] sm:$0xf]
        %v5689 = vld [vmem:[%s2065 + $0x8] sm:$0xf]
        %v5690 = vld [vmem:[%s2065 + $0xc] sm:$0xf]
        %v5691 = vld [vmem:[%s2065 + $0x10] sm:$0xf]
        %v5692 = vld [vmem:[%s2065 + $0x14] sm:$0xf]
        %v5693 = vld [vmem:[%s2065 + $0x18] sm:$0xf]
        %v5694 = vld [vmem:[%s2065 + $0x1c] sm:$0xf]
        %v5695 = vld [vmem:[%s2065 + $0x20] sm:$0xf]
        %v5696 = vld [vmem:[%s2065 + $0x24] sm:$0xf]
        %v5697 = vld [vmem:[%s2065 + $0x28] sm:$0xf]
        %v5698 = vld [vmem:[%s2065 + $0x2c] sm:$0xf]
        %v5699 = vld [vmem:[%s2065 + $0x30] sm:$0xf]
        %v5700 = vld [vmem:[%s2065 + $0x34] sm:$0xf]
        %v5701 = vld [vmem:[%s2065 + $0x38] sm:$0xf]
        %v5702 = vld [vmem:[%s2065 + $0x3c] sm:$0xf]
        %v5703 = vld [vmem:[%s2065 + $0x40] sm:$0xf]
        %v5704 = vld [vmem:[%s2065 + $0x44] sm:$0xf]
        %v5705 = vld [vmem:[%s2065 + $0x48] sm:$0xf]
        %v5706 = vld [vmem:[%s2065 + $0x4c] sm:$0xf]
        %v5707 = vld [vmem:[%s2065 + $0x50] sm:$0xf]
        %v5708 = vld [vmem:[%s2065 + $0x54] sm:$0xf]
        %v5709 = vld [vmem:[%s2065 + $0x58] sm:$0xf]
        %v5710 = vld [vmem:[%s2065 + $0x5c] sm:$0xf]
        %v5711 = vld [vmem:[%s2065 + $0x60] sm:$0xf]
        %v5712 = vld [vmem:[%s2065 + $0x64] sm:$0xf]
        %v5713 = vld [vmem:[%s2065 + $0x68] sm:$0xf]
        %v5714 = vld [vmem:[%s2065 + $0x6c] sm:$0xf]
        %v5715 = vld [vmem:[%s2065 + $0x70] sm:$0xf]
        %v5716 = vld [vmem:[%s2065 + $0x74] sm:$0xf]
        %v5717 = vld [vmem:[%s2065 + $0x78] sm:$0xf]
        %v5718 = vld [vmem:[%s2065 + $0x7c] sm:$0xf]
        %5719 = vst [vmem:[#allocation3 + $0x1c] sm:$0xf] %v5687
        %5720 = vst [vmem:[#allocation3 + $0x40] sm:$0xf] %v5688
        %5721 = vst [vmem:[#allocation3 + $0x64] sm:$0xf] %v5689
        %5722 = vst [vmem:[#allocation3 + $0x88] sm:$0xf] %v5690
        %5723 = vst [vmem:[#allocation3 + $0xac] sm:$0xf] %v5691
        %5724 = vst [vmem:[#allocation3 + $0xd0] sm:$0xf] %v5692
        %5725 = vst [vmem:[#allocation3 + $0xf4] sm:$0xf] %v5693
        %5726 = vst [vmem:[#allocation3 + $0x118] sm:$0xf] %v5694
        %5727 = vst [vmem:[#allocation3 + $0x13c] sm:$0xf] %v5695
        %5728 = vst [vmem:[#allocation3 + $0x160] sm:$0xf] %v5696
        %5729 = vst [vmem:[#allocation3 + $0x184] sm:$0xf] %v5697
        %5730 = vst [vmem:[#allocation3 + $0x1a8] sm:$0xf] %v5698
        %5731 = vst [vmem:[#allocation3 + $0x1cc] sm:$0xf] %v5699
        %5732 = vst [vmem:[#allocation3 + $0x1f0] sm:$0xf] %v5700
        %5733 = vst [vmem:[#allocation3 + $0x214] sm:$0xf] %v5701
        %5734 = vst [vmem:[#allocation3 + $0x238] sm:$0xf] %v5702
        %5735 = vst [vmem:[#allocation3 + $0x25c] sm:$0xf] %v5703
        %5736 = vst [vmem:[#allocation3 + $0x280] sm:$0xf] %v5704
        %5737 = vst [vmem:[#allocation3 + $0x2a4] sm:$0xf] %v5705
        %5738 = vst [vmem:[#allocation3 + $0x2c8] sm:$0xf] %v5706
        %5739 = vst [vmem:[#allocation3 + $0x2ec] sm:$0xf] %v5707
        %5740 = vst [vmem:[#allocation3 + $0x310] sm:$0xf] %v5708
        %5741 = vst [vmem:[#allocation3 + $0x334] sm:$0xf] %v5709
        %5742 = vst [vmem:[#allocation3 + $0x358] sm:$0xf] %v5710
        %5743 = vst [vmem:[#allocation3 + $0x37c] sm:$0xf] %v5711
        %5744 = vst [vmem:[#allocation3 + $0x3a0] sm:$0xf] %v5712
        %5745 = vst [vmem:[#allocation3 + $0x3c4] sm:$0xf] %v5713
        %5746 = vst [vmem:[#allocation3 + $0x3e8] sm:$0xf] %v5714
        %5747 = vst [vmem:[#allocation3 + $0x40c] sm:$0xf] %v5715
        %5748 = vst [vmem:[#allocation3 + $0x430] sm:$0xf] %v5716
        %5749 = vst [vmem:[#allocation3 + $0x454] sm:$0xf] %v5717
        %5750 = vst [vmem:[#allocation3 + $0x478] sm:$0xf] %v5718
        %v5751 = vunpack.c.l.bf16 %v5687
        %v5752 = vunpack.c.l.bf16 %v5688
        %v5753 = vunpack.c.l.bf16 %v5689
        %v5754 = vunpack.c.l.bf16 %v5690
        %v5755 = vunpack.c.l.bf16 %v5691
        %v5756 = vunpack.c.l.bf16 %v5692
        %v5757 = vunpack.c.l.bf16 %v5693
        %v5758 = vunpack.c.l.bf16 %v5694
        %v5759 = vunpack.c.l.bf16 %v5695
        %v5760 = vunpack.c.l.bf16 %v5696
        %v5761 = vunpack.c.l.bf16 %v5697
        %v5762 = vunpack.c.l.bf16 %v5698
        %v5763 = vunpack.c.l.bf16 %v5699
        %v5764 = vunpack.c.l.bf16 %v5700
        %v5765 = vunpack.c.l.bf16 %v5701
        %v5766 = vunpack.c.l.bf16 %v5702
        %v5767 = vunpack.c.l.bf16 %v5703
        %v5768 = vunpack.c.l.bf16 %v5704
        %v5769 = vunpack.c.l.bf16 %v5705
        %v5770 = vunpack.c.l.bf16 %v5706
        %v5771 = vunpack.c.l.bf16 %v5707
        %v5772 = vunpack.c.l.bf16 %v5708
        %v5773 = vunpack.c.l.bf16 %v5709
        %v5774 = vunpack.c.l.bf16 %v5710
        %v5775 = vunpack.c.l.bf16 %v5711
        %v5776 = vunpack.c.l.bf16 %v5712
        %v5777 = vunpack.c.l.bf16 %v5713
        %v5778 = vunpack.c.l.bf16 %v5714
        %v5779 = vunpack.c.l.bf16 %v5715
        %v5780 = vunpack.c.l.bf16 %v5716
        %v5781 = vunpack.c.l.bf16 %v5717
        %v5782 = vunpack.c.l.bf16 %v5718
        %v5783 = vrot.slane %v5751, 7
        %v5784 = vrot.slane %v5752, 7
        %v5785 = vrot.slane %v5753, 7
        %v5786 = vrot.slane %v5754, 7
        %v5787 = vrot.slane %v5755, 7
        %v5788 = vrot.slane %v5756, 7
        %v5789 = vrot.slane %v5757, 7
        %v5790 = vrot.slane %v5758, 7
        %v5791 = vrot.slane %v5759, 7
        %v5792 = vrot.slane %v5760, 7
        %v5793 = vrot.slane %v5761, 7
        %v5794 = vrot.slane %v5762, 7
        %v5795 = vrot.slane %v5763, 7
        %v5796 = vrot.slane %v5764, 7
        %v5797 = vrot.slane %v5765, 7
        %v5798 = vrot.slane %v5766, 7
        %v5799 = vrot.slane %v5767, 7
        %v5800 = vrot.slane %v5768, 7
        %v5801 = vrot.slane %v5769, 7
        %v5802 = vrot.slane %v5770, 7
        %v5803 = vrot.slane %v5771, 7
        %v5804 = vrot.slane %v5772, 7
        %v5805 = vrot.slane %v5773, 7
        %v5806 = vrot.slane %v5774, 7
        %v5807 = vrot.slane %v5775, 7
        %v5808 = vrot.slane %v5776, 7
        %v5809 = vrot.slane %v5777, 7
        %v5810 = vrot.slane %v5778, 7
        %v5811 = vrot.slane %v5779, 7
        %v5812 = vrot.slane %v5780, 7
        %v5813 = vrot.slane %v5781, 7
        %v5814 = vrot.slane %v5782, 7
        %v5815 = vsel %vm1359, %v5813, %v5814
        %v5816 = vsel %vm1359, %v5812, %v5813
        %v5817 = vsel %vm1359, %v5811, %v5812
        %v5818 = vsel %vm1359, %v5810, %v5811
        %v5819 = vsel %vm1359, %v5809, %v5810
        %v5820 = vsel %vm1359, %v5808, %v5809
        %v5821 = vsel %vm1359, %v5807, %v5808
        %v5822 = vsel %vm1359, %v5806, %v5807
        %v5823 = vsel %vm1359, %v5805, %v5806
        %v5824 = vsel %vm1359, %v5804, %v5805
        %v5825 = vsel %vm1359, %v5803, %v5804
        %v5826 = vsel %vm1359, %v5802, %v5803
        %v5827 = vsel %vm1359, %v5801, %v5802
        %v5828 = vsel %vm1359, %v5800, %v5801
        %v5829 = vsel %vm1359, %v5799, %v5800
        %v5830 = vsel %vm1359, %v5798, %v5799
        %v5831 = vsel %vm1359, %v5797, %v5798
        %v5832 = vsel %vm1359, %v5796, %v5797
        %v5833 = vsel %vm1359, %v5795, %v5796
        %v5834 = vsel %vm1359, %v5794, %v5795
        %v5835 = vsel %vm1359, %v5793, %v5794
        %v5836 = vsel %vm1359, %v5792, %v5793
        %v5837 = vsel %vm1359, %v5791, %v5792
        %v5838 = vsel %vm1359, %v5790, %v5791
        %v5839 = vsel %vm1359, %v5789, %v5790
        %v5840 = vsel %vm1359, %v5788, %v5789
        %v5841 = vsel %vm1359, %v5787, %v5788
        %v5842 = vsel %vm1359, %v5786, %v5787
        %v5843 = vsel %vm1359, %v5785, %v5786
        %v5844 = vsel %vm1359, %v5784, %v5785
        %v5845 = vsel %vm1359, %v5783, %v5784
        %v5846 = vsel %vm1359, %v5814, %v5783
        %v5847 = vsel %vm753, %v5846, 0.0
        %v5848 = vsel %vm754, %v5845, 0.0
        %v5849 = vsel %vm755, %v5844, 0.0
        %v5850 = vsel %vm756, %v5843, 0.0
        %v5851 = vsel %vm757, %v5842, 0.0
        %v5852 = vsel %vm758, %v5841, 0.0
        %v5853 = vsel %vm759, %v5840, 0.0
        %v5854 = vsel %vm760, %v5839, 0.0
        %v5855 = vsel %vm761, %v5838, 0.0
        %v5856 = vsel %vm762, %v5837, 0.0
        %v5857 = vsel %vm763, %v5836, 0.0
        %v5858 = vsel %vm764, %v5835, 0.0
        %v5859 = vsel %vm765, %v5834, 0.0
        %v5860 = vsel %vm766, %v5833, 0.0
        %v5861 = vsel %vm767, %v5832, 0.0
        %v5862 = vsel %vm768, %v5831, 0.0
        %v5863 = vsel %vm769, %v5830, 0.0
        %v5864 = vsel %vm770, %v5829, 0.0
        %v5865 = vsel %vm771, %v5828, 0.0
        %v5866 = vsel %vm772, %v5827, 0.0
        %v5867 = vsel %vm773, %v5826, 0.0
        %v5868 = vsel %vm774, %v5825, 0.0
        %v5869 = vsel %vm775, %v5824, 0.0
        %v5870 = vsel %vm776, %v5823, 0.0
        %v5871 = vsel %vm777, %v5822, 0.0
        %v5872 = vsel %vm778, %v5821, 0.0
        %v5873 = vsel %vm779, %v5820, 0.0
        %v5874 = vsel %vm780, %v5819, 0.0
        %v5875 = vsel %vm781, %v5818, 0.0
        %v5876 = vsel %vm782, %v5817, 0.0
        %v5877 = vsel %vm783, %v5816, 0.0
        %v5878 = vsel %vm784, %v5815, 0.0
        %v5879 = vrot.slane %v5751, 1
        %v5880 = vrot.slane %v5752, 1
        %v5881 = vrot.slane %v5753, 1
        %v5882 = vrot.slane %v5754, 1
        %v5883 = vrot.slane %v5755, 1
        %v5884 = vrot.slane %v5756, 1
        %v5885 = vrot.slane %v5757, 1
        %v5886 = vrot.slane %v5758, 1
        %v5887 = vrot.slane %v5759, 1
        %v5888 = vrot.slane %v5760, 1
        %v5889 = vrot.slane %v5761, 1
        %v5890 = vrot.slane %v5762, 1
        %v5891 = vrot.slane %v5763, 1
        %v5892 = vrot.slane %v5764, 1
        %v5893 = vrot.slane %v5765, 1
        %v5894 = vrot.slane %v5766, 1
        %v5895 = vrot.slane %v5767, 1
        %v5896 = vrot.slane %v5768, 1
        %v5897 = vrot.slane %v5769, 1
        %v5898 = vrot.slane %v5770, 1
        %v5899 = vrot.slane %v5771, 1
        %v5900 = vrot.slane %v5772, 1
        %v5901 = vrot.slane %v5773, 1
        %v5902 = vrot.slane %v5774, 1
        %v5903 = vrot.slane %v5775, 1
        %v5904 = vrot.slane %v5776, 1
        %v5905 = vrot.slane %v5777, 1
        %v5906 = vrot.slane %v5778, 1
        %v5907 = vrot.slane %v5779, 1
        %v5908 = vrot.slane %v5780, 1
        %v5909 = vrot.slane %v5781, 1
        %v5910 = vrot.slane %v5782, 1
        %v5911 = vsel %vm1456, %v5909, %v5910
        %v5912 = vsel %vm1456, %v5908, %v5909
        %v5913 = vsel %vm1456, %v5907, %v5908
        %v5914 = vsel %vm1456, %v5906, %v5907
        %v5915 = vsel %vm1456, %v5905, %v5906
        %v5916 = vsel %vm1456, %v5904, %v5905
        %v5917 = vsel %vm1456, %v5903, %v5904
        %v5918 = vsel %vm1456, %v5902, %v5903
        %v5919 = vsel %vm1456, %v5901, %v5902
        %v5920 = vsel %vm1456, %v5900, %v5901
        %v5921 = vsel %vm1456, %v5899, %v5900
        %v5922 = vsel %vm1456, %v5898, %v5899
        %v5923 = vsel %vm1456, %v5897, %v5898
        %v5924 = vsel %vm1456, %v5896, %v5897
        %v5925 = vsel %vm1456, %v5895, %v5896
        %v5926 = vsel %vm1456, %v5894, %v5895
        %v5927 = vsel %vm1456, %v5893, %v5894
        %v5928 = vsel %vm1456, %v5892, %v5893
        %v5929 = vsel %vm1456, %v5891, %v5892
        %v5930 = vsel %vm1456, %v5890, %v5891
        %v5931 = vsel %vm1456, %v5889, %v5890
        %v5932 = vsel %vm1456, %v5888, %v5889
        %v5933 = vsel %vm1456, %v5887, %v5888
        %v5934 = vsel %vm1456, %v5886, %v5887
        %v5935 = vsel %vm1456, %v5885, %v5886
        %v5936 = vsel %vm1456, %v5884, %v5885
        %v5937 = vsel %vm1456, %v5883, %v5884
        %v5938 = vsel %vm1456, %v5882, %v5883
        %v5939 = vsel %vm1456, %v5881, %v5882
        %v5940 = vsel %vm1456, %v5880, %v5881
        %v5941 = vsel %vm1456, %v5879, %v5880
        %v5942 = vsel %vm1456, %v5910, %v5879
        %v5943 = vsel %vm785, %v5941, 0.0
        %v5944 = vsel %vm786, %v5940, 0.0
        %v5945 = vsel %vm787, %v5939, 0.0
        %v5946 = vsel %vm788, %v5938, 0.0
        %v5947 = vsel %vm789, %v5937, 0.0
        %v5948 = vsel %vm790, %v5936, 0.0
        %v5949 = vsel %vm791, %v5935, 0.0
        %v5950 = vsel %vm792, %v5934, 0.0
        %v5951 = vsel %vm793, %v5933, 0.0
        %v5952 = vsel %vm794, %v5932, 0.0
        %v5953 = vsel %vm795, %v5931, 0.0
        %v5954 = vsel %vm796, %v5930, 0.0
        %v5955 = vsel %vm797, %v5929, 0.0
        %v5956 = vsel %vm798, %v5928, 0.0
        %v5957 = vsel %vm799, %v5927, 0.0
        %v5958 = vsel %vm800, %v5926, 0.0
        %v5959 = vsel %vm801, %v5925, 0.0
        %v5960 = vsel %vm802, %v5924, 0.0
        %v5961 = vsel %vm803, %v5923, 0.0
        %v5962 = vsel %vm804, %v5922, 0.0
        %v5963 = vsel %vm805, %v5921, 0.0
        %v5964 = vsel %vm806, %v5920, 0.0
        %v5965 = vsel %vm807, %v5919, 0.0
        %v5966 = vsel %vm808, %v5918, 0.0
        %v5967 = vsel %vm809, %v5917, 0.0
        %v5968 = vsel %vm810, %v5916, 0.0
        %v5969 = vsel %vm811, %v5915, 0.0
        %v5970 = vsel %vm812, %v5914, 0.0
        %v5971 = vsel %vm813, %v5913, 0.0
        %v5972 = vsel %vm814, %v5912, 0.0
        %v5973 = vsel %vm815, %v5911, 0.0
        %v5974 = vsel %vm816, %v5942, 0.0
        %v5975 = vpack.c.bf16 %v5847, %v5847
        %v5976 = vpack.c.bf16 %v5848, %v5848
        %v5977 = vpack.c.bf16 %v5849, %v5849
        %v5978 = vpack.c.bf16 %v5850, %v5850
        %v5979 = vpack.c.bf16 %v5851, %v5851
        %v5980 = vpack.c.bf16 %v5852, %v5852
        %v5981 = vpack.c.bf16 %v5853, %v5853
        %v5982 = vpack.c.bf16 %v5854, %v5854
        %v5983 = vpack.c.bf16 %v5855, %v5855
        %v5984 = vpack.c.bf16 %v5856, %v5856
        %v5985 = vpack.c.bf16 %v5857, %v5857
        %v5986 = vpack.c.bf16 %v5858, %v5858
        %v5987 = vpack.c.bf16 %v5859, %v5859
        %v5988 = vpack.c.bf16 %v5860, %v5860
        %v5989 = vpack.c.bf16 %v5861, %v5861
        %v5990 = vpack.c.bf16 %v5862, %v5862
        %v5991 = vpack.c.bf16 %v5863, %v5863
        %v5992 = vpack.c.bf16 %v5864, %v5864
        %v5993 = vpack.c.bf16 %v5865, %v5865
        %v5994 = vpack.c.bf16 %v5866, %v5866
        %v5995 = vpack.c.bf16 %v5867, %v5867
        %v5996 = vpack.c.bf16 %v5868, %v5868
        %v5997 = vpack.c.bf16 %v5869, %v5869
        %v5998 = vpack.c.bf16 %v5870, %v5870
        %v5999 = vpack.c.bf16 %v5871, %v5871
        %v6000 = vpack.c.bf16 %v5872, %v5872
        %v6001 = vpack.c.bf16 %v5873, %v5873
        %v6002 = vpack.c.bf16 %v5874, %v5874
        %v6003 = vpack.c.bf16 %v5875, %v5875
        %v6004 = vpack.c.bf16 %v5876, %v5876
        %v6005 = vpack.c.bf16 %v5877, %v5877
        %v6006 = vpack.c.bf16 %v5878, %v5878
        %6007 = vst [vmem:[#allocation3 + $0x18] sm:$0xf] %v5975
        %6008 = vst [vmem:[#allocation3 + $0x3c] sm:$0xf] %v5976
        %6009 = vst [vmem:[#allocation3 + $0x60] sm:$0xf] %v5977
        %6010 = vst [vmem:[#allocation3 + $0x84] sm:$0xf] %v5978
        %6011 = vst [vmem:[#allocation3 + $0xa8] sm:$0xf] %v5979
        %6012 = vst [vmem:[#allocation3 + $0xcc] sm:$0xf] %v5980
        %6013 = vst [vmem:[#allocation3 + $0xf0] sm:$0xf] %v5981
        %6014 = vst [vmem:[#allocation3 + $0x114] sm:$0xf] %v5982
        %6015 = vst [vmem:[#allocation3 + $0x138] sm:$0xf] %v5983
        %6016 = vst [vmem:[#allocation3 + $0x15c] sm:$0xf] %v5984
        %6017 = vst [vmem:[#allocation3 + $0x180] sm:$0xf] %v5985
        %6018 = vst [vmem:[#allocation3 + $0x1a4] sm:$0xf] %v5986
        %6019 = vst [vmem:[#allocation3 + $0x1c8] sm:$0xf] %v5987
        %6020 = vst [vmem:[#allocation3 + $0x1ec] sm:$0xf] %v5988
        %6021 = vst [vmem:[#allocation3 + $0x210] sm:$0xf] %v5989
        %6022 = vst [vmem:[#allocation3 + $0x234] sm:$0xf] %v5990
        %6023 = vst [vmem:[#allocation3 + $0x258] sm:$0xf] %v5991
        %6024 = vst [vmem:[#allocation3 + $0x27c] sm:$0xf] %v5992
        %6025 = vst [vmem:[#allocation3 + $0x2a0] sm:$0xf] %v5993
        %6026 = vst [vmem:[#allocation3 + $0x2c4] sm:$0xf] %v5994
        %6027 = vst [vmem:[#allocation3 + $0x2e8] sm:$0xf] %v5995
        %6028 = vst [vmem:[#allocation3 + $0x30c] sm:$0xf] %v5996
        %6029 = vst [vmem:[#allocation3 + $0x330] sm:$0xf] %v5997
        %6030 = vst [vmem:[#allocation3 + $0x354] sm:$0xf] %v5998
        %6031 = vst [vmem:[#allocation3 + $0x378] sm:$0xf] %v5999
        %6032 = vst [vmem:[#allocation3 + $0x39c] sm:$0xf] %v6000
        %6033 = vst [vmem:[#allocation3 + $0x3c0] sm:$0xf] %v6001
        %6034 = vst [vmem:[#allocation3 + $0x3e4] sm:$0xf] %v6002
        %6035 = vst [vmem:[#allocation3 + $0x408] sm:$0xf] %v6003
        %6036 = vst [vmem:[#allocation3 + $0x42c] sm:$0xf] %v6004
        %6037 = vst [vmem:[#allocation3 + $0x450] sm:$0xf] %v6005
        %6038 = vst [vmem:[#allocation3 + $0x474] sm:$0xf] %v6006
        %v6039 = vpack.c.bf16 %v5943, %v5943
        %v6040 = vpack.c.bf16 %v5944, %v5944
        %v6041 = vpack.c.bf16 %v5945, %v5945
        %v6042 = vpack.c.bf16 %v5946, %v5946
        %v6043 = vpack.c.bf16 %v5947, %v5947
        %v6044 = vpack.c.bf16 %v5948, %v5948
        %v6045 = vpack.c.bf16 %v5949, %v5949
        %v6046 = vpack.c.bf16 %v5950, %v5950
        %v6047 = vpack.c.bf16 %v5951, %v5951
        %v6048 = vpack.c.bf16 %v5952, %v5952
        %v6049 = vpack.c.bf16 %v5953, %v5953
        %v6050 = vpack.c.bf16 %v5954, %v5954
        %v6051 = vpack.c.bf16 %v5955, %v5955
        %v6052 = vpack.c.bf16 %v5956, %v5956
        %v6053 = vpack.c.bf16 %v5957, %v5957
        %v6054 = vpack.c.bf16 %v5958, %v5958
        %v6055 = vpack.c.bf16 %v5959, %v5959
        %v6056 = vpack.c.bf16 %v5960, %v5960
        %v6057 = vpack.c.bf16 %v5961, %v5961
        %v6058 = vpack.c.bf16 %v5962, %v5962
        %v6059 = vpack.c.bf16 %v5963, %v5963
        %v6060 = vpack.c.bf16 %v5964, %v5964
        %v6061 = vpack.c.bf16 %v5965, %v5965
        %v6062 = vpack.c.bf16 %v5966, %v5966
        %v6063 = vpack.c.bf16 %v5967, %v5967
        %v6064 = vpack.c.bf16 %v5968, %v5968
        %v6065 = vpack.c.bf16 %v5969, %v5969
        %v6066 = vpack.c.bf16 %v5970, %v5970
        %v6067 = vpack.c.bf16 %v5971, %v5971
        %v6068 = vpack.c.bf16 %v5972, %v5972
        %v6069 = vpack.c.bf16 %v5973, %v5973
        %v6070 = vpack.c.bf16 %v5974, %v5974
        %6071 = vst [vmem:[#allocation3 + $0x20] sm:$0xf] %v6039
        %6072 = vst [vmem:[#allocation3 + $0x44] sm:$0xf] %v6040
        %6073 = vst [vmem:[#allocation3 + $0x68] sm:$0xf] %v6041
        %6074 = vst [vmem:[#allocation3 + $0x8c] sm:$0xf] %v6042
        %6075 = vst [vmem:[#allocation3 + $0xb0] sm:$0xf] %v6043
        %6076 = vst [vmem:[#allocation3 + $0xd4] sm:$0xf] %v6044
        %6077 = vst [vmem:[#allocation3 + $0xf8] sm:$0xf] %v6045
        %6078 = vst [vmem:[#allocation3 + $0x11c] sm:$0xf] %v6046
        %6079 = vst [vmem:[#allocation3 + $0x140] sm:$0xf] %v6047
        %6080 = vst [vmem:[#allocation3 + $0x164] sm:$0xf] %v6048
        %6081 = vst [vmem:[#allocation3 + $0x188] sm:$0xf] %v6049
        %6082 = vst [vmem:[#allocation3 + $0x1ac] sm:$0xf] %v6050
        %6083 = vst [vmem:[#allocation3 + $0x1d0] sm:$0xf] %v6051
        %6084 = vst [vmem:[#allocation3 + $0x1f4] sm:$0xf] %v6052
        %6085 = vst [vmem:[#allocation3 + $0x218] sm:$0xf] %v6053
        %6086 = vst [vmem:[#allocation3 + $0x23c] sm:$0xf] %v6054
        %6087 = vst [vmem:[#allocation3 + $0x260] sm:$0xf] %v6055
        %6088 = vst [vmem:[#allocation3 + $0x284] sm:$0xf] %v6056
        %6089 = vst [vmem:[#allocation3 + $0x2a8] sm:$0xf] %v6057
        %6090 = vst [vmem:[#allocation3 + $0x2cc] sm:$0xf] %v6058
        %6091 = vst [vmem:[#allocation3 + $0x2f0] sm:$0xf] %v6059
        %6092 = vst [vmem:[#allocation3 + $0x314] sm:$0xf] %v6060
        %6093 = vst [vmem:[#allocation3 + $0x338] sm:$0xf] %v6061
        %6094 = vst [vmem:[#allocation3 + $0x35c] sm:$0xf] %v6062
        %6095 = vst [vmem:[#allocation3 + $0x380] sm:$0xf] %v6063
        %6096 = vst [vmem:[#allocation3 + $0x3a4] sm:$0xf] %v6064
        %6097 = vst [vmem:[#allocation3 + $0x3c8] sm:$0xf] %v6065
        %6098 = vst [vmem:[#allocation3 + $0x3ec] sm:$0xf] %v6066
        %6099 = vst [vmem:[#allocation3 + $0x410] sm:$0xf] %v6067
        %6100 = vst [vmem:[#allocation3 + $0x434] sm:$0xf] %v6068
        %6101 = vst [vmem:[#allocation3 + $0x458] sm:$0xf] %v6069
        %6102 = vst [vmem:[#allocation3 + $0x47c] sm:$0xf] %v6070
        %v6103 = vld [vmem:[#allocation3] sm:$0xff]
        %v6104 = vld [vmem:[#allocation3 + $0x8] sm:$0xff]
        %v6105 = vld [vmem:[#allocation3 + $0x10] sm:$0xff]
        %v6106 = vld [vmem:[#allocation3 + $0x18] sm:$0xff]
        %v6107 = vld [vmem:[#allocation3 + $0x20] sm:$0xf]
        %v6108 = vld [vmem:[#allocation3 + $0x24] sm:$0xff]
        %v6109 = vld [vmem:[#allocation3 + $0x2c] sm:$0xff]
        %v6110 = vld [vmem:[#allocation3 + $0x34] sm:$0xff]
        %v6111 = vld [vmem:[#allocation3 + $0x3c] sm:$0xff]
        %v6112 = vld [vmem:[#allocation3 + $0x44] sm:$0xf]
        %v6113 = vld [vmem:[#allocation3 + $0x48] sm:$0xff]
        %v6114 = vld [vmem:[#allocation3 + $0x50] sm:$0xff]
        %v6115 = vld [vmem:[#allocation3 + $0x58] sm:$0xff]
        %v6116 = vld [vmem:[#allocation3 + $0x60] sm:$0xff]
        %v6117 = vld [vmem:[#allocation3 + $0x68] sm:$0xf]
        %v6118 = vld [vmem:[#allocation3 + $0x6c] sm:$0xff]
        %v6119 = vld [vmem:[#allocation3 + $0x74] sm:$0xff]
        %v6120 = vld [vmem:[#allocation3 + $0x7c] sm:$0xff]
        %v6121 = vld [vmem:[#allocation3 + $0x84] sm:$0xff]
        %v6122 = vld [vmem:[#allocation3 + $0x8c] sm:$0xf]
        %v6123 = vld [vmem:[#allocation3 + $0x90] sm:$0xff]
        %v6124 = vld [vmem:[#allocation3 + $0x98] sm:$0xff]
        %v6125 = vld [vmem:[#allocation3 + $0xa0] sm:$0xff]
        %v6126 = vld [vmem:[#allocation3 + $0xa8] sm:$0xff]
        %v6127 = vld [vmem:[#allocation3 + $0xb0] sm:$0xf]
        %v6128 = vld [vmem:[#allocation3 + $0xb4] sm:$0xff]
        %v6129 = vld [vmem:[#allocation3 + $0xbc] sm:$0xff]
        %v6130 = vld [vmem:[#allocation3 + $0xc4] sm:$0xff]
        %v6131 = vld [vmem:[#allocation3 + $0xcc] sm:$0xff]
        %v6132 = vld [vmem:[#allocation3 + $0xd4] sm:$0xf]
        %v6133 = vld [vmem:[#allocation3 + $0xd8] sm:$0xff]
        %v6134 = vld [vmem:[#allocation3 + $0xe0] sm:$0xff]
        %v6135 = vld [vmem:[#allocation3 + $0xe8] sm:$0xff]
        %v6136 = vld [vmem:[#allocation3 + $0xf0] sm:$0xff]
        %v6137 = vld [vmem:[#allocation3 + $0xf8] sm:$0xf]
        %v6138 = vld [vmem:[#allocation3 + $0xfc] sm:$0xff]
        %v6139 = vld [vmem:[#allocation3 + $0x104] sm:$0xff]
        %v6140 = vld [vmem:[#allocation3 + $0x10c] sm:$0xff]
        %v6141 = vld [vmem:[#allocation3 + $0x114] sm:$0xff]
        %v6142 = vld [vmem:[#allocation3 + $0x11c] sm:$0xf]
        %v6143 = vld [vmem:[#allocation3 + $0x120] sm:$0xff]
        %v6144 = vld [vmem:[#allocation3 + $0x128] sm:$0xff]
        %v6145 = vld [vmem:[#allocation3 + $0x130] sm:$0xff]
        %v6146 = vld [vmem:[#allocation3 + $0x138] sm:$0xff]
        %v6147 = vld [vmem:[#allocation3 + $0x140] sm:$0xf]
        %v6148 = vld [vmem:[#allocation3 + $0x144] sm:$0xff]
        %v6149 = vld [vmem:[#allocation3 + $0x14c] sm:$0xff]
        %v6150 = vld [vmem:[#allocation3 + $0x154] sm:$0xff]
        %v6151 = vld [vmem:[#allocation3 + $0x15c] sm:$0xff]
        %v6152 = vld [vmem:[#allocation3 + $0x164] sm:$0xf]
        %v6153 = vld [vmem:[#allocation3 + $0x168] sm:$0xff]
        %v6154 = vld [vmem:[#allocation3 + $0x170] sm:$0xff]
        %v6155 = vld [vmem:[#allocation3 + $0x178] sm:$0xff]
        %v6156 = vld [vmem:[#allocation3 + $0x180] sm:$0xff]
        %v6157 = vld [vmem:[#allocation3 + $0x188] sm:$0xf]
        %v6158 = vld [vmem:[#allocation3 + $0x18c] sm:$0xff]
        %v6159 = vld [vmem:[#allocation3 + $0x194] sm:$0xff]
        %v6160 = vld [vmem:[#allocation3 + $0x19c] sm:$0xff]
        %v6161 = vld [vmem:[#allocation3 + $0x1a4] sm:$0xff]
        %v6162 = vld [vmem:[#allocation3 + $0x1ac] sm:$0xf]
        %v6163 = vld [vmem:[#allocation3 + $0x1b0] sm:$0xff]
        %v6164 = vld [vmem:[#allocation3 + $0x1b8] sm:$0xff]
        %v6165 = vld [vmem:[#allocation3 + $0x1c0] sm:$0xff]
        %v6166 = vld [vmem:[#allocation3 + $0x1c8] sm:$0xff]
        %v6167 = vld [vmem:[#allocation3 + $0x1d0] sm:$0xf]
        %v6168 = vld [vmem:[#allocation3 + $0x1d4] sm:$0xff]
        %v6169 = vld [vmem:[#allocation3 + $0x1dc] sm:$0xff]
        %v6170 = vld [vmem:[#allocation3 + $0x1e4] sm:$0xff]
        %v6171 = vld [vmem:[#allocation3 + $0x1ec] sm:$0xff]
        %v6172 = vld [vmem:[#allocation3 + $0x1f4] sm:$0xf]
        %v6173 = vld [vmem:[#allocation3 + $0x1f8] sm:$0xff]
        %v6174 = vld [vmem:[#allocation3 + $0x200] sm:$0xff]
        %v6175 = vld [vmem:[#allocation3 + $0x208] sm:$0xff]
        %v6176 = vld [vmem:[#allocation3 + $0x210] sm:$0xff]
        %v6177 = vld [vmem:[#allocation3 + $0x218] sm:$0xf]
        %v6178 = vld [vmem:[#allocation3 + $0x21c] sm:$0xff]
        %v6179 = vld [vmem:[#allocation3 + $0x224] sm:$0xff]
        %v6180 = vld [vmem:[#allocation3 + $0x22c] sm:$0xff]
        %v6181 = vld [vmem:[#allocation3 + $0x234] sm:$0xff]
        %v6182 = vld [vmem:[#allocation3 + $0x23c] sm:$0xf]
        %v6183 = vld [vmem:[#allocation3 + $0x240] sm:$0xff]
        %v6184 = vld [vmem:[#allocation3 + $0x248] sm:$0xff]
        %v6185 = vld [vmem:[#allocation3 + $0x250] sm:$0xff]
        %v6186 = vld [vmem:[#allocation3 + $0x258] sm:$0xff]
        %v6187 = vld [vmem:[#allocation3 + $0x260] sm:$0xf]
        %v6188 = vld [vmem:[#allocation3 + $0x264] sm:$0xff]
        %v6189 = vld [vmem:[#allocation3 + $0x26c] sm:$0xff]
        %v6190 = vld [vmem:[#allocation3 + $0x274] sm:$0xff]
        %v6191 = vld [vmem:[#allocation3 + $0x27c] sm:$0xff]
        %v6192 = vld [vmem:[#allocation3 + $0x284] sm:$0xf]
        %v6193 = vld [vmem:[#allocation3 + $0x288] sm:$0xff]
        %v6194 = vld [vmem:[#allocation3 + $0x290] sm:$0xff]
        %v6195 = vld [vmem:[#allocation3 + $0x298] sm:$0xff]
        %v6196 = vld [vmem:[#allocation3 + $0x2a0] sm:$0xff]
        %v6197 = vld [vmem:[#allocation3 + $0x2a8] sm:$0xf]
        %v6198 = vld [vmem:[#allocation3 + $0x2ac] sm:$0xff]
        %v6199 = vld [vmem:[#allocation3 + $0x2b4] sm:$0xff]
        %v6200 = vld [vmem:[#allocation3 + $0x2bc] sm:$0xff]
        %v6201 = vld [vmem:[#allocation3 + $0x2c4] sm:$0xff]
        %v6202 = vld [vmem:[#allocation3 + $0x2cc] sm:$0xf]
        %v6203 = vld [vmem:[#allocation3 + $0x2d0] sm:$0xff]
        %v6204 = vld [vmem:[#allocation3 + $0x2d8] sm:$0xff]
        %v6205 = vld [vmem:[#allocation3 + $0x2e0] sm:$0xff]
        %v6206 = vld [vmem:[#allocation3 + $0x2e8] sm:$0xff]
        %v6207 = vld [vmem:[#allocation3 + $0x2f0] sm:$0xf]
        %v6208 = vld [vmem:[#allocation3 + $0x2f4] sm:$0xff]
        %v6209 = vld [vmem:[#allocation3 + $0x2fc] sm:$0xff]
        %v6210 = vld [vmem:[#allocation3 + $0x304] sm:$0xff]
        %v6211 = vld [vmem:[#allocation3 + $0x30c] sm:$0xff]
        %v6212 = vld [vmem:[#allocation3 + $0x314] sm:$0xf]
        %v6213 = vld [vmem:[#allocation3 + $0x318] sm:$0xff]
        %v6214 = vld [vmem:[#allocation3 + $0x320] sm:$0xff]
        %v6215 = vld [vmem:[#allocation3 + $0x328] sm:$0xff]
        %v6216 = vld [vmem:[#allocation3 + $0x330] sm:$0xff]
        %v6217 = vld [vmem:[#allocation3 + $0x338] sm:$0xf]
        %v6218 = vld [vmem:[#allocation3 + $0x33c] sm:$0xff]
        %v6219 = vld [vmem:[#allocation3 + $0x344] sm:$0xff]
        %v6220 = vld [vmem:[#allocation3 + $0x34c] sm:$0xff]
        %v6221 = vld [vmem:[#allocation3 + $0x354] sm:$0xff]
        %v6222 = vld [vmem:[#allocation3 + $0x35c] sm:$0xf]
        %v6223 = vld [vmem:[#allocation3 + $0x360] sm:$0xff]
        %v6224 = vld [vmem:[#allocation3 + $0x368] sm:$0xff]
        %v6225 = vld [vmem:[#allocation3 + $0x370] sm:$0xff]
        %v6226 = vld [vmem:[#allocation3 + $0x378] sm:$0xff]
        %v6227 = vld [vmem:[#allocation3 + $0x380] sm:$0xf]
        %v6228 = vld [vmem:[#allocation3 + $0x384] sm:$0xff]
        %v6229 = vld [vmem:[#allocation3 + $0x38c] sm:$0xff]
        %v6230 = vld [vmem:[#allocation3 + $0x394] sm:$0xff]
        %v6231 = vld [vmem:[#allocation3 + $0x39c] sm:$0xff]
        %v6232 = vld [vmem:[#allocation3 + $0x3a4] sm:$0xf]
        %v6233 = vld [vmem:[#allocation3 + $0x3a8] sm:$0xff]
        %v6234 = vld [vmem:[#allocation3 + $0x3b0] sm:$0xff]
        %v6235 = vld [vmem:[#allocation3 + $0x3b8] sm:$0xff]
        %v6236 = vld [vmem:[#allocation3 + $0x3c0] sm:$0xff]
        %v6237 = vld [vmem:[#allocation3 + $0x3c8] sm:$0xf]
        %v6238 = vld [vmem:[#allocation3 + $0x3cc] sm:$0xff]
        %v6239 = vld [vmem:[#allocation3 + $0x3d4] sm:$0xff]
        %v6240 = vld [vmem:[#allocation3 + $0x3dc] sm:$0xff]
        %v6241 = vld [vmem:[#allocation3 + $0x3e4] sm:$0xff]
        %v6242 = vld [vmem:[#allocation3 + $0x3ec] sm:$0xf]
        %v6243 = vld [vmem:[#allocation3 + $0x3f0] sm:$0xff]
        %v6244 = vld [vmem:[#allocation3 + $0x3f8] sm:$0xff]
        %v6245 = vld [vmem:[#allocation3 + $0x400] sm:$0xff]
        %v6246 = vld [vmem:[#allocation3 + $0x408] sm:$0xff]
        %v6247 = vld [vmem:[#allocation3 + $0x410] sm:$0xf]
        %v6248 = vld [vmem:[#allocation3 + $0x414] sm:$0xff]
        %v6249 = vld [vmem:[#allocation3 + $0x41c] sm:$0xff]
        %v6250 = vld [vmem:[#allocation3 + $0x424] sm:$0xff]
        %v6251 = vld [vmem:[#allocation3 + $0x42c] sm:$0xff]
        %v6252 = vld [vmem:[#allocation3 + $0x434] sm:$0xf]
        %v6253 = vld [vmem:[#allocation3 + $0x438] sm:$0xff]
        %v6254 = vld [vmem:[#allocation3 + $0x440] sm:$0xff]
        %v6255 = vld [vmem:[#allocation3 + $0x448] sm:$0xff]
        %v6256 = vld [vmem:[#allocation3 + $0x450] sm:$0xff]
        %v6257 = vld [vmem:[#allocation3 + $0x458] sm:$0xf]
        %v6258 = vld [vmem:[#allocation3 + $0x45c] sm:$0xff]
        %v6259 = vld [vmem:[#allocation3 + $0x464] sm:$0xff]
        %v6260 = vld [vmem:[#allocation3 + $0x46c] sm:$0xff]
        %v6261 = vld [vmem:[#allocation3 + $0x474] sm:$0xff]
        %v6262 = vld [vmem:[#allocation3 + $0x47c] sm:$0xf]
        %v6263 = vld [vmem:[%s5] sm:$0xf]
        %v6264 = vld [vmem:[%s5 + $0x4] sm:$0xf]
        %v6265 = vld [vmem:[%s5 + $0x8] sm:$0xf]
        %v6266 = vld [vmem:[%s5 + $0xc] sm:$0xf]
        %v6267 = vld [vmem:[%s5 + $0x10] sm:$0xf]
        %v6268 = vld [vmem:[%s5 + $0x14] sm:$0xf]
        %v6269 = vld [vmem:[%s5 + $0x18] sm:$0xf]
        %v6270 = vld [vmem:[%s5 + $0x1c] sm:$0xf]
        %v6271 = vld [vmem:[%s5 + $0x20] sm:$0xf]
        %v6272 = vld [vmem:[%s5 + $0x24] sm:$0xf]
        %v6273 = vld [vmem:[%s5 + $0x28] sm:$0xf]
        %v6274 = vld [vmem:[%s5 + $0x2c] sm:$0xf]
        %v6275 = vld [vmem:[%s5 + $0x30] sm:$0xf]
        %v6276 = vld [vmem:[%s5 + $0x34] sm:$0xf]
        %v6277 = vld [vmem:[%s5 + $0x38] sm:$0xf]
        %v6278 = vld [vmem:[%s5 + $0x3c] sm:$0xf]
        %v6279 = vld [vmem:[%s5 + $0x40] sm:$0xf]
        %v6280 = vld [vmem:[%s5 + $0x44] sm:$0xf]
        %v6281 = vld [vmem:[%s5 + $0x48] sm:$0xf]
        %v6282 = vld [vmem:[%s5 + $0x4c] sm:$0xf]
        %v6283 = vld [vmem:[%s5 + $0x50] sm:$0xf]
        %v6284 = vld [vmem:[%s5 + $0x54] sm:$0xf]
        %v6285 = vld [vmem:[%s5 + $0x58] sm:$0xf]
        %v6286 = vld [vmem:[%s5 + $0x5c] sm:$0xf]
        %v6287 = vld [vmem:[%s5 + $0x60] sm:$0xf]
        %v6288 = vld [vmem:[%s5 + $0x64] sm:$0xf]
        %v6289 = vld [vmem:[%s5 + $0x68] sm:$0xf]
        %v6290 = vld [vmem:[%s5 + $0x6c] sm:$0xf]
        %v6291 = vld [vmem:[%s5 + $0x70] sm:$0xf]
        %v6292 = vld [vmem:[%s5 + $0x74] sm:$0xf]
        %v6293 = vld [vmem:[%s5 + $0x78] sm:$0xf]
        %v6294 = vld [vmem:[%s5 + $0x7c] sm:$0xf]
        %v6295 = vld [vmem:[%s5 + $0x80] sm:$0xf]
        %v6296 = vld [vmem:[%s5 + $0x84] sm:$0xf]
        %v6297 = vld [vmem:[%s5 + $0x88] sm:$0xf]
        %v6298 = vld [vmem:[%s5 + $0x8c] sm:$0xf]
        %v6299 = vld [vmem:[%s5 + $0x90] sm:$0xf]
        %v6300 = vld [vmem:[%s5 + $0x94] sm:$0xf]
        %v6301 = vld [vmem:[%s5 + $0x98] sm:$0xf]
        %v6302 = vld [vmem:[%s5 + $0x9c] sm:$0xf]
        %v6303 = vld [vmem:[%s5 + $0xa0] sm:$0xf]
        %v6304 = vld [vmem:[%s5 + $0xa4] sm:$0xf]
        %v6305 = vld [vmem:[%s5 + $0xa8] sm:$0xf]
        %v6306 = vld [vmem:[%s5 + $0xac] sm:$0xf]
        %v6307 = vld [vmem:[%s5 + $0xb0] sm:$0xf]
        %v6308 = vld [vmem:[%s5 + $0xb4] sm:$0xf]
        %v6309 = vld [vmem:[%s5 + $0xb8] sm:$0xf]
        %v6310 = vld [vmem:[%s5 + $0xbc] sm:$0xf]
        %v6311 = vld [vmem:[%s5 + $0xc0] sm:$0xf]
        %v6312 = vld [vmem:[%s5 + $0xc4] sm:$0xf]
        %v6313 = vld [vmem:[%s5 + $0xc8] sm:$0xf]
        %v6314 = vld [vmem:[%s5 + $0xcc] sm:$0xf]
        %v6315 = vld [vmem:[%s5 + $0xd0] sm:$0xf]
        %v6316 = vld [vmem:[%s5 + $0xd4] sm:$0xf]
        %v6317 = vld [vmem:[%s5 + $0xd8] sm:$0xf]
        %v6318 = vld [vmem:[%s5 + $0xdc] sm:$0xf]
        %v6319 = vld [vmem:[%s5 + $0xe0] sm:$0xf]
        %v6320 = vld [vmem:[%s5 + $0xe4] sm:$0xf]
        %v6321 = vld [vmem:[%s5 + $0xe8] sm:$0xf]
        %v6322 = vld [vmem:[%s5 + $0xec] sm:$0xf]
        %v6323 = vld [vmem:[%s5 + $0xf0] sm:$0xf]
        %v6324 = vld [vmem:[%s5 + $0xf4] sm:$0xf]
        %v6325 = vld [vmem:[%s5 + $0xf8] sm:$0xf]
        %v6326 = vld [vmem:[%s5 + $0xfc] sm:$0xf]
        %v6327 = vld [vmem:[%s5 + $0x100] sm:$0xf]
        %v6328 = vld [vmem:[%s5 + $0x104] sm:$0xf]
        %v6329 = vld [vmem:[%s5 + $0x108] sm:$0xf]
        %v6330 = vld [vmem:[%s5 + $0x10c] sm:$0xf]
        %v6331 = vld [vmem:[%s5 + $0x110] sm:$0xf]
        %v6332 = vld [vmem:[%s5 + $0x114] sm:$0xf]
        %v6333 = vld [vmem:[%s5 + $0x118] sm:$0xf]
        %v6334 = vld [vmem:[%s5 + $0x11c] sm:$0xf]
        %v6335 = vld [vmem:[%s5 + $0x120] sm:$0xf]
        %v6336 = vld [vmem:[%s5 + $0x124] sm:$0xf]
        %v6337 = vld [vmem:[%s5 + $0x128] sm:$0xf]
        %v6338 = vld [vmem:[%s5 + $0x12c] sm:$0xf]
        %v6339 = vld [vmem:[%s5 + $0x130] sm:$0xf]
        %v6340 = vld [vmem:[%s5 + $0x134] sm:$0xf]
        %v6341 = vld [vmem:[%s5 + $0x138] sm:$0xf]
        %v6342 = vld [vmem:[%s5 + $0x13c] sm:$0xf]
        %v6343 = vld [vmem:[%s5 + $0x140] sm:$0xf]
        %v6344 = vld [vmem:[%s5 + $0x144] sm:$0xf]
        %v6345 = vld [vmem:[%s5 + $0x148] sm:$0xf]
        %v6346 = vld [vmem:[%s5 + $0x14c] sm:$0xf]
        %v6347 = vld [vmem:[%s5 + $0x150] sm:$0xf]
        %v6348 = vld [vmem:[%s5 + $0x154] sm:$0xf]
        %v6349 = vld [vmem:[%s5 + $0x158] sm:$0xf]
        %v6350 = vld [vmem:[%s5 + $0x15c] sm:$0xf]
        %v6351 = vld [vmem:[%s5 + $0x160] sm:$0xf]
        %v6352 = vld [vmem:[%s5 + $0x164] sm:$0xf]
        %v6353 = vld [vmem:[%s5 + $0x168] sm:$0xf]
        %v6354 = vld [vmem:[%s5 + $0x16c] sm:$0xf]
        %v6355 = vld [vmem:[%s5 + $0x170] sm:$0xf]
        %v6356 = vld [vmem:[%s5 + $0x174] sm:$0xf]
        %v6357 = vld [vmem:[%s5 + $0x178] sm:$0xf]
        %v6358 = vld [vmem:[%s5 + $0x17c] sm:$0xf]
        %v6359 = vld [vmem:[%s5 + $0x180] sm:$0xf]
        %v6360 = vld [vmem:[%s5 + $0x184] sm:$0xf]
        %v6361 = vld [vmem:[%s5 + $0x188] sm:$0xf]
        %v6362 = vld [vmem:[%s5 + $0x18c] sm:$0xf]
        %v6363 = vld [vmem:[%s5 + $0x190] sm:$0xf]
        %v6364 = vld [vmem:[%s5 + $0x194] sm:$0xf]
        %v6365 = vld [vmem:[%s5 + $0x198] sm:$0xf]
        %v6366 = vld [vmem:[%s5 + $0x19c] sm:$0xf]
        %v6367 = vld [vmem:[%s5 + $0x1a0] sm:$0xf]
        %v6368 = vld [vmem:[%s5 + $0x1a4] sm:$0xf]
        %v6369 = vld [vmem:[%s5 + $0x1a8] sm:$0xf]
        %v6370 = vld [vmem:[%s5 + $0x1ac] sm:$0xf]
        %v6371 = vld [vmem:[%s5 + $0x1b0] sm:$0xf]
        %v6372 = vld [vmem:[%s5 + $0x1b4] sm:$0xf]
        %v6373 = vld [vmem:[%s5 + $0x1b8] sm:$0xf]
        %v6374 = vld [vmem:[%s5 + $0x1bc] sm:$0xf]
        %v6375 = vld [vmem:[%s5 + $0x1c0] sm:$0xf]
        %v6376 = vld [vmem:[%s5 + $0x1c4] sm:$0xf]
        %v6377 = vld [vmem:[%s5 + $0x1c8] sm:$0xf]
        %v6378 = vld [vmem:[%s5 + $0x1cc] sm:$0xf]
        %v6379 = vld [vmem:[%s5 + $0x1d0] sm:$0xf]
        %v6380 = vld [vmem:[%s5 + $0x1d4] sm:$0xf]
        %v6381 = vld [vmem:[%s5 + $0x1d8] sm:$0xf]
        %v6382 = vld [vmem:[%s5 + $0x1dc] sm:$0xf]
        %v6383 = vld [vmem:[%s5 + $0x1e0] sm:$0xf]
        %v6384 = vld [vmem:[%s5 + $0x1e4] sm:$0xf]
        %v6385 = vld [vmem:[%s5 + $0x1e8] sm:$0xf]
        %v6386 = vld [vmem:[%s5 + $0x1ec] sm:$0xf]
        %v6387 = vld [vmem:[%s5 + $0x1f0] sm:$0xf]
        %v6388 = vld [vmem:[%s5 + $0x1f4] sm:$0xf]
        %v6389 = vld [vmem:[%s5 + $0x1f8] sm:$0xf]
        %v6390 = vld [vmem:[%s5 + $0x1fc] sm:$0xf]
        %v6391 = vld [vmem:[%s5 + $0x200] sm:$0xf]
        %v6392 = vld [vmem:[%s5 + $0x204] sm:$0xf]
        %v6393 = vld [vmem:[%s5 + $0x208] sm:$0xf]
        %v6394 = vld [vmem:[%s5 + $0x20c] sm:$0xf]
        %v6395 = vld [vmem:[%s5 + $0x210] sm:$0xf]
        %v6396 = vld [vmem:[%s5 + $0x214] sm:$0xf]
        %v6397 = vld [vmem:[%s5 + $0x218] sm:$0xf]
        %v6398 = vld [vmem:[%s5 + $0x21c] sm:$0xf]
        %v6399 = vld [vmem:[%s5 + $0x220] sm:$0xf]
        %v6400 = vld [vmem:[%s5 + $0x224] sm:$0xf]
        %v6401 = vld [vmem:[%s5 + $0x228] sm:$0xf]
        %v6402 = vld [vmem:[%s5 + $0x22c] sm:$0xf]
        %v6403 = vld [vmem:[%s5 + $0x230] sm:$0xf]
        %v6404 = vld [vmem:[%s5 + $0x234] sm:$0xf]
        %v6405 = vld [vmem:[%s5 + $0x238] sm:$0xf]
        %v6406 = vld [vmem:[%s5 + $0x23c] sm:$0xf]
        %v6407 = vld [vmem:[%s6] sm:$0x1]
        %v6409 = vperm.slane %v6407, 0
        %v6571 = vunpack.c.l.b16 %v6103
        %v6572 = vunpack.c.h.b16 %v6103
        %v6573 = vunpack.c.l.b16 %v6104
        %v6574 = vunpack.c.h.b16 %v6104
        %v6575 = vunpack.c.l.b16 %v6105
        %v6576 = vunpack.c.h.b16 %v6105
        %v6577 = vunpack.c.l.b16 %v6106
        %v6578 = vunpack.c.h.b16 %v6106
        %v6579 = vunpack.c.l.b16 %v6107
        %v6580 = vunpack.c.l.b16 %v6108
        %v6581 = vunpack.c.h.b16 %v6108
        %v6582 = vunpack.c.l.b16 %v6109
        %v6583 = vunpack.c.h.b16 %v6109
        %v6584 = vunpack.c.l.b16 %v6110
        %v6585 = vunpack.c.h.b16 %v6110
        %v6586 = vunpack.c.l.b16 %v6111
        %v6587 = vunpack.c.h.b16 %v6111
        %v6588 = vunpack.c.l.b16 %v6112
        %v6589 = vunpack.c.l.b16 %v6113
        %v6590 = vunpack.c.h.b16 %v6113
        %v6591 = vunpack.c.l.b16 %v6114
        %v6592 = vunpack.c.h.b16 %v6114
        %v6593 = vunpack.c.l.b16 %v6115
        %v6594 = vunpack.c.h.b16 %v6115
        %v6595 = vunpack.c.l.b16 %v6116
        %v6596 = vunpack.c.h.b16 %v6116
        %v6597 = vunpack.c.l.b16 %v6117
        %v6598 = vunpack.c.l.b16 %v6118
        %v6599 = vunpack.c.h.b16 %v6118
        %v6600 = vunpack.c.l.b16 %v6119
        %v6601 = vunpack.c.h.b16 %v6119
        %v6602 = vunpack.c.l.b16 %v6120
        %v6603 = vunpack.c.h.b16 %v6120
        %v6604 = vunpack.c.l.b16 %v6121
        %v6605 = vunpack.c.h.b16 %v6121
        %v6606 = vunpack.c.l.b16 %v6122
        %v6607 = vunpack.c.l.b16 %v6123
        %v6608 = vunpack.c.h.b16 %v6123
        %v6609 = vunpack.c.l.b16 %v6124
        %v6610 = vunpack.c.h.b16 %v6124
        %v6611 = vunpack.c.l.b16 %v6125
        %v6612 = vunpack.c.h.b16 %v6125
        %v6613 = vunpack.c.l.b16 %v6126
        %v6614 = vunpack.c.h.b16 %v6126
        %v6615 = vunpack.c.l.b16 %v6127
        %v6616 = vunpack.c.l.b16 %v6128
        %v6617 = vunpack.c.h.b16 %v6128
        %v6618 = vunpack.c.l.b16 %v6129
        %v6619 = vunpack.c.h.b16 %v6129
        %v6620 = vunpack.c.l.b16 %v6130
        %v6621 = vunpack.c.h.b16 %v6130
        %v6622 = vunpack.c.l.b16 %v6131
        %v6623 = vunpack.c.h.b16 %v6131
        %v6624 = vunpack.c.l.b16 %v6132
        %v6625 = vunpack.c.l.b16 %v6133
        %v6626 = vunpack.c.h.b16 %v6133
        %v6627 = vunpack.c.l.b16 %v6134
        %v6628 = vunpack.c.h.b16 %v6134
        %v6629 = vunpack.c.l.b16 %v6135
        %v6630 = vunpack.c.h.b16 %v6135
        %v6631 = vunpack.c.l.b16 %v6136
        %v6632 = vunpack.c.h.b16 %v6136
        %v6633 = vunpack.c.l.b16 %v6137
        %v6634 = vunpack.c.l.b16 %v6138
        %v6635 = vunpack.c.h.b16 %v6138
        %v6636 = vunpack.c.l.b16 %v6139
        %v6637 = vunpack.c.h.b16 %v6139
        %v6638 = vunpack.c.l.b16 %v6140
        %v6639 = vunpack.c.h.b16 %v6140
        %v6640 = vunpack.c.l.b16 %v6141
        %v6641 = vunpack.c.h.b16 %v6141
        %v6642 = vunpack.c.l.b16 %v6142
        %v6643 = vunpack.c.l.b16 %v6143
        %v6644 = vunpack.c.h.b16 %v6143
        %v6645 = vunpack.c.l.b16 %v6144
        %v6646 = vunpack.c.h.b16 %v6144
        %v6647 = vunpack.c.l.b16 %v6145
        %v6648 = vunpack.c.h.b16 %v6145
        %v6649 = vunpack.c.l.b16 %v6146
        %v6650 = vunpack.c.h.b16 %v6146
        %v6651 = vunpack.c.l.b16 %v6147
        %v6652 = vunpack.c.l.b16 %v6148
        %v6653 = vunpack.c.h.b16 %v6148
        %v6654 = vunpack.c.l.b16 %v6149
        %v6655 = vunpack.c.h.b16 %v6149
        %v6656 = vunpack.c.l.b16 %v6150
        %v6657 = vunpack.c.h.b16 %v6150
        %v6658 = vunpack.c.l.b16 %v6151
        %v6659 = vunpack.c.h.b16 %v6151
        %v6660 = vunpack.c.l.b16 %v6152
        %v6661 = vunpack.c.l.b16 %v6153
        %v6662 = vunpack.c.h.b16 %v6153
        %v6663 = vunpack.c.l.b16 %v6154
        %v6664 = vunpack.c.h.b16 %v6154
        %v6665 = vunpack.c.l.b16 %v6155
        %v6666 = vunpack.c.h.b16 %v6155
        %v6667 = vunpack.c.l.b16 %v6156
        %v6668 = vunpack.c.h.b16 %v6156
        %v6669 = vunpack.c.l.b16 %v6157
        %v6670 = vunpack.c.l.b16 %v6158
        %v6671 = vunpack.c.h.b16 %v6158
        %v6672 = vunpack.c.l.b16 %v6159
        %v6673 = vunpack.c.h.b16 %v6159
        %v6674 = vunpack.c.l.b16 %v6160
        %v6675 = vunpack.c.h.b16 %v6160
        %v6676 = vunpack.c.l.b16 %v6161
        %v6677 = vunpack.c.h.b16 %v6161
        %v6678 = vunpack.c.l.b16 %v6162
        %v6679 = vunpack.c.l.b16 %v6163
        %v6680 = vunpack.c.h.b16 %v6163
        %v6681 = vunpack.c.l.b16 %v6164
        %v6682 = vunpack.c.h.b16 %v6164
        %v6683 = vunpack.c.l.b16 %v6165
        %v6684 = vunpack.c.h.b16 %v6165
        %v6685 = vunpack.c.l.b16 %v6166
        %v6686 = vunpack.c.h.b16 %v6166
        %v6687 = vunpack.c.l.b16 %v6167
        %v6688 = vunpack.c.l.b16 %v6168
        %v6689 = vunpack.c.h.b16 %v6168
        %v6690 = vunpack.c.l.b16 %v6169
        %v6691 = vunpack.c.h.b16 %v6169
        %v6692 = vunpack.c.l.b16 %v6170
        %v6693 = vunpack.c.h.b16 %v6170
        %v6694 = vunpack.c.l.b16 %v6171
        %v6695 = vunpack.c.h.b16 %v6171
        %v6696 = vunpack.c.l.b16 %v6172
        %v6697 = vunpack.c.l.b16 %v6173
        %v6698 = vunpack.c.h.b16 %v6173
        %v6699 = vunpack.c.l.b16 %v6174
        %v6700 = vunpack.c.h.b16 %v6174
        %v6701 = vunpack.c.l.b16 %v6175
        %v6702 = vunpack.c.h.b16 %v6175
        %v6703 = vunpack.c.l.b16 %v6176
        %v6704 = vunpack.c.h.b16 %v6176
        %v6705 = vunpack.c.l.b16 %v6177
        %v6706 = vunpack.c.l.b16 %v6178
        %v6707 = vunpack.c.h.b16 %v6178
        %v6708 = vunpack.c.l.b16 %v6179
        %v6709 = vunpack.c.h.b16 %v6179
        %v6710 = vunpack.c.l.b16 %v6180
        %v6711 = vunpack.c.h.b16 %v6180
        %v6712 = vunpack.c.l.b16 %v6181
        %v6713 = vunpack.c.h.b16 %v6181
        %v6714 = vunpack.c.l.b16 %v6182
        %v6715 = vunpack.c.l.b16 %v6183
        %v6716 = vunpack.c.h.b16 %v6183
        %v6717 = vunpack.c.l.b16 %v6184
        %v6718 = vunpack.c.h.b16 %v6184
        %v6719 = vunpack.c.l.b16 %v6185
        %v6720 = vunpack.c.h.b16 %v6185
        %v6721 = vunpack.c.l.b16 %v6186
        %v6722 = vunpack.c.h.b16 %v6186
        %v6723 = vunpack.c.l.b16 %v6187
        %v6724 = vunpack.c.l.b16 %v6188
        %v6725 = vunpack.c.h.b16 %v6188
        %v6726 = vunpack.c.l.b16 %v6189
        %v6727 = vunpack.c.h.b16 %v6189
        %v6728 = vunpack.c.l.b16 %v6190
        %v6729 = vunpack.c.h.b16 %v6190
        %v6730 = vunpack.c.l.b16 %v6191
        %v6731 = vunpack.c.h.b16 %v6191
        %v6732 = vunpack.c.l.b16 %v6192
        %v6733 = vunpack.c.l.b16 %v6193
        %v6734 = vunpack.c.h.b16 %v6193
        %v6735 = vunpack.c.l.b16 %v6194
        %v6736 = vunpack.c.h.b16 %v6194
        %v6737 = vunpack.c.l.b16 %v6195
        %v6738 = vunpack.c.h.b16 %v6195
        %v6739 = vunpack.c.l.b16 %v6196
        %v6740 = vunpack.c.h.b16 %v6196
        %v6741 = vunpack.c.l.b16 %v6197
        %v6742 = vunpack.c.l.b16 %v6198
        %v6743 = vunpack.c.h.b16 %v6198
        %v6744 = vunpack.c.l.b16 %v6199
        %v6745 = vunpack.c.h.b16 %v6199
        %v6746 = vunpack.c.l.b16 %v6200
        %v6747 = vunpack.c.h.b16 %v6200
        %v6748 = vunpack.c.l.b16 %v6201
        %v6749 = vunpack.c.h.b16 %v6201
        %v6750 = vunpack.c.l.b16 %v6202
        %v6751 = vunpack.c.l.b16 %v6203
        %v6752 = vunpack.c.h.b16 %v6203
        %v6753 = vunpack.c.l.b16 %v6204
        %v6754 = vunpack.c.h.b16 %v6204
        %v6755 = vunpack.c.l.b16 %v6205
        %v6756 = vunpack.c.h.b16 %v6205
        %v6757 = vunpack.c.l.b16 %v6206
        %v6758 = vunpack.c.h.b16 %v6206
        %v6759 = vunpack.c.l.b16 %v6207
        %v6760 = vunpack.c.l.b16 %v6208
        %v6761 = vunpack.c.h.b16 %v6208
        %v6762 = vunpack.c.l.b16 %v6209
        %v6763 = vunpack.c.h.b16 %v6209
        %v6764 = vunpack.c.l.b16 %v6210
        %v6765 = vunpack.c.h.b16 %v6210
        %v6766 = vunpack.c.l.b16 %v6211
        %v6767 = vunpack.c.h.b16 %v6211
        %v6768 = vunpack.c.l.b16 %v6212
        %v6769 = vunpack.c.l.b16 %v6213
        %v6770 = vunpack.c.h.b16 %v6213
        %v6771 = vunpack.c.l.b16 %v6214
        %v6772 = vunpack.c.h.b16 %v6214
        %v6773 = vunpack.c.l.b16 %v6215
        %v6774 = vunpack.c.h.b16 %v6215
        %v6775 = vunpack.c.l.b16 %v6216
        %v6776 = vunpack.c.h.b16 %v6216
        %v6777 = vunpack.c.l.b16 %v6217
        %v6778 = vunpack.c.l.b16 %v6218
        %v6779 = vunpack.c.h.b16 %v6218
        %v6780 = vunpack.c.l.b16 %v6219
        %v6781 = vunpack.c.h.b16 %v6219
        %v6782 = vunpack.c.l.b16 %v6220
        %v6783 = vunpack.c.h.b16 %v6220
        %v6784 = vunpack.c.l.b16 %v6221
        %v6785 = vunpack.c.h.b16 %v6221
        %v6786 = vunpack.c.l.b16 %v6222
        %v6787 = vunpack.c.l.b16 %v6223
        %v6788 = vunpack.c.h.b16 %v6223
        %v6789 = vunpack.c.l.b16 %v6224
        %v6790 = vunpack.c.h.b16 %v6224
        %v6791 = vunpack.c.l.b16 %v6225
        %v6792 = vunpack.c.h.b16 %v6225
        %v6793 = vunpack.c.l.b16 %v6226
        %v6794 = vunpack.c.h.b16 %v6226
        %v6795 = vunpack.c.l.b16 %v6227
        %v6796 = vunpack.c.l.b16 %v6228
        %v6797 = vunpack.c.h.b16 %v6228
        %v6798 = vunpack.c.l.b16 %v6229
        %v6799 = vunpack.c.h.b16 %v6229
        %v6800 = vunpack.c.l.b16 %v6230
        %v6801 = vunpack.c.h.b16 %v6230
        %v6802 = vunpack.c.l.b16 %v6231
        %v6803 = vunpack.c.h.b16 %v6231
        %v6804 = vunpack.c.l.b16 %v6232
        %v6805 = vunpack.c.l.b16 %v6233
        %v6806 = vunpack.c.h.b16 %v6233
        %v6807 = vunpack.c.l.b16 %v6234
        %v6808 = vunpack.c.h.b16 %v6234
        %v6809 = vunpack.c.l.b16 %v6235
        %v6810 = vunpack.c.h.b16 %v6235
        %v6811 = vunpack.c.l.b16 %v6236
        %v6812 = vunpack.c.h.b16 %v6236
        %v6813 = vunpack.c.l.b16 %v6237
        %v6814 = vunpack.c.l.b16 %v6238
        %v6815 = vunpack.c.h.b16 %v6238
        %v6816 = vunpack.c.l.b16 %v6239
        %v6817 = vunpack.c.h.b16 %v6239
        %v6818 = vunpack.c.l.b16 %v6240
        %v6819 = vunpack.c.h.b16 %v6240
        %v6820 = vunpack.c.l.b16 %v6241
        %v6821 = vunpack.c.h.b16 %v6241
        %v6822 = vunpack.c.l.b16 %v6242
        %v6823 = vunpack.c.l.b16 %v6243
        %v6824 = vunpack.c.h.b16 %v6243
        %v6825 = vunpack.c.l.b16 %v6244
        %v6826 = vunpack.c.h.b16 %v6244
        %v6827 = vunpack.c.l.b16 %v6245
        %v6828 = vunpack.c.h.b16 %v6245
        %v6829 = vunpack.c.l.b16 %v6246
        %v6830 = vunpack.c.h.b16 %v6246
        %v6831 = vunpack.c.l.b16 %v6247
        %v6832 = vunpack.c.l.b16 %v6248
        %v6833 = vunpack.c.h.b16 %v6248
        %v6834 = vunpack.c.l.b16 %v6249
        %v6835 = vunpack.c.h.b16 %v6249
        %v6836 = vunpack.c.l.b16 %v6250
        %v6837 = vunpack.c.h.b16 %v6250
        %v6838 = vunpack.c.l.b16 %v6251
        %v6839 = vunpack.c.h.b16 %v6251
        %v6840 = vunpack.c.l.b16 %v6252
        %v6841 = vunpack.c.l.b16 %v6253
        %v6842 = vunpack.c.h.b16 %v6253
        %v6843 = vunpack.c.l.b16 %v6254
        %v6844 = vunpack.c.h.b16 %v6254
        %v6845 = vunpack.c.l.b16 %v6255
        %v6846 = vunpack.c.h.b16 %v6255
        %v6847 = vunpack.c.l.b16 %v6256
        %v6848 = vunpack.c.h.b16 %v6256
        %v6849 = vunpack.c.l.b16 %v6257
        %v6850 = vunpack.c.l.b16 %v6258
        %v6851 = vunpack.c.h.b16 %v6258
        %v6852 = vunpack.c.l.b16 %v6259
        %v6853 = vunpack.c.h.b16 %v6259
        %v6854 = vunpack.c.l.b16 %v6260
        %v6855 = vunpack.c.h.b16 %v6260
        %v6856 = vunpack.c.l.b16 %v6261
        %v6857 = vunpack.c.h.b16 %v6261
        %v6858 = vunpack.c.l.b16 %v6262
        %v6859 = vpack.c.b16 %v6580, %v6571
        %v6860 = vpack.c.b16 %v6581, %v6572
        %v6861 = vpack.c.b16 %v6582, %v6573
        %v6862 = vpack.c.b16 %v6583, %v6574
        %v6863 = vpack.c.b16 %v6584, %v6575
        %v6864 = vpack.c.b16 %v6585, %v6576
        %v6865 = vpack.c.b16 %v6586, %v6577
        %v6866 = vpack.c.b16 %v6587, %v6578
        %v6867 = vpack.c.b16 %v6588, %v6579
        %v6868 = vpack.c.b16 %v6598, %v6589
        %v6869 = vpack.c.b16 %v6599, %v6590
        %v6870 = vpack.c.b16 %v6600, %v6591
        %v6871 = vpack.c.b16 %v6601, %v6592
        %v6872 = vpack.c.b16 %v6602, %v6593
        %v6873 = vpack.c.b16 %v6603, %v6594
        %v6874 = vpack.c.b16 %v6604, %v6595
        %v6875 = vpack.c.b16 %v6605, %v6596
        %v6876 = vpack.c.b16 %v6606, %v6597
        %v6877 = vpack.c.b16 %v6616, %v6607
        %v6878 = vpack.c.b16 %v6617, %v6608
        %v6879 = vpack.c.b16 %v6618, %v6609
        %v6880 = vpack.c.b16 %v6619, %v6610
        %v6881 = vpack.c.b16 %v6620, %v6611
        %v6882 = vpack.c.b16 %v6621, %v6612
        %v6883 = vpack.c.b16 %v6622, %v6613
        %v6884 = vpack.c.b16 %v6623, %v6614
        %v6885 = vpack.c.b16 %v6624, %v6615
        %v6886 = vpack.c.b16 %v6634, %v6625
        %v6887 = vpack.c.b16 %v6635, %v6626
        %v6888 = vpack.c.b16 %v6636, %v6627
        %v6889 = vpack.c.b16 %v6637, %v6628
        %v6890 = vpack.c.b16 %v6638, %v6629
        %v6891 = vpack.c.b16 %v6639, %v6630
        %v6892 = vpack.c.b16 %v6640, %v6631
        %v6893 = vpack.c.b16 %v6641, %v6632
        %v6894 = vpack.c.b16 %v6642, %v6633
        %v6895 = vpack.c.b16 %v6652, %v6643
        %v6896 = vpack.c.b16 %v6653, %v6644
        %v6897 = vpack.c.b16 %v6654, %v6645
        %v6898 = vpack.c.b16 %v6655, %v6646
        %v6899 = vpack.c.b16 %v6656, %v6647
        %v6900 = vpack.c.b16 %v6657, %v6648
        %v6901 = vpack.c.b16 %v6658, %v6649
        %v6902 = vpack.c.b16 %v6659, %v6650
        %v6903 = vpack.c.b16 %v6660, %v6651
        %v6904 = vpack.c.b16 %v6670, %v6661
        %v6905 = vpack.c.b16 %v6671, %v6662
        %v6906 = vpack.c.b16 %v6672, %v6663
        %v6907 = vpack.c.b16 %v6673, %v6664
        %v6908 = vpack.c.b16 %v6674, %v6665
        %v6909 = vpack.c.b16 %v6675, %v6666
        %v6910 = vpack.c.b16 %v6676, %v6667
        %v6911 = vpack.c.b16 %v6677, %v6668
        %v6912 = vpack.c.b16 %v6678, %v6669
        %v6913 = vpack.c.b16 %v6688, %v6679
        %v6914 = vpack.c.b16 %v6689, %v6680
        %v6915 = vpack.c.b16 %v6690, %v6681
        %v6916 = vpack.c.b16 %v6691, %v6682
        %v6917 = vpack.c.b16 %v6692, %v6683
        %v6918 = vpack.c.b16 %v6693, %v6684
        %v6919 = vpack.c.b16 %v6694, %v6685
        %v6920 = vpack.c.b16 %v6695, %v6686
        %v6921 = vpack.c.b16 %v6696, %v6687
        %v6922 = vpack.c.b16 %v6706, %v6697
        %v6923 = vpack.c.b16 %v6707, %v6698
        %v6924 = vpack.c.b16 %v6708, %v6699
        %v6925 = vpack.c.b16 %v6709, %v6700
        %v6926 = vpack.c.b16 %v6710, %v6701
        %v6927 = vpack.c.b16 %v6711, %v6702
        %v6928 = vpack.c.b16 %v6712, %v6703
        %v6929 = vpack.c.b16 %v6713, %v6704
        %v6930 = vpack.c.b16 %v6714, %v6705
        %v6931 = vpack.c.b16 %v6724, %v6715
        %v6932 = vpack.c.b16 %v6725, %v6716
        %v6933 = vpack.c.b16 %v6726, %v6717
        %v6934 = vpack.c.b16 %v6727, %v6718
        %v6935 = vpack.c.b16 %v6728, %v6719
        %v6936 = vpack.c.b16 %v6729, %v6720
        %v6937 = vpack.c.b16 %v6730, %v6721
        %v6938 = vpack.c.b16 %v6731, %v6722
        %v6939 = vpack.c.b16 %v6732, %v6723
        %v6940 = vpack.c.b16 %v6742, %v6733
        %v6941 = vpack.c.b16 %v6743, %v6734
        %v6942 = vpack.c.b16 %v6744, %v6735
        %v6943 = vpack.c.b16 %v6745, %v6736
        %v6944 = vpack.c.b16 %v6746, %v6737
        %v6945 = vpack.c.b16 %v6747, %v6738
        %v6946 = vpack.c.b16 %v6748, %v6739
        %v6947 = vpack.c.b16 %v6749, %v6740
        %v6948 = vpack.c.b16 %v6750, %v6741
        %v6949 = vpack.c.b16 %v6760, %v6751
        %v6950 = vpack.c.b16 %v6761, %v6752
        %v6951 = vpack.c.b16 %v6762, %v6753
        %v6952 = vpack.c.b16 %v6763, %v6754
        %v6953 = vpack.c.b16 %v6764, %v6755
        %v6954 = vpack.c.b16 %v6765, %v6756
        %v6955 = vpack.c.b16 %v6766, %v6757
        %v6956 = vpack.c.b16 %v6767, %v6758
        %v6957 = vpack.c.b16 %v6768, %v6759
        %v6958 = vpack.c.b16 %v6778, %v6769
        %v6959 = vpack.c.b16 %v6779, %v6770
        %v6960 = vpack.c.b16 %v6780, %v6771
        %v6961 = vpack.c.b16 %v6781, %v6772
        %v6962 = vpack.c.b16 %v6782, %v6773
        %v6963 = vpack.c.b16 %v6783, %v6774
        %v6964 = vpack.c.b16 %v6784, %v6775
        %v6965 = vpack.c.b16 %v6785, %v6776
        %v6966 = vpack.c.b16 %v6786, %v6777
        %v6967 = vpack.c.b16 %v6796, %v6787
        %v6968 = vpack.c.b16 %v6797, %v6788
        %v6969 = vpack.c.b16 %v6798, %v6789
        %v6970 = vpack.c.b16 %v6799, %v6790
        %v6971 = vpack.c.b16 %v6800, %v6791
        %v6972 = vpack.c.b16 %v6801, %v6792
        %v6973 = vpack.c.b16 %v6802, %v6793
        %v6974 = vpack.c.b16 %v6803, %v6794
        %v6975 = vpack.c.b16 %v6804, %v6795
        %v6976 = vpack.c.b16 %v6814, %v6805
        %v6977 = vpack.c.b16 %v6815, %v6806
        %v6978 = vpack.c.b16 %v6816, %v6807
        %v6979 = vpack.c.b16 %v6817, %v6808
        %v6980 = vpack.c.b16 %v6818, %v6809
        %v6981 = vpack.c.b16 %v6819, %v6810
        %v6982 = vpack.c.b16 %v6820, %v6811
        %v6983 = vpack.c.b16 %v6821, %v6812
        %v6984 = vpack.c.b16 %v6822, %v6813
        %v6985 = vpack.c.b16 %v6832, %v6823
        %v6986 = vpack.c.b16 %v6833, %v6824
        %v6987 = vpack.c.b16 %v6834, %v6825
        %v6988 = vpack.c.b16 %v6835, %v6826
        %v6989 = vpack.c.b16 %v6836, %v6827
        %v6990 = vpack.c.b16 %v6837, %v6828
        %v6991 = vpack.c.b16 %v6838, %v6829
        %v6992 = vpack.c.b16 %v6839, %v6830
        %v6993 = vpack.c.b16 %v6840, %v6831
        %v6994 = vpack.c.b16 %v6850, %v6841
        %v6995 = vpack.c.b16 %v6851, %v6842
        %v6996 = vpack.c.b16 %v6852, %v6843
        %v6997 = vpack.c.b16 %v6853, %v6844
        %v6998 = vpack.c.b16 %v6854, %v6845
        %v6999 = vpack.c.b16 %v6855, %v6846
        %v7000 = vpack.c.b16 %v6856, %v6847
        %v7001 = vpack.c.b16 %v6857, %v6848
        %v7002 = vpack.c.b16 %v6858, %v6849
        %v7291 = vunpack.c.l.b16 %v6263
        %v7292 = vunpack.c.l.b16 %v6264
        %v7293 = vunpack.c.l.b16 %v6265
        %v7294 = vunpack.c.l.b16 %v6266
        %v7295 = vunpack.c.l.b16 %v6267
        %v7296 = vunpack.c.l.b16 %v6268
        %v7297 = vunpack.c.l.b16 %v6269
        %v7298 = vunpack.c.l.b16 %v6270
        %v7299 = vunpack.c.l.b16 %v6271
        %v7300 = vunpack.c.l.b16 %v6272
        %v7301 = vunpack.c.l.b16 %v6273
        %v7302 = vunpack.c.l.b16 %v6274
        %v7303 = vunpack.c.l.b16 %v6275
        %v7304 = vunpack.c.l.b16 %v6276
        %v7305 = vunpack.c.l.b16 %v6277
        %v7306 = vunpack.c.l.b16 %v6278
        %v7307 = vunpack.c.l.b16 %v6279
        %v7308 = vunpack.c.l.b16 %v6280
        %v7309 = vunpack.c.l.b16 %v6281
        %v7310 = vunpack.c.l.b16 %v6282
        %v7311 = vunpack.c.l.b16 %v6283
        %v7312 = vunpack.c.l.b16 %v6284
        %v7313 = vunpack.c.l.b16 %v6285
        %v7314 = vunpack.c.l.b16 %v6286
        %v7315 = vunpack.c.l.b16 %v6287
        %v7316 = vunpack.c.l.b16 %v6288
        %v7317 = vunpack.c.l.b16 %v6289
        %v7318 = vunpack.c.l.b16 %v6290
        %v7319 = vunpack.c.l.b16 %v6291
        %v7320 = vunpack.c.l.b16 %v6292
        %v7321 = vunpack.c.l.b16 %v6293
        %v7322 = vunpack.c.l.b16 %v6294
        %v7323 = vunpack.c.l.b16 %v6295
        %v7324 = vunpack.c.l.b16 %v6296
        %v7325 = vunpack.c.l.b16 %v6297
        %v7326 = vunpack.c.l.b16 %v6298
        %v7327 = vunpack.c.l.b16 %v6299
        %v7328 = vunpack.c.l.b16 %v6300
        %v7329 = vunpack.c.l.b16 %v6301
        %v7330 = vunpack.c.l.b16 %v6302
        %v7331 = vunpack.c.l.b16 %v6303
        %v7332 = vunpack.c.l.b16 %v6304
        %v7333 = vunpack.c.l.b16 %v6305
        %v7334 = vunpack.c.l.b16 %v6306
        %v7335 = vunpack.c.l.b16 %v6307
        %v7336 = vunpack.c.l.b16 %v6308
        %v7337 = vunpack.c.l.b16 %v6309
        %v7338 = vunpack.c.l.b16 %v6310
        %v7339 = vunpack.c.l.b16 %v6311
        %v7340 = vunpack.c.l.b16 %v6312
        %v7341 = vunpack.c.l.b16 %v6313
        %v7342 = vunpack.c.l.b16 %v6314
        %v7343 = vunpack.c.l.b16 %v6315
        %v7344 = vunpack.c.l.b16 %v6316
        %v7345 = vunpack.c.l.b16 %v6317
        %v7346 = vunpack.c.l.b16 %v6318
        %v7347 = vunpack.c.l.b16 %v6319
        %v7348 = vunpack.c.l.b16 %v6320
        %v7349 = vunpack.c.l.b16 %v6321
        %v7350 = vunpack.c.l.b16 %v6322
        %v7351 = vunpack.c.l.b16 %v6323
        %v7352 = vunpack.c.l.b16 %v6324
        %v7353 = vunpack.c.l.b16 %v6325
        %v7354 = vunpack.c.l.b16 %v6326
        %v7355 = vunpack.c.l.b16 %v6327
        %v7356 = vunpack.c.l.b16 %v6328
        %v7357 = vunpack.c.l.b16 %v6329
        %v7358 = vunpack.c.l.b16 %v6330
        %v7359 = vunpack.c.l.b16 %v6331
        %v7360 = vunpack.c.l.b16 %v6332
        %v7361 = vunpack.c.l.b16 %v6333
        %v7362 = vunpack.c.l.b16 %v6334
        %v7363 = vunpack.c.l.b16 %v6335
        %v7364 = vunpack.c.l.b16 %v6336
        %v7365 = vunpack.c.l.b16 %v6337
        %v7366 = vunpack.c.l.b16 %v6338
        %v7367 = vunpack.c.l.b16 %v6339
        %v7368 = vunpack.c.l.b16 %v6340
        %v7369 = vunpack.c.l.b16 %v6341
        %v7370 = vunpack.c.l.b16 %v6342
        %v7371 = vunpack.c.l.b16 %v6343
        %v7372 = vunpack.c.l.b16 %v6344
        %v7373 = vunpack.c.l.b16 %v6345
        %v7374 = vunpack.c.l.b16 %v6346
        %v7375 = vunpack.c.l.b16 %v6347
        %v7376 = vunpack.c.l.b16 %v6348
        %v7377 = vunpack.c.l.b16 %v6349
        %v7378 = vunpack.c.l.b16 %v6350
        %v7379 = vunpack.c.l.b16 %v6351
        %v7380 = vunpack.c.l.b16 %v6352
        %v7381 = vunpack.c.l.b16 %v6353
        %v7382 = vunpack.c.l.b16 %v6354
        %v7383 = vunpack.c.l.b16 %v6355
        %v7384 = vunpack.c.l.b16 %v6356
        %v7385 = vunpack.c.l.b16 %v6357
        %v7386 = vunpack.c.l.b16 %v6358
        %v7387 = vunpack.c.l.b16 %v6359
        %v7388 = vunpack.c.l.b16 %v6360
        %v7389 = vunpack.c.l.b16 %v6361
        %v7390 = vunpack.c.l.b16 %v6362
        %v7391 = vunpack.c.l.b16 %v6363
        %v7392 = vunpack.c.l.b16 %v6364
        %v7393 = vunpack.c.l.b16 %v6365
        %v7394 = vunpack.c.l.b16 %v6366
        %v7395 = vunpack.c.l.b16 %v6367
        %v7396 = vunpack.c.l.b16 %v6368
        %v7397 = vunpack.c.l.b16 %v6369
        %v7398 = vunpack.c.l.b16 %v6370
        %v7399 = vunpack.c.l.b16 %v6371
        %v7400 = vunpack.c.l.b16 %v6372
        %v7401 = vunpack.c.l.b16 %v6373
        %v7402 = vunpack.c.l.b16 %v6374
        %v7403 = vunpack.c.l.b16 %v6375
        %v7404 = vunpack.c.l.b16 %v6376
        %v7405 = vunpack.c.l.b16 %v6377
        %v7406 = vunpack.c.l.b16 %v6378
        %v7407 = vunpack.c.l.b16 %v6379
        %v7408 = vunpack.c.l.b16 %v6380
        %v7409 = vunpack.c.l.b16 %v6381
        %v7410 = vunpack.c.l.b16 %v6382
        %v7411 = vunpack.c.l.b16 %v6383
        %v7412 = vunpack.c.l.b16 %v6384
        %v7413 = vunpack.c.l.b16 %v6385
        %v7414 = vunpack.c.l.b16 %v6386
        %v7415 = vunpack.c.l.b16 %v6387
        %v7416 = vunpack.c.l.b16 %v6388
        %v7417 = vunpack.c.l.b16 %v6389
        %v7418 = vunpack.c.l.b16 %v6390
        %v7419 = vunpack.c.l.b16 %v6391
        %v7420 = vunpack.c.l.b16 %v6392
        %v7421 = vunpack.c.l.b16 %v6393
        %v7422 = vunpack.c.l.b16 %v6394
        %v7423 = vunpack.c.l.b16 %v6395
        %v7424 = vunpack.c.l.b16 %v6396
        %v7425 = vunpack.c.l.b16 %v6397
        %v7426 = vunpack.c.l.b16 %v6398
        %v7427 = vunpack.c.l.b16 %v6399
        %v7428 = vunpack.c.l.b16 %v6400
        %v7429 = vunpack.c.l.b16 %v6401
        %v7430 = vunpack.c.l.b16 %v6402
        %v7431 = vunpack.c.l.b16 %v6403
        %v7432 = vunpack.c.l.b16 %v6404
        %v7433 = vunpack.c.l.b16 %v6405
        %v7434 = vunpack.c.l.b16 %v6406
        %v7435 = vpack.c.b16 %v7292, %v7291
        %v7436 = vpack.c.b16 %v7294, %v7293
        %v7437 = vpack.c.b16 %v7296, %v7295
        %v7438 = vpack.c.b16 %v7298, %v7297
        %v7439 = vpack.c.b16 %v7300, %v7299
        %v7440 = vpack.c.b16 %v7302, %v7301
        %v7441 = vpack.c.b16 %v7304, %v7303
        %v7442 = vpack.c.b16 %v7306, %v7305
        %v7443 = vpack.c.b16 %v7308, %v7307
        %v7444 = vpack.c.b16 %v7310, %v7309
        %v7445 = vpack.c.b16 %v7312, %v7311
        %v7446 = vpack.c.b16 %v7314, %v7313
        %v7447 = vpack.c.b16 %v7316, %v7315
        %v7448 = vpack.c.b16 %v7318, %v7317
        %v7449 = vpack.c.b16 %v7320, %v7319
        %v7450 = vpack.c.b16 %v7322, %v7321
        %v7451 = vpack.c.b16 %v7324, %v7323
        %v7452 = vpack.c.b16 %v7326, %v7325
        %v7453 = vpack.c.b16 %v7328, %v7327
        %v7454 = vpack.c.b16 %v7330, %v7329
        %v7455 = vpack.c.b16 %v7332, %v7331
        %v7456 = vpack.c.b16 %v7334, %v7333
        %v7457 = vpack.c.b16 %v7336, %v7335
        %v7458 = vpack.c.b16 %v7338, %v7337
        %v7459 = vpack.c.b16 %v7340, %v7339
        %v7460 = vpack.c.b16 %v7342, %v7341
        %v7461 = vpack.c.b16 %v7344, %v7343
        %v7462 = vpack.c.b16 %v7346, %v7345
        %v7463 = vpack.c.b16 %v7348, %v7347
        %v7464 = vpack.c.b16 %v7350, %v7349
        %v7465 = vpack.c.b16 %v7352, %v7351
        %v7466 = vpack.c.b16 %v7354, %v7353
        %v7467 = vpack.c.b16 %v7356, %v7355
        %v7468 = vpack.c.b16 %v7358, %v7357
        %v7469 = vpack.c.b16 %v7360, %v7359
        %v7470 = vpack.c.b16 %v7362, %v7361
        %v7471 = vpack.c.b16 %v7364, %v7363
        %v7472 = vpack.c.b16 %v7366, %v7365
        %v7473 = vpack.c.b16 %v7368, %v7367
        %v7474 = vpack.c.b16 %v7370, %v7369
        %v7475 = vpack.c.b16 %v7372, %v7371
        %v7476 = vpack.c.b16 %v7374, %v7373
        %v7477 = vpack.c.b16 %v7376, %v7375
        %v7478 = vpack.c.b16 %v7378, %v7377
        %v7479 = vpack.c.b16 %v7380, %v7379
        %v7480 = vpack.c.b16 %v7382, %v7381
        %v7481 = vpack.c.b16 %v7384, %v7383
        %v7482 = vpack.c.b16 %v7386, %v7385
        %v7483 = vpack.c.b16 %v7388, %v7387
        %v7484 = vpack.c.b16 %v7390, %v7389
        %v7485 = vpack.c.b16 %v7392, %v7391
        %v7486 = vpack.c.b16 %v7394, %v7393
        %v7487 = vpack.c.b16 %v7396, %v7395
        %v7488 = vpack.c.b16 %v7398, %v7397
        %v7489 = vpack.c.b16 %v7400, %v7399
        %v7490 = vpack.c.b16 %v7402, %v7401
        %v7491 = vpack.c.b16 %v7404, %v7403
        %v7492 = vpack.c.b16 %v7406, %v7405
        %v7493 = vpack.c.b16 %v7408, %v7407
        %v7494 = vpack.c.b16 %v7410, %v7409
        %v7495 = vpack.c.b16 %v7412, %v7411
        %v7496 = vpack.c.b16 %v7414, %v7413
        %v7497 = vpack.c.b16 %v7416, %v7415
        %v7498 = vpack.c.b16 %v7418, %v7417
        %v7499 = vpack.c.b16 %v7420, %v7419
        %v7500 = vpack.c.b16 %v7422, %v7421
        %v7501 = vpack.c.b16 %v7424, %v7423
        %v7502 = vpack.c.b16 %v7426, %v7425
        %v7503 = vpack.c.b16 %v7428, %v7427
        %v7504 = vpack.c.b16 %v7430, %v7429
        %v7505 = vpack.c.b16 %v7432, %v7431
        %v7506 = vpack.c.b16 %v7434, %v7433
        %7579 = vmatpush.bf16.msra.mxu0 %v7442
        %7580 = vmatpush.bf16.msra.mxu0 %v7441
        %7581 = vmatpush.bf16.msra.mxu0 %v7440
        %7582 = vmatpush.bf16.msra.mxu0 %v7439
        %7583 = vmatpush.bf16.msra.mxu0 %v7438
        %7584 = vmatpush.bf16.msra.mxu0 %v7437
        %7585 = vmatpush.bf16.msra.mxu0 %v7436
        %7586 = vmatpush.bf16.msra.mxu0 %v7435
        %7587 = vmatmul.bf16.gmra.mxu0 %v6859
        %v7588 = vpop.f32.mrf.mxu0
        %v7589 = vadd.f32 %v6409, %v7588
        %v7590 = vpop.f32.mrf.mxu0
        %v7591 = vadd.f32 %v6409, %v7590
        %7592 = vmatmul.bf16.gmra.mxu0 %v6868
        %v7593 = vpop.f32.mrf.mxu0
        %v7594 = vadd.f32 %v6409, %v7593
        %v7595 = vpop.f32.mrf.mxu0
        %v7596 = vadd.f32 %v6409, %v7595
        %7597 = vmatmul.bf16.gmra.mxu0 %v6877
        %v7598 = vpop.f32.mrf.mxu0
        %v7599 = vadd.f32 %v6409, %v7598
        %v7600 = vpop.f32.mrf.mxu0
        %v7601 = vadd.f32 %v6409, %v7600
        %7602 = vmatmul.bf16.gmra.mxu0 %v6886
        %v7603 = vpop.f32.mrf.mxu0
        %v7604 = vadd.f32 %v6409, %v7603
        %v7605 = vpop.f32.mrf.mxu0
        %v7606 = vadd.f32 %v6409, %v7605
        %7607 = vmatmul.bf16.gmra.mxu0 %v6895
        %v7608 = vpop.f32.mrf.mxu0
        %v7609 = vadd.f32 %v6409, %v7608
        %v7610 = vpop.f32.mrf.mxu0
        %v7611 = vadd.f32 %v6409, %v7610
        %7612 = vmatmul.bf16.gmra.mxu0 %v6904
        %v7613 = vpop.f32.mrf.mxu0
        %v7614 = vadd.f32 %v6409, %v7613
        %v7615 = vpop.f32.mrf.mxu0
        %v7616 = vadd.f32 %v6409, %v7615
        %7617 = vmatmul.bf16.gmra.mxu0 %v6913
        %v7618 = vpop.f32.mrf.mxu0
        %v7619 = vadd.f32 %v6409, %v7618
        %v7620 = vpop.f32.mrf.mxu0
        %v7621 = vadd.f32 %v6409, %v7620
        %7622 = vmatmul.bf16.gmra.mxu0 %v6922
        %v7623 = vpop.f32.mrf.mxu0
        %v7624 = vadd.f32 %v6409, %v7623
        %v7625 = vpop.f32.mrf.mxu0
        %v7626 = vadd.f32 %v6409, %v7625
        %7627 = vmatmul.bf16.gmra.mxu0 %v6931
        %v7628 = vpop.f32.mrf.mxu0
        %v7629 = vadd.f32 %v6409, %v7628
        %v7630 = vpop.f32.mrf.mxu0
        %v7631 = vadd.f32 %v6409, %v7630
        %7632 = vmatmul.bf16.gmra.mxu0 %v6940
        %v7633 = vpop.f32.mrf.mxu0
        %v7634 = vadd.f32 %v6409, %v7633
        %v7635 = vpop.f32.mrf.mxu0
        %v7636 = vadd.f32 %v6409, %v7635
        %7637 = vmatmul.bf16.gmra.mxu0 %v6949
        %v7638 = vpop.f32.mrf.mxu0
        %v7639 = vadd.f32 %v6409, %v7638
        %v7640 = vpop.f32.mrf.mxu0
        %v7641 = vadd.f32 %v6409, %v7640
        %7642 = vmatmul.bf16.gmra.mxu0 %v6958
        %v7643 = vpop.f32.mrf.mxu0
        %v7644 = vadd.f32 %v6409, %v7643
        %v7645 = vpop.f32.mrf.mxu0
        %v7646 = vadd.f32 %v6409, %v7645
        %7647 = vmatmul.bf16.gmra.mxu0 %v6967
        %v7648 = vpop.f32.mrf.mxu0
        %v7649 = vadd.f32 %v6409, %v7648
        %v7650 = vpop.f32.mrf.mxu0
        %v7651 = vadd.f32 %v6409, %v7650
        %7652 = vmatmul.bf16.gmra.mxu0 %v6976
        %v7653 = vpop.f32.mrf.mxu0
        %v7654 = vadd.f32 %v6409, %v7653
        %v7655 = vpop.f32.mrf.mxu0
        %v7656 = vadd.f32 %v6409, %v7655
        %7657 = vmatmul.bf16.gmra.mxu0 %v6985
        %v7658 = vpop.f32.mrf.mxu0
        %v7659 = vadd.f32 %v6409, %v7658
        %v7660 = vpop.f32.mrf.mxu0
        %v7661 = vadd.f32 %v6409, %v7660
        %7662 = vmatmul.bf16.gmra.mxu0 %v6994
        %v7663 = vpop.f32.mrf.mxu0
        %v7664 = vadd.f32 %v6409, %v7663
        %v7665 = vpop.f32.mrf.mxu0
        %v7666 = vadd.f32 %v6409, %v7665
        %7667 = vdwg.mxu0
        %7668 = vmatpush.bf16.msra.mxu0 %v7450
        %7669 = vmatpush.bf16.msra.mxu0 %v7449
        %7670 = vmatpush.bf16.msra.mxu0 %v7448
        %7671 = vmatpush.bf16.msra.mxu0 %v7447
        %7672 = vmatpush.bf16.msra.mxu0 %v7446
        %7673 = vmatpush.bf16.msra.mxu0 %v7445
        %7674 = vmatpush.bf16.msra.mxu0 %v7444
        %7675 = vmatpush.bf16.msra.mxu0 %v7443
        %7676 = vmatmul.bf16.gmra.mxu0 %v6860
        %v7677 = vpop.f32.mrf.mxu0
        %v7678 = vadd.f32 %v7589, %v7677
        %v7679 = vpop.f32.mrf.mxu0
        %v7680 = vadd.f32 %v7591, %v7679
        %7681 = vmatmul.bf16.gmra.mxu0 %v6869
        %v7682 = vpop.f32.mrf.mxu0
        %v7683 = vadd.f32 %v7594, %v7682
        %v7684 = vpop.f32.mrf.mxu0
        %v7685 = vadd.f32 %v7596, %v7684
        %7686 = vmatmul.bf16.gmra.mxu0 %v6878
        %v7687 = vpop.f32.mrf.mxu0
        %v7688 = vadd.f32 %v7599, %v7687
        %v7689 = vpop.f32.mrf.mxu0
        %v7690 = vadd.f32 %v7601, %v7689
        %7691 = vmatmul.bf16.gmra.mxu0 %v6887
        %v7692 = vpop.f32.mrf.mxu0
        %v7693 = vadd.f32 %v7604, %v7692
        %v7694 = vpop.f32.mrf.mxu0
        %v7695 = vadd.f32 %v7606, %v7694
        %7696 = vmatmul.bf16.gmra.mxu0 %v6896
        %v7697 = vpop.f32.mrf.mxu0
        %v7698 = vadd.f32 %v7609, %v7697
        %v7699 = vpop.f32.mrf.mxu0
        %v7700 = vadd.f32 %v7611, %v7699
        %7701 = vmatmul.bf16.gmra.mxu0 %v6905
        %v7702 = vpop.f32.mrf.mxu0
        %v7703 = vadd.f32 %v7614, %v7702
        %v7704 = vpop.f32.mrf.mxu0
        %v7705 = vadd.f32 %v7616, %v7704
        %7706 = vmatmul.bf16.gmra.mxu0 %v6914
        %v7707 = vpop.f32.mrf.mxu0
        %v7708 = vadd.f32 %v7619, %v7707
        %v7709 = vpop.f32.mrf.mxu0
        %v7710 = vadd.f32 %v7621, %v7709
        %7711 = vmatmul.bf16.gmra.mxu0 %v6923
        %v7712 = vpop.f32.mrf.mxu0
        %v7713 = vadd.f32 %v7624, %v7712
        %v7714 = vpop.f32.mrf.mxu0
        %v7715 = vadd.f32 %v7626, %v7714
        %7716 = vmatmul.bf16.gmra.mxu0 %v6932
        %v7717 = vpop.f32.mrf.mxu0
        %v7718 = vadd.f32 %v7629, %v7717
        %v7719 = vpop.f32.mrf.mxu0
        %v7720 = vadd.f32 %v7631, %v7719
        %7721 = vmatmul.bf16.gmra.mxu0 %v6941
        %v7722 = vpop.f32.mrf.mxu0
        %v7723 = vadd.f32 %v7634, %v7722
        %v7724 = vpop.f32.mrf.mxu0
        %v7725 = vadd.f32 %v7636, %v7724
        %7726 = vmatmul.bf16.gmra.mxu0 %v6950
        %v7727 = vpop.f32.mrf.mxu0
        %v7728 = vadd.f32 %v7639, %v7727
        %v7729 = vpop.f32.mrf.mxu0
        %v7730 = vadd.f32 %v7641, %v7729
        %7731 = vmatmul.bf16.gmra.mxu0 %v6959
        %v7732 = vpop.f32.mrf.mxu0
        %v7733 = vadd.f32 %v7644, %v7732
        %v7734 = vpop.f32.mrf.mxu0
        %v7735 = vadd.f32 %v7646, %v7734
        %7736 = vmatmul.bf16.gmra.mxu0 %v6968
        %v7737 = vpop.f32.mrf.mxu0
        %v7738 = vadd.f32 %v7649, %v7737
        %v7739 = vpop.f32.mrf.mxu0
        %v7740 = vadd.f32 %v7651, %v7739
        %7741 = vmatmul.bf16.gmra.mxu0 %v6977
        %v7742 = vpop.f32.mrf.mxu0
        %v7743 = vadd.f32 %v7654, %v7742
        %v7744 = vpop.f32.mrf.mxu0
        %v7745 = vadd.f32 %v7656, %v7744
        %7746 = vmatmul.bf16.gmra.mxu0 %v6986
        %v7747 = vpop.f32.mrf.mxu0
        %v7748 = vadd.f32 %v7659, %v7747
        %v7749 = vpop.f32.mrf.mxu0
        %v7750 = vadd.f32 %v7661, %v7749
        %7751 = vmatmul.bf16.gmra.mxu0 %v6995
        %v7752 = vpop.f32.mrf.mxu0
        %v7753 = vadd.f32 %v7664, %v7752
        %v7754 = vpop.f32.mrf.mxu0
        %v7755 = vadd.f32 %v7666, %v7754
        %7756 = vdwg.mxu0
        %7757 = vmatpush.bf16.msra.mxu0 %v7458
        %7758 = vmatpush.bf16.msra.mxu0 %v7457
        %7759 = vmatpush.bf16.msra.mxu0 %v7456
        %7760 = vmatpush.bf16.msra.mxu0 %v7455
        %7761 = vmatpush.bf16.msra.mxu0 %v7454
        %7762 = vmatpush.bf16.msra.mxu0 %v7453
        %7763 = vmatpush.bf16.msra.mxu0 %v7452
        %7764 = vmatpush.bf16.msra.mxu0 %v7451
        %7765 = vmatmul.bf16.gmra.mxu0 %v6861
        %v7766 = vpop.f32.mrf.mxu0
        %v7767 = vadd.f32 %v7678, %v7766
        %v7768 = vpop.f32.mrf.mxu0
        %v7769 = vadd.f32 %v7680, %v7768
        %7770 = vmatmul.bf16.gmra.mxu0 %v6870
        %v7771 = vpop.f32.mrf.mxu0
        %v7772 = vadd.f32 %v7683, %v7771
        %v7773 = vpop.f32.mrf.mxu0
        %v7774 = vadd.f32 %v7685, %v7773
        %7775 = vmatmul.bf16.gmra.mxu0 %v6879
        %v7776 = vpop.f32.mrf.mxu0
        %v7777 = vadd.f32 %v7688, %v7776
        %v7778 = vpop.f32.mrf.mxu0
        %v7779 = vadd.f32 %v7690, %v7778
        %7780 = vmatmul.bf16.gmra.mxu0 %v6888
        %v7781 = vpop.f32.mrf.mxu0
        %v7782 = vadd.f32 %v7693, %v7781
        %v7783 = vpop.f32.mrf.mxu0
        %v7784 = vadd.f32 %v7695, %v7783
        %7785 = vmatmul.bf16.gmra.mxu0 %v6897
        %v7786 = vpop.f32.mrf.mxu0
        %v7787 = vadd.f32 %v7698, %v7786
        %v7788 = vpop.f32.mrf.mxu0
        %v7789 = vadd.f32 %v7700, %v7788
        %7790 = vmatmul.bf16.gmra.mxu0 %v6906
        %v7791 = vpop.f32.mrf.mxu0
        %v7792 = vadd.f32 %v7703, %v7791
        %v7793 = vpop.f32.mrf.mxu0
        %v7794 = vadd.f32 %v7705, %v7793
        %7795 = vmatmul.bf16.gmra.mxu0 %v6915
        %v7796 = vpop.f32.mrf.mxu0
        %v7797 = vadd.f32 %v7708, %v7796
        %v7798 = vpop.f32.mrf.mxu0
        %v7799 = vadd.f32 %v7710, %v7798
        %7800 = vmatmul.bf16.gmra.mxu0 %v6924
        %v7801 = vpop.f32.mrf.mxu0
        %v7802 = vadd.f32 %v7713, %v7801
        %v7803 = vpop.f32.mrf.mxu0
        %v7804 = vadd.f32 %v7715, %v7803
        %7805 = vmatmul.bf16.gmra.mxu0 %v6933
        %v7806 = vpop.f32.mrf.mxu0
        %v7807 = vadd.f32 %v7718, %v7806
        %v7808 = vpop.f32.mrf.mxu0
        %v7809 = vadd.f32 %v7720, %v7808
        %7810 = vmatmul.bf16.gmra.mxu0 %v6942
        %v7811 = vpop.f32.mrf.mxu0
        %v7812 = vadd.f32 %v7723, %v7811
        %v7813 = vpop.f32.mrf.mxu0
        %v7814 = vadd.f32 %v7725, %v7813
        %7815 = vmatmul.bf16.gmra.mxu0 %v6951
        %v7816 = vpop.f32.mrf.mxu0
        %v7817 = vadd.f32 %v7728, %v7816
        %v7818 = vpop.f32.mrf.mxu0
        %v7819 = vadd.f32 %v7730, %v7818
        %7820 = vmatmul.bf16.gmra.mxu0 %v6960
        %v7821 = vpop.f32.mrf.mxu0
        %v7822 = vadd.f32 %v7733, %v7821
        %v7823 = vpop.f32.mrf.mxu0
        %v7824 = vadd.f32 %v7735, %v7823
        %7825 = vmatmul.bf16.gmra.mxu0 %v6969
        %v7826 = vpop.f32.mrf.mxu0
        %v7827 = vadd.f32 %v7738, %v7826
        %v7828 = vpop.f32.mrf.mxu0
        %v7829 = vadd.f32 %v7740, %v7828
        %7830 = vmatmul.bf16.gmra.mxu0 %v6978
        %v7831 = vpop.f32.mrf.mxu0
        %v7832 = vadd.f32 %v7743, %v7831
        %v7833 = vpop.f32.mrf.mxu0
        %v7834 = vadd.f32 %v7745, %v7833
        %7835 = vmatmul.bf16.gmra.mxu0 %v6987
        %v7836 = vpop.f32.mrf.mxu0
        %v7837 = vadd.f32 %v7748, %v7836
        %v7838 = vpop.f32.mrf.mxu0
        %v7839 = vadd.f32 %v7750, %v7838
        %7840 = vmatmul.bf16.gmra.mxu0 %v6996
        %v7841 = vpop.f32.mrf.mxu0
        %v7842 = vadd.f32 %v7753, %v7841
        %v7843 = vpop.f32.mrf.mxu0
        %v7844 = vadd.f32 %v7755, %v7843
        %7845 = vdwg.mxu0
        %7846 = vmatpush.bf16.msra.mxu0 %v7466
        %7847 = vmatpush.bf16.msra.mxu0 %v7465
        %7848 = vmatpush.bf16.msra.mxu0 %v7464
        %7849 = vmatpush.bf16.msra.mxu0 %v7463
        %7850 = vmatpush.bf16.msra.mxu0 %v7462
        %7851 = vmatpush.bf16.msra.mxu0 %v7461
        %7852 = vmatpush.bf16.msra.mxu0 %v7460
        %7853 = vmatpush.bf16.msra.mxu0 %v7459
        %7854 = vmatmul.bf16.gmra.mxu0 %v6862
        %v7855 = vpop.f32.mrf.mxu0
        %v7856 = vadd.f32 %v7767, %v7855
        %v7857 = vpop.f32.mrf.mxu0
        %v7858 = vadd.f32 %v7769, %v7857
        %7859 = vmatmul.bf16.gmra.mxu0 %v6871
        %v7860 = vpop.f32.mrf.mxu0
        %v7861 = vadd.f32 %v7772, %v7860
        %v7862 = vpop.f32.mrf.mxu0
        %v7863 = vadd.f32 %v7774, %v7862
        %7864 = vmatmul.bf16.gmra.mxu0 %v6880
        %v7865 = vpop.f32.mrf.mxu0
        %v7866 = vadd.f32 %v7777, %v7865
        %v7867 = vpop.f32.mrf.mxu0
        %v7868 = vadd.f32 %v7779, %v7867
        %7869 = vmatmul.bf16.gmra.mxu0 %v6889
        %v7870 = vpop.f32.mrf.mxu0
        %v7871 = vadd.f32 %v7782, %v7870
        %v7872 = vpop.f32.mrf.mxu0
        %v7873 = vadd.f32 %v7784, %v7872
        %7874 = vmatmul.bf16.gmra.mxu0 %v6898
        %v7875 = vpop.f32.mrf.mxu0
        %v7876 = vadd.f32 %v7787, %v7875
        %v7877 = vpop.f32.mrf.mxu0
        %v7878 = vadd.f32 %v7789, %v7877
        %7879 = vmatmul.bf16.gmra.mxu0 %v6907
        %v7880 = vpop.f32.mrf.mxu0
        %v7881 = vadd.f32 %v7792, %v7880
        %v7882 = vpop.f32.mrf.mxu0
        %v7883 = vadd.f32 %v7794, %v7882
        %7884 = vmatmul.bf16.gmra.mxu0 %v6916
        %v7885 = vpop.f32.mrf.mxu0
        %v7886 = vadd.f32 %v7797, %v7885
        %v7887 = vpop.f32.mrf.mxu0
        %v7888 = vadd.f32 %v7799, %v7887
        %7889 = vmatmul.bf16.gmra.mxu0 %v6925
        %v7890 = vpop.f32.mrf.mxu0
        %v7891 = vadd.f32 %v7802, %v7890
        %v7892 = vpop.f32.mrf.mxu0
        %v7893 = vadd.f32 %v7804, %v7892
        %7894 = vmatmul.bf16.gmra.mxu0 %v6934
        %v7895 = vpop.f32.mrf.mxu0
        %v7896 = vadd.f32 %v7807, %v7895
        %v7897 = vpop.f32.mrf.mxu0
        %v7898 = vadd.f32 %v7809, %v7897
        %7899 = vmatmul.bf16.gmra.mxu0 %v6943
        %v7900 = vpop.f32.mrf.mxu0
        %v7901 = vadd.f32 %v7812, %v7900
        %v7902 = vpop.f32.mrf.mxu0
        %v7903 = vadd.f32 %v7814, %v7902
        %7904 = vmatmul.bf16.gmra.mxu0 %v6952
        %v7905 = vpop.f32.mrf.mxu0
        %v7906 = vadd.f32 %v7817, %v7905
        %v7907 = vpop.f32.mrf.mxu0
        %v7908 = vadd.f32 %v7819, %v7907
        %7909 = vmatmul.bf16.gmra.mxu0 %v6961
        %v7910 = vpop.f32.mrf.mxu0
        %v7911 = vadd.f32 %v7822, %v7910
        %v7912 = vpop.f32.mrf.mxu0
        %v7913 = vadd.f32 %v7824, %v7912
        %7914 = vmatmul.bf16.gmra.mxu0 %v6970
        %v7915 = vpop.f32.mrf.mxu0
        %v7916 = vadd.f32 %v7827, %v7915
        %v7917 = vpop.f32.mrf.mxu0
        %v7918 = vadd.f32 %v7829, %v7917
        %7919 = vmatmul.bf16.gmra.mxu0 %v6979
        %v7920 = vpop.f32.mrf.mxu0
        %v7921 = vadd.f32 %v7832, %v7920
        %v7922 = vpop.f32.mrf.mxu0
        %v7923 = vadd.f32 %v7834, %v7922
        %7924 = vmatmul.bf16.gmra.mxu0 %v6988
        %v7925 = vpop.f32.mrf.mxu0
        %v7926 = vadd.f32 %v7837, %v7925
        %v7927 = vpop.f32.mrf.mxu0
        %v7928 = vadd.f32 %v7839, %v7927
        %7929 = vmatmul.bf16.gmra.mxu0 %v6997
        %v7930 = vpop.f32.mrf.mxu0
        %v7931 = vadd.f32 %v7842, %v7930
        %v7932 = vpop.f32.mrf.mxu0
        %v7933 = vadd.f32 %v7844, %v7932
        %7934 = vdwg.mxu0
        %7935 = vmatpush.bf16.msra.mxu0 %v7474
        %7936 = vmatpush.bf16.msra.mxu0 %v7473
        %7937 = vmatpush.bf16.msra.mxu0 %v7472
        %7938 = vmatpush.bf16.msra.mxu0 %v7471
        %7939 = vmatpush.bf16.msra.mxu0 %v7470
        %7940 = vmatpush.bf16.msra.mxu0 %v7469
        %7941 = vmatpush.bf16.msra.mxu0 %v7468
        %7942 = vmatpush.bf16.msra.mxu0 %v7467
        %7943 = vmatmul.bf16.gmra.mxu0 %v6863
        %v7944 = vpop.f32.mrf.mxu0
        %v7945 = vadd.f32 %v7856, %v7944
        %v7946 = vpop.f32.mrf.mxu0
        %v7947 = vadd.f32 %v7858, %v7946
        %7948 = vmatmul.bf16.gmra.mxu0 %v6872
        %v7949 = vpop.f32.mrf.mxu0
        %v7950 = vadd.f32 %v7861, %v7949
        %v7951 = vpop.f32.mrf.mxu0
        %v7952 = vadd.f32 %v7863, %v7951
        %7953 = vmatmul.bf16.gmra.mxu0 %v6881
        %v7954 = vpop.f32.mrf.mxu0
        %v7955 = vadd.f32 %v7866, %v7954
        %v7956 = vpop.f32.mrf.mxu0
        %v7957 = vadd.f32 %v7868, %v7956
        %7958 = vmatmul.bf16.gmra.mxu0 %v6890
        %v7959 = vpop.f32.mrf.mxu0
        %v7960 = vadd.f32 %v7871, %v7959
        %v7961 = vpop.f32.mrf.mxu0
        %v7962 = vadd.f32 %v7873, %v7961
        %7963 = vmatmul.bf16.gmra.mxu0 %v6899
        %v7964 = vpop.f32.mrf.mxu0
        %v7965 = vadd.f32 %v7876, %v7964
        %v7966 = vpop.f32.mrf.mxu0
        %v7967 = vadd.f32 %v7878, %v7966
        %7968 = vmatmul.bf16.gmra.mxu0 %v6908
        %v7969 = vpop.f32.mrf.mxu0
        %v7970 = vadd.f32 %v7881, %v7969
        %v7971 = vpop.f32.mrf.mxu0
        %v7972 = vadd.f32 %v7883, %v7971
        %7973 = vmatmul.bf16.gmra.mxu0 %v6917
        %v7974 = vpop.f32.mrf.mxu0
        %v7975 = vadd.f32 %v7886, %v7974
        %v7976 = vpop.f32.mrf.mxu0
        %v7977 = vadd.f32 %v7888, %v7976
        %7978 = vmatmul.bf16.gmra.mxu0 %v6926
        %v7979 = vpop.f32.mrf.mxu0
        %v7980 = vadd.f32 %v7891, %v7979
        %v7981 = vpop.f32.mrf.mxu0
        %v7982 = vadd.f32 %v7893, %v7981
        %7983 = vmatmul.bf16.gmra.mxu0 %v6935
        %v7984 = vpop.f32.mrf.mxu0
        %v7985 = vadd.f32 %v7896, %v7984
        %v7986 = vpop.f32.mrf.mxu0
        %v7987 = vadd.f32 %v7898, %v7986
        %7988 = vmatmul.bf16.gmra.mxu0 %v6944
        %v7989 = vpop.f32.mrf.mxu0
        %v7990 = vadd.f32 %v7901, %v7989
        %v7991 = vpop.f32.mrf.mxu0
        %v7992 = vadd.f32 %v7903, %v7991
        %7993 = vmatmul.bf16.gmra.mxu0 %v6953
        %v7994 = vpop.f32.mrf.mxu0
        %v7995 = vadd.f32 %v7906, %v7994
        %v7996 = vpop.f32.mrf.mxu0
        %v7997 = vadd.f32 %v7908, %v7996
        %7998 = vmatmul.bf16.gmra.mxu0 %v6962
        %v7999 = vpop.f32.mrf.mxu0
        %v8000 = vadd.f32 %v7911, %v7999
        %v8001 = vpop.f32.mrf.mxu0
        %v8002 = vadd.f32 %v7913, %v8001
        %8003 = vmatmul.bf16.gmra.mxu0 %v6971
        %v8004 = vpop.f32.mrf.mxu0
        %v8005 = vadd.f32 %v7916, %v8004
        %v8006 = vpop.f32.mrf.mxu0
        %v8007 = vadd.f32 %v7918, %v8006
        %8008 = vmatmul.bf16.gmra.mxu0 %v6980
        %v8009 = vpop.f32.mrf.mxu0
        %v8010 = vadd.f32 %v7921, %v8009
        %v8011 = vpop.f32.mrf.mxu0
        %v8012 = vadd.f32 %v7923, %v8011
        %8013 = vmatmul.bf16.gmra.mxu0 %v6989
        %v8014 = vpop.f32.mrf.mxu0
        %v8015 = vadd.f32 %v7926, %v8014
        %v8016 = vpop.f32.mrf.mxu0
        %v8017 = vadd.f32 %v7928, %v8016
        %8018 = vmatmul.bf16.gmra.mxu0 %v6998
        %v8019 = vpop.f32.mrf.mxu0
        %v8020 = vadd.f32 %v7931, %v8019
        %v8021 = vpop.f32.mrf.mxu0
        %v8022 = vadd.f32 %v7933, %v8021
        %8023 = vdwg.mxu0
        %8024 = vmatpush.bf16.msra.mxu0 %v7482
        %8025 = vmatpush.bf16.msra.mxu0 %v7481
        %8026 = vmatpush.bf16.msra.mxu0 %v7480
        %8027 = vmatpush.bf16.msra.mxu0 %v7479
        %8028 = vmatpush.bf16.msra.mxu0 %v7478
        %8029 = vmatpush.bf16.msra.mxu0 %v7477
        %8030 = vmatpush.bf16.msra.mxu0 %v7476
        %8031 = vmatpush.bf16.msra.mxu0 %v7475
        %8032 = vmatmul.bf16.gmra.mxu0 %v6864
        %v8033 = vpop.f32.mrf.mxu0
        %v8034 = vadd.f32 %v7945, %v8033
        %v8035 = vpop.f32.mrf.mxu0
        %v8036 = vadd.f32 %v7947, %v8035
        %8037 = vmatmul.bf16.gmra.mxu0 %v6873
        %v8038 = vpop.f32.mrf.mxu0
        %v8039 = vadd.f32 %v7950, %v8038
        %v8040 = vpop.f32.mrf.mxu0
        %v8041 = vadd.f32 %v7952, %v8040
        %8042 = vmatmul.bf16.gmra.mxu0 %v6882
        %v8043 = vpop.f32.mrf.mxu0
        %v8044 = vadd.f32 %v7955, %v8043
        %v8045 = vpop.f32.mrf.mxu0
        %v8046 = vadd.f32 %v7957, %v8045
        %8047 = vmatmul.bf16.gmra.mxu0 %v6891
        %v8048 = vpop.f32.mrf.mxu0
        %v8049 = vadd.f32 %v7960, %v8048
        %v8050 = vpop.f32.mrf.mxu0
        %v8051 = vadd.f32 %v7962, %v8050
        %8052 = vmatmul.bf16.gmra.mxu0 %v6900
        %v8053 = vpop.f32.mrf.mxu0
        %v8054 = vadd.f32 %v7965, %v8053
        %v8055 = vpop.f32.mrf.mxu0
        %v8056 = vadd.f32 %v7967, %v8055
        %8057 = vmatmul.bf16.gmra.mxu0 %v6909
        %v8058 = vpop.f32.mrf.mxu0
        %v8059 = vadd.f32 %v7970, %v8058
        %v8060 = vpop.f32.mrf.mxu0
        %v8061 = vadd.f32 %v7972, %v8060
        %8062 = vmatmul.bf16.gmra.mxu0 %v6918
        %v8063 = vpop.f32.mrf.mxu0
        %v8064 = vadd.f32 %v7975, %v8063
        %v8065 = vpop.f32.mrf.mxu0
        %v8066 = vadd.f32 %v7977, %v8065
        %8067 = vmatmul.bf16.gmra.mxu0 %v6927
        %v8068 = vpop.f32.mrf.mxu0
        %v8069 = vadd.f32 %v7980, %v8068
        %v8070 = vpop.f32.mrf.mxu0
        %v8071 = vadd.f32 %v7982, %v8070
        %8072 = vmatmul.bf16.gmra.mxu0 %v6936
        %v8073 = vpop.f32.mrf.mxu0
        %v8074 = vadd.f32 %v7985, %v8073
        %v8075 = vpop.f32.mrf.mxu0
        %v8076 = vadd.f32 %v7987, %v8075
        %8077 = vmatmul.bf16.gmra.mxu0 %v6945
        %v8078 = vpop.f32.mrf.mxu0
        %v8079 = vadd.f32 %v7990, %v8078
        %v8080 = vpop.f32.mrf.mxu0
        %v8081 = vadd.f32 %v7992, %v8080
        %8082 = vmatmul.bf16.gmra.mxu0 %v6954
        %v8083 = vpop.f32.mrf.mxu0
        %v8084 = vadd.f32 %v7995, %v8083
        %v8085 = vpop.f32.mrf.mxu0
        %v8086 = vadd.f32 %v7997, %v8085
        %8087 = vmatmul.bf16.gmra.mxu0 %v6963
        %v8088 = vpop.f32.mrf.mxu0
        %v8089 = vadd.f32 %v8000, %v8088
        %v8090 = vpop.f32.mrf.mxu0
        %v8091 = vadd.f32 %v8002, %v8090
        %8092 = vmatmul.bf16.gmra.mxu0 %v6972
        %v8093 = vpop.f32.mrf.mxu0
        %v8094 = vadd.f32 %v8005, %v8093
        %v8095 = vpop.f32.mrf.mxu0
        %v8096 = vadd.f32 %v8007, %v8095
        %8097 = vmatmul.bf16.gmra.mxu0 %v6981
        %v8098 = vpop.f32.mrf.mxu0
        %v8099 = vadd.f32 %v8010, %v8098
        %v8100 = vpop.f32.mrf.mxu0
        %v8101 = vadd.f32 %v8012, %v8100
        %8102 = vmatmul.bf16.gmra.mxu0 %v6990
        %v8103 = vpop.f32.mrf.mxu0
        %v8104 = vadd.f32 %v8015, %v8103
        %v8105 = vpop.f32.mrf.mxu0
        %v8106 = vadd.f32 %v8017, %v8105
        %8107 = vmatmul.bf16.gmra.mxu0 %v6999
        %v8108 = vpop.f32.mrf.mxu0
        %v8109 = vadd.f32 %v8020, %v8108
        %v8110 = vpop.f32.mrf.mxu0
        %v8111 = vadd.f32 %v8022, %v8110
        %8112 = vdwg.mxu0
        %8113 = vmatpush.bf16.msra.mxu0 %v7490
        %8114 = vmatpush.bf16.msra.mxu0 %v7489
        %8115 = vmatpush.bf16.msra.mxu0 %v7488
        %8116 = vmatpush.bf16.msra.mxu0 %v7487
        %8117 = vmatpush.bf16.msra.mxu0 %v7486
        %8118 = vmatpush.bf16.msra.mxu0 %v7485
        %8119 = vmatpush.bf16.msra.mxu0 %v7484
        %8120 = vmatpush.bf16.msra.mxu0 %v7483
        %8121 = vmatmul.bf16.gmra.mxu0 %v6865
        %v8122 = vpop.f32.mrf.mxu0
        %v8123 = vadd.f32 %v8034, %v8122
        %v8124 = vpop.f32.mrf.mxu0
        %v8125 = vadd.f32 %v8036, %v8124
        %8126 = vmatmul.bf16.gmra.mxu0 %v6874
        %v8127 = vpop.f32.mrf.mxu0
        %v8128 = vadd.f32 %v8039, %v8127
        %v8129 = vpop.f32.mrf.mxu0
        %v8130 = vadd.f32 %v8041, %v8129
        %8131 = vmatmul.bf16.gmra.mxu0 %v6883
        %v8132 = vpop.f32.mrf.mxu0
        %v8133 = vadd.f32 %v8044, %v8132
        %v8134 = vpop.f32.mrf.mxu0
        %v8135 = vadd.f32 %v8046, %v8134
        %8136 = vmatmul.bf16.gmra.mxu0 %v6892
        %v8137 = vpop.f32.mrf.mxu0
        %v8138 = vadd.f32 %v8049, %v8137
        %v8139 = vpop.f32.mrf.mxu0
        %v8140 = vadd.f32 %v8051, %v8139
        %8141 = vmatmul.bf16.gmra.mxu0 %v6901
        %v8142 = vpop.f32.mrf.mxu0
        %v8143 = vadd.f32 %v8054, %v8142
        %v8144 = vpop.f32.mrf.mxu0
        %v8145 = vadd.f32 %v8056, %v8144
        %8146 = vmatmul.bf16.gmra.mxu0 %v6910
        %v8147 = vpop.f32.mrf.mxu0
        %v8148 = vadd.f32 %v8059, %v8147
        %v8149 = vpop.f32.mrf.mxu0
        %v8150 = vadd.f32 %v8061, %v8149
        %8151 = vmatmul.bf16.gmra.mxu0 %v6919
        %v8152 = vpop.f32.mrf.mxu0
        %v8153 = vadd.f32 %v8064, %v8152
        %v8154 = vpop.f32.mrf.mxu0
        %v8155 = vadd.f32 %v8066, %v8154
        %8156 = vmatmul.bf16.gmra.mxu0 %v6928
        %v8157 = vpop.f32.mrf.mxu0
        %v8158 = vadd.f32 %v8069, %v8157
        %v8159 = vpop.f32.mrf.mxu0
        %v8160 = vadd.f32 %v8071, %v8159
        %8161 = vmatmul.bf16.gmra.mxu0 %v6937
        %v8162 = vpop.f32.mrf.mxu0
        %v8163 = vadd.f32 %v8074, %v8162
        %v8164 = vpop.f32.mrf.mxu0
        %v8165 = vadd.f32 %v8076, %v8164
        %8166 = vmatmul.bf16.gmra.mxu0 %v6946
        %v8167 = vpop.f32.mrf.mxu0
        %v8168 = vadd.f32 %v8079, %v8167
        %v8169 = vpop.f32.mrf.mxu0
        %v8170 = vadd.f32 %v8081, %v8169
        %8171 = vmatmul.bf16.gmra.mxu0 %v6955
        %v8172 = vpop.f32.mrf.mxu0
        %v8173 = vadd.f32 %v8084, %v8172
        %v8174 = vpop.f32.mrf.mxu0
        %v8175 = vadd.f32 %v8086, %v8174
        %8176 = vmatmul.bf16.gmra.mxu0 %v6964
        %v8177 = vpop.f32.mrf.mxu0
        %v8178 = vadd.f32 %v8089, %v8177
        %v8179 = vpop.f32.mrf.mxu0
        %v8180 = vadd.f32 %v8091, %v8179
        %8181 = vmatmul.bf16.gmra.mxu0 %v6973
        %v8182 = vpop.f32.mrf.mxu0
        %v8183 = vadd.f32 %v8094, %v8182
        %v8184 = vpop.f32.mrf.mxu0
        %v8185 = vadd.f32 %v8096, %v8184
        %8186 = vmatmul.bf16.gmra.mxu0 %v6982
        %v8187 = vpop.f32.mrf.mxu0
        %v8188 = vadd.f32 %v8099, %v8187
        %v8189 = vpop.f32.mrf.mxu0
        %v8190 = vadd.f32 %v8101, %v8189
        %8191 = vmatmul.bf16.gmra.mxu0 %v6991
        %v8192 = vpop.f32.mrf.mxu0
        %v8193 = vadd.f32 %v8104, %v8192
        %v8194 = vpop.f32.mrf.mxu0
        %v8195 = vadd.f32 %v8106, %v8194
        %8196 = vmatmul.bf16.gmra.mxu0 %v7000
        %v8197 = vpop.f32.mrf.mxu0
        %v8198 = vadd.f32 %v8109, %v8197
        %v8199 = vpop.f32.mrf.mxu0
        %v8200 = vadd.f32 %v8111, %v8199
        %8201 = vdwg.mxu0
        %8202 = vmatpush.bf16.msra.mxu0 %v7498
        %8203 = vmatpush.bf16.msra.mxu0 %v7497
        %8204 = vmatpush.bf16.msra.mxu0 %v7496
        %8205 = vmatpush.bf16.msra.mxu0 %v7495
        %8206 = vmatpush.bf16.msra.mxu0 %v7494
        %8207 = vmatpush.bf16.msra.mxu0 %v7493
        %8208 = vmatpush.bf16.msra.mxu0 %v7492
        %8209 = vmatpush.bf16.msra.mxu0 %v7491
        %8210 = vmatmul.bf16.gmra.mxu0 %v6866
        %v8211 = vpop.f32.mrf.mxu0
        %v8212 = vadd.f32 %v8123, %v8211
        %v8213 = vpop.f32.mrf.mxu0
        %v8214 = vadd.f32 %v8125, %v8213
        %8215 = vmatmul.bf16.gmra.mxu0 %v6875
        %v8216 = vpop.f32.mrf.mxu0
        %v8217 = vadd.f32 %v8128, %v8216
        %v8218 = vpop.f32.mrf.mxu0
        %v8219 = vadd.f32 %v8130, %v8218
        %8220 = vmatmul.bf16.gmra.mxu0 %v6884
        %v8221 = vpop.f32.mrf.mxu0
        %v8222 = vadd.f32 %v8133, %v8221
        %v8223 = vpop.f32.mrf.mxu0
        %v8224 = vadd.f32 %v8135, %v8223
        %8225 = vmatmul.bf16.gmra.mxu0 %v6893
        %v8226 = vpop.f32.mrf.mxu0
        %v8227 = vadd.f32 %v8138, %v8226
        %v8228 = vpop.f32.mrf.mxu0
        %v8229 = vadd.f32 %v8140, %v8228
        %8230 = vmatmul.bf16.gmra.mxu0 %v6902
        %v8231 = vpop.f32.mrf.mxu0
        %v8232 = vadd.f32 %v8143, %v8231
        %v8233 = vpop.f32.mrf.mxu0
        %v8234 = vadd.f32 %v8145, %v8233
        %8235 = vmatmul.bf16.gmra.mxu0 %v6911
        %v8236 = vpop.f32.mrf.mxu0
        %v8237 = vadd.f32 %v8148, %v8236
        %v8238 = vpop.f32.mrf.mxu0
        %v8239 = vadd.f32 %v8150, %v8238
        %8240 = vmatmul.bf16.gmra.mxu0 %v6920
        %v8241 = vpop.f32.mrf.mxu0
        %v8242 = vadd.f32 %v8153, %v8241
        %v8243 = vpop.f32.mrf.mxu0
        %v8244 = vadd.f32 %v8155, %v8243
        %8245 = vmatmul.bf16.gmra.mxu0 %v6929
        %v8246 = vpop.f32.mrf.mxu0
        %v8247 = vadd.f32 %v8158, %v8246
        %v8248 = vpop.f32.mrf.mxu0
        %v8249 = vadd.f32 %v8160, %v8248
        %8250 = vmatmul.bf16.gmra.mxu0 %v6938
        %v8251 = vpop.f32.mrf.mxu0
        %v8252 = vadd.f32 %v8163, %v8251
        %v8253 = vpop.f32.mrf.mxu0
        %v8254 = vadd.f32 %v8165, %v8253
        %8255 = vmatmul.bf16.gmra.mxu0 %v6947
        %v8256 = vpop.f32.mrf.mxu0
        %v8257 = vadd.f32 %v8168, %v8256
        %v8258 = vpop.f32.mrf.mxu0
        %v8259 = vadd.f32 %v8170, %v8258
        %8260 = vmatmul.bf16.gmra.mxu0 %v6956
        %v8261 = vpop.f32.mrf.mxu0
        %v8262 = vadd.f32 %v8173, %v8261
        %v8263 = vpop.f32.mrf.mxu0
        %v8264 = vadd.f32 %v8175, %v8263
        %8265 = vmatmul.bf16.gmra.mxu0 %v6965
        %v8266 = vpop.f32.mrf.mxu0
        %v8267 = vadd.f32 %v8178, %v8266
        %v8268 = vpop.f32.mrf.mxu0
        %v8269 = vadd.f32 %v8180, %v8268
        %8270 = vmatmul.bf16.gmra.mxu0 %v6974
        %v8271 = vpop.f32.mrf.mxu0
        %v8272 = vadd.f32 %v8183, %v8271
        %v8273 = vpop.f32.mrf.mxu0
        %v8274 = vadd.f32 %v8185, %v8273
        %8275 = vmatmul.bf16.gmra.mxu0 %v6983
        %v8276 = vpop.f32.mrf.mxu0
        %v8277 = vadd.f32 %v8188, %v8276
        %v8278 = vpop.f32.mrf.mxu0
        %v8279 = vadd.f32 %v8190, %v8278
        %8280 = vmatmul.bf16.gmra.mxu0 %v6992
        %v8281 = vpop.f32.mrf.mxu0
        %v8282 = vadd.f32 %v8193, %v8281
        %v8283 = vpop.f32.mrf.mxu0
        %v8284 = vadd.f32 %v8195, %v8283
        %8285 = vmatmul.bf16.gmra.mxu0 %v7001
        %v8286 = vpop.f32.mrf.mxu0
        %v8287 = vadd.f32 %v8198, %v8286
        %v8288 = vpop.f32.mrf.mxu0
        %v8289 = vadd.f32 %v8200, %v8288
        %8290 = vdwg.mxu0
        %8291 = vmatpush.bf16.msra.mxu0 %v7506
        %8292 = vmatpush.bf16.msra.mxu0 %v7505
        %8293 = vmatpush.bf16.msra.mxu0 %v7504
        %8294 = vmatpush.bf16.msra.mxu0 %v7503
        %8295 = vmatpush.bf16.msra.mxu0 %v7502
        %8296 = vmatpush.bf16.msra.mxu0 %v7501
        %8297 = vmatpush.bf16.msra.mxu0 %v7500
        %8298 = vmatpush.bf16.msra.mxu0 %v7499
        %8299 = vmatmul.bf16.gmra.mxu0 %v6867
        %v8300 = vpop.f32.mrf.mxu0
        %v8301 = vadd.f32 %v8212, %v8300
        %v8302 = vpop.f32.mrf.mxu0
        %v8303 = vadd.f32 %v8214, %v8302
        %8304 = vmatmul.bf16.gmra.mxu0 %v6876
        %v8305 = vpop.f32.mrf.mxu0
        %v8306 = vadd.f32 %v8217, %v8305
        %v8307 = vpop.f32.mrf.mxu0
        %v8308 = vadd.f32 %v8219, %v8307
        %8309 = vmatmul.bf16.gmra.mxu0 %v6885
        %v8310 = vpop.f32.mrf.mxu0
        %v8311 = vadd.f32 %v8222, %v8310
        %v8312 = vpop.f32.mrf.mxu0
        %v8313 = vadd.f32 %v8224, %v8312
        %8314 = vmatmul.bf16.gmra.mxu0 %v6894
        %v8315 = vpop.f32.mrf.mxu0
        %v8316 = vadd.f32 %v8227, %v8315
        %v8317 = vpop.f32.mrf.mxu0
        %v8318 = vadd.f32 %v8229, %v8317
        %8319 = vmatmul.bf16.gmra.mxu0 %v6903
        %v8320 = vpop.f32.mrf.mxu0
        %v8321 = vadd.f32 %v8232, %v8320
        %v8322 = vpop.f32.mrf.mxu0
        %v8323 = vadd.f32 %v8234, %v8322
        %8324 = vmatmul.bf16.gmra.mxu0 %v6912
        %v8325 = vpop.f32.mrf.mxu0
        %v8326 = vadd.f32 %v8237, %v8325
        %v8327 = vpop.f32.mrf.mxu0
        %v8328 = vadd.f32 %v8239, %v8327
        %8329 = vmatmul.bf16.gmra.mxu0 %v6921
        %v8330 = vpop.f32.mrf.mxu0
        %v8331 = vadd.f32 %v8242, %v8330
        %v8332 = vpop.f32.mrf.mxu0
        %v8333 = vadd.f32 %v8244, %v8332
        %8334 = vmatmul.bf16.gmra.mxu0 %v6930
        %v8335 = vpop.f32.mrf.mxu0
        %v8336 = vadd.f32 %v8247, %v8335
        %v8337 = vpop.f32.mrf.mxu0
        %v8338 = vadd.f32 %v8249, %v8337
        %8339 = vmatmul.bf16.gmra.mxu0 %v6939
        %v8340 = vpop.f32.mrf.mxu0
        %v8341 = vadd.f32 %v8252, %v8340
        %v8342 = vpop.f32.mrf.mxu0
        %v8343 = vadd.f32 %v8254, %v8342
        %8344 = vmatmul.bf16.gmra.mxu0 %v6948
        %v8345 = vpop.f32.mrf.mxu0
        %v8346 = vadd.f32 %v8257, %v8345
        %v8347 = vpop.f32.mrf.mxu0
        %v8348 = vadd.f32 %v8259, %v8347
        %8349 = vmatmul.bf16.gmra.mxu0 %v6957
        %v8350 = vpop.f32.mrf.mxu0
        %v8351 = vadd.f32 %v8262, %v8350
        %v8352 = vpop.f32.mrf.mxu0
        %v8353 = vadd.f32 %v8264, %v8352
        %8354 = vmatmul.bf16.gmra.mxu0 %v6966
        %v8355 = vpop.f32.mrf.mxu0
        %v8356 = vadd.f32 %v8267, %v8355
        %v8357 = vpop.f32.mrf.mxu0
        %v8358 = vadd.f32 %v8269, %v8357
        %8359 = vmatmul.bf16.gmra.mxu0 %v6975
        %v8360 = vpop.f32.mrf.mxu0
        %v8361 = vadd.f32 %v8272, %v8360
        %v8362 = vpop.f32.mrf.mxu0
        %v8363 = vadd.f32 %v8274, %v8362
        %8364 = vmatmul.bf16.gmra.mxu0 %v6984
        %v8365 = vpop.f32.mrf.mxu0
        %v8366 = vadd.f32 %v8277, %v8365
        %v8367 = vpop.f32.mrf.mxu0
        %v8368 = vadd.f32 %v8279, %v8367
        %8369 = vmatmul.bf16.gmra.mxu0 %v6993
        %v8370 = vpop.f32.mrf.mxu0
        %v8371 = vadd.f32 %v8282, %v8370
        %v8372 = vpop.f32.mrf.mxu0
        %v8373 = vadd.f32 %v8284, %v8372
        %8374 = vmatmul.bf16.gmra.mxu0 %v7002
        %v8375 = vpop.f32.mrf.mxu0
        %v8376 = vadd.f32 %v8287, %v8375
        %v8377 = vpop.f32.mrf.mxu0
        %v8378 = vadd.f32 %v8289, %v8377
        %8379 = vdwg.mxu0
        %v8380 = vld [vmem:[#allocation4] sm:$0xf]
        %v8381 = vld [vmem:[#allocation4 + $0x4] sm:$0xf]
        %v8382 = vld [vmem:[#allocation4 + $0x8] sm:$0xf]
        %v8383 = vld [vmem:[#allocation4 + $0xc] sm:$0xf]
        %v8384 = vld [vmem:[#allocation4 + $0x10] sm:$0xf]
        %v8385 = vld [vmem:[#allocation4 + $0x14] sm:$0xf]
        %v8386 = vld [vmem:[#allocation4 + $0x18] sm:$0xf]
        %v8387 = vld [vmem:[#allocation4 + $0x1c] sm:$0xf]
        %v8388 = vld [vmem:[#allocation4 + $0x20] sm:$0xf]
        %v8389 = vld [vmem:[#allocation4 + $0x24] sm:$0xf]
        %v8390 = vld [vmem:[#allocation4 + $0x28] sm:$0xf]
        %v8391 = vld [vmem:[#allocation4 + $0x2c] sm:$0xf]
        %v8392 = vld [vmem:[#allocation4 + $0x30] sm:$0xf]
        %v8393 = vld [vmem:[#allocation4 + $0x34] sm:$0xf]
        %v8394 = vld [vmem:[#allocation4 + $0x38] sm:$0xf]
        %v8395 = vld [vmem:[#allocation4 + $0x3c] sm:$0xf]
        %v8396 = vld [vmem:[#allocation4 + $0x40] sm:$0xf]
        %v8397 = vld [vmem:[#allocation4 + $0x44] sm:$0xf]
        %v8398 = vld [vmem:[#allocation4 + $0x48] sm:$0xf]
        %v8399 = vld [vmem:[#allocation4 + $0x4c] sm:$0xf]
        %v8400 = vld [vmem:[#allocation4 + $0x50] sm:$0xf]
        %v8401 = vld [vmem:[#allocation4 + $0x54] sm:$0xf]
        %v8402 = vld [vmem:[#allocation4 + $0x58] sm:$0xf]
        %v8403 = vld [vmem:[#allocation4 + $0x5c] sm:$0xf]
        %v8404 = vld [vmem:[#allocation4 + $0x60] sm:$0xf]
        %v8405 = vld [vmem:[#allocation4 + $0x64] sm:$0xf]
        %v8406 = vld [vmem:[#allocation4 + $0x68] sm:$0xf]
        %v8407 = vld [vmem:[#allocation4 + $0x6c] sm:$0xf]
        %v8408 = vld [vmem:[#allocation4 + $0x70] sm:$0xf]
        %v8409 = vld [vmem:[#allocation4 + $0x74] sm:$0xf]
        %v8410 = vld [vmem:[#allocation4 + $0x78] sm:$0xf]
        %v8411 = vld [vmem:[#allocation4 + $0x7c] sm:$0xf]
        %v8412 = vunpack.c.l.bf16 %v8380
        %v8413 = vunpack.c.l.bf16 %v8381
        %v8414 = vunpack.c.l.bf16 %v8382
        %v8415 = vunpack.c.l.bf16 %v8383
        %v8416 = vunpack.c.l.bf16 %v8384
        %v8417 = vunpack.c.l.bf16 %v8385
        %v8418 = vunpack.c.l.bf16 %v8386
        %v8419 = vunpack.c.l.bf16 %v8387
        %v8420 = vunpack.c.l.bf16 %v8388
        %v8421 = vunpack.c.l.bf16 %v8389
        %v8422 = vunpack.c.l.bf16 %v8390
        %v8423 = vunpack.c.l.bf16 %v8391
        %v8424 = vunpack.c.l.bf16 %v8392
        %v8425 = vunpack.c.l.bf16 %v8393
        %v8426 = vunpack.c.l.bf16 %v8394
        %v8427 = vunpack.c.l.bf16 %v8395
        %v8428 = vunpack.c.l.bf16 %v8396
        %v8429 = vunpack.c.l.bf16 %v8397
        %v8430 = vunpack.c.l.bf16 %v8398
        %v8431 = vunpack.c.l.bf16 %v8399
        %v8432 = vunpack.c.l.bf16 %v8400
        %v8433 = vunpack.c.l.bf16 %v8401
        %v8434 = vunpack.c.l.bf16 %v8402
        %v8435 = vunpack.c.l.bf16 %v8403
        %v8436 = vunpack.c.l.bf16 %v8404
        %v8437 = vunpack.c.l.bf16 %v8405
        %v8438 = vunpack.c.l.bf16 %v8406
        %v8439 = vunpack.c.l.bf16 %v8407
        %v8440 = vunpack.c.l.bf16 %v8408
        %v8441 = vunpack.c.l.bf16 %v8409
        %v8442 = vunpack.c.l.bf16 %v8410
        %v8443 = vunpack.c.l.bf16 %v8411
        %v8444 = vadd.f32 %v8301, %v8412
        %v8445 = vadd.f32 %v8303, %v8413
        %v8446 = vadd.f32 %v8306, %v8414
        %v8447 = vadd.f32 %v8308, %v8415
        %v8448 = vadd.f32 %v8311, %v8416
        %v8449 = vadd.f32 %v8313, %v8417
        %v8450 = vadd.f32 %v8316, %v8418
        %v8451 = vadd.f32 %v8318, %v8419
        %v8452 = vadd.f32 %v8321, %v8420
        %v8453 = vadd.f32 %v8323, %v8421
        %v8454 = vadd.f32 %v8326, %v8422
        %v8455 = vadd.f32 %v8328, %v8423
        %v8456 = vadd.f32 %v8331, %v8424
        %v8457 = vadd.f32 %v8333, %v8425
        %v8458 = vadd.f32 %v8336, %v8426
        %v8459 = vadd.f32 %v8338, %v8427
        %v8460 = vadd.f32 %v8341, %v8428
        %v8461 = vadd.f32 %v8343, %v8429
        %v8462 = vadd.f32 %v8346, %v8430
        %v8463 = vadd.f32 %v8348, %v8431
        %v8464 = vadd.f32 %v8351, %v8432
        %v8465 = vadd.f32 %v8353, %v8433
        %v8466 = vadd.f32 %v8356, %v8434
        %v8467 = vadd.f32 %v8358, %v8435
        %v8468 = vadd.f32 %v8361, %v8436
        %v8469 = vadd.f32 %v8363, %v8437
        %v8470 = vadd.f32 %v8366, %v8438
        %v8471 = vadd.f32 %v8368, %v8439
        %v8472 = vadd.f32 %v8371, %v8440
        %v8473 = vadd.f32 %v8373, %v8441
        %v8474 = vadd.f32 %v8376, %v8442
        %v8475 = vadd.f32 %v8378, %v8443
        %v8476 = vmax.f32 %v8444, 0.0
        %v8477 = vmax.f32 %v8445, 0.0
        %v8478 = vmax.f32 %v8446, 0.0
        %v8479 = vmax.f32 %v8447, 0.0
        %v8480 = vmax.f32 %v8448, 0.0
        %v8481 = vmax.f32 %v8449, 0.0
        %v8482 = vmax.f32 %v8450, 0.0
        %v8483 = vmax.f32 %v8451, 0.0
        %v8484 = vmax.f32 %v8452, 0.0
        %v8485 = vmax.f32 %v8453, 0.0
        %v8486 = vmax.f32 %v8454, 0.0
        %v8487 = vmax.f32 %v8455, 0.0
        %v8488 = vmax.f32 %v8456, 0.0
        %v8489 = vmax.f32 %v8457, 0.0
        %v8490 = vmax.f32 %v8458, 0.0
        %v8491 = vmax.f32 %v8459, 0.0
        %v8492 = vmax.f32 %v8460, 0.0
        %v8493 = vmax.f32 %v8461, 0.0
        %v8494 = vmax.f32 %v8462, 0.0
        %v8495 = vmax.f32 %v8463, 0.0
        %v8496 = vmax.f32 %v8464, 0.0
        %v8497 = vmax.f32 %v8465, 0.0
        %v8498 = vmax.f32 %v8466, 0.0
        %v8499 = vmax.f32 %v8467, 0.0
        %v8500 = vmax.f32 %v8468, 0.0
        %v8501 = vmax.f32 %v8469, 0.0
        %v8502 = vmax.f32 %v8470, 0.0
        %v8503 = vmax.f32 %v8471, 0.0
        %v8504 = vmax.f32 %v8472, 0.0
        %v8505 = vmax.f32 %v8473, 0.0
        %v8506 = vmax.f32 %v8474, 0.0
        %v8507 = vmax.f32 %v8475, 0.0
        %v8508 = vadd.f32 %v8476, %v8477
        %v8509 = vadd.f32 %v8508, %v8478
        %v8510 = vadd.f32 %v8509, %v8479
        %v8511 = vadd.f32 %v8510, %v8480
        %v8512 = vadd.f32 %v8511, %v8481
        %v8513 = vadd.f32 %v8512, %v8482
        %v8514 = vadd.f32 %v8513, %v8483
        %v8515 = vadd.f32 %v8514, %v8484
        %v8516 = vadd.f32 %v8515, %v8485
        %v8517 = vadd.f32 %v8516, %v8486
        %v8518 = vadd.f32 %v8517, %v8487
        %v8519 = vadd.f32 %v8518, %v8488
        %v8520 = vadd.f32 %v8519, %v8489
        %v8521 = vadd.f32 %v8520, %v8490
        %v8522 = vadd.f32 %v8521, %v8491
        %v8523 = vadd.f32 %v8522, %v8492
        %v8524 = vadd.f32 %v8523, %v8493
        %v8525 = vadd.f32 %v8524, %v8494
        %v8526 = vadd.f32 %v8525, %v8495
        %v8527 = vadd.f32 %v8526, %v8496
        %v8528 = vadd.f32 %v8527, %v8497
        %v8529 = vadd.f32 %v8528, %v8498
        %v8530 = vadd.f32 %v8529, %v8499
        %v8531 = vadd.f32 %v8530, %v8500
        %v8532 = vadd.f32 %v8531, %v8501
        %v8533 = vadd.f32 %v8532, %v8502
        %v8534 = vadd.f32 %v8533, %v8503
        %v8535 = vadd.f32 %v8534, %v8504
        %v8536 = vadd.f32 %v8535, %v8505
        %v8537 = vadd.f32 %v8536, %v8506
        %v8538 = vadd.f32 %v8537, %v8507
        %v8539 = vrot.slane %v8538, 4
        %v8540 = vadd.f32 %v8538, %v8539
        %v8541 = vrot.slane %v8540, 2
        %v8542 = vadd.f32 %v8540, %v8541
        %v8543 = vrot.slane %v8542, 1
        %v8544 = vadd.f32 %v8542, %v8543
        %v8545 = vpack.c.bf16 %v8544, %v8544
        %v8546 = vld [vmem:[%s7] sm:$0xf]
        %v8547 = vld [vmem:[%s7 + $0x4] sm:$0xf]
        %v8548 = vld [vmem:[%s7 + $0x8] sm:$0xf]
        %v8549 = vld [vmem:[%s7 + $0xc] sm:$0xf]
        %v8550 = vld [vmem:[%s7 + $0x10] sm:$0xf]
        %v8551 = vld [vmem:[%s7 + $0x14] sm:$0xf]
        %v8552 = vld [vmem:[%s7 + $0x18] sm:$0xf]
        %v8553 = vld [vmem:[%s7 + $0x1c] sm:$0xf]
        %v8554 = vld [vmem:[%s7 + $0x20] sm:$0xf]
        %v8555 = vld [vmem:[%s7 + $0x24] sm:$0xf]
        %v8556 = vld [vmem:[%s7 + $0x28] sm:$0xf]
        %v8557 = vld [vmem:[%s7 + $0x2c] sm:$0xf]
        %v8558 = vld [vmem:[%s7 + $0x30] sm:$0xf]
        %v8559 = vld [vmem:[%s7 + $0x34] sm:$0xf]
        %v8560 = vld [vmem:[%s7 + $0x38] sm:$0xf]
        %v8561 = vld [vmem:[%s7 + $0x3c] sm:$0xf]
        %v8562 = vld [vmem:[%s8] sm:$0x1]
        %v8579 = vunpack.c.l.b16 %v8546
        %v8580 = vunpack.c.l.b16 %v8547
        %v8581 = vunpack.c.l.b16 %v8548
        %v8582 = vunpack.c.l.b16 %v8549
        %v8583 = vunpack.c.l.b16 %v8550
        %v8584 = vunpack.c.l.b16 %v8551
        %v8585 = vunpack.c.l.b16 %v8552
        %v8586 = vunpack.c.l.b16 %v8553
        %v8587 = vunpack.c.l.b16 %v8554
        %v8588 = vunpack.c.l.b16 %v8555
        %v8589 = vunpack.c.l.b16 %v8556
        %v8590 = vunpack.c.l.b16 %v8557
        %v8591 = vunpack.c.l.b16 %v8558
        %v8592 = vunpack.c.l.b16 %v8559
        %v8593 = vunpack.c.l.b16 %v8560
        %v8594 = vunpack.c.l.b16 %v8561
        %v8595 = vpack.c.b16 %v8580, %v8579
        %v8596 = vpack.c.b16 %v8582, %v8581
        %v8597 = vpack.c.b16 %v8584, %v8583
        %v8598 = vpack.c.b16 %v8586, %v8585
        %v8599 = vpack.c.b16 %v8588, %v8587
        %v8600 = vpack.c.b16 %v8590, %v8589
        %v8601 = vpack.c.b16 %v8592, %v8591
        %v8602 = vpack.c.b16 %v8594, %v8593
        %8611 = vmatpush.bf16.msra.mxu0 %v8602
        %8612 = vmatpush.bf16.msra.mxu0 %v8601
        %8613 = vmatpush.bf16.msra.mxu0 %v8600
        %8614 = vmatpush.bf16.msra.mxu0 %v8599
        %8615 = vmatpush.bf16.msra.mxu0 %v8598
        %8616 = vmatpush.bf16.msra.mxu0 %v8597
        %8617 = vmatpush.bf16.msra.mxu0 %v8596
        %8618 = vmatpush.bf16.msra.mxu0 %v8595
        %8619 = vmatmul.bf16.gmra.mxu0 %v8545
        %v8620 = vpop.f32.mrf.mxu0
        %v8621 = vadd.f32 %v8562, %v8620
        %v8622 = vpop.f32.mrf.mxu0
        %8623 = vdwg.mxu0
        %8624 = vst [vmem:[%s324] sm:$0x1] %v8621
        %s8625 = sand.u32 %s225, 1
        %s8626 = scalar_lea.sflag [#allocation6], %s8625
        %s8627 = sand.u32 %s225, 1
        %s8628 = scalar_lea.vmem [#allocation5], %s8627
        // Predicated region
        $region57: #{encoder_cnn_forward.1} parent=55 // pred_check
          %p8629 = pneg %p235
        $region58: #{encoder_cnn_forward.1} parent=55 // pred_check_branch
          %8631 = sbr.rel (%p8629) target = $region60
        $region59: #{encoder_cnn_forward.1} parent=55 // pred_region
          %8633 = vsyncadd %s8626, 0
          %s8634 = scalar_lea.hbm %s9, %s23
          %s8636 = sshll.u32 %s8628, 4
          %s8637 = int_to_ptr.vmem [resolvable:$true] %s8636
          %s8638 = sshll.u32 %s8634, 4
          %s8639 = int_to_ptr.hbm [resolvable:$true] %s8638
          %8641 = dma.vmem_to_hbm [thread:$0]  %s8637, 16, %s8639, %s8626
        $region60: #{encoder_cnn_forward.1} parent=55 // pred_fallthru
          _
      $region56: #{encoder_cnn_forward.1} parent=5 // pred_fallthru
        _
      %p8642 = scmp.le.s32.totalorder 2, %s18
      // Predicated region
      $region61: #{encoder_cnn_forward.1} parent=5 // pred_check
        %p8643 = pneg %p8642
      $region62: #{encoder_cnn_forward.1} parent=5 // pred_check_branch
        %8645 = sbr.rel (%p8643) target = $region64
      $region63: #{encoder_cnn_forward.1} parent=5 // pred_region
        %s8646 = ssub.s32 %s18, 2
        // Predicated region
        $region65: #{encoder_cnn_forward.1} parent=63 // pred_check
          %p8647 = pneg %p241
        $region66: #{encoder_cnn_forward.1} parent=63 // pred_check_branch
          %8649 = sbr.rel (%p8647) target = $region68
        $region67: #{encoder_cnn_forward.1} parent=63 // pred_region
          %s8650 = sand.u32 %s226, 1
          %s8651 = scalar_lea.sflag [#allocation6], %s8650
          %s8652 = sand.u32 %s226, 1
          %s8653 = scalar_lea.vmem [#allocation5], %s8652
          %8655 = dma.done %s8651, 16
        $region68: #{encoder_cnn_forward.1} parent=63 // pred_fallthru
          _
      $region64: #{encoder_cnn_forward.1} parent=5 // pred_fallthru
        _
    $region6: #{encoder_cnn_forward.1} parent=1 // loop_footer
      %s22 = sadd.s32 1, %s18
    $region7: #{encoder_cnn_forward.1} parent=1 // loop_footer_branch
      %17 = sbr.rel target = $region3
    $region8: #{encoder_cnn_forward.1} parent=1 // loop_exit
      _
    %8656 = vsyncpa [#allocation6], 1
    %s8657 = scalar_lea.sflag [#allocation6], 1
    %8658 = vsyncpa %s8657, 1

</llo_original>
